<compile_context>
chip_gen: v6e
topology: v6e:2x2x1
jax: 0.10.0
libtpu: 0.0.40
codegen_flags: <defaults>
</compile_context>

<pallas_src>
import jax
import jax.numpy as jnp
import numpy as np
from jax import lax
from jax.experimental import pallas as pl
from jax.experimental.pallas import tpu as pltpu


def _round_up(x, m):
    return (x + m - 1) // m * m


def _pick_tile(dim, candidates):
    for c in candidates:
        if c <= dim and dim % c == 0:
            return c
    return dim


# ----------------------------- Pallas kernels ------------------------------
# Single K-step GEMMs (whole-K tile).  Epilogues:
#   "stats": also emit per-tile column sum / sum-of-squares of the f32
#            accumulator (BatchNorm statistics come for free).
#   "tanh":  fused tanh on the f32 accumulator (last layer).

def _gemm_stats_kernel(a_ref, b_ref, o_ref, s_ref):
    acc = jnp.dot(a_ref[...], b_ref[...], preferred_element_type=jnp.float32)
    o_ref[...] = acc.astype(o_ref.dtype)
    s_ref[0:1, :] = jnp.sum(acc, axis=0, keepdims=True)
    s_ref[1:2, :] = jnp.sum(acc * acc, axis=0, keepdims=True)


def _gemm_tanh_kernel(a_ref, b_ref, o_ref):
    acc = jnp.dot(a_ref[...], b_ref[...], preferred_element_type=jnp.float32)
    o_ref[...] = jnp.tanh(acc).astype(o_ref.dtype)   # f32 tanh (EUP, v5e-safe)


def _gemm_plain_kernel(a_ref, b_ref, o_ref):
    o_ref[...] = jnp.dot(a_ref[...], b_ref[...],
                         preferred_element_type=jnp.float32).astype(o_ref.dtype)


def pallas_bmm(a, b, *, epilogue="none", out_dtype=jnp.float32):
    """(G,M,K) @ (G,K,N) -> (G,Mp,Np); bf16 operands, f32 accumulation.

    epilogue == "stats" additionally returns per-(g, M-tile) column sums /
    sums-of-squares of the f32 accumulator, shaped (G*n_i, 2, Np).
    """
    G, M, K = a.shape
    G2, K2, N = b.shape
    assert G == G2 and K == K2
    Mp, Kp, Np = _round_up(M, 8), _round_up(K, 128), _round_up(N, 128)
    # Whole-K tile: every layer of this generator has K <= 2048, so one K-step
    # always fits in VMEM (largest operand block ~1 MiB double-buffered).
    assert Kp <= 2048, "add a K-loop accumulator path for larger K"
    tk = Kp
    tm = _pick_tile(Mp, (512, 256, 128, 64, 32, 16, 8))
    # Large-N tiles cut grid steps; top candidate 4096 (not whole-N) keeps a
    # 2-way j split on layer 1 so both v7x TensorCores get a block.
    tn = _pick_tile(Np, (4096, 2048, 1024, 512, 256, 128))
    ni, nj = Mp // tm, Np // tn

    a = a.astype(jnp.bfloat16)
    b = b.astype(jnp.bfloat16)
    if (Mp, Kp) != (M, K):
        a = jnp.pad(a, ((0, 0), (0, Mp - M), (0, Kp - K)))
    if (Kp, Np) != (K, N):
        b = jnp.pad(b, ((0, 0), (0, Kp - K), (0, Np - N)))

    in_specs = [
        pl.BlockSpec((None, tm, tk), lambda g, i, j: (g, i, 0)),
        pl.BlockSpec((None, tk, tn), lambda g, i, j: (g, 0, j)),
    ]
    cp = pltpu.CompilerParams(
        dimension_semantics=("parallel", "parallel", "parallel"))

    if epilogue == "stats":
        out_shape = (jax.ShapeDtypeStruct((G, Mp, Np), out_dtype),
                     jax.ShapeDtypeStruct((G * ni, 2, Np), jnp.float32))
        out_specs = [
            pl.BlockSpec((None, tm, tn), lambda g, i, j: (g, i, j)),
            pl.BlockSpec((None, 2, tn), lambda g, i, j: (g * ni + i, 0, j)),
        ]
        kernel = _gemm_stats_kernel
    else:
        out_shape = jax.ShapeDtypeStruct((G, Mp, Np), out_dtype)
        out_specs = pl.BlockSpec((None, tm, tn), lambda g, i, j: (g, i, j))
        kernel = _gemm_tanh_kernel if epilogue == "tanh" else _gemm_plain_kernel

    return pl.pallas_call(
        kernel,
        out_shape=out_shape,
        grid_spec=pltpu.PrefetchScalarGridSpec(
            num_scalar_prefetch=0,
            grid=(G, ni, nj),
            in_specs=in_specs,
            out_specs=out_specs),
        compiler_params=cp,
    )(a, b)


# ---------------- ConvTranspose2d -> GEMM operands (no zeros) ---------------

def convt_s2_operands(x, w):
    """x: (N,H,W,Cin) NHWC; w: (Cin,Cout,4,4) PyTorch ConvTranspose2d weight.

    stride=2, padding=1, kernel=4 transposed conv decomposed into 4 output
    parities.  Output pixel (2r+py, 2c+px) = P[g, n*H*W + r*W + c, :] @ Wc[g]
    with g = 2*py + px, K = 4*Cin (a 2x2 sub-kernel per parity)."""
    N, H, W, Cin = x.shape
    Cin2, Cout, kH, kW = w.shape
    assert (Cin2, kH, kW) == (Cin, 4, 4)
    xp = jnp.pad(x, ((0, 0), (1, 1), (1, 1), (0, 0)))
    wt = w.transpose(2, 3, 0, 1)                      # (kH, kW, Cin, Cout)
    P_list, W_list = [], []
    for py in range(2):
        for px in range(2):
            slabs = [xp[:, py + d: py + d + H, px + e: px + e + W, :]
                     for d in range(2) for e in range(2)]
            P_list.append(
                jnp.concatenate(slabs, axis=-1).reshape(N * H * W, 4 * Cin))
            # window tap (d,e) corresponds to kernel tap ky=3-py-2d, kx=3-px-2e
            sub = wt[3 - py::-2, 3 - px::-2]          # (2,2,Cin,Cout)
            W_list.append(sub.reshape(4 * Cin, Cout))
    return jnp.stack(P_list, 0), jnp.stack(W_list, 0)


def convt_s2_operands_T(x, w):
    """Transposed-GEMM operands for the last ConvTranspose: returns
    WT (4, Cout, 4*Cin) and PT (4, 4*Cin, N*H*W), so the GEMM output is
    channel-major — Cout sits on the 8-sublane axis instead of being padded
    3->128 on the lane axis, and the final NHWC->NCHW transpose disappears."""
    N, H, W, Cin = x.shape
    Cin2, Cout, kH, kW = w.shape
    assert (Cin2, kH, kW) == (Cin, 4, 4)
    M = N * H * W
    xc = jnp.transpose(x, (3, 0, 1, 2))               # channel-major (Cin,N,H,W)
    xcp = jnp.pad(xc, ((0, 0), (0, 0), (1, 1), (1, 1)))
    wt = w.transpose(2, 3, 0, 1)                      # (kH, kW, Cin, Cout)
    WT_list, PT_list = [], []
    for py in range(2):
        for px in range(2):
            slabs = [xcp[:, :, py + d: py + d + H, px + e: px + e + W]
                     .reshape(Cin, M)
                     for d in range(2) for e in range(2)]
            PT_list.append(jnp.concatenate(slabs, axis=0))       # (4*Cin, M)
            sub = wt[3 - py::-2, 3 - px::-2]                     # (2,2,Cin,Cout)
            WT_list.append(sub.reshape(4 * Cin, Cout).T)         # (Cout, 4*Cin)
    return jnp.stack(WT_list, 0), jnp.stack(PT_list, 0)


def interleave_parities(y, N, H, W):
    """y: (4, N*H*W, C) parity-ordered GEMM outputs -> (N, 2H, 2W, C) NHWC."""
    C = y.shape[-1]
    y = y.reshape(2, 2, N, H, W, C)           # (py, px, n, r, c, C)
    y = y.transpose(2, 3, 0, 4, 1, 5)         # (n, r, py, c, px, C)
    return y.reshape(N, 2 * H, 2 * W, C)


def interleave_parities_cmajor(y, N, H, W):
    """y: (4, C, N*H*W) channel-major parity outputs -> (N, C, 2H, 2W) NCHW."""
    C = y.shape[1]
    y = y.reshape(2, 2, C, N, H, W)           # (py, px, c, n, r, col)
    y = y.transpose(3, 2, 4, 0, 5, 1)         # (n, c, r, py, col, px)
    return y.reshape(N, C, 2 * H, 2 * W)


def _bn_affine(sums, m, gamma, beta, eps=1e-5):
    """Per-channel BN scale/shift from GEMM-epilogue sums (f32, one-pass)."""
    mean = sums[0] / m
    var = jnp.maximum(sums[1] / m - mean * mean, 0.0)
    scale = gamma * lax.rsqrt(var + eps)
    shift = beta - mean * scale
    return scale, shift


# -------------------------------- the model --------------------------------

LAYER_CFG = [
    # (Cin, Cout, stride, padding, use_bn_relu)
    (100, 512, 1, 0, True),
    (512, 256, 2, 1, True),
    (256, 128, 2, 1, True),
    (128, 64, 2, 1, True),
    (64, 3, 2, 1, False),
]


def init_params(key):
    """Conv weights ~ N(0, 0.02); BN gamma ~ N(1, 0.02), beta ~ N(0, 0.02)."""
    params = []
    for (cin, cout, _s, _p, bn) in LAYER_CFG:
        key, wk, gk, bk = jax.random.split(key, 4)
        w = jax.random.normal(wk, (cin, cout, 4, 4), jnp.float32) * 0.02
        if bn:
            gamma = 1.0 + 0.02 * jax.random.normal(gk, (cout,), jnp.float32)
            beta = 0.02 * jax.random.normal(bk, (cout,), jnp.float32)
        else:
            gamma = beta = None
        params.append((w, gamma, beta))
    return params


@jax.jit
def gen_forward(z, params):
    # TODO(synk): BatchNorm running-mean/var buffer updates (training-time side
    # effect) are not modeled; normalization uses batch statistics, matching
    # the module's default training-mode forward.
    N = z.shape[0]

    # ---- layer 1: ConvT(100,512,4,1,0) on a 1x1 input == plain GEMM --------
    w1, g1, b1 = params[0]
    Cin1, Cout1 = w1.shape[0], w1.shape[1]
    a1 = z.reshape(N, Cin1)                                     # (N, 100)
    wc1 = w1.transpose(0, 2, 3, 1).reshape(Cin1, 16 * Cout1)    # cols: (ky,kx,co)
    y, st = pallas_bmm(a1[None], wc1[None], epilogue="stats")
    y = y[0, :N, :]                                             # (N, 16*Cout1) f32
    # fold the 16 spatial positions into the per-channel statistics
    s = jnp.sum(st, axis=0).reshape(2, 16, Cout1).sum(axis=1)   # (2, Cout1)
    scale, shift = _bn_affine(s, jnp.float32(N * 16), g1, b1)
    # BN apply + ReLU is a tiny per-channel affine; it fuses into the XLA glue
    # that already reshapes/slices the activation for the next layer's im2col.
    x = jnp.maximum(y.reshape(N, 16, Cout1) * scale + shift, 0.0)
    x = x.astype(jnp.bfloat16).reshape(N, 4, 4, Cout1)          # NHWC bf16

    # ---- layers 2..4: stride-2 ConvT via 4 output-parity GEMMs + BN stats --
    for li in range(1, 4):
        w, gamma, beta = params[li]
        _cin, Cout, _s, _p, _bn = LAYER_CFG[li]
        _, H, W, _ = x.shape
        M = N * H * W
        P, Wc = convt_s2_operands(x, w)                  # (4,M,4Cin),(4,4Cin,Cout)
        y, st = pallas_bmm(P, Wc, epilogue="stats")      # y: (4, Mp, Cp) f32
        y = y[:, :M, :Cout]
        s = jnp.sum(st, axis=0)[:, :Cout]                # (2, Cout)
        scale, shift = _bn_affine(s, jnp.float32(4 * M), gamma, beta)
        y = jnp.maximum(y * scale + shift, 0.0).astype(jnp.bfloat16)
        x = interleave_parities(y, N, H, W)              # (N, 2H, 2W, Cout) bf16

    # ---- layer 5: ConvT(64,3) as a transposed GEMM with fused tanh ---------
    w5, _, _ = params[4]
    _, H, W, _ = x.shape
    WT, PT = convt_s2_operands_T(x, w5)                  # (4,3,256), (4,256,M)
    y = pallas_bmm(WT, PT, epilogue="tanh")              # (4, 8, M) f32, tanh'd
    return interleave_parities_cmajor(y[:, :3, :], N, H, W)   # (N, 3, 2H, 2W)


# ------------------------- pure-JAX reference check ------------------------

@jax.jit
def ref_forward(z, params):
    x = z
    for (w, gamma, beta), (_ci, _co, stride, padding, use_bn) in zip(params, LAYER_CFG):
        k = w.shape[2]
        w_conv = jnp.flip(w, axis=(2, 3)).transpose(1, 0, 2, 3)   # (Cout,Cin,kH,kW)
        x = lax.conv_general_dilated(
            x, w_conv, window_strides=(1, 1),
            padding=[(k - 1 - padding, k - 1 - padding)] * 2,
            lhs_dilation=(stride, stride),
            dimension_numbers=('NCHW', 'OIHW', 'NCHW'),
            precision=lax.Precision.HIGHEST)
        if use_bn:
            mean = x.mean(axis=(0, 2, 3), keepdims=True)
            var = ((x - mean) ** 2).mean(axis=(0, 2, 3), keepdims=True)
            x = (x - mean) * lax.rsqrt(var + 1e-5)
            x = x * gamma.reshape(1, -1, 1, 1) + beta.reshape(1, -1, 1, 1)
            x = jnp.maximum(x, 0.0)
        else:
            x = jnp.tanh(x)
    return x


if __name__ == "__main__":
    key = jax.random.PRNGKey(0)
    pkey, zkey = jax.random.split(key)
    params = init_params(pkey)
    z = jax.random.normal(zkey, (2, 100, 1, 1), jnp.float32)   # latent, batch=2

    out = gen_forward(z, params)
    out = jax.block_until_ready(out)
    assert out.shape == (2, 3, 64, 64), out.shape

    ref = np.asarray(ref_forward(z, params))
    got = np.asarray(out)
    err = np.abs(got - ref)
    # bf16 GEMM operands vs fp32-HIGHEST reference: loose elementwise bound
    # plus a tight aggregate bound; real bugs produce O(0.3+) discrepancies.
    np.testing.assert_allclose(got, ref, atol=5e-2, rtol=0)
    assert err.mean() < 1e-2, err.mean()
    print("KERNEL_OK")
</pallas_src>

<mosaic_0001>
module attributes {stable_mosaic.version = 11 : i64} {
  func.func @_gemm_stats_kernel(%arg0: i32, %arg1: i32, %arg2: i32, %arg3: memref<1x8x128xbf16, #tpu.memory_space<vmem>>, %arg4: memref<1x128x4096xbf16, #tpu.memory_space<vmem>>, %arg5: memref<1x8x4096xf32, #tpu.memory_space<vmem>>, %arg6: memref<1x2x4096xf32, #tpu.memory_space<vmem>>) attributes {dimension_semantics = [#tpu.dimension_semantics<parallel>, #tpu.dimension_semantics<parallel>, #tpu.dimension_semantics<parallel>], iteration_bounds = array<i64: 1, 1, 2>, scalar_prefetch = 0 : i64, scratch_operands = 0 : i64, tpu.core_type = #tpu.core_type<tc>, window_params = [{transform_indices = @transform_0, window_bounds = array<i64: 1, 8, 128>}, {transform_indices = @transform_1, window_bounds = array<i64: 1, 128, 4096>}, {transform_indices = @transform_2, window_bounds = array<i64: 1, 8, 4096>}, {transform_indices = @transform_3, window_bounds = array<i64: 1, 2, 4096>}]} {
    %c0 = arith.constant 0 : index
    %c0_0 = arith.constant 0 : index
    %c0_1 = arith.constant 0 : index
    %0 = vector.load %arg3[%c0, %c0_0, %c0_1] : memref<1x8x128xbf16, #tpu.memory_space<vmem>>, vector<1x8x128xbf16>
    %1 = vector.shape_cast %0 : vector<1x8x128xbf16> to vector<8x128xbf16>
    %c0_2 = arith.constant 0 : index
    %c0_3 = arith.constant 0 : index
    %c0_4 = arith.constant 0 : index
    %2 = vector.load %arg4[%c0_2, %c0_3, %c0_4] : memref<1x128x4096xbf16, #tpu.memory_space<vmem>>, vector<1x128x4096xbf16>
    %3 = vector.shape_cast %2 : vector<1x128x4096xbf16> to vector<128x4096xbf16>
    %cst = arith.constant dense<0.000000e+00> : vector<8x4096xf32>
    %4 = tpu.matmul %1, %3, %cst {dimension_numbers = #tpu.dot_dimension_numbers<[1], [0], [0], [1], [0, 0, 1, 1], [], []>} : vector<8x128xbf16>, vector<128x4096xbf16>, vector<8x4096xf32> -> vector<8x4096xf32>
    %c0_5 = arith.constant 0 : index
    %c0_6 = arith.constant 0 : index
    %c0_7 = arith.constant 0 : index
    %5 = vector.load %arg5[%c0_5, %c0_6, %c0_7] : memref<1x8x4096xf32, #tpu.memory_space<vmem>>, vector<1x8x4096xf32>
    %6 = vector.shape_cast %5 : vector<1x8x4096xf32> to vector<8x4096xf32>
    %7 = vector.shape_cast %4 : vector<8x4096xf32> to vector<1x8x4096xf32>
    tpu.vector_store %arg5[%c0_5, %c0_6, %c0_7], %7 {strides = array<i32>} : memref<1x8x4096xf32, #tpu.memory_space<vmem>>, vector<1x8x4096xf32>,
    %cst_8 = arith.constant dense<0.000000e+00> : vector<4096xf32>
    %8 = vector.multi_reduction <add>, %4, %cst_8 [0] : vector<8x4096xf32> to vector<4096xf32>
    %9 = vector.shape_cast %8 : vector<4096xf32> to vector<1x4096xf32>
    %c0_9 = arith.constant 0 : index
    %c0_10 = arith.constant 0 : index
    %c0_11 = arith.constant 0 : index
    %10 = vector.load %arg6[%c0_9, %c0_10, %c0_11] : memref<1x2x4096xf32, #tpu.memory_space<vmem>>, vector<1x1x4096xf32>
    %11 = vector.shape_cast %10 : vector<1x1x4096xf32> to vector<1x4096xf32>
    %12 = vector.shape_cast %9 : vector<1x4096xf32> to vector<1x1x4096xf32>
    tpu.vector_store %arg6[%c0_9, %c0_10, %c0_11], %12 {strides = array<i32>} : memref<1x2x4096xf32, #tpu.memory_space<vmem>>, vector<1x1x4096xf32>,
    %13 = arith.mulf %4, %4 : vector<8x4096xf32>
    %cst_12 = arith.constant dense<0.000000e+00> : vector<4096xf32>
    %14 = vector.multi_reduction <add>, %13, %cst_12 [0] : vector<8x4096xf32> to vector<4096xf32>
    %15 = vector.shape_cast %14 : vector<4096xf32> to vector<1x4096xf32>
    %c0_13 = arith.constant 0 : index
    %c1 = arith.constant 1 : index
    %c0_14 = arith.constant 0 : index
    %16 = vector.load %arg6[%c0_13, %c1, %c0_14] : memref<1x2x4096xf32, #tpu.memory_space<vmem>>, vector<1x1x4096xf32>
    %17 = vector.shape_cast %16 : vector<1x1x4096xf32> to vector<1x4096xf32>
    %18 = vector.shape_cast %15 : vector<1x4096xf32> to vector<1x1x4096xf32>
    tpu.vector_store %arg6[%c0_13, %c1, %c0_14], %18 {strides = array<i32>} : memref<1x2x4096xf32, #tpu.memory_space<vmem>>, vector<1x1x4096xf32>,
    return
  }
  func.func @transform_0(%arg0: i32, %arg1: i32, %arg2: i32) -> (i32, i32, i32) {
    %c0_i32 = arith.constant 0 : i32
    %c0_i32_0 = arith.constant 0 : i32
    return %arg0, %arg1, %c0_i32 : i32, i32, i32
  }
  func.func @transform_1(%arg0: i32, %arg1: i32, %arg2: i32) -> (i32, i32, i32) {
    %c0_i32 = arith.constant 0 : i32
    %c0_i32_0 = arith.constant 0 : i32
    return %arg0, %c0_i32, %arg2 : i32, i32, i32
  }
  func.func @transform_2(%arg0: i32, %arg1: i32, %arg2: i32) -> (i32, i32, i32) {
    %c0_i32 = arith.constant 0 : i32
    return %arg0, %arg1, %arg2 : i32, i32, i32
  }
  func.func @transform_3(%arg0: i32, %arg1: i32, %arg2: i32) -> (i32, i32, i32) {
    %c1_i32 = arith.constant 1 : i32
    %0 = arith.muli %arg0, %c1_i32 : i32
    %1 = arith.addi %0, %arg1 : i32
    %c0_i32 = arith.constant 0 : i32
    %c0_i32_0 = arith.constant 0 : i32
    return %1, %c0_i32, %arg2 : i32, i32, i32
  }
}

module attributes {stable_mosaic.version = 11 : i64} {
  func.func @_gemm_stats_kernel(%arg0: i32, %arg1: i32, %arg2: i32, %arg3: memref<1x32x2048xbf16, #tpu.memory_space<vmem>>, %arg4: memref<1x2048x256xbf16, #tpu.memory_space<vmem>>, %arg5: memref<1x32x256xf32, #tpu.memory_space<vmem>>, %arg6: memref<1x2x256xf32, #tpu.memory_space<vmem>>) attributes {dimension_semantics = [#tpu.dimension_semantics<parallel>, #tpu.dimension_semantics<parallel>, #tpu.dimension_semantics<parallel>], iteration_bounds = array<i64: 4, 1, 1>, scalar_prefetch = 0 : i64, scratch_operands = 0 : i64, tpu.core_type = #tpu.core_type<tc>, window_params = [{transform_indices = @transform_0, window_bounds = array<i64: 1, 32, 2048>}, {transform_indices = @transform_1, window_bounds = array<i64: 1, 2048, 256>}, {transform_indices = @transform_2, window_bounds = array<i64: 1, 32, 256>}, {transform_indices = @transform_3, window_bounds = array<i64: 1, 2, 256>}]} {
    %c0 = arith.constant 0 : index
    %c0_0 = arith.constant 0 : index
    %c0_1 = arith.constant 0 : index
    %0 = vector.load %arg3[%c0, %c0_0, %c0_1] : memref<1x32x2048xbf16, #tpu.memory_space<vmem>>, vector<1x32x2048xbf16>
    %1 = vector.shape_cast %0 : vector<1x32x2048xbf16> to vector<32x2048xbf16>
    %c0_2 = arith.constant 0 : index
    %c0_3 = arith.constant 0 : index
    %c0_4 = arith.constant 0 : index
    %2 = vector.load %arg4[%c0_2, %c0_3, %c0_4] : memref<1x2048x256xbf16, #tpu.memory_space<vmem>>, vector<1x2048x256xbf16>
    %3 = vector.shape_cast %2 : vector<1x2048x256xbf16> to vector<2048x256xbf16>
    %cst = arith.constant dense<0.000000e+00> : vector<32x256xf32>
    %4 = tpu.matmul %1, %3, %cst {dimension_numbers = #tpu.dot_dimension_numbers<[1], [0], [0], [1], [0, 0, 1, 1], [], []>} : vector<32x2048xbf16>, vector<2048x256xbf16>, vector<32x256xf32> -> vector<32x256xf32>
    %c0_5 = arith.constant 0 : index
    %c0_6 = arith.constant 0 : index
    %c0_7 = arith.constant 0 : index
    %5 = vector.load %arg5[%c0_5, %c0_6, %c0_7] : memref<1x32x256xf32, #tpu.memory_space<vmem>>, vector<1x32x256xf32>
    %6 = vector.shape_cast %5 : vector<1x32x256xf32> to vector<32x256xf32>
    %7 = vector.shape_cast %4 : vector<32x256xf32> to vector<1x32x256xf32>
    tpu.vector_store %arg5[%c0_5, %c0_6, %c0_7], %7 {strides = array<i32>} : memref<1x32x256xf32, #tpu.memory_space<vmem>>, vector<1x32x256xf32>,
    %cst_8 = arith.constant dense<0.000000e+00> : vector<256xf32>
    %8 = vector.multi_reduction <add>, %4, %cst_8 [0] : vector<32x256xf32> to vector<256xf32>
    %9 = vector.shape_cast %8 : vector<256xf32> to vector<1x256xf32>
    %c0_9 = arith.constant 0 : index
    %c0_10 = arith.constant 0 : index
    %c0_11 = arith.constant 0 : index
    %10 = vector.load %arg6[%c0_9, %c0_10, %c0_11] : memref<1x2x256xf32, #tpu.memory_space<vmem>>, vector<1x1x256xf32>
    %11 = vector.shape_cast %10 : vector<1x1x256xf32> to vector<1x256xf32>
    %12 = vector.shape_cast %9 : vector<1x256xf32> to vector<1x1x256xf32>
    tpu.vector_store %arg6[%c0_9, %c0_10, %c0_11], %12 {strides = array<i32>} : memref<1x2x256xf32, #tpu.memory_space<vmem>>, vector<1x1x256xf32>,
    %13 = arith.mulf %4, %4 : vector<32x256xf32>
    %cst_12 = arith.constant dense<0.000000e+00> : vector<256xf32>
    %14 = vector.multi_reduction <add>, %13, %cst_12 [0] : vector<32x256xf32> to vector<256xf32>
    %15 = vector.shape_cast %14 : vector<256xf32> to vector<1x256xf32>
    %c0_13 = arith.constant 0 : index
    %c1 = arith.constant 1 : index
    %c0_14 = arith.constant 0 : index
    %16 = vector.load %arg6[%c0_13, %c1, %c0_14] : memref<1x2x256xf32, #tpu.memory_space<vmem>>, vector<1x1x256xf32>
    %17 = vector.shape_cast %16 : vector<1x1x256xf32> to vector<1x256xf32>
    %18 = vector.shape_cast %15 : vector<1x256xf32> to vector<1x1x256xf32>
    tpu.vector_store %arg6[%c0_13, %c1, %c0_14], %18 {strides = array<i32>} : memref<1x2x256xf32, #tpu.memory_space<vmem>>, vector<1x1x256xf32>,
    return
  }
  func.func @transform_0(%arg0: i32, %arg1: i32, %arg2: i32) -> (i32, i32, i32) {
    %c0_i32 = arith.constant 0 : i32
    %c0_i32_0 = arith.constant 0 : i32
    return %arg0, %arg1, %c0_i32 : i32, i32, i32
  }
  func.func @transform_1(%arg0: i32, %arg1: i32, %arg2: i32) -> (i32, i32, i32) {
    %c0_i32 = arith.constant 0 : i32
    %c0_i32_0 = arith.constant 0 : i32
    return %arg0, %c0_i32, %arg2 : i32, i32, i32
  }
  func.func @transform_2(%arg0: i32, %arg1: i32, %arg2: i32) -> (i32, i32, i32) {
    %c0_i32 = arith.constant 0 : i32
    return %arg0, %arg1, %arg2 : i32, i32, i32
  }
  func.func @transform_3(%arg0: i32, %arg1: i32, %arg2: i32) -> (i32, i32, i32) {
    %c1_i32 = arith.constant 1 : i32
    %0 = arith.muli %arg0, %c1_i32 : i32
    %1 = arith.addi %0, %arg1 : i32
    %c0_i32 = arith.constant 0 : i32
    %c0_i32_0 = arith.constant 0 : i32
    return %1, %c0_i32, %arg2 : i32, i32, i32
  }
}

module attributes {stable_mosaic.version = 11 : i64} {
  func.func @_gemm_stats_kernel(%arg0: i32, %arg1: i32, %arg2: i32, %arg3: memref<1x128x1024xbf16, #tpu.memory_space<vmem>>, %arg4: memref<1x1024x128xbf16, #tpu.memory_space<vmem>>, %arg5: memref<1x128x128xf32, #tpu.memory_space<vmem>>, %arg6: memref<1x2x128xf32, #tpu.memory_space<vmem>>) attributes {dimension_semantics = [#tpu.dimension_semantics<parallel>, #tpu.dimension_semantics<parallel>, #tpu.dimension_semantics<parallel>], iteration_bounds = array<i64: 4, 1, 1>, scalar_prefetch = 0 : i64, scratch_operands = 0 : i64, tpu.core_type = #tpu.core_type<tc>, window_params = [{transform_indices = @transform_0, window_bounds = array<i64: 1, 128, 1024>}, {transform_indices = @transform_1, window_bounds = array<i64: 1, 1024, 128>}, {transform_indices = @transform_2, window_bounds = array<i64: 1, 128, 128>}, {transform_indices = @transform_3, window_bounds = array<i64: 1, 2, 128>}]} {
    %c0 = arith.constant 0 : index
    %c0_0 = arith.constant 0 : index
    %c0_1 = arith.constant 0 : index
    %0 = vector.load %arg3[%c0, %c0_0, %c0_1] : memref<1x128x1024xbf16, #tpu.memory_space<vmem>>, vector<1x128x1024xbf16>
    %1 = vector.shape_cast %0 : vector<1x128x1024xbf16> to vector<128x1024xbf16>
    %c0_2 = arith.constant 0 : index
    %c0_3 = arith.constant 0 : index
    %c0_4 = arith.constant 0 : index
    %2 = vector.load %arg4[%c0_2, %c0_3, %c0_4] : memref<1x1024x128xbf16, #tpu.memory_space<vmem>>, vector<1x1024x128xbf16>
    %3 = vector.shape_cast %2 : vector<1x1024x128xbf16> to vector<1024x128xbf16>
    %cst = arith.constant dense<0.000000e+00> : vector<128x128xf32>
    %4 = tpu.matmul %1, %3, %cst {dimension_numbers = #tpu.dot_dimension_numbers<[1], [0], [0], [1], [0, 0, 1, 1], [], []>} : vector<128x1024xbf16>, vector<1024x128xbf16>, vector<128x128xf32> -> vector<128x128xf32>
    %c0_5 = arith.constant 0 : index
    %c0_6 = arith.constant 0 : index
    %c0_7 = arith.constant 0 : index
    %5 = vector.load %arg5[%c0_5, %c0_6, %c0_7] : memref<1x128x128xf32, #tpu.memory_space<vmem>>, vector<1x128x128xf32>
    %6 = vector.shape_cast %5 : vector<1x128x128xf32> to vector<128x128xf32>
    %7 = vector.shape_cast %4 : vector<128x128xf32> to vector<1x128x128xf32>
    tpu.vector_store %arg5[%c0_5, %c0_6, %c0_7], %7 {strides = array<i32>} : memref<1x128x128xf32, #tpu.memory_space<vmem>>, vector<1x128x128xf32>,
    %cst_8 = arith.constant dense<0.000000e+00> : vector<128xf32>
    %8 = vector.multi_reduction <add>, %4, %cst_8 [0] : vector<128x128xf32> to vector<128xf32>
    %9 = vector.shape_cast %8 : vector<128xf32> to vector<1x128xf32>
    %c0_9 = arith.constant 0 : index
    %c0_10 = arith.constant 0 : index
    %c0_11 = arith.constant 0 : index
    %10 = vector.load %arg6[%c0_9, %c0_10, %c0_11] : memref<1x2x128xf32, #tpu.memory_space<vmem>>, vector<1x1x128xf32>
    %11 = vector.shape_cast %10 : vector<1x1x128xf32> to vector<1x128xf32>
    %12 = vector.shape_cast %9 : vector<1x128xf32> to vector<1x1x128xf32>
    tpu.vector_store %arg6[%c0_9, %c0_10, %c0_11], %12 {strides = array<i32>} : memref<1x2x128xf32, #tpu.memory_space<vmem>>, vector<1x1x128xf32>,
    %13 = arith.mulf %4, %4 : vector<128x128xf32>
    %cst_12 = arith.constant dense<0.000000e+00> : vector<128xf32>
    %14 = vector.multi_reduction <add>, %13, %cst_12 [0] : vector<128x128xf32> to vector<128xf32>
    %15 = vector.shape_cast %14 : vector<128xf32> to vector<1x128xf32>
    %c0_13 = arith.constant 0 : index
    %c1 = arith.constant 1 : index
    %c0_14 = arith.constant 0 : index
    %16 = vector.load %arg6[%c0_13, %c1, %c0_14] : memref<1x2x128xf32, #tpu.memory_space<vmem>>, vector<1x1x128xf32>
    %17 = vector.shape_cast %16 : vector<1x1x128xf32> to vector<1x128xf32>
    %18 = vector.shape_cast %15 : vector<1x128xf32> to vector<1x1x128xf32>
    tpu.vector_store %arg6[%c0_13, %c1, %c0_14], %18 {strides = array<i32>} : memref<1x2x128xf32, #tpu.memory_space<vmem>>, vector<1x1x128xf32>,
    return
  }
  func.func @transform_0(%arg0: i32, %arg1: i32, %arg2: i32) -> (i32, i32, i32) {
    %c0_i32 = arith.constant 0 : i32
    %c0_i32_0 = arith.constant 0 : i32
    return %arg0, %arg1, %c0_i32 : i32, i32, i32
  }
  func.func @transform_1(%arg0: i32, %arg1: i32, %arg2: i32) -> (i32, i32, i32) {
    %c0_i32 = arith.constant 0 : i32
    %c0_i32_0 = arith.constant 0 : i32
    return %arg0, %c0_i32, %arg2 : i32, i32, i32
  }
  func.func @transform_2(%arg0: i32, %arg1: i32, %arg2: i32) -> (i32, i32, i32) {
    %c0_i32 = arith.constant 0 : i32
    return %arg0, %arg1, %arg2 : i32, i32, i32
  }
  func.func @transform_3(%arg0: i32, %arg1: i32, %arg2: i32) -> (i32, i32, i32) {
    %c1_i32 = arith.constant 1 : i32
    %0 = arith.muli %arg0, %c1_i32 : i32
    %1 = arith.addi %0, %arg1 : i32
    %c0_i32 = arith.constant 0 : i32
    %c0_i32_0 = arith.constant 0 : i32
    return %1, %c0_i32, %arg2 : i32, i32, i32
  }
}

module attributes {stable_mosaic.version = 11 : i64} {
  func.func @_gemm_stats_kernel(%arg0: i32, %arg1: i32, %arg2: i32, %arg3: memref<1x512x512xbf16, #tpu.memory_space<vmem>>, %arg4: memref<1x512x128xbf16, #tpu.memory_space<vmem>>, %arg5: memref<1x512x128xf32, #tpu.memory_space<vmem>>, %arg6: memref<1x2x128xf32, #tpu.memory_space<vmem>>) attributes {dimension_semantics = [#tpu.dimension_semantics<parallel>, #tpu.dimension_semantics<parallel>, #tpu.dimension_semantics<parallel>], iteration_bounds = array<i64: 4, 1, 1>, scalar_prefetch = 0 : i64, scratch_operands = 0 : i64, tpu.core_type = #tpu.core_type<tc>, window_params = [{transform_indices = @transform_0, window_bounds = array<i64: 1, 512, 512>}, {transform_indices = @transform_1, window_bounds = array<i64: 1, 512, 128>}, {transform_indices = @transform_2, window_bounds = array<i64: 1, 512, 128>}, {transform_indices = @transform_3, window_bounds = array<i64: 1, 2, 128>}]} {
    %c0 = arith.constant 0 : index
    %c0_0 = arith.constant 0 : index
    %c0_1 = arith.constant 0 : index
    %0 = vector.load %arg3[%c0, %c0_0, %c0_1] : memref<1x512x512xbf16, #tpu.memory_space<vmem>>, vector<1x512x512xbf16>
    %1 = vector.shape_cast %0 : vector<1x512x512xbf16> to vector<512x512xbf16>
    %c0_2 = arith.constant 0 : index
    %c0_3 = arith.constant 0 : index
    %c0_4 = arith.constant 0 : index
    %2 = vector.load %arg4[%c0_2, %c0_3, %c0_4] : memref<1x512x128xbf16, #tpu.memory_space<vmem>>, vector<1x512x128xbf16>
    %3 = vector.shape_cast %2 : vector<1x512x128xbf16> to vector<512x128xbf16>
    %cst = arith.constant dense<0.000000e+00> : vector<512x128xf32>
    %4 = tpu.matmul %1, %3, %cst {dimension_numbers = #tpu.dot_dimension_numbers<[1], [0], [0], [1], [0, 0, 1, 1], [], []>} : vector<512x512xbf16>, vector<512x128xbf16>, vector<512x128xf32> -> vector<512x128xf32>
    %c0_5 = arith.constant 0 : index
    %c0_6 = arith.constant 0 : index
    %c0_7 = arith.constant 0 : index
    %5 = vector.load %arg5[%c0_5, %c0_6, %c0_7] : memref<1x512x128xf32, #tpu.memory_space<vmem>>, vector<1x512x128xf32>
    %6 = vector.shape_cast %5 : vector<1x512x128xf32> to vector<512x128xf32>
    %7 = vector.shape_cast %4 : vector<512x128xf32> to vector<1x512x128xf32>
    tpu.vector_store %arg5[%c0_5, %c0_6, %c0_7], %7 {strides = array<i32>} : memref<1x512x128xf32, #tpu.memory_space<vmem>>, vector<1x512x128xf32>,
    %cst_8 = arith.constant dense<0.000000e+00> : vector<128xf32>
    %8 = vector.multi_reduction <add>, %4, %cst_8 [0] : vector<512x128xf32> to vector<128xf32>
    %9 = vector.shape_cast %8 : vector<128xf32> to vector<1x128xf32>
    %c0_9 = arith.constant 0 : index
    %c0_10 = arith.constant 0 : index
    %c0_11 = arith.constant 0 : index
    %10 = vector.load %arg6[%c0_9, %c0_10, %c0_11] : memref<1x2x128xf32, #tpu.memory_space<vmem>>, vector<1x1x128xf32>
    %11 = vector.shape_cast %10 : vector<1x1x128xf32> to vector<1x128xf32>
    %12 = vector.shape_cast %9 : vector<1x128xf32> to vector<1x1x128xf32>
    tpu.vector_store %arg6[%c0_9, %c0_10, %c0_11], %12 {strides = array<i32>} : memref<1x2x128xf32, #tpu.memory_space<vmem>>, vector<1x1x128xf32>,
    %13 = arith.mulf %4, %4 : vector<512x128xf32>
    %cst_12 = arith.constant dense<0.000000e+00> : vector<128xf32>
    %14 = vector.multi_reduction <add>, %13, %cst_12 [0] : vector<512x128xf32> to vector<128xf32>
    %15 = vector.shape_cast %14 : vector<128xf32> to vector<1x128xf32>
    %c0_13 = arith.constant 0 : index
    %c1 = arith.constant 1 : index
    %c0_14 = arith.constant 0 : index
    %16 = vector.load %arg6[%c0_13, %c1, %c0_14] : memref<1x2x128xf32, #tpu.memory_space<vmem>>, vector<1x1x128xf32>
    %17 = vector.shape_cast %16 : vector<1x1x128xf32> to vector<1x128xf32>
    %18 = vector.shape_cast %15 : vector<1x128xf32> to vector<1x1x128xf32>
    tpu.vector_store %arg6[%c0_13, %c1, %c0_14], %18 {strides = array<i32>} : memref<1x2x128xf32, #tpu.memory_space<vmem>>, vector<1x1x128xf32>,
    return
  }
  func.func @transform_0(%arg0: i32, %arg1: i32, %arg2: i32) -> (i32, i32, i32) {
    %c0_i32 = arith.constant 0 : i32
    %c0_i32_0 = arith.constant 0 : i32
    return %arg0, %arg1, %c0_i32 : i32, i32, i32
  }
  func.func @transform_1(%arg0: i32, %arg1: i32, %arg2: i32) -> (i32, i32, i32) {
    %c0_i32 = arith.constant 0 : i32
    %c0_i32_0 = arith.constant 0 : i32
    return %arg0, %c0_i32, %arg2 : i32, i32, i32
  }
  func.func @transform_2(%arg0: i32, %arg1: i32, %arg2: i32) -> (i32, i32, i32) {
    %c0_i32 = arith.constant 0 : i32
    return %arg0, %arg1, %arg2 : i32, i32, i32
  }
  func.func @transform_3(%arg0: i32, %arg1: i32, %arg2: i32) -> (i32, i32, i32) {
    %c1_i32 = arith.constant 1 : i32
    %0 = arith.muli %arg0, %c1_i32 : i32
    %1 = arith.addi %0, %arg1 : i32
    %c0_i32 = arith.constant 0 : i32
    %c0_i32_0 = arith.constant 0 : i32
    return %1, %c0_i32, %arg2 : i32, i32, i32
  }
}

module attributes {stable_mosaic.version = 11 : i64} {
  func.func @_gemm_tanh_kernel(%arg0: i32, %arg1: i32, %arg2: i32, %arg3: memref<1x8x256xbf16, #tpu.memory_space<vmem>>, %arg4: memref<1x256x2048xbf16, #tpu.memory_space<vmem>>, %arg5: memref<1x8x2048xf32, #tpu.memory_space<vmem>>) attributes {dimension_semantics = [#tpu.dimension_semantics<parallel>, #tpu.dimension_semantics<parallel>, #tpu.dimension_semantics<parallel>], iteration_bounds = array<i64: 4, 1, 1>, scalar_prefetch = 0 : i64, scratch_operands = 0 : i64, tpu.core_type = #tpu.core_type<tc>, window_params = [{transform_indices = @transform_0, window_bounds = array<i64: 1, 8, 256>}, {transform_indices = @transform_1, window_bounds = array<i64: 1, 256, 2048>}, {transform_indices = @transform_2, window_bounds = array<i64: 1, 8, 2048>}]} {
    %c0 = arith.constant 0 : index
    %c0_0 = arith.constant 0 : index
    %c0_1 = arith.constant 0 : index
    %0 = vector.load %arg3[%c0, %c0_0, %c0_1] : memref<1x8x256xbf16, #tpu.memory_space<vmem>>, vector<1x8x256xbf16>
    %1 = vector.shape_cast %0 : vector<1x8x256xbf16> to vector<8x256xbf16>
    %c0_2 = arith.constant 0 : index
    %c0_3 = arith.constant 0 : index
    %c0_4 = arith.constant 0 : index
    %2 = vector.load %arg4[%c0_2, %c0_3, %c0_4] : memref<1x256x2048xbf16, #tpu.memory_space<vmem>>, vector<1x256x2048xbf16>
    %3 = vector.shape_cast %2 : vector<1x256x2048xbf16> to vector<256x2048xbf16>
    %cst = arith.constant dense<0.000000e+00> : vector<8x2048xf32>
    %4 = tpu.matmul %1, %3, %cst {dimension_numbers = #tpu.dot_dimension_numbers<[1], [0], [0], [1], [0, 0, 1, 1], [], []>} : vector<8x256xbf16>, vector<256x2048xbf16>, vector<8x2048xf32> -> vector<8x2048xf32>
    %5 = math.tanh %4 : vector<8x2048xf32>
    %c0_5 = arith.constant 0 : index
    %c0_6 = arith.constant 0 : index
    %c0_7 = arith.constant 0 : index
    %6 = vector.load %arg5[%c0_5, %c0_6, %c0_7] : memref<1x8x2048xf32, #tpu.memory_space<vmem>>, vector<1x8x2048xf32>
    %7 = vector.shape_cast %6 : vector<1x8x2048xf32> to vector<8x2048xf32>
    %8 = vector.shape_cast %5 : vector<8x2048xf32> to vector<1x8x2048xf32>
    tpu.vector_store %arg5[%c0_5, %c0_6, %c0_7], %8 {strides = array<i32>} : memref<1x8x2048xf32, #tpu.memory_space<vmem>>, vector<1x8x2048xf32>,
    return
  }
  func.func @transform_0(%arg0: i32, %arg1: i32, %arg2: i32) -> (i32, i32, i32) {
    %c0_i32 = arith.constant 0 : i32
    %c0_i32_0 = arith.constant 0 : i32
    return %arg0, %arg1, %c0_i32 : i32, i32, i32
  }
  func.func @transform_1(%arg0: i32, %arg1: i32, %arg2: i32) -> (i32, i32, i32) {
    %c0_i32 = arith.constant 0 : i32
    %c0_i32_0 = arith.constant 0 : i32
    return %arg0, %c0_i32, %arg2 : i32, i32, i32
  }
  func.func @transform_2(%arg0: i32, %arg1: i32, %arg2: i32) -> (i32, i32, i32) {
    %c0_i32 = arith.constant 0 : i32
    return %arg0, %arg1, %arg2 : i32, i32, i32
  }
}

</mosaic_0001>

<llo_original>
// kernel: gen_forward.5
$region0: #{gen_forward.5}
  #allocation0 [shape = 'u32[]', space=smem, size = 0x4, offset = 0x4, fixed_abs, tag = 'smem constant byte address 0x4 - core index']
  #allocation1 [shape = 'u32[144,128]{1,0:T(1,128)}', space=vmem, size = 0x12000, scoped, tag = 'internal scratch']
  %s0 = inlined_call_operand.vmem [shape: bf16[1,8,128], index: 0, kind: input, shape index: {}]
  %s1 = inlined_call_operand.vmem [shape: bf16[1,128,8192], index: 1, kind: input, shape index: {}]
  %s2 = inlined_call_operand.vmem [shape: f32[1,8,8192], index: 2, kind: output, shape index: {0}]
  %s3 = inlined_call_operand.vmem [shape: f32[1,2,8192], index: 3, kind: output, shape index: {1}]
  %4 = xla_tuple %s2, %s3
  %s5 = sld [smem:[#allocation0]]
  $region72: #{gen_forward.5} parent=0
    _
  %s7 = ssub.s32 1, %s5
  %s8 = scalar_select 0, %s7, %s5
  $region1: #{gen_forward.5} parent=0
    #allocation2 [shape = 'u8[2097152]{0}', space=vmem, size = 0x200000, scoped, tag = 'input window, operand 1']
    loop: start=0, step=1, limit=4
    $region2: #{gen_forward.5} parent=1 // loop_pre_header
      _
    $region3: #{gen_forward.5} parent=1 // loop_header
      %s10 = sphi 0, %s14
      %p11 = scmp.ge.s32.totalorder %s10, 4
      %s17 = sphi 0, %s36
      %s18 = sphi 0, %s32
      %s19 = sphi 0, %s28
      %s20 = sphi 0, %s17
      %s21 = sphi 0, %s18
      %s22 = sphi 0, %s19
      %s23 = sphi 0, %s20
      %s24 = sphi 0, %s21
      %s25 = sphi 0, %s22
      %s41 = sphi 0, %s43
      %s44 = sphi 0, %s41
      %s45 = sphi 0, %s44
      %s61 = sphi 0, %s45
      %s69 = sphi 0, %s71
      %s72 = sphi 0, %s69
      %s73 = sphi 0, %s72
      %s89 = sphi 0, %s73
      %s99 = sphi 0, %s101
      %s102 = sphi 0, %s99
      %s103 = sphi 0, %s102
      %s119 = sphi 0, %s103
      %s129 = sphi 0, %s131
      %s132 = sphi 0, %s129
      %s133 = sphi 0, %s132
      %s149 = sphi 0, %s133
    $region4: #{gen_forward.5} parent=1 // loop_header_branch
      %13 = sbr.rel (%p11) target = $region8
    $region5: #{gen_forward.5} parent=1 // loop_body
      %s15 = ssub.s32 %s10, 1
      %s16 = ssub.s32 %s10, 2
      %s26 = sadd.s32 1, %s19
      %p27 = scmp.ge.s32.totalorder %s26, 2
      %s28 = scalar_select %p27, 0, %s26
      %s29 = sadd.s32 1, %s18
      %s30 = scalar_select %p27, %s29, %s18
      %p31 = scmp.ge.s32.totalorder %s30, 1
      %s32 = scalar_select %p31, 0, %s30
      %s33 = sadd.s32 1, %s17
      %s34 = scalar_select %p31, %s33, %s17
      %p35 = scmp.ge.s32.totalorder %s34, 1
      %s36 = scalar_select %p35, 0, %s34
      %s37 = ssub.s32 %s17, %s36
      %s38 = ssub.s32 %s18, %s32
      %s39 = sor.u32 %s37, %s38
      %p40 = scmp.eq.s32.totalorder %s39, 0
      %s42 = sadd.s32 %s41, 1
      %s43 = scalar_select %p40, %s41, %s42
      %p46 = pneg %p40
      %p47 = scmp.eq.s32.totalorder %s10, 1
      %p48 = por %p46, %p47
      %p49 = scmp.ne.s32.totalorder %s41, %s44
      %p50 = scmp.eq.s32.totalorder %s10, 0
      %p51 = por %p49, %p50
      %p52 = scmp.ne.s32.totalorder %s41, %s44
      %p53 = scmp.eq.s32.totalorder %s15, 1
      %p54 = por %p52, %p53
      %p55 = scmp.ne.s32.totalorder %s44, %s45
      %p56 = scmp.eq.s32.totalorder %s15, 0
      %p57 = por %p55, %p56
      %p58 = scmp.ne.s32.totalorder %s44, %s45
      %p59 = scmp.eq.s32.totalorder %s16, 1
      %p60 = por %p58, %p59
      %p62 = scmp.ne.s32.totalorder %s45, %s61
      %p63 = scmp.eq.s32.totalorder %s16, 0
      %p64 = por %p62, %p63
      %s65 = ssub.s32 %s17, %s36
      %s66 = ssub.s32 %s19, %s28
      %s67 = sor.u32 %s65, %s66
      %p68 = scmp.eq.s32.totalorder %s67, 0
      %s70 = sadd.s32 %s69, 1
      %s71 = scalar_select %p68, %s69, %s70
      %p74 = pneg %p68
      %p75 = scmp.eq.s32.totalorder %s10, 1
      %p76 = por %p74, %p75
      %p77 = scmp.ne.s32.totalorder %s69, %s72
      %p78 = scmp.eq.s32.totalorder %s10, 0
      %p79 = por %p77, %p78
      %p80 = scmp.ne.s32.totalorder %s69, %s72
      %p81 = scmp.eq.s32.totalorder %s15, 1
      %p82 = por %p80, %p81
      %p83 = scmp.ne.s32.totalorder %s72, %s73
      %p84 = scmp.eq.s32.totalorder %s15, 0
      %p85 = por %p83, %p84
      %p86 = scmp.ne.s32.totalorder %s72, %s73
      %p87 = scmp.eq.s32.totalorder %s16, 1
      %p88 = por %p86, %p87
      %p90 = scmp.ne.s32.totalorder %s73, %s89
      %p91 = scmp.eq.s32.totalorder %s16, 0
      %p92 = por %p90, %p91
      %s93 = ssub.s32 %s17, %s36
      %s94 = ssub.s32 %s18, %s32
      %s95 = sor.u32 %s93, %s94
      %s96 = ssub.s32 %s19, %s28
      %s97 = sor.u32 %s95, %s96
      %p98 = scmp.eq.s32.totalorder %s97, 0
      %s100 = sadd.s32 %s99, 1
      %s101 = scalar_select %p98, %s99, %s100
      %p104 = pneg %p98
      %p105 = scmp.eq.s32.totalorder %s10, 1
      %p106 = por %p104, %p105
      %p107 = scmp.ne.s32.totalorder %s99, %s102
      %p108 = scmp.eq.s32.totalorder %s10, 0
      %p109 = por %p107, %p108
      %p110 = scmp.ne.s32.totalorder %s99, %s102
      %p111 = scmp.eq.s32.totalorder %s15, 1
      %p112 = por %p110, %p111
      %p113 = scmp.ne.s32.totalorder %s102, %s103
      %p114 = scmp.eq.s32.totalorder %s15, 0
      %p115 = por %p113, %p114
      %p116 = scmp.ne.s32.totalorder %s102, %s103
      %p117 = scmp.eq.s32.totalorder %s16, 1
      %p118 = por %p116, %p117
      %p120 = scmp.ne.s32.totalorder %s103, %s119
      %p121 = scmp.eq.s32.totalorder %s16, 0
      %p122 = por %p120, %p121
      %s123 = sadd.s32 %s17, %s18
      %s124 = sadd.s32 %s36, %s32
      %s125 = ssub.s32 %s123, %s124
      %s126 = ssub.s32 %s19, %s28
      %s127 = sor.u32 %s125, %s126
      %p128 = scmp.eq.s32.totalorder %s127, 0
      %s130 = sadd.s32 %s129, 1
      %s131 = scalar_select %p128, %s129, %s130
      %p134 = pneg %p128
      %p135 = scmp.eq.s32.totalorder %s10, 1
      %p136 = por %p134, %p135
      %p137 = scmp.ne.s32.totalorder %s129, %s132
      %p138 = scmp.eq.s32.totalorder %s10, 0
      %p139 = por %p137, %p138
      %p140 = scmp.ne.s32.totalorder %s129, %s132
      %p141 = scmp.eq.s32.totalorder %s15, 1
      %p142 = por %p140, %p141
      %p143 = scmp.ne.s32.totalorder %s132, %s133
      %p144 = scmp.eq.s32.totalorder %s15, 0
      %p145 = por %p143, %p144
      %p146 = scmp.ne.s32.totalorder %s132, %s133
      %p147 = scmp.eq.s32.totalorder %s16, 1
      %p148 = por %p146, %p147
      %p150 = scmp.ne.s32.totalorder %s133, %s149
      %p151 = scmp.eq.s32.totalorder %s16, 0
      %p152 = por %p150, %p151
      %p153 = scmp.le.s32.totalorder 1, %s10
      %p154 = scmp.lt.s32.totalorder %s10, 3
      %p155 = pnand %p153, %p154
      %p156 = pneg %p155
      // Predicated region
      $region9: #{gen_forward.5} parent=5 // pred_check
        _
      $region10: #{gen_forward.5} parent=5 // pred_check_branch
        %158 = sbr.rel (%p155) target = $region12
      $region11: #{gen_forward.5} parent=5 // pred_region
        %s159 = ssub.s32 %s10, 1
        // Predicated region
        $region13: #{gen_forward.5} parent=11 // pred_check
          %p160 = pneg %p57
        $region14: #{gen_forward.5} parent=11 // pred_check_branch
          %162 = sbr.rel (%p160) target = $region16
        $region15: #{gen_forward.5} parent=11 // pred_region
          %p163 = scmp.lt.s32.totalorder %s20, 0
          %s164 = scalar_select %p163, %s20, 0
          %p165 = scmp.lt.s32.totalorder %s21, 0
          %s166 = scalar_select %p165, %s21, 0
          %s167 = sadd.s32 %s166, %s164
          %s168 = smul.addr %s167, 4
          %s169 = scalar_lea.vmem %s0, %s168
        $region16: #{gen_forward.5} parent=11 // pred_fallthru
          _
      $region12: #{gen_forward.5} parent=5 // pred_fallthru
        _
      %p170 = scmp.lt.s32.totalorder %s10, 2
      // Predicated region
      $region17: #{gen_forward.5} parent=5 // pred_check
        %p171 = pneg %p170
      $region18: #{gen_forward.5} parent=5 // pred_check_branch
        %173 = sbr.rel (%p171) target = $region20
      $region19: #{gen_forward.5} parent=5 // pred_region
        // Predicated region
        $region21: #{gen_forward.5} parent=19 // pred_check
          %p174 = pneg %p79
        $region22: #{gen_forward.5} parent=19 // pred_check_branch
          %176 = sbr.rel (%p174) target = $region24
        $region23: #{gen_forward.5} parent=19 // pred_region
          %s177 = sand.u32 %s69, 1
          %s178 = sand.u32 %s69, 1
          %s179 = smul.addr %s178, 2048
          %s180 = scalar_lea.vmem [#allocation2], %s179
          %s181 = smul.u32 32, %s19
          %s182 = smul.addr %s17, 1024
          %s183 = sadd.s32 %s181, %s182
          %s184 = smul.addr %s183, 4
          %s185 = scalar_lea.vmem %s1, %s184
          // Predicated region
          $region25: #{gen_forward.5} parent=23 // pred_check
            _
          $region26: #{gen_forward.5} parent=23 // pred_check_branch
            %187 = sbr.rel (0) target = $region28
          $region27: #{gen_forward.5} parent=23 // pred_region
            // Predicated region
            $region29: #{gen_forward.5} parent=27 // pred_check
              _
            $region30: #{gen_forward.5} parent=27 // pred_check_branch
              %189 = sbr.rel (0) target = $region32
            $region31: #{gen_forward.5} parent=27 // pred_region
              loop: start=0, step=1, limit=1
              $region33: #{gen_forward.5} parent=31 // loop_pre_header
                _
              $region34: #{gen_forward.5} parent=31 // loop_header
                %s191 = sphi 0, %s195
                %p192 = scmp.ge.s32.totalorder %s191, 1
                %s196 = sphi %s185, %s185
                %s197 = sphi %s180, %s180
              $region35: #{gen_forward.5} parent=31 // loop_header_branch
                %194 = sbr.rel (%p192) target = $region39
              $region36: #{gen_forward.5} parent=31 // loop_body
                %v198 = vld [vmem:[%s196] sm:$0xff]
                %199 = vst [vmem:[%s197] sm:$0xff] %v198
                %v200 = vld [vmem:[%s196 + $0x8] sm:$0xff]
                %201 = vst [vmem:[%s197 + $0x8] sm:$0xff] %v200
                %v202 = vld [vmem:[%s196 + $0x10] sm:$0xff]
                %203 = vst [vmem:[%s197 + $0x10] sm:$0xff] %v202
                %v204 = vld [vmem:[%s196 + $0x18] sm:$0xff]
                %205 = vst [vmem:[%s197 + $0x18] sm:$0xff] %v204
                %v206 = vld [vmem:[%s196 + $0x20] sm:$0xff]
                %207 = vst [vmem:[%s197 + $0x20] sm:$0xff] %v206
                %v208 = vld [vmem:[%s196 + $0x28] sm:$0xff]
                %209 = vst [vmem:[%s197 + $0x28] sm:$0xff] %v208
                %v210 = vld [vmem:[%s196 + $0x30] sm:$0xff]
                %211 = vst [vmem:[%s197 + $0x30] sm:$0xff] %v210
                %v212 = vld [vmem:[%s196 + $0x38] sm:$0xff]
                %213 = vst [vmem:[%s197 + $0x38] sm:$0xff] %v212
                %v214 = vld [vmem:[%s196 + $0x40] sm:$0xff]
                %215 = vst [vmem:[%s197 + $0x40] sm:$0xff] %v214
                %v216 = vld [vmem:[%s196 + $0x48] sm:$0xff]
                %217 = vst [vmem:[%s197 + $0x48] sm:$0xff] %v216
                %v218 = vld [vmem:[%s196 + $0x50] sm:$0xff]
                %219 = vst [vmem:[%s197 + $0x50] sm:$0xff] %v218
                %v220 = vld [vmem:[%s196 + $0x58] sm:$0xff]
                %221 = vst [vmem:[%s197 + $0x58] sm:$0xff] %v220
                %v222 = vld [vmem:[%s196 + $0x60] sm:$0xff]
                %223 = vst [vmem:[%s197 + $0x60] sm:$0xff] %v222
                %v224 = vld [vmem:[%s196 + $0x68] sm:$0xff]
                %225 = vst [vmem:[%s197 + $0x68] sm:$0xff] %v224
                %v226 = vld [vmem:[%s196 + $0x70] sm:$0xff]
                %227 = vst [vmem:[%s197 + $0x70] sm:$0xff] %v226
                %v228 = vld [vmem:[%s196 + $0x78] sm:$0xff]
                %229 = vst [vmem:[%s197 + $0x78] sm:$0xff] %v228
                %v230 = vld [vmem:[%s196 + $0x100] sm:$0xff]
                %231 = vst [vmem:[%s197 + $0x80] sm:$0xff] %v230
                %v232 = vld [vmem:[%s196 + $0x108] sm:$0xff]
                %233 = vst [vmem:[%s197 + $0x88] sm:$0xff] %v232
                %v234 = vld [vmem:[%s196 + $0x110] sm:$0xff]
                %235 = vst [vmem:[%s197 + $0x90] sm:$0xff] %v234
                %v236 = vld [vmem:[%s196 + $0x118] sm:$0xff]
                %237 = vst [vmem:[%s197 + $0x98] sm:$0xff] %v236
                %v238 = vld [vmem:[%s196 + $0x120] sm:$0xff]
                %239 = vst [vmem:[%s197 + $0xa0] sm:$0xff] %v238
                %v240 = vld [vmem:[%s196 + $0x128] sm:$0xff]
                %241 = vst [vmem:[%s197 + $0xa8] sm:$0xff] %v240
                %v242 = vld [vmem:[%s196 + $0x130] sm:$0xff]
                %243 = vst [vmem:[%s197 + $0xb0] sm:$0xff] %v242
                %v244 = vld [vmem:[%s196 + $0x138] sm:$0xff]
                %245 = vst [vmem:[%s197 + $0xb8] sm:$0xff] %v244
                %v246 = vld [vmem:[%s196 + $0x140] sm:$0xff]
                %247 = vst [vmem:[%s197 + $0xc0] sm:$0xff] %v246
                %v248 = vld [vmem:[%s196 + $0x148] sm:$0xff]
                %249 = vst [vmem:[%s197 + $0xc8] sm:$0xff] %v248
                %v250 = vld [vmem:[%s196 + $0x150] sm:$0xff]
                %251 = vst [vmem:[%s197 + $0xd0] sm:$0xff] %v250
                %v252 = vld [vmem:[%s196 + $0x158] sm:$0xff]
                %253 = vst [vmem:[%s197 + $0xd8] sm:$0xff] %v252
                %v254 = vld [vmem:[%s196 + $0x160] sm:$0xff]
                %255 = vst [vmem:[%s197 + $0xe0] sm:$0xff] %v254
                %v256 = vld [vmem:[%s196 + $0x168] sm:$0xff]
                %257 = vst [vmem:[%s197 + $0xe8] sm:$0xff] %v256
                %v258 = vld [vmem:[%s196 + $0x170] sm:$0xff]
                %259 = vst [vmem:[%s197 + $0xf0] sm:$0xff] %v258
                %v260 = vld [vmem:[%s196 + $0x178] sm:$0xff]
                %261 = vst [vmem:[%s197 + $0xf8] sm:$0xff] %v260
                %v262 = vld [vmem:[%s196 + $0x200] sm:$0xff]
                %263 = vst [vmem:[%s197 + $0x100] sm:$0xff] %v262
                %v264 = vld [vmem:[%s196 + $0x208] sm:$0xff]
                %265 = vst [vmem:[%s197 + $0x108] sm:$0xff] %v264
                %v266 = vld [vmem:[%s196 + $0x210] sm:$0xff]
                %267 = vst [vmem:[%s197 + $0x110] sm:$0xff] %v266
                %v268 = vld [vmem:[%s196 + $0x218] sm:$0xff]
                %269 = vst [vmem:[%s197 + $0x118] sm:$0xff] %v268
                %v270 = vld [vmem:[%s196 + $0x220] sm:$0xff]
                %271 = vst [vmem:[%s197 + $0x120] sm:$0xff] %v270
                %v272 = vld [vmem:[%s196 + $0x228] sm:$0xff]
                %273 = vst [vmem:[%s197 + $0x128] sm:$0xff] %v272
                %v274 = vld [vmem:[%s196 + $0x230] sm:$0xff]
                %275 = vst [vmem:[%s197 + $0x130] sm:$0xff] %v274
                %v276 = vld [vmem:[%s196 + $0x238] sm:$0xff]
                %277 = vst [vmem:[%s197 + $0x138] sm:$0xff] %v276
                %v278 = vld [vmem:[%s196 + $0x240] sm:$0xff]
                %279 = vst [vmem:[%s197 + $0x140] sm:$0xff] %v278
                %v280 = vld [vmem:[%s196 + $0x248] sm:$0xff]
                %281 = vst [vmem:[%s197 + $0x148] sm:$0xff] %v280
                %v282 = vld [vmem:[%s196 + $0x250] sm:$0xff]
                %283 = vst [vmem:[%s197 + $0x150] sm:$0xff] %v282
                %v284 = vld [vmem:[%s196 + $0x258] sm:$0xff]
                %285 = vst [vmem:[%s197 + $0x158] sm:$0xff] %v284
                %v286 = vld [vmem:[%s196 + $0x260] sm:$0xff]
                %287 = vst [vmem:[%s197 + $0x160] sm:$0xff] %v286
                %v288 = vld [vmem:[%s196 + $0x268] sm:$0xff]
                %289 = vst [vmem:[%s197 + $0x168] sm:$0xff] %v288
                %v290 = vld [vmem:[%s196 + $0x270] sm:$0xff]
                %291 = vst [vmem:[%s197 + $0x170] sm:$0xff] %v290
                %v292 = vld [vmem:[%s196 + $0x278] sm:$0xff]
                %293 = vst [vmem:[%s197 + $0x178] sm:$0xff] %v292
                %v294 = vld [vmem:[%s196 + $0x300] sm:$0xff]
                %295 = vst [vmem:[%s197 + $0x180] sm:$0xff] %v294
                %v296 = vld [vmem:[%s196 + $0x308] sm:$0xff]
                %297 = vst [vmem:[%s197 + $0x188] sm:$0xff] %v296
                %v298 = vld [vmem:[%s196 + $0x310] sm:$0xff]
                %299 = vst [vmem:[%s197 + $0x190] sm:$0xff] %v298
                %v300 = vld [vmem:[%s196 + $0x318] sm:$0xff]
                %301 = vst [vmem:[%s197 + $0x198] sm:$0xff] %v300
                %v302 = vld [vmem:[%s196 + $0x320] sm:$0xff]
                %303 = vst [vmem:[%s197 + $0x1a0] sm:$0xff] %v302
                %v304 = vld [vmem:[%s196 + $0x328] sm:$0xff]
                %305 = vst [vmem:[%s197 + $0x1a8] sm:$0xff] %v304
                %v306 = vld [vmem:[%s196 + $0x330] sm:$0xff]
                %307 = vst [vmem:[%s197 + $0x1b0] sm:$0xff] %v306
                %v308 = vld [vmem:[%s196 + $0x338] sm:$0xff]
                %309 = vst [vmem:[%s197 + $0x1b8] sm:$0xff] %v308
                %v310 = vld [vmem:[%s196 + $0x340] sm:$0xff]
                %311 = vst [vmem:[%s197 + $0x1c0] sm:$0xff] %v310
                %v312 = vld [vmem:[%s196 + $0x348] sm:$0xff]
                %313 = vst [vmem:[%s197 + $0x1c8] sm:$0xff] %v312
                %v314 = vld [vmem:[%s196 + $0x350] sm:$0xff]
                %315 = vst [vmem:[%s197 + $0x1d0] sm:$0xff] %v314
                %v316 = vld [vmem:[%s196 + $0x358] sm:$0xff]
                %317 = vst [vmem:[%s197 + $0x1d8] sm:$0xff] %v316
                %v318 = vld [vmem:[%s196 + $0x360] sm:$0xff]
                %319 = vst [vmem:[%s197 + $0x1e0] sm:$0xff] %v318
                %v320 = vld [vmem:[%s196 + $0x368] sm:$0xff]
                %321 = vst [vmem:[%s197 + $0x1e8] sm:$0xff] %v320
                %v322 = vld [vmem:[%s196 + $0x370] sm:$0xff]
                %323 = vst [vmem:[%s197 + $0x1f0] sm:$0xff] %v322
                %v324 = vld [vmem:[%s196 + $0x378] sm:$0xff]
                %325 = vst [vmem:[%s197 + $0x1f8] sm:$0xff] %v324
                %v326 = vld [vmem:[%s196 + $0x400] sm:$0xff]
                %327 = vst [vmem:[%s197 + $0x200] sm:$0xff] %v326
                %v328 = vld [vmem:[%s196 + $0x408] sm:$0xff]
                %329 = vst [vmem:[%s197 + $0x208] sm:$0xff] %v328
                %v330 = vld [vmem:[%s196 + $0x410] sm:$0xff]
                %331 = vst [vmem:[%s197 + $0x210] sm:$0xff] %v330
                %v332 = vld [vmem:[%s196 + $0x418] sm:$0xff]
                %333 = vst [vmem:[%s197 + $0x218] sm:$0xff] %v332
                %v334 = vld [vmem:[%s196 + $0x420] sm:$0xff]
                %335 = vst [vmem:[%s197 + $0x220] sm:$0xff] %v334
                %v336 = vld [vmem:[%s196 + $0x428] sm:$0xff]
                %337 = vst [vmem:[%s197 + $0x228] sm:$0xff] %v336
                %v338 = vld [vmem:[%s196 + $0x430] sm:$0xff]
                %339 = vst [vmem:[%s197 + $0x230] sm:$0xff] %v338
                %v340 = vld [vmem:[%s196 + $0x438] sm:$0xff]
                %341 = vst [vmem:[%s197 + $0x238] sm:$0xff] %v340
                %v342 = vld [vmem:[%s196 + $0x440] sm:$0xff]
                %343 = vst [vmem:[%s197 + $0x240] sm:$0xff] %v342
                %v344 = vld [vmem:[%s196 + $0x448] sm:$0xff]
                %345 = vst [vmem:[%s197 + $0x248] sm:$0xff] %v344
                %v346 = vld [vmem:[%s196 + $0x450] sm:$0xff]
                %347 = vst [vmem:[%s197 + $0x250] sm:$0xff] %v346
                %v348 = vld [vmem:[%s196 + $0x458] sm:$0xff]
                %349 = vst [vmem:[%s197 + $0x258] sm:$0xff] %v348
                %v350 = vld [vmem:[%s196 + $0x460] sm:$0xff]
                %351 = vst [vmem:[%s197 + $0x260] sm:$0xff] %v350
                %v352 = vld [vmem:[%s196 + $0x468] sm:$0xff]
                %353 = vst [vmem:[%s197 + $0x268] sm:$0xff] %v352
                %v354 = vld [vmem:[%s196 + $0x470] sm:$0xff]
                %355 = vst [vmem:[%s197 + $0x270] sm:$0xff] %v354
                %v356 = vld [vmem:[%s196 + $0x478] sm:$0xff]
                %357 = vst [vmem:[%s197 + $0x278] sm:$0xff] %v356
                %v358 = vld [vmem:[%s196 + $0x500] sm:$0xff]
                %359 = vst [vmem:[%s197 + $0x280] sm:$0xff] %v358
                %v360 = vld [vmem:[%s196 + $0x508] sm:$0xff]
                %361 = vst [vmem:[%s197 + $0x288] sm:$0xff] %v360
                %v362 = vld [vmem:[%s196 + $0x510] sm:$0xff]
                %363 = vst [vmem:[%s197 + $0x290] sm:$0xff] %v362
                %v364 = vld [vmem:[%s196 + $0x518] sm:$0xff]
                %365 = vst [vmem:[%s197 + $0x298] sm:$0xff] %v364
                %v366 = vld [vmem:[%s196 + $0x520] sm:$0xff]
                %367 = vst [vmem:[%s197 + $0x2a0] sm:$0xff] %v366
                %v368 = vld [vmem:[%s196 + $0x528] sm:$0xff]
                %369 = vst [vmem:[%s197 + $0x2a8] sm:$0xff] %v368
                %v370 = vld [vmem:[%s196 + $0x530] sm:$0xff]
                %371 = vst [vmem:[%s197 + $0x2b0] sm:$0xff] %v370
                %v372 = vld [vmem:[%s196 + $0x538] sm:$0xff]
                %373 = vst [vmem:[%s197 + $0x2b8] sm:$0xff] %v372
                %v374 = vld [vmem:[%s196 + $0x540] sm:$0xff]
                %375 = vst [vmem:[%s197 + $0x2c0] sm:$0xff] %v374
                %v376 = vld [vmem:[%s196 + $0x548] sm:$0xff]
                %377 = vst [vmem:[%s197 + $0x2c8] sm:$0xff] %v376
                %v378 = vld [vmem:[%s196 + $0x550] sm:$0xff]
                %379 = vst [vmem:[%s197 + $0x2d0] sm:$0xff] %v378
                %v380 = vld [vmem:[%s196 + $0x558] sm:$0xff]
                %381 = vst [vmem:[%s197 + $0x2d8] sm:$0xff] %v380
                %v382 = vld [vmem:[%s196 + $0x560] sm:$0xff]
                %383 = vst [vmem:[%s197 + $0x2e0] sm:$0xff] %v382
                %v384 = vld [vmem:[%s196 + $0x568] sm:$0xff]
                %385 = vst [vmem:[%s197 + $0x2e8] sm:$0xff] %v384
                %v386 = vld [vmem:[%s196 + $0x570] sm:$0xff]
                %387 = vst [vmem:[%s197 + $0x2f0] sm:$0xff] %v386
                %v388 = vld [vmem:[%s196 + $0x578] sm:$0xff]
                %389 = vst [vmem:[%s197 + $0x2f8] sm:$0xff] %v388
                %v390 = vld [vmem:[%s196 + $0x600] sm:$0xff]
                %391 = vst [vmem:[%s197 + $0x300] sm:$0xff] %v390
                %v392 = vld [vmem:[%s196 + $0x608] sm:$0xff]
                %393 = vst [vmem:[%s197 + $0x308] sm:$0xff] %v392
                %v394 = vld [vmem:[%s196 + $0x610] sm:$0xff]
                %395 = vst [vmem:[%s197 + $0x310] sm:$0xff] %v394
                %v396 = vld [vmem:[%s196 + $0x618] sm:$0xff]
                %397 = vst [vmem:[%s197 + $0x318] sm:$0xff] %v396
                %v398 = vld [vmem:[%s196 + $0x620] sm:$0xff]
                %399 = vst [vmem:[%s197 + $0x320] sm:$0xff] %v398
                %v400 = vld [vmem:[%s196 + $0x628] sm:$0xff]
                %401 = vst [vmem:[%s197 + $0x328] sm:$0xff] %v400
                %v402 = vld [vmem:[%s196 + $0x630] sm:$0xff]
                %403 = vst [vmem:[%s197 + $0x330] sm:$0xff] %v402
                %v404 = vld [vmem:[%s196 + $0x638] sm:$0xff]
                %405 = vst [vmem:[%s197 + $0x338] sm:$0xff] %v404
                %v406 = vld [vmem:[%s196 + $0x640] sm:$0xff]
                %407 = vst [vmem:[%s197 + $0x340] sm:$0xff] %v406
                %v408 = vld [vmem:[%s196 + $0x648] sm:$0xff]
                %409 = vst [vmem:[%s197 + $0x348] sm:$0xff] %v408
                %v410 = vld [vmem:[%s196 + $0x650] sm:$0xff]
                %411 = vst [vmem:[%s197 + $0x350] sm:$0xff] %v410
                %v412 = vld [vmem:[%s196 + $0x658] sm:$0xff]
                %413 = vst [vmem:[%s197 + $0x358] sm:$0xff] %v412
                %v414 = vld [vmem:[%s196 + $0x660] sm:$0xff]
                %415 = vst [vmem:[%s197 + $0x360] sm:$0xff] %v414
                %v416 = vld [vmem:[%s196 + $0x668] sm:$0xff]
                %417 = vst [vmem:[%s197 + $0x368] sm:$0xff] %v416
                %v418 = vld [vmem:[%s196 + $0x670] sm:$0xff]
                %419 = vst [vmem:[%s197 + $0x370] sm:$0xff] %v418
                %v420 = vld [vmem:[%s196 + $0x678] sm:$0xff]
                %421 = vst [vmem:[%s197 + $0x378] sm:$0xff] %v420
                %v422 = vld [vmem:[%s196 + $0x700] sm:$0xff]
                %423 = vst [vmem:[%s197 + $0x380] sm:$0xff] %v422
                %v424 = vld [vmem:[%s196 + $0x708] sm:$0xff]
                %425 = vst [vmem:[%s197 + $0x388] sm:$0xff] %v424
                %v426 = vld [vmem:[%s196 + $0x710] sm:$0xff]
                %427 = vst [vmem:[%s197 + $0x390] sm:$0xff] %v426
                %v428 = vld [vmem:[%s196 + $0x718] sm:$0xff]
                %429 = vst [vmem:[%s197 + $0x398] sm:$0xff] %v428
                %v430 = vld [vmem:[%s196 + $0x720] sm:$0xff]
                %431 = vst [vmem:[%s197 + $0x3a0] sm:$0xff] %v430
                %v432 = vld [vmem:[%s196 + $0x728] sm:$0xff]
                %433 = vst [vmem:[%s197 + $0x3a8] sm:$0xff] %v432
                %v434 = vld [vmem:[%s196 + $0x730] sm:$0xff]
                %435 = vst [vmem:[%s197 + $0x3b0] sm:$0xff] %v434
                %v436 = vld [vmem:[%s196 + $0x738] sm:$0xff]
                %437 = vst [vmem:[%s197 + $0x3b8] sm:$0xff] %v436
                %v438 = vld [vmem:[%s196 + $0x740] sm:$0xff]
                %439 = vst [vmem:[%s197 + $0x3c0] sm:$0xff] %v438
                %v440 = vld [vmem:[%s196 + $0x748] sm:$0xff]
                %441 = vst [vmem:[%s197 + $0x3c8] sm:$0xff] %v440
                %v442 = vld [vmem:[%s196 + $0x750] sm:$0xff]
                %443 = vst [vmem:[%s197 + $0x3d0] sm:$0xff] %v442
                %v444 = vld [vmem:[%s196 + $0x758] sm:$0xff]
                %445 = vst [vmem:[%s197 + $0x3d8] sm:$0xff] %v444
                %v446 = vld [vmem:[%s196 + $0x760] sm:$0xff]
                %447 = vst [vmem:[%s197 + $0x3e0] sm:$0xff] %v446
                %v448 = vld [vmem:[%s196 + $0x768] sm:$0xff]
                %449 = vst [vmem:[%s197 + $0x3e8] sm:$0xff] %v448
                %v450 = vld [vmem:[%s196 + $0x770] sm:$0xff]
                %451 = vst [vmem:[%s197 + $0x3f0] sm:$0xff] %v450
                %v452 = vld [vmem:[%s196 + $0x778] sm:$0xff]
                %453 = vst [vmem:[%s197 + $0x3f8] sm:$0xff] %v452
                %v454 = vld [vmem:[%s196 + $0x800] sm:$0xff]
                %455 = vst [vmem:[%s197 + $0x400] sm:$0xff] %v454
                %v456 = vld [vmem:[%s196 + $0x808] sm:$0xff]
                %457 = vst [vmem:[%s197 + $0x408] sm:$0xff] %v456
                %v458 = vld [vmem:[%s196 + $0x810] sm:$0xff]
                %459 = vst [vmem:[%s197 + $0x410] sm:$0xff] %v458
                %v460 = vld [vmem:[%s196 + $0x818] sm:$0xff]
                %461 = vst [vmem:[%s197 + $0x418] sm:$0xff] %v460
                %v462 = vld [vmem:[%s196 + $0x820] sm:$0xff]
                %463 = vst [vmem:[%s197 + $0x420] sm:$0xff] %v462
                %v464 = vld [vmem:[%s196 + $0x828] sm:$0xff]
                %465 = vst [vmem:[%s197 + $0x428] sm:$0xff] %v464
                %v466 = vld [vmem:[%s196 + $0x830] sm:$0xff]
                %467 = vst [vmem:[%s197 + $0x430] sm:$0xff] %v466
                %v468 = vld [vmem:[%s196 + $0x838] sm:$0xff]
                %469 = vst [vmem:[%s197 + $0x438] sm:$0xff] %v468
                %v470 = vld [vmem:[%s196 + $0x840] sm:$0xff]
                %471 = vst [vmem:[%s197 + $0x440] sm:$0xff] %v470
                %v472 = vld [vmem:[%s196 + $0x848] sm:$0xff]
                %473 = vst [vmem:[%s197 + $0x448] sm:$0xff] %v472
                %v474 = vld [vmem:[%s196 + $0x850] sm:$0xff]
                %475 = vst [vmem:[%s197 + $0x450] sm:$0xff] %v474
                %v476 = vld [vmem:[%s196 + $0x858] sm:$0xff]
                %477 = vst [vmem:[%s197 + $0x458] sm:$0xff] %v476
                %v478 = vld [vmem:[%s196 + $0x860] sm:$0xff]
                %479 = vst [vmem:[%s197 + $0x460] sm:$0xff] %v478
                %v480 = vld [vmem:[%s196 + $0x868] sm:$0xff]
                %481 = vst [vmem:[%s197 + $0x468] sm:$0xff] %v480
                %v482 = vld [vmem:[%s196 + $0x870] sm:$0xff]
                %483 = vst [vmem:[%s197 + $0x470] sm:$0xff] %v482
                %v484 = vld [vmem:[%s196 + $0x878] sm:$0xff]
                %485 = vst [vmem:[%s197 + $0x478] sm:$0xff] %v484
                %v486 = vld [vmem:[%s196 + $0x900] sm:$0xff]
                %487 = vst [vmem:[%s197 + $0x480] sm:$0xff] %v486
                %v488 = vld [vmem:[%s196 + $0x908] sm:$0xff]
                %489 = vst [vmem:[%s197 + $0x488] sm:$0xff] %v488
                %v490 = vld [vmem:[%s196 + $0x910] sm:$0xff]
                %491 = vst [vmem:[%s197 + $0x490] sm:$0xff] %v490
                %v492 = vld [vmem:[%s196 + $0x918] sm:$0xff]
                %493 = vst [vmem:[%s197 + $0x498] sm:$0xff] %v492
                %v494 = vld [vmem:[%s196 + $0x920] sm:$0xff]
                %495 = vst [vmem:[%s197 + $0x4a0] sm:$0xff] %v494
                %v496 = vld [vmem:[%s196 + $0x928] sm:$0xff]
                %497 = vst [vmem:[%s197 + $0x4a8] sm:$0xff] %v496
                %v498 = vld [vmem:[%s196 + $0x930] sm:$0xff]
                %499 = vst [vmem:[%s197 + $0x4b0] sm:$0xff] %v498
                %v500 = vld [vmem:[%s196 + $0x938] sm:$0xff]
                %501 = vst [vmem:[%s197 + $0x4b8] sm:$0xff] %v500
                %v502 = vld [vmem:[%s196 + $0x940] sm:$0xff]
                %503 = vst [vmem:[%s197 + $0x4c0] sm:$0xff] %v502
                %v504 = vld [vmem:[%s196 + $0x948] sm:$0xff]
                %505 = vst [vmem:[%s197 + $0x4c8] sm:$0xff] %v504
                %v506 = vld [vmem:[%s196 + $0x950] sm:$0xff]
                %507 = vst [vmem:[%s197 + $0x4d0] sm:$0xff] %v506
                %v508 = vld [vmem:[%s196 + $0x958] sm:$0xff]
                %509 = vst [vmem:[%s197 + $0x4d8] sm:$0xff] %v508
                %v510 = vld [vmem:[%s196 + $0x960] sm:$0xff]
                %511 = vst [vmem:[%s197 + $0x4e0] sm:$0xff] %v510
                %v512 = vld [vmem:[%s196 + $0x968] sm:$0xff]
                %513 = vst [vmem:[%s197 + $0x4e8] sm:$0xff] %v512
                %v514 = vld [vmem:[%s196 + $0x970] sm:$0xff]
                %515 = vst [vmem:[%s197 + $0x4f0] sm:$0xff] %v514
                %v516 = vld [vmem:[%s196 + $0x978] sm:$0xff]
                %517 = vst [vmem:[%s197 + $0x4f8] sm:$0xff] %v516
                %v518 = vld [vmem:[%s196 + $0xa00] sm:$0xff]
                %519 = vst [vmem:[%s197 + $0x500] sm:$0xff] %v518
                %v520 = vld [vmem:[%s196 + $0xa08] sm:$0xff]
                %521 = vst [vmem:[%s197 + $0x508] sm:$0xff] %v520
                %v522 = vld [vmem:[%s196 + $0xa10] sm:$0xff]
                %523 = vst [vmem:[%s197 + $0x510] sm:$0xff] %v522
                %v524 = vld [vmem:[%s196 + $0xa18] sm:$0xff]
                %525 = vst [vmem:[%s197 + $0x518] sm:$0xff] %v524
                %v526 = vld [vmem:[%s196 + $0xa20] sm:$0xff]
                %527 = vst [vmem:[%s197 + $0x520] sm:$0xff] %v526
                %v528 = vld [vmem:[%s196 + $0xa28] sm:$0xff]
                %529 = vst [vmem:[%s197 + $0x528] sm:$0xff] %v528
                %v530 = vld [vmem:[%s196 + $0xa30] sm:$0xff]
                %531 = vst [vmem:[%s197 + $0x530] sm:$0xff] %v530
                %v532 = vld [vmem:[%s196 + $0xa38] sm:$0xff]
                %533 = vst [vmem:[%s197 + $0x538] sm:$0xff] %v532
                %v534 = vld [vmem:[%s196 + $0xa40] sm:$0xff]
                %535 = vst [vmem:[%s197 + $0x540] sm:$0xff] %v534
                %v536 = vld [vmem:[%s196 + $0xa48] sm:$0xff]
                %537 = vst [vmem:[%s197 + $0x548] sm:$0xff] %v536
                %v538 = vld [vmem:[%s196 + $0xa50] sm:$0xff]
                %539 = vst [vmem:[%s197 + $0x550] sm:$0xff] %v538
                %v540 = vld [vmem:[%s196 + $0xa58] sm:$0xff]
                %541 = vst [vmem:[%s197 + $0x558] sm:$0xff] %v540
                %v542 = vld [vmem:[%s196 + $0xa60] sm:$0xff]
                %543 = vst [vmem:[%s197 + $0x560] sm:$0xff] %v542
                %v544 = vld [vmem:[%s196 + $0xa68] sm:$0xff]
                %545 = vst [vmem:[%s197 + $0x568] sm:$0xff] %v544
                %v546 = vld [vmem:[%s196 + $0xa70] sm:$0xff]
                %547 = vst [vmem:[%s197 + $0x570] sm:$0xff] %v546
                %v548 = vld [vmem:[%s196 + $0xa78] sm:$0xff]
                %549 = vst [vmem:[%s197 + $0x578] sm:$0xff] %v548
                %v550 = vld [vmem:[%s196 + $0xb00] sm:$0xff]
                %551 = vst [vmem:[%s197 + $0x580] sm:$0xff] %v550
                %v552 = vld [vmem:[%s196 + $0xb08] sm:$0xff]
                %553 = vst [vmem:[%s197 + $0x588] sm:$0xff] %v552
                %v554 = vld [vmem:[%s196 + $0xb10] sm:$0xff]
                %555 = vst [vmem:[%s197 + $0x590] sm:$0xff] %v554
                %v556 = vld [vmem:[%s196 + $0xb18] sm:$0xff]
                %557 = vst [vmem:[%s197 + $0x598] sm:$0xff] %v556
                %v558 = vld [vmem:[%s196 + $0xb20] sm:$0xff]
                %559 = vst [vmem:[%s197 + $0x5a0] sm:$0xff] %v558
                %v560 = vld [vmem:[%s196 + $0xb28] sm:$0xff]
                %561 = vst [vmem:[%s197 + $0x5a8] sm:$0xff] %v560
                %v562 = vld [vmem:[%s196 + $0xb30] sm:$0xff]
                %563 = vst [vmem:[%s197 + $0x5b0] sm:$0xff] %v562
                %v564 = vld [vmem:[%s196 + $0xb38] sm:$0xff]
                %565 = vst [vmem:[%s197 + $0x5b8] sm:$0xff] %v564
                %v566 = vld [vmem:[%s196 + $0xb40] sm:$0xff]
                %567 = vst [vmem:[%s197 + $0x5c0] sm:$0xff] %v566
                %v568 = vld [vmem:[%s196 + $0xb48] sm:$0xff]
                %569 = vst [vmem:[%s197 + $0x5c8] sm:$0xff] %v568
                %v570 = vld [vmem:[%s196 + $0xb50] sm:$0xff]
                %571 = vst [vmem:[%s197 + $0x5d0] sm:$0xff] %v570
                %v572 = vld [vmem:[%s196 + $0xb58] sm:$0xff]
                %573 = vst [vmem:[%s197 + $0x5d8] sm:$0xff] %v572
                %v574 = vld [vmem:[%s196 + $0xb60] sm:$0xff]
                %575 = vst [vmem:[%s197 + $0x5e0] sm:$0xff] %v574
                %v576 = vld [vmem:[%s196 + $0xb68] sm:$0xff]
                %577 = vst [vmem:[%s197 + $0x5e8] sm:$0xff] %v576
                %v578 = vld [vmem:[%s196 + $0xb70] sm:$0xff]
                %579 = vst [vmem:[%s197 + $0x5f0] sm:$0xff] %v578
                %v580 = vld [vmem:[%s196 + $0xb78] sm:$0xff]
                %581 = vst [vmem:[%s197 + $0x5f8] sm:$0xff] %v580
                %v582 = vld [vmem:[%s196 + $0xc00] sm:$0xff]
                %583 = vst [vmem:[%s197 + $0x600] sm:$0xff] %v582
                %v584 = vld [vmem:[%s196 + $0xc08] sm:$0xff]
                %585 = vst [vmem:[%s197 + $0x608] sm:$0xff] %v584
                %v586 = vld [vmem:[%s196 + $0xc10] sm:$0xff]
                %587 = vst [vmem:[%s197 + $0x610] sm:$0xff] %v586
                %v588 = vld [vmem:[%s196 + $0xc18] sm:$0xff]
                %589 = vst [vmem:[%s197 + $0x618] sm:$0xff] %v588
                %v590 = vld [vmem:[%s196 + $0xc20] sm:$0xff]
                %591 = vst [vmem:[%s197 + $0x620] sm:$0xff] %v590
                %v592 = vld [vmem:[%s196 + $0xc28] sm:$0xff]
                %593 = vst [vmem:[%s197 + $0x628] sm:$0xff] %v592
                %v594 = vld [vmem:[%s196 + $0xc30] sm:$0xff]
                %595 = vst [vmem:[%s197 + $0x630] sm:$0xff] %v594
                %v596 = vld [vmem:[%s196 + $0xc38] sm:$0xff]
                %597 = vst [vmem:[%s197 + $0x638] sm:$0xff] %v596
                %v598 = vld [vmem:[%s196 + $0xc40] sm:$0xff]
                %599 = vst [vmem:[%s197 + $0x640] sm:$0xff] %v598
                %v600 = vld [vmem:[%s196 + $0xc48] sm:$0xff]
                %601 = vst [vmem:[%s197 + $0x648] sm:$0xff] %v600
                %v602 = vld [vmem:[%s196 + $0xc50] sm:$0xff]
                %603 = vst [vmem:[%s197 + $0x650] sm:$0xff] %v602
                %v604 = vld [vmem:[%s196 + $0xc58] sm:$0xff]
                %605 = vst [vmem:[%s197 + $0x658] sm:$0xff] %v604
                %v606 = vld [vmem:[%s196 + $0xc60] sm:$0xff]
                %607 = vst [vmem:[%s197 + $0x660] sm:$0xff] %v606
                %v608 = vld [vmem:[%s196 + $0xc68] sm:$0xff]
                %609 = vst [vmem:[%s197 + $0x668] sm:$0xff] %v608
                %v610 = vld [vmem:[%s196 + $0xc70] sm:$0xff]
                %611 = vst [vmem:[%s197 + $0x670] sm:$0xff] %v610
                %v612 = vld [vmem:[%s196 + $0xc78] sm:$0xff]
                %613 = vst [vmem:[%s197 + $0x678] sm:$0xff] %v612
                %v614 = vld [vmem:[%s196 + $0xd00] sm:$0xff]
                %615 = vst [vmem:[%s197 + $0x680] sm:$0xff] %v614
                %v616 = vld [vmem:[%s196 + $0xd08] sm:$0xff]
                %617 = vst [vmem:[%s197 + $0x688] sm:$0xff] %v616
                %v618 = vld [vmem:[%s196 + $0xd10] sm:$0xff]
                %619 = vst [vmem:[%s197 + $0x690] sm:$0xff] %v618
                %v620 = vld [vmem:[%s196 + $0xd18] sm:$0xff]
                %621 = vst [vmem:[%s197 + $0x698] sm:$0xff] %v620
                %v622 = vld [vmem:[%s196 + $0xd20] sm:$0xff]
                %623 = vst [vmem:[%s197 + $0x6a0] sm:$0xff] %v622
                %v624 = vld [vmem:[%s196 + $0xd28] sm:$0xff]
                %625 = vst [vmem:[%s197 + $0x6a8] sm:$0xff] %v624
                %v626 = vld [vmem:[%s196 + $0xd30] sm:$0xff]
                %627 = vst [vmem:[%s197 + $0x6b0] sm:$0xff] %v626
                %v628 = vld [vmem:[%s196 + $0xd38] sm:$0xff]
                %629 = vst [vmem:[%s197 + $0x6b8] sm:$0xff] %v628
                %v630 = vld [vmem:[%s196 + $0xd40] sm:$0xff]
                %631 = vst [vmem:[%s197 + $0x6c0] sm:$0xff] %v630
                %v632 = vld [vmem:[%s196 + $0xd48] sm:$0xff]
                %633 = vst [vmem:[%s197 + $0x6c8] sm:$0xff] %v632
                %v634 = vld [vmem:[%s196 + $0xd50] sm:$0xff]
                %635 = vst [vmem:[%s197 + $0x6d0] sm:$0xff] %v634
                %v636 = vld [vmem:[%s196 + $0xd58] sm:$0xff]
                %637 = vst [vmem:[%s197 + $0x6d8] sm:$0xff] %v636
                %v638 = vld [vmem:[%s196 + $0xd60] sm:$0xff]
                %639 = vst [vmem:[%s197 + $0x6e0] sm:$0xff] %v638
                %v640 = vld [vmem:[%s196 + $0xd68] sm:$0xff]
                %641 = vst [vmem:[%s197 + $0x6e8] sm:$0xff] %v640
                %v642 = vld [vmem:[%s196 + $0xd70] sm:$0xff]
                %643 = vst [vmem:[%s197 + $0x6f0] sm:$0xff] %v642
                %v644 = vld [vmem:[%s196 + $0xd78] sm:$0xff]
                %645 = vst [vmem:[%s197 + $0x6f8] sm:$0xff] %v644
                %v646 = vld [vmem:[%s196 + $0xe00] sm:$0xff]
                %647 = vst [vmem:[%s197 + $0x700] sm:$0xff] %v646
                %v648 = vld [vmem:[%s196 + $0xe08] sm:$0xff]
                %649 = vst [vmem:[%s197 + $0x708] sm:$0xff] %v648
                %v650 = vld [vmem:[%s196 + $0xe10] sm:$0xff]
                %651 = vst [vmem:[%s197 + $0x710] sm:$0xff] %v650
                %v652 = vld [vmem:[%s196 + $0xe18] sm:$0xff]
                %653 = vst [vmem:[%s197 + $0x718] sm:$0xff] %v652
                %v654 = vld [vmem:[%s196 + $0xe20] sm:$0xff]
                %655 = vst [vmem:[%s197 + $0x720] sm:$0xff] %v654
                %v656 = vld [vmem:[%s196 + $0xe28] sm:$0xff]
                %657 = vst [vmem:[%s197 + $0x728] sm:$0xff] %v656
                %v658 = vld [vmem:[%s196 + $0xe30] sm:$0xff]
                %659 = vst [vmem:[%s197 + $0x730] sm:$0xff] %v658
                %v660 = vld [vmem:[%s196 + $0xe38] sm:$0xff]
                %661 = vst [vmem:[%s197 + $0x738] sm:$0xff] %v660
                %v662 = vld [vmem:[%s196 + $0xe40] sm:$0xff]
                %663 = vst [vmem:[%s197 + $0x740] sm:$0xff] %v662
                %v664 = vld [vmem:[%s196 + $0xe48] sm:$0xff]
                %665 = vst [vmem:[%s197 + $0x748] sm:$0xff] %v664
                %v666 = vld [vmem:[%s196 + $0xe50] sm:$0xff]
                %667 = vst [vmem:[%s197 + $0x750] sm:$0xff] %v666
                %v668 = vld [vmem:[%s196 + $0xe58] sm:$0xff]
                %669 = vst [vmem:[%s197 + $0x758] sm:$0xff] %v668
                %v670 = vld [vmem:[%s196 + $0xe60] sm:$0xff]
                %671 = vst [vmem:[%s197 + $0x760] sm:$0xff] %v670
                %v672 = vld [vmem:[%s196 + $0xe68] sm:$0xff]
                %673 = vst [vmem:[%s197 + $0x768] sm:$0xff] %v672
                %v674 = vld [vmem:[%s196 + $0xe70] sm:$0xff]
                %675 = vst [vmem:[%s197 + $0x770] sm:$0xff] %v674
                %v676 = vld [vmem:[%s196 + $0xe78] sm:$0xff]
                %677 = vst [vmem:[%s197 + $0x778] sm:$0xff] %v676
                %v678 = vld [vmem:[%s196 + $0xf00] sm:$0xff]
                %679 = vst [vmem:[%s197 + $0x780] sm:$0xff] %v678
                %v680 = vld [vmem:[%s196 + $0xf08] sm:$0xff]
                %681 = vst [vmem:[%s197 + $0x788] sm:$0xff] %v680
                %v682 = vld [vmem:[%s196 + $0xf10] sm:$0xff]
                %683 = vst [vmem:[%s197 + $0x790] sm:$0xff] %v682
                %v684 = vld [vmem:[%s196 + $0xf18] sm:$0xff]
                %685 = vst [vmem:[%s197 + $0x798] sm:$0xff] %v684
                %v686 = vld [vmem:[%s196 + $0xf20] sm:$0xff]
                %687 = vst [vmem:[%s197 + $0x7a0] sm:$0xff] %v686
                %v688 = vld [vmem:[%s196 + $0xf28] sm:$0xff]
                %689 = vst [vmem:[%s197 + $0x7a8] sm:$0xff] %v688
                %v690 = vld [vmem:[%s196 + $0xf30] sm:$0xff]
                %691 = vst [vmem:[%s197 + $0x7b0] sm:$0xff] %v690
                %v692 = vld [vmem:[%s196 + $0xf38] sm:$0xff]
                %693 = vst [vmem:[%s197 + $0x7b8] sm:$0xff] %v692
                %v694 = vld [vmem:[%s196 + $0xf40] sm:$0xff]
                %695 = vst [vmem:[%s197 + $0x7c0] sm:$0xff] %v694
                %v696 = vld [vmem:[%s196 + $0xf48] sm:$0xff]
                %697 = vst [vmem:[%s197 + $0x7c8] sm:$0xff] %v696
                %v698 = vld [vmem:[%s196 + $0xf50] sm:$0xff]
                %699 = vst [vmem:[%s197 + $0x7d0] sm:$0xff] %v698
                %v700 = vld [vmem:[%s196 + $0xf58] sm:$0xff]
                %701 = vst [vmem:[%s197 + $0x7d8] sm:$0xff] %v700
                %v702 = vld [vmem:[%s196 + $0xf60] sm:$0xff]
                %703 = vst [vmem:[%s197 + $0x7e0] sm:$0xff] %v702
                %v704 = vld [vmem:[%s196 + $0xf68] sm:$0xff]
                %705 = vst [vmem:[%s197 + $0x7e8] sm:$0xff] %v704
                %v706 = vld [vmem:[%s196 + $0xf70] sm:$0xff]
                %707 = vst [vmem:[%s197 + $0x7f0] sm:$0xff] %v706
                %v708 = vld [vmem:[%s196 + $0xf78] sm:$0xff]
                %709 = vst [vmem:[%s197 + $0x7f8] sm:$0xff] %v708
              $region37: #{gen_forward.5} parent=31 // loop_footer
                %s195 = sadd.s32 1, %s191
              $region38: #{gen_forward.5} parent=31 // loop_footer_branch
                %190 = sbr.rel target = $region34
              $region39: #{gen_forward.5} parent=31 // loop_exit
                _
            $region32: #{gen_forward.5} parent=27 // pred_fallthru
              _
            // Predicated region
            $region40: #{gen_forward.5} parent=27 // pred_check
              _
            $region41: #{gen_forward.5} parent=27 // pred_check_branch
              %711 = sbr.rel target = $region43
            $region42: #{gen_forward.5} parent=27 // pred_region
              _
            $region43: #{gen_forward.5} parent=27 // pred_fallthru
              _
          $region28: #{gen_forward.5} parent=23 // pred_fallthru
            _
          %712 = vnop
        $region24: #{gen_forward.5} parent=19 // pred_fallthru
          _
      $region20: #{gen_forward.5} parent=5 // pred_fallthru
        _
      %p713 = scmp.le.s32.totalorder 1, %s10
      %p714 = scmp.lt.s32.totalorder %s10, 3
      %p715 = pnand %p713, %p714
      %p716 = pneg %p715
      // Predicated region
      $region44: #{gen_forward.5} parent=5 // pred_check
        _
      $region45: #{gen_forward.5} parent=5 // pred_check_branch
        %718 = sbr.rel (%p715) target = $region47
      $region46: #{gen_forward.5} parent=5 // pred_region
        %s719 = ssub.s32 %s10, 1
        %s720 = sand.u32 %s72, 1
        %s721 = sand.u32 %s72, 1
        %s722 = smul.addr %s721, 2048
        %s723 = scalar_lea.vmem [#allocation2], %s722
        // Predicated region
        $region48: #{gen_forward.5} parent=46 // pred_check
          %p724 = pneg %p85
        $region49: #{gen_forward.5} parent=46 // pred_check_branch
          %726 = sbr.rel (%p724) target = $region51
        $region50: #{gen_forward.5} parent=46 // pred_region
          _
        $region51: #{gen_forward.5} parent=46 // pred_fallthru
          _
        %p727 = scmp.lt.s32.totalorder %s20, 0
        %s728 = scalar_select %p727, %s20, 0
        %p729 = scmp.lt.s32.totalorder %s21, 0
        %s730 = scalar_select %p729, %s21, 0
        %s731 = sadd.s32 %s730, %s728
        %s732 = smul.addr %s731, 4
        %s733 = scalar_lea.vmem %s0, %s732
        %p734 = pneg %p57
        %p735 = pneg %p54
        %s736 = sand.u32 %s72, 1
        %s737 = sand.u32 %s72, 1
        %s738 = smul.addr %s737, 2048
        %s739 = scalar_lea.vmem [#allocation2], %s738
        %p740 = pneg %p85
        %p741 = pneg %p82
        %p742 = pneg %p115
        %p743 = pneg %p112
        %s744 = smul.u32 32, %s22
        %p745 = scmp.lt.s32.totalorder %s20, 0
        %s746 = scalar_select %p745, %s20, 0
        %p747 = scmp.lt.s32.totalorder %s21, 0
        %s748 = scalar_select %p747, %s21, 0
        %p749 = scmp.lt.s32.totalorder %s744, 63
        %s750 = scalar_select %p749, %s744, 63
        %s751 = smul.addr %s748, 64
        %s752 = sadd.s32 %s750, %s751
        %s753 = smul.addr %s746, 64
        %s754 = sadd.s32 %s752, %s753
        %s755 = smul.addr %s754, 8
        %s756 = scalar_lea.vmem %s2, %s755
        %p757 = pneg %p145
        %p758 = pneg %p142
        %s759 = sadd.s32 %s20, %s21
        %s760 = smul.u32 32, %s22
        %p761 = scmp.lt.s32.totalorder %s759, 0
        %s762 = scalar_select %p761, %s759, 0
        %p763 = scmp.lt.s32.totalorder %s760, 63
        %s764 = scalar_select %p763, %s760, 63
        %s765 = smul.addr %s762, 64
        %s766 = sadd.s32 %s764, %s765
        %s767 = smul.addr %s766, 2
        %s768 = scalar_lea.vmem %s3, %s767
        %p769 = scmp.lt.s32.totalorder %s20, 0
        %s770 = scalar_select %p769, %s20, 0
        %p771 = scmp.lt.s32.totalorder %s21, 0
        %s772 = scalar_select %p771, %s21, 0
        %s773 = sadd.s32 %s772, %s770
        %s774 = smul.addr %s773, 4
        %s775 = scalar_lea.vmem %s0, %s774
        %s776 = smul.u32 32, %s22
        %s777 = smul.u32 32, %s22
        %p778 = scmp.lt.s32.totalorder %s20, 0
        %s779 = scalar_select %p778, %s20, 0
        %p780 = scmp.lt.s32.totalorder %s21, 0
        %s781 = scalar_select %p780, %s21, 0
        %p782 = scmp.lt.s32.totalorder %s777, 63
        %s783 = scalar_select %p782, %s777, 63
        %s784 = smul.addr %s781, 64
        %s785 = sadd.s32 %s783, %s784
        %s786 = smul.addr %s779, 64
        %s787 = sadd.s32 %s785, %s786
        %s788 = smul.addr %s787, 8
        %s789 = scalar_lea.vmem %s2, %s788
        %s790 = smul.u32 32, %s22
        %s791 = sadd.s32 %s20, %s21
        %s792 = smul.u32 32, %s22
        %p793 = scmp.lt.s32.totalorder %s791, 0
        %s794 = scalar_select %p793, %s791, 0
        %p795 = scmp.lt.s32.totalorder %s792, 63
        %s796 = scalar_select %p795, %s792, 63
        %s797 = smul.addr %s794, 64
        %s798 = sadd.s32 %s796, %s797
        %s799 = smul.addr %s798, 2
        %s800 = scalar_lea.vmem %s3, %s799
        %s801 = sadd.s32 %s20, %s21
        %s802 = smul.u32 32, %s22
        %v804 = vld [vmem:[%s775] sm:$0xf]
        %v805 = vld [vmem:[%s723] sm:$0xff]
        %v806 = vld [vmem:[%s723 + $0x8] sm:$0xff]
        %v807 = vld [vmem:[%s723 + $0x10] sm:$0xff]
        %v808 = vld [vmem:[%s723 + $0x18] sm:$0xff]
        %v809 = vld [vmem:[%s723 + $0x20] sm:$0xff]
        %v810 = vld [vmem:[%s723 + $0x28] sm:$0xff]
        %v811 = vld [vmem:[%s723 + $0x30] sm:$0xff]
        %v812 = vld [vmem:[%s723 + $0x38] sm:$0xff]
        %v813 = vld [vmem:[%s723 + $0x40] sm:$0xff]
        %v814 = vld [vmem:[%s723 + $0x48] sm:$0xff]
        %v815 = vld [vmem:[%s723 + $0x50] sm:$0xff]
        %v816 = vld [vmem:[%s723 + $0x58] sm:$0xff]
        %v817 = vld [vmem:[%s723 + $0x60] sm:$0xff]
        %v818 = vld [vmem:[%s723 + $0x68] sm:$0xff]
        %v819 = vld [vmem:[%s723 + $0x70] sm:$0xff]
        %v820 = vld [vmem:[%s723 + $0x78] sm:$0xff]
        %v821 = vld [vmem:[%s723 + $0x80] sm:$0xff]
        %v822 = vld [vmem:[%s723 + $0x88] sm:$0xff]
        %v823 = vld [vmem:[%s723 + $0x90] sm:$0xff]
        %v824 = vld [vmem:[%s723 + $0x98] sm:$0xff]
        %v825 = vld [vmem:[%s723 + $0xa0] sm:$0xff]
        %v826 = vld [vmem:[%s723 + $0xa8] sm:$0xff]
        %v827 = vld [vmem:[%s723 + $0xb0] sm:$0xff]
        %v828 = vld [vmem:[%s723 + $0xb8] sm:$0xff]
        %v829 = vld [vmem:[%s723 + $0xc0] sm:$0xff]
        %v830 = vld [vmem:[%s723 + $0xc8] sm:$0xff]
        %v831 = vld [vmem:[%s723 + $0xd0] sm:$0xff]
        %v832 = vld [vmem:[%s723 + $0xd8] sm:$0xff]
        %v833 = vld [vmem:[%s723 + $0xe0] sm:$0xff]
        %v834 = vld [vmem:[%s723 + $0xe8] sm:$0xff]
        %v835 = vld [vmem:[%s723 + $0xf0] sm:$0xff]
        %v836 = vld [vmem:[%s723 + $0xf8] sm:$0xff]
        %v837 = vld [vmem:[%s723 + $0x100] sm:$0xff]
        %v838 = vld [vmem:[%s723 + $0x108] sm:$0xff]
        %v839 = vld [vmem:[%s723 + $0x110] sm:$0xff]
        %v840 = vld [vmem:[%s723 + $0x118] sm:$0xff]
        %v841 = vld [vmem:[%s723 + $0x120] sm:$0xff]
        %v842 = vld [vmem:[%s723 + $0x128] sm:$0xff]
        %v843 = vld [vmem:[%s723 + $0x130] sm:$0xff]
        %v844 = vld [vmem:[%s723 + $0x138] sm:$0xff]
        %v845 = vld [vmem:[%s723 + $0x140] sm:$0xff]
        %v846 = vld [vmem:[%s723 + $0x148] sm:$0xff]
        %v847 = vld [vmem:[%s723 + $0x150] sm:$0xff]
        %v848 = vld [vmem:[%s723 + $0x158] sm:$0xff]
        %v849 = vld [vmem:[%s723 + $0x160] sm:$0xff]
        %v850 = vld [vmem:[%s723 + $0x168] sm:$0xff]
        %v851 = vld [vmem:[%s723 + $0x170] sm:$0xff]
        %v852 = vld [vmem:[%s723 + $0x178] sm:$0xff]
        %v853 = vld [vmem:[%s723 + $0x180] sm:$0xff]
        %v854 = vld [vmem:[%s723 + $0x188] sm:$0xff]
        %v855 = vld [vmem:[%s723 + $0x190] sm:$0xff]
        %v856 = vld [vmem:[%s723 + $0x198] sm:$0xff]
        %v857 = vld [vmem:[%s723 + $0x1a0] sm:$0xff]
        %v858 = vld [vmem:[%s723 + $0x1a8] sm:$0xff]
        %v859 = vld [vmem:[%s723 + $0x1b0] sm:$0xff]
        %v860 = vld [vmem:[%s723 + $0x1b8] sm:$0xff]
        %v861 = vld [vmem:[%s723 + $0x1c0] sm:$0xff]
        %v862 = vld [vmem:[%s723 + $0x1c8] sm:$0xff]
        %v863 = vld [vmem:[%s723 + $0x1d0] sm:$0xff]
        %v864 = vld [vmem:[%s723 + $0x1d8] sm:$0xff]
        %v865 = vld [vmem:[%s723 + $0x1e0] sm:$0xff]
        %v866 = vld [vmem:[%s723 + $0x1e8] sm:$0xff]
        %v867 = vld [vmem:[%s723 + $0x1f0] sm:$0xff]
        %v868 = vld [vmem:[%s723 + $0x1f8] sm:$0xff]
        %v869 = vld [vmem:[%s723 + $0x200] sm:$0xff]
        %v870 = vld [vmem:[%s723 + $0x208] sm:$0xff]
        %v871 = vld [vmem:[%s723 + $0x210] sm:$0xff]
        %v872 = vld [vmem:[%s723 + $0x218] sm:$0xff]
        %v873 = vld [vmem:[%s723 + $0x220] sm:$0xff]
        %v874 = vld [vmem:[%s723 + $0x228] sm:$0xff]
        %v875 = vld [vmem:[%s723 + $0x230] sm:$0xff]
        %v876 = vld [vmem:[%s723 + $0x238] sm:$0xff]
        %v877 = vld [vmem:[%s723 + $0x240] sm:$0xff]
        %v878 = vld [vmem:[%s723 + $0x248] sm:$0xff]
        %v879 = vld [vmem:[%s723 + $0x250] sm:$0xff]
        %v880 = vld [vmem:[%s723 + $0x258] sm:$0xff]
        %v881 = vld [vmem:[%s723 + $0x260] sm:$0xff]
        %v882 = vld [vmem:[%s723 + $0x268] sm:$0xff]
        %v883 = vld [vmem:[%s723 + $0x270] sm:$0xff]
        %v884 = vld [vmem:[%s723 + $0x278] sm:$0xff]
        %v885 = vld [vmem:[%s723 + $0x280] sm:$0xff]
        %v886 = vld [vmem:[%s723 + $0x288] sm:$0xff]
        %v887 = vld [vmem:[%s723 + $0x290] sm:$0xff]
        %v888 = vld [vmem:[%s723 + $0x298] sm:$0xff]
        %v889 = vld [vmem:[%s723 + $0x2a0] sm:$0xff]
        %v890 = vld [vmem:[%s723 + $0x2a8] sm:$0xff]
        %v891 = vld [vmem:[%s723 + $0x2b0] sm:$0xff]
        %v892 = vld [vmem:[%s723 + $0x2b8] sm:$0xff]
        %v893 = vld [vmem:[%s723 + $0x2c0] sm:$0xff]
        %v894 = vld [vmem:[%s723 + $0x2c8] sm:$0xff]
        %v895 = vld [vmem:[%s723 + $0x2d0] sm:$0xff]
        %v896 = vld [vmem:[%s723 + $0x2d8] sm:$0xff]
        %v897 = vld [vmem:[%s723 + $0x2e0] sm:$0xff]
        %v898 = vld [vmem:[%s723 + $0x2e8] sm:$0xff]
        %v899 = vld [vmem:[%s723 + $0x2f0] sm:$0xff]
        %v900 = vld [vmem:[%s723 + $0x2f8] sm:$0xff]
        %v901 = vld [vmem:[%s723 + $0x300] sm:$0xff]
        %v902 = vld [vmem:[%s723 + $0x308] sm:$0xff]
        %v903 = vld [vmem:[%s723 + $0x310] sm:$0xff]
        %v904 = vld [vmem:[%s723 + $0x318] sm:$0xff]
        %v905 = vld [vmem:[%s723 + $0x320] sm:$0xff]
        %v906 = vld [vmem:[%s723 + $0x328] sm:$0xff]
        %v907 = vld [vmem:[%s723 + $0x330] sm:$0xff]
        %v908 = vld [vmem:[%s723 + $0x338] sm:$0xff]
        %v909 = vld [vmem:[%s723 + $0x340] sm:$0xff]
        %v910 = vld [vmem:[%s723 + $0x348] sm:$0xff]
        %v911 = vld [vmem:[%s723 + $0x350] sm:$0xff]
        %v912 = vld [vmem:[%s723 + $0x358] sm:$0xff]
        %v913 = vld [vmem:[%s723 + $0x360] sm:$0xff]
        %v914 = vld [vmem:[%s723 + $0x368] sm:$0xff]
        %v915 = vld [vmem:[%s723 + $0x370] sm:$0xff]
        %v916 = vld [vmem:[%s723 + $0x378] sm:$0xff]
        %v917 = vld [vmem:[%s723 + $0x380] sm:$0xff]
        %v918 = vld [vmem:[%s723 + $0x388] sm:$0xff]
        %v919 = vld [vmem:[%s723 + $0x390] sm:$0xff]
        %v920 = vld [vmem:[%s723 + $0x398] sm:$0xff]
        %v921 = vld [vmem:[%s723 + $0x3a0] sm:$0xff]
        %v922 = vld [vmem:[%s723 + $0x3a8] sm:$0xff]
        %v923 = vld [vmem:[%s723 + $0x3b0] sm:$0xff]
        %v924 = vld [vmem:[%s723 + $0x3b8] sm:$0xff]
        %v925 = vld [vmem:[%s723 + $0x3c0] sm:$0xff]
        %v926 = vld [vmem:[%s723 + $0x3c8] sm:$0xff]
        %v927 = vld [vmem:[%s723 + $0x3d0] sm:$0xff]
        %v928 = vld [vmem:[%s723 + $0x3d8] sm:$0xff]
        %v929 = vld [vmem:[%s723 + $0x3e0] sm:$0xff]
        %v930 = vld [vmem:[%s723 + $0x3e8] sm:$0xff]
        %v931 = vld [vmem:[%s723 + $0x3f0] sm:$0xff]
        %v932 = vld [vmem:[%s723 + $0x3f8] sm:$0xff]
        %v933 = vld [vmem:[%s723 + $0x400] sm:$0xff]
        %v934 = vld [vmem:[%s723 + $0x408] sm:$0xff]
        %v935 = vld [vmem:[%s723 + $0x410] sm:$0xff]
        %v936 = vld [vmem:[%s723 + $0x418] sm:$0xff]
        %v937 = vld [vmem:[%s723 + $0x420] sm:$0xff]
        %v938 = vld [vmem:[%s723 + $0x428] sm:$0xff]
        %v939 = vld [vmem:[%s723 + $0x430] sm:$0xff]
        %v940 = vld [vmem:[%s723 + $0x438] sm:$0xff]
        %v941 = vld [vmem:[%s723 + $0x440] sm:$0xff]
        %v942 = vld [vmem:[%s723 + $0x448] sm:$0xff]
        %v943 = vld [vmem:[%s723 + $0x450] sm:$0xff]
        %v944 = vld [vmem:[%s723 + $0x458] sm:$0xff]
        %v945 = vld [vmem:[%s723 + $0x460] sm:$0xff]
        %v946 = vld [vmem:[%s723 + $0x468] sm:$0xff]
        %v947 = vld [vmem:[%s723 + $0x470] sm:$0xff]
        %v948 = vld [vmem:[%s723 + $0x478] sm:$0xff]
        %v949 = vld [vmem:[%s723 + $0x480] sm:$0xff]
        %v950 = vld [vmem:[%s723 + $0x488] sm:$0xff]
        %v951 = vld [vmem:[%s723 + $0x490] sm:$0xff]
        %v952 = vld [vmem:[%s723 + $0x498] sm:$0xff]
        %v953 = vld [vmem:[%s723 + $0x4a0] sm:$0xff]
        %v954 = vld [vmem:[%s723 + $0x4a8] sm:$0xff]
        %v955 = vld [vmem:[%s723 + $0x4b0] sm:$0xff]
        %v956 = vld [vmem:[%s723 + $0x4b8] sm:$0xff]
        %v957 = vld [vmem:[%s723 + $0x4c0] sm:$0xff]
        %v958 = vld [vmem:[%s723 + $0x4c8] sm:$0xff]
        %v959 = vld [vmem:[%s723 + $0x4d0] sm:$0xff]
        %v960 = vld [vmem:[%s723 + $0x4d8] sm:$0xff]
        %v961 = vld [vmem:[%s723 + $0x4e0] sm:$0xff]
        %v962 = vld [vmem:[%s723 + $0x4e8] sm:$0xff]
        %v963 = vld [vmem:[%s723 + $0x4f0] sm:$0xff]
        %v964 = vld [vmem:[%s723 + $0x4f8] sm:$0xff]
        %v965 = vld [vmem:[%s723 + $0x500] sm:$0xff]
        %v966 = vld [vmem:[%s723 + $0x508] sm:$0xff]
        %v967 = vld [vmem:[%s723 + $0x510] sm:$0xff]
        %v968 = vld [vmem:[%s723 + $0x518] sm:$0xff]
        %v969 = vld [vmem:[%s723 + $0x520] sm:$0xff]
        %v970 = vld [vmem:[%s723 + $0x528] sm:$0xff]
        %v971 = vld [vmem:[%s723 + $0x530] sm:$0xff]
        %v972 = vld [vmem:[%s723 + $0x538] sm:$0xff]
        %v973 = vld [vmem:[%s723 + $0x540] sm:$0xff]
        %v974 = vld [vmem:[%s723 + $0x548] sm:$0xff]
        %v975 = vld [vmem:[%s723 + $0x550] sm:$0xff]
        %v976 = vld [vmem:[%s723 + $0x558] sm:$0xff]
        %v977 = vld [vmem:[%s723 + $0x560] sm:$0xff]
        %v978 = vld [vmem:[%s723 + $0x568] sm:$0xff]
        %v979 = vld [vmem:[%s723 + $0x570] sm:$0xff]
        %v980 = vld [vmem:[%s723 + $0x578] sm:$0xff]
        %v981 = vld [vmem:[%s723 + $0x580] sm:$0xff]
        %v982 = vld [vmem:[%s723 + $0x588] sm:$0xff]
        %v983 = vld [vmem:[%s723 + $0x590] sm:$0xff]
        %v984 = vld [vmem:[%s723 + $0x598] sm:$0xff]
        %v985 = vld [vmem:[%s723 + $0x5a0] sm:$0xff]
        %v986 = vld [vmem:[%s723 + $0x5a8] sm:$0xff]
        %v987 = vld [vmem:[%s723 + $0x5b0] sm:$0xff]
        %v988 = vld [vmem:[%s723 + $0x5b8] sm:$0xff]
        %v989 = vld [vmem:[%s723 + $0x5c0] sm:$0xff]
        %v990 = vld [vmem:[%s723 + $0x5c8] sm:$0xff]
        %v991 = vld [vmem:[%s723 + $0x5d0] sm:$0xff]
        %v992 = vld [vmem:[%s723 + $0x5d8] sm:$0xff]
        %v993 = vld [vmem:[%s723 + $0x5e0] sm:$0xff]
        %v994 = vld [vmem:[%s723 + $0x5e8] sm:$0xff]
        %v995 = vld [vmem:[%s723 + $0x5f0] sm:$0xff]
        %v996 = vld [vmem:[%s723 + $0x5f8] sm:$0xff]
        %v997 = vld [vmem:[%s723 + $0x600] sm:$0xff]
        %v998 = vld [vmem:[%s723 + $0x608] sm:$0xff]
        %v999 = vld [vmem:[%s723 + $0x610] sm:$0xff]
        %v1000 = vld [vmem:[%s723 + $0x618] sm:$0xff]
        %v1001 = vld [vmem:[%s723 + $0x620] sm:$0xff]
        %v1002 = vld [vmem:[%s723 + $0x628] sm:$0xff]
        %v1003 = vld [vmem:[%s723 + $0x630] sm:$0xff]
        %v1004 = vld [vmem:[%s723 + $0x638] sm:$0xff]
        %v1005 = vld [vmem:[%s723 + $0x640] sm:$0xff]
        %v1006 = vld [vmem:[%s723 + $0x648] sm:$0xff]
        %v1007 = vld [vmem:[%s723 + $0x650] sm:$0xff]
        %v1008 = vld [vmem:[%s723 + $0x658] sm:$0xff]
        %v1009 = vld [vmem:[%s723 + $0x660] sm:$0xff]
        %v1010 = vld [vmem:[%s723 + $0x668] sm:$0xff]
        %v1011 = vld [vmem:[%s723 + $0x670] sm:$0xff]
        %v1012 = vld [vmem:[%s723 + $0x678] sm:$0xff]
        %v1013 = vld [vmem:[%s723 + $0x680] sm:$0xff]
        %v1014 = vld [vmem:[%s723 + $0x688] sm:$0xff]
        %v1015 = vld [vmem:[%s723 + $0x690] sm:$0xff]
        %v1016 = vld [vmem:[%s723 + $0x698] sm:$0xff]
        %v1017 = vld [vmem:[%s723 + $0x6a0] sm:$0xff]
        %v1018 = vld [vmem:[%s723 + $0x6a8] sm:$0xff]
        %v1019 = vld [vmem:[%s723 + $0x6b0] sm:$0xff]
        %v1020 = vld [vmem:[%s723 + $0x6b8] sm:$0xff]
        %v1021 = vld [vmem:[%s723 + $0x6c0] sm:$0xff]
        %v1022 = vld [vmem:[%s723 + $0x6c8] sm:$0xff]
        %v1023 = vld [vmem:[%s723 + $0x6d0] sm:$0xff]
        %v1024 = vld [vmem:[%s723 + $0x6d8] sm:$0xff]
        %v1025 = vld [vmem:[%s723 + $0x6e0] sm:$0xff]
        %v1026 = vld [vmem:[%s723 + $0x6e8] sm:$0xff]
        %v1027 = vld [vmem:[%s723 + $0x6f0] sm:$0xff]
        %v1028 = vld [vmem:[%s723 + $0x6f8] sm:$0xff]
        %v1029 = vld [vmem:[%s723 + $0x700] sm:$0xff]
        %v1030 = vld [vmem:[%s723 + $0x708] sm:$0xff]
        %v1031 = vld [vmem:[%s723 + $0x710] sm:$0xff]
        %v1032 = vld [vmem:[%s723 + $0x718] sm:$0xff]
        %v1033 = vld [vmem:[%s723 + $0x720] sm:$0xff]
        %v1034 = vld [vmem:[%s723 + $0x728] sm:$0xff]
        %v1035 = vld [vmem:[%s723 + $0x730] sm:$0xff]
        %v1036 = vld [vmem:[%s723 + $0x738] sm:$0xff]
        %v1037 = vld [vmem:[%s723 + $0x740] sm:$0xff]
        %v1038 = vld [vmem:[%s723 + $0x748] sm:$0xff]
        %v1039 = vld [vmem:[%s723 + $0x750] sm:$0xff]
        %v1040 = vld [vmem:[%s723 + $0x758] sm:$0xff]
        %v1041 = vld [vmem:[%s723 + $0x760] sm:$0xff]
        %v1042 = vld [vmem:[%s723 + $0x768] sm:$0xff]
        %v1043 = vld [vmem:[%s723 + $0x770] sm:$0xff]
        %v1044 = vld [vmem:[%s723 + $0x778] sm:$0xff]
        %v1045 = vld [vmem:[%s723 + $0x780] sm:$0xff]
        %v1046 = vld [vmem:[%s723 + $0x788] sm:$0xff]
        %v1047 = vld [vmem:[%s723 + $0x790] sm:$0xff]
        %v1048 = vld [vmem:[%s723 + $0x798] sm:$0xff]
        %v1049 = vld [vmem:[%s723 + $0x7a0] sm:$0xff]
        %v1050 = vld [vmem:[%s723 + $0x7a8] sm:$0xff]
        %v1051 = vld [vmem:[%s723 + $0x7b0] sm:$0xff]
        %v1052 = vld [vmem:[%s723 + $0x7b8] sm:$0xff]
        %v1053 = vld [vmem:[%s723 + $0x7c0] sm:$0xff]
        %v1054 = vld [vmem:[%s723 + $0x7c8] sm:$0xff]
        %v1055 = vld [vmem:[%s723 + $0x7d0] sm:$0xff]
        %v1056 = vld [vmem:[%s723 + $0x7d8] sm:$0xff]
        %v1057 = vld [vmem:[%s723 + $0x7e0] sm:$0xff]
        %v1058 = vld [vmem:[%s723 + $0x7e8] sm:$0xff]
        %v1059 = vld [vmem:[%s723 + $0x7f0] sm:$0xff]
        %v1060 = vld [vmem:[%s723 + $0x7f8] sm:$0xff]
        %v1317 = vunpack.c.l.b16 %v805
        %v1318 = vunpack.c.h.b16 %v805
        %v1319 = vunpack.c.l.b16 %v806
        %v1320 = vunpack.c.h.b16 %v806
        %v1321 = vunpack.c.l.b16 %v807
        %v1322 = vunpack.c.h.b16 %v807
        %v1323 = vunpack.c.l.b16 %v808
        %v1324 = vunpack.c.h.b16 %v808
        %v1325 = vunpack.c.l.b16 %v809
        %v1326 = vunpack.c.h.b16 %v809
        %v1327 = vunpack.c.l.b16 %v810
        %v1328 = vunpack.c.h.b16 %v810
        %v1329 = vunpack.c.l.b16 %v811
        %v1330 = vunpack.c.h.b16 %v811
        %v1331 = vunpack.c.l.b16 %v812
        %v1332 = vunpack.c.h.b16 %v812
        %v1333 = vunpack.c.l.b16 %v813
        %v1334 = vunpack.c.h.b16 %v813
        %v1335 = vunpack.c.l.b16 %v814
        %v1336 = vunpack.c.h.b16 %v814
        %v1337 = vunpack.c.l.b16 %v815
        %v1338 = vunpack.c.h.b16 %v815
        %v1339 = vunpack.c.l.b16 %v816
        %v1340 = vunpack.c.h.b16 %v816
        %v1341 = vunpack.c.l.b16 %v817
        %v1342 = vunpack.c.h.b16 %v817
        %v1343 = vunpack.c.l.b16 %v818
        %v1344 = vunpack.c.h.b16 %v818
        %v1345 = vunpack.c.l.b16 %v819
        %v1346 = vunpack.c.h.b16 %v819
        %v1347 = vunpack.c.l.b16 %v820
        %v1348 = vunpack.c.h.b16 %v820
        %v1349 = vunpack.c.l.b16 %v821
        %v1350 = vunpack.c.h.b16 %v821
        %v1351 = vunpack.c.l.b16 %v822
        %v1352 = vunpack.c.h.b16 %v822
        %v1353 = vunpack.c.l.b16 %v823
        %v1354 = vunpack.c.h.b16 %v823
        %v1355 = vunpack.c.l.b16 %v824
        %v1356 = vunpack.c.h.b16 %v824
        %v1357 = vunpack.c.l.b16 %v825
        %v1358 = vunpack.c.h.b16 %v825
        %v1359 = vunpack.c.l.b16 %v826
        %v1360 = vunpack.c.h.b16 %v826
        %v1361 = vunpack.c.l.b16 %v827
        %v1362 = vunpack.c.h.b16 %v827
        %v1363 = vunpack.c.l.b16 %v828
        %v1364 = vunpack.c.h.b16 %v828
        %v1365 = vunpack.c.l.b16 %v829
        %v1366 = vunpack.c.h.b16 %v829
        %v1367 = vunpack.c.l.b16 %v830
        %v1368 = vunpack.c.h.b16 %v830
        %v1369 = vunpack.c.l.b16 %v831
        %v1370 = vunpack.c.h.b16 %v831
        %v1371 = vunpack.c.l.b16 %v832
        %v1372 = vunpack.c.h.b16 %v832
        %v1373 = vunpack.c.l.b16 %v833
        %v1374 = vunpack.c.h.b16 %v833
        %v1375 = vunpack.c.l.b16 %v834
        %v1376 = vunpack.c.h.b16 %v834
        %v1377 = vunpack.c.l.b16 %v835
        %v1378 = vunpack.c.h.b16 %v835
        %v1379 = vunpack.c.l.b16 %v836
        %v1380 = vunpack.c.h.b16 %v836
        %v1381 = vunpack.c.l.b16 %v837
        %v1382 = vunpack.c.h.b16 %v837
        %v1383 = vunpack.c.l.b16 %v838
        %v1384 = vunpack.c.h.b16 %v838
        %v1385 = vunpack.c.l.b16 %v839
        %v1386 = vunpack.c.h.b16 %v839
        %v1387 = vunpack.c.l.b16 %v840
        %v1388 = vunpack.c.h.b16 %v840
        %v1389 = vunpack.c.l.b16 %v841
        %v1390 = vunpack.c.h.b16 %v841
        %v1391 = vunpack.c.l.b16 %v842
        %v1392 = vunpack.c.h.b16 %v842
        %v1393 = vunpack.c.l.b16 %v843
        %v1394 = vunpack.c.h.b16 %v843
        %v1395 = vunpack.c.l.b16 %v844
        %v1396 = vunpack.c.h.b16 %v844
        %v1397 = vunpack.c.l.b16 %v845
        %v1398 = vunpack.c.h.b16 %v845
        %v1399 = vunpack.c.l.b16 %v846
        %v1400 = vunpack.c.h.b16 %v846
        %v1401 = vunpack.c.l.b16 %v847
        %v1402 = vunpack.c.h.b16 %v847
        %v1403 = vunpack.c.l.b16 %v848
        %v1404 = vunpack.c.h.b16 %v848
        %v1405 = vunpack.c.l.b16 %v849
        %v1406 = vunpack.c.h.b16 %v849
        %v1407 = vunpack.c.l.b16 %v850
        %v1408 = vunpack.c.h.b16 %v850
        %v1409 = vunpack.c.l.b16 %v851
        %v1410 = vunpack.c.h.b16 %v851
        %v1411 = vunpack.c.l.b16 %v852
        %v1412 = vunpack.c.h.b16 %v852
        %v1413 = vunpack.c.l.b16 %v853
        %v1414 = vunpack.c.h.b16 %v853
        %v1415 = vunpack.c.l.b16 %v854
        %v1416 = vunpack.c.h.b16 %v854
        %v1417 = vunpack.c.l.b16 %v855
        %v1418 = vunpack.c.h.b16 %v855
        %v1419 = vunpack.c.l.b16 %v856
        %v1420 = vunpack.c.h.b16 %v856
        %v1421 = vunpack.c.l.b16 %v857
        %v1422 = vunpack.c.h.b16 %v857
        %v1423 = vunpack.c.l.b16 %v858
        %v1424 = vunpack.c.h.b16 %v858
        %v1425 = vunpack.c.l.b16 %v859
        %v1426 = vunpack.c.h.b16 %v859
        %v1427 = vunpack.c.l.b16 %v860
        %v1428 = vunpack.c.h.b16 %v860
        %v1429 = vunpack.c.l.b16 %v861
        %v1430 = vunpack.c.h.b16 %v861
        %v1431 = vunpack.c.l.b16 %v862
        %v1432 = vunpack.c.h.b16 %v862
        %v1433 = vunpack.c.l.b16 %v863
        %v1434 = vunpack.c.h.b16 %v863
        %v1435 = vunpack.c.l.b16 %v864
        %v1436 = vunpack.c.h.b16 %v864
        %v1437 = vunpack.c.l.b16 %v865
        %v1438 = vunpack.c.h.b16 %v865
        %v1439 = vunpack.c.l.b16 %v866
        %v1440 = vunpack.c.h.b16 %v866
        %v1441 = vunpack.c.l.b16 %v867
        %v1442 = vunpack.c.h.b16 %v867
        %v1443 = vunpack.c.l.b16 %v868
        %v1444 = vunpack.c.h.b16 %v868
        %v1445 = vunpack.c.l.b16 %v869
        %v1446 = vunpack.c.h.b16 %v869
        %v1447 = vunpack.c.l.b16 %v870
        %v1448 = vunpack.c.h.b16 %v870
        %v1449 = vunpack.c.l.b16 %v871
        %v1450 = vunpack.c.h.b16 %v871
        %v1451 = vunpack.c.l.b16 %v872
        %v1452 = vunpack.c.h.b16 %v872
        %v1453 = vunpack.c.l.b16 %v873
        %v1454 = vunpack.c.h.b16 %v873
        %v1455 = vunpack.c.l.b16 %v874
        %v1456 = vunpack.c.h.b16 %v874
        %v1457 = vunpack.c.l.b16 %v875
        %v1458 = vunpack.c.h.b16 %v875
        %v1459 = vunpack.c.l.b16 %v876
        %v1460 = vunpack.c.h.b16 %v876
        %v1461 = vunpack.c.l.b16 %v877
        %v1462 = vunpack.c.h.b16 %v877
        %v1463 = vunpack.c.l.b16 %v878
        %v1464 = vunpack.c.h.b16 %v878
        %v1465 = vunpack.c.l.b16 %v879
        %v1466 = vunpack.c.h.b16 %v879
        %v1467 = vunpack.c.l.b16 %v880
        %v1468 = vunpack.c.h.b16 %v880
        %v1469 = vunpack.c.l.b16 %v881
        %v1470 = vunpack.c.h.b16 %v881
        %v1471 = vunpack.c.l.b16 %v882
        %v1472 = vunpack.c.h.b16 %v882
        %v1473 = vunpack.c.l.b16 %v883
        %v1474 = vunpack.c.h.b16 %v883
        %v1475 = vunpack.c.l.b16 %v884
        %v1476 = vunpack.c.h.b16 %v884
        %v1477 = vunpack.c.l.b16 %v885
        %v1478 = vunpack.c.h.b16 %v885
        %v1479 = vunpack.c.l.b16 %v886
        %v1480 = vunpack.c.h.b16 %v886
        %v1481 = vunpack.c.l.b16 %v887
        %v1482 = vunpack.c.h.b16 %v887
        %v1483 = vunpack.c.l.b16 %v888
        %v1484 = vunpack.c.h.b16 %v888
        %v1485 = vunpack.c.l.b16 %v889
        %v1486 = vunpack.c.h.b16 %v889
        %v1487 = vunpack.c.l.b16 %v890
        %v1488 = vunpack.c.h.b16 %v890
        %v1489 = vunpack.c.l.b16 %v891
        %v1490 = vunpack.c.h.b16 %v891
        %v1491 = vunpack.c.l.b16 %v892
        %v1492 = vunpack.c.h.b16 %v892
        %v1493 = vunpack.c.l.b16 %v893
        %v1494 = vunpack.c.h.b16 %v893
        %v1495 = vunpack.c.l.b16 %v894
        %v1496 = vunpack.c.h.b16 %v894
        %v1497 = vunpack.c.l.b16 %v895
        %v1498 = vunpack.c.h.b16 %v895
        %v1499 = vunpack.c.l.b16 %v896
        %v1500 = vunpack.c.h.b16 %v896
        %v1501 = vunpack.c.l.b16 %v897
        %v1502 = vunpack.c.h.b16 %v897
        %v1503 = vunpack.c.l.b16 %v898
        %v1504 = vunpack.c.h.b16 %v898
        %v1505 = vunpack.c.l.b16 %v899
        %v1506 = vunpack.c.h.b16 %v899
        %v1507 = vunpack.c.l.b16 %v900
        %v1508 = vunpack.c.h.b16 %v900
        %v1509 = vunpack.c.l.b16 %v901
        %v1510 = vunpack.c.h.b16 %v901
        %v1511 = vunpack.c.l.b16 %v902
        %v1512 = vunpack.c.h.b16 %v902
        %v1513 = vunpack.c.l.b16 %v903
        %v1514 = vunpack.c.h.b16 %v903
        %v1515 = vunpack.c.l.b16 %v904
        %v1516 = vunpack.c.h.b16 %v904
        %v1517 = vunpack.c.l.b16 %v905
        %v1518 = vunpack.c.h.b16 %v905
        %v1519 = vunpack.c.l.b16 %v906
        %v1520 = vunpack.c.h.b16 %v906
        %v1521 = vunpack.c.l.b16 %v907
        %v1522 = vunpack.c.h.b16 %v907
        %v1523 = vunpack.c.l.b16 %v908
        %v1524 = vunpack.c.h.b16 %v908
        %v1525 = vunpack.c.l.b16 %v909
        %v1526 = vunpack.c.h.b16 %v909
        %v1527 = vunpack.c.l.b16 %v910
        %v1528 = vunpack.c.h.b16 %v910
        %v1529 = vunpack.c.l.b16 %v911
        %v1530 = vunpack.c.h.b16 %v911
        %v1531 = vunpack.c.l.b16 %v912
        %v1532 = vunpack.c.h.b16 %v912
        %v1533 = vunpack.c.l.b16 %v913
        %v1534 = vunpack.c.h.b16 %v913
        %v1535 = vunpack.c.l.b16 %v914
        %v1536 = vunpack.c.h.b16 %v914
        %v1537 = vunpack.c.l.b16 %v915
        %v1538 = vunpack.c.h.b16 %v915
        %v1539 = vunpack.c.l.b16 %v916
        %v1540 = vunpack.c.h.b16 %v916
        %v1541 = vunpack.c.l.b16 %v917
        %v1542 = vunpack.c.h.b16 %v917
        %v1543 = vunpack.c.l.b16 %v918
        %v1544 = vunpack.c.h.b16 %v918
        %v1545 = vunpack.c.l.b16 %v919
        %v1546 = vunpack.c.h.b16 %v919
        %v1547 = vunpack.c.l.b16 %v920
        %v1548 = vunpack.c.h.b16 %v920
        %v1549 = vunpack.c.l.b16 %v921
        %v1550 = vunpack.c.h.b16 %v921
        %v1551 = vunpack.c.l.b16 %v922
        %v1552 = vunpack.c.h.b16 %v922
        %v1553 = vunpack.c.l.b16 %v923
        %v1554 = vunpack.c.h.b16 %v923
        %v1555 = vunpack.c.l.b16 %v924
        %v1556 = vunpack.c.h.b16 %v924
        %v1557 = vunpack.c.l.b16 %v925
        %v1558 = vunpack.c.h.b16 %v925
        %v1559 = vunpack.c.l.b16 %v926
        %v1560 = vunpack.c.h.b16 %v926
        %v1561 = vunpack.c.l.b16 %v927
        %v1562 = vunpack.c.h.b16 %v927
        %v1563 = vunpack.c.l.b16 %v928
        %v1564 = vunpack.c.h.b16 %v928
        %v1565 = vunpack.c.l.b16 %v929
        %v1566 = vunpack.c.h.b16 %v929
        %v1567 = vunpack.c.l.b16 %v930
        %v1568 = vunpack.c.h.b16 %v930
        %v1569 = vunpack.c.l.b16 %v931
        %v1570 = vunpack.c.h.b16 %v931
        %v1571 = vunpack.c.l.b16 %v932
        %v1572 = vunpack.c.h.b16 %v932
        %v1573 = vunpack.c.l.b16 %v933
        %v1574 = vunpack.c.h.b16 %v933
        %v1575 = vunpack.c.l.b16 %v934
        %v1576 = vunpack.c.h.b16 %v934
        %v1577 = vunpack.c.l.b16 %v935
        %v1578 = vunpack.c.h.b16 %v935
        %v1579 = vunpack.c.l.b16 %v936
        %v1580 = vunpack.c.h.b16 %v936
        %v1581 = vunpack.c.l.b16 %v937
        %v1582 = vunpack.c.h.b16 %v937
        %v1583 = vunpack.c.l.b16 %v938
        %v1584 = vunpack.c.h.b16 %v938
        %v1585 = vunpack.c.l.b16 %v939
        %v1586 = vunpack.c.h.b16 %v939
        %v1587 = vunpack.c.l.b16 %v940
        %v1588 = vunpack.c.h.b16 %v940
        %v1589 = vunpack.c.l.b16 %v941
        %v1590 = vunpack.c.h.b16 %v941
        %v1591 = vunpack.c.l.b16 %v942
        %v1592 = vunpack.c.h.b16 %v942
        %v1593 = vunpack.c.l.b16 %v943
        %v1594 = vunpack.c.h.b16 %v943
        %v1595 = vunpack.c.l.b16 %v944
        %v1596 = vunpack.c.h.b16 %v944
        %v1597 = vunpack.c.l.b16 %v945
        %v1598 = vunpack.c.h.b16 %v945
        %v1599 = vunpack.c.l.b16 %v946
        %v1600 = vunpack.c.h.b16 %v946
        %v1601 = vunpack.c.l.b16 %v947
        %v1602 = vunpack.c.h.b16 %v947
        %v1603 = vunpack.c.l.b16 %v948
        %v1604 = vunpack.c.h.b16 %v948
        %v1605 = vunpack.c.l.b16 %v949
        %v1606 = vunpack.c.h.b16 %v949
        %v1607 = vunpack.c.l.b16 %v950
        %v1608 = vunpack.c.h.b16 %v950
        %v1609 = vunpack.c.l.b16 %v951
        %v1610 = vunpack.c.h.b16 %v951
        %v1611 = vunpack.c.l.b16 %v952
        %v1612 = vunpack.c.h.b16 %v952
        %v1613 = vunpack.c.l.b16 %v953
        %v1614 = vunpack.c.h.b16 %v953
        %v1615 = vunpack.c.l.b16 %v954
        %v1616 = vunpack.c.h.b16 %v954
        %v1617 = vunpack.c.l.b16 %v955
        %v1618 = vunpack.c.h.b16 %v955
        %v1619 = vunpack.c.l.b16 %v956
        %v1620 = vunpack.c.h.b16 %v956
        %v1621 = vunpack.c.l.b16 %v957
        %v1622 = vunpack.c.h.b16 %v957
        %v1623 = vunpack.c.l.b16 %v958
        %v1624 = vunpack.c.h.b16 %v958
        %v1625 = vunpack.c.l.b16 %v959
        %v1626 = vunpack.c.h.b16 %v959
        %v1627 = vunpack.c.l.b16 %v960
        %v1628 = vunpack.c.h.b16 %v960
        %v1629 = vunpack.c.l.b16 %v961
        %v1630 = vunpack.c.h.b16 %v961
        %v1631 = vunpack.c.l.b16 %v962
        %v1632 = vunpack.c.h.b16 %v962
        %v1633 = vunpack.c.l.b16 %v963
        %v1634 = vunpack.c.h.b16 %v963
        %v1635 = vunpack.c.l.b16 %v964
        %v1636 = vunpack.c.h.b16 %v964
        %v1637 = vunpack.c.l.b16 %v965
        %v1638 = vunpack.c.h.b16 %v965
        %v1639 = vunpack.c.l.b16 %v966
        %v1640 = vunpack.c.h.b16 %v966
        %v1641 = vunpack.c.l.b16 %v967
        %v1642 = vunpack.c.h.b16 %v967
        %v1643 = vunpack.c.l.b16 %v968
        %v1644 = vunpack.c.h.b16 %v968
        %v1645 = vunpack.c.l.b16 %v969
        %v1646 = vunpack.c.h.b16 %v969
        %v1647 = vunpack.c.l.b16 %v970
        %v1648 = vunpack.c.h.b16 %v970
        %v1649 = vunpack.c.l.b16 %v971
        %v1650 = vunpack.c.h.b16 %v971
        %v1651 = vunpack.c.l.b16 %v972
        %v1652 = vunpack.c.h.b16 %v972
        %v1653 = vunpack.c.l.b16 %v973
        %v1654 = vunpack.c.h.b16 %v973
        %v1655 = vunpack.c.l.b16 %v974
        %v1656 = vunpack.c.h.b16 %v974
        %v1657 = vunpack.c.l.b16 %v975
        %v1658 = vunpack.c.h.b16 %v975
        %v1659 = vunpack.c.l.b16 %v976
        %v1660 = vunpack.c.h.b16 %v976
        %v1661 = vunpack.c.l.b16 %v977
        %v1662 = vunpack.c.h.b16 %v977
        %v1663 = vunpack.c.l.b16 %v978
        %v1664 = vunpack.c.h.b16 %v978
        %v1665 = vunpack.c.l.b16 %v979
        %v1666 = vunpack.c.h.b16 %v979
        %v1667 = vunpack.c.l.b16 %v980
        %v1668 = vunpack.c.h.b16 %v980
        %v1669 = vunpack.c.l.b16 %v981
        %v1670 = vunpack.c.h.b16 %v981
        %v1671 = vunpack.c.l.b16 %v982
        %v1672 = vunpack.c.h.b16 %v982
        %v1673 = vunpack.c.l.b16 %v983
        %v1674 = vunpack.c.h.b16 %v983
        %v1675 = vunpack.c.l.b16 %v984
        %v1676 = vunpack.c.h.b16 %v984
        %v1677 = vunpack.c.l.b16 %v985
        %v1678 = vunpack.c.h.b16 %v985
        %v1679 = vunpack.c.l.b16 %v986
        %v1680 = vunpack.c.h.b16 %v986
        %v1681 = vunpack.c.l.b16 %v987
        %v1682 = vunpack.c.h.b16 %v987
        %v1683 = vunpack.c.l.b16 %v988
        %v1684 = vunpack.c.h.b16 %v988
        %v1685 = vunpack.c.l.b16 %v989
        %v1686 = vunpack.c.h.b16 %v989
        %v1687 = vunpack.c.l.b16 %v990
        %v1688 = vunpack.c.h.b16 %v990
        %v1689 = vunpack.c.l.b16 %v991
        %v1690 = vunpack.c.h.b16 %v991
        %v1691 = vunpack.c.l.b16 %v992
        %v1692 = vunpack.c.h.b16 %v992
        %v1693 = vunpack.c.l.b16 %v993
        %v1694 = vunpack.c.h.b16 %v993
        %v1695 = vunpack.c.l.b16 %v994
        %v1696 = vunpack.c.h.b16 %v994
        %v1697 = vunpack.c.l.b16 %v995
        %v1698 = vunpack.c.h.b16 %v995
        %v1699 = vunpack.c.l.b16 %v996
        %v1700 = vunpack.c.h.b16 %v996
        %v1701 = vunpack.c.l.b16 %v997
        %v1702 = vunpack.c.h.b16 %v997
        %v1703 = vunpack.c.l.b16 %v998
        %v1704 = vunpack.c.h.b16 %v998
        %v1705 = vunpack.c.l.b16 %v999
        %v1706 = vunpack.c.h.b16 %v999
        %v1707 = vunpack.c.l.b16 %v1000
        %v1708 = vunpack.c.h.b16 %v1000
        %v1709 = vunpack.c.l.b16 %v1001
        %v1710 = vunpack.c.h.b16 %v1001
        %v1711 = vunpack.c.l.b16 %v1002
        %v1712 = vunpack.c.h.b16 %v1002
        %v1713 = vunpack.c.l.b16 %v1003
        %v1714 = vunpack.c.h.b16 %v1003
        %v1715 = vunpack.c.l.b16 %v1004
        %v1716 = vunpack.c.h.b16 %v1004
        %v1717 = vunpack.c.l.b16 %v1005
        %v1718 = vunpack.c.h.b16 %v1005
        %v1719 = vunpack.c.l.b16 %v1006
        %v1720 = vunpack.c.h.b16 %v1006
        %v1721 = vunpack.c.l.b16 %v1007
        %v1722 = vunpack.c.h.b16 %v1007
        %v1723 = vunpack.c.l.b16 %v1008
        %v1724 = vunpack.c.h.b16 %v1008
        %v1725 = vunpack.c.l.b16 %v1009
        %v1726 = vunpack.c.h.b16 %v1009
        %v1727 = vunpack.c.l.b16 %v1010
        %v1728 = vunpack.c.h.b16 %v1010
        %v1729 = vunpack.c.l.b16 %v1011
        %v1730 = vunpack.c.h.b16 %v1011
        %v1731 = vunpack.c.l.b16 %v1012
        %v1732 = vunpack.c.h.b16 %v1012
        %v1733 = vunpack.c.l.b16 %v1013
        %v1734 = vunpack.c.h.b16 %v1013
        %v1735 = vunpack.c.l.b16 %v1014
        %v1736 = vunpack.c.h.b16 %v1014
        %v1737 = vunpack.c.l.b16 %v1015
        %v1738 = vunpack.c.h.b16 %v1015
        %v1739 = vunpack.c.l.b16 %v1016
        %v1740 = vunpack.c.h.b16 %v1016
        %v1741 = vunpack.c.l.b16 %v1017
        %v1742 = vunpack.c.h.b16 %v1017
        %v1743 = vunpack.c.l.b16 %v1018
        %v1744 = vunpack.c.h.b16 %v1018
        %v1745 = vunpack.c.l.b16 %v1019
        %v1746 = vunpack.c.h.b16 %v1019
        %v1747 = vunpack.c.l.b16 %v1020
        %v1748 = vunpack.c.h.b16 %v1020
        %v1749 = vunpack.c.l.b16 %v1021
        %v1750 = vunpack.c.h.b16 %v1021
        %v1751 = vunpack.c.l.b16 %v1022
        %v1752 = vunpack.c.h.b16 %v1022
        %v1753 = vunpack.c.l.b16 %v1023
        %v1754 = vunpack.c.h.b16 %v1023
        %v1755 = vunpack.c.l.b16 %v1024
        %v1756 = vunpack.c.h.b16 %v1024
        %v1757 = vunpack.c.l.b16 %v1025
        %v1758 = vunpack.c.h.b16 %v1025
        %v1759 = vunpack.c.l.b16 %v1026
        %v1760 = vunpack.c.h.b16 %v1026
        %v1761 = vunpack.c.l.b16 %v1027
        %v1762 = vunpack.c.h.b16 %v1027
        %v1763 = vunpack.c.l.b16 %v1028
        %v1764 = vunpack.c.h.b16 %v1028
        %v1765 = vunpack.c.l.b16 %v1029
        %v1766 = vunpack.c.h.b16 %v1029
        %v1767 = vunpack.c.l.b16 %v1030
        %v1768 = vunpack.c.h.b16 %v1030
        %v1769 = vunpack.c.l.b16 %v1031
        %v1770 = vunpack.c.h.b16 %v1031
        %v1771 = vunpack.c.l.b16 %v1032
        %v1772 = vunpack.c.h.b16 %v1032
        %v1773 = vunpack.c.l.b16 %v1033
        %v1774 = vunpack.c.h.b16 %v1033
        %v1775 = vunpack.c.l.b16 %v1034
        %v1776 = vunpack.c.h.b16 %v1034
        %v1777 = vunpack.c.l.b16 %v1035
        %v1778 = vunpack.c.h.b16 %v1035
        %v1779 = vunpack.c.l.b16 %v1036
        %v1780 = vunpack.c.h.b16 %v1036
        %v1781 = vunpack.c.l.b16 %v1037
        %v1782 = vunpack.c.h.b16 %v1037
        %v1783 = vunpack.c.l.b16 %v1038
        %v1784 = vunpack.c.h.b16 %v1038
        %v1785 = vunpack.c.l.b16 %v1039
        %v1786 = vunpack.c.h.b16 %v1039
        %v1787 = vunpack.c.l.b16 %v1040
        %v1788 = vunpack.c.h.b16 %v1040
        %v1789 = vunpack.c.l.b16 %v1041
        %v1790 = vunpack.c.h.b16 %v1041
        %v1791 = vunpack.c.l.b16 %v1042
        %v1792 = vunpack.c.h.b16 %v1042
        %v1793 = vunpack.c.l.b16 %v1043
        %v1794 = vunpack.c.h.b16 %v1043
        %v1795 = vunpack.c.l.b16 %v1044
        %v1796 = vunpack.c.h.b16 %v1044
        %v1797 = vunpack.c.l.b16 %v1045
        %v1798 = vunpack.c.h.b16 %v1045
        %v1799 = vunpack.c.l.b16 %v1046
        %v1800 = vunpack.c.h.b16 %v1046
        %v1801 = vunpack.c.l.b16 %v1047
        %v1802 = vunpack.c.h.b16 %v1047
        %v1803 = vunpack.c.l.b16 %v1048
        %v1804 = vunpack.c.h.b16 %v1048
        %v1805 = vunpack.c.l.b16 %v1049
        %v1806 = vunpack.c.h.b16 %v1049
        %v1807 = vunpack.c.l.b16 %v1050
        %v1808 = vunpack.c.h.b16 %v1050
        %v1809 = vunpack.c.l.b16 %v1051
        %v1810 = vunpack.c.h.b16 %v1051
        %v1811 = vunpack.c.l.b16 %v1052
        %v1812 = vunpack.c.h.b16 %v1052
        %v1813 = vunpack.c.l.b16 %v1053
        %v1814 = vunpack.c.h.b16 %v1053
        %v1815 = vunpack.c.l.b16 %v1054
        %v1816 = vunpack.c.h.b16 %v1054
        %v1817 = vunpack.c.l.b16 %v1055
        %v1818 = vunpack.c.h.b16 %v1055
        %v1819 = vunpack.c.l.b16 %v1056
        %v1820 = vunpack.c.h.b16 %v1056
        %v1821 = vunpack.c.l.b16 %v1057
        %v1822 = vunpack.c.h.b16 %v1057
        %v1823 = vunpack.c.l.b16 %v1058
        %v1824 = vunpack.c.h.b16 %v1058
        %v1825 = vunpack.c.l.b16 %v1059
        %v1826 = vunpack.c.h.b16 %v1059
        %v1827 = vunpack.c.l.b16 %v1060
        %v1828 = vunpack.c.h.b16 %v1060
        %v1829 = vpack.c.b16 %v1349, %v1317
        %v1830 = vpack.c.b16 %v1350, %v1318
        %v1831 = vpack.c.b16 %v1351, %v1319
        %v1832 = vpack.c.b16 %v1352, %v1320
        %v1833 = vpack.c.b16 %v1353, %v1321
        %v1834 = vpack.c.b16 %v1354, %v1322
        %v1835 = vpack.c.b16 %v1355, %v1323
        %v1836 = vpack.c.b16 %v1356, %v1324
        %v1837 = vpack.c.b16 %v1357, %v1325
        %v1838 = vpack.c.b16 %v1358, %v1326
        %v1839 = vpack.c.b16 %v1359, %v1327
        %v1840 = vpack.c.b16 %v1360, %v1328
        %v1841 = vpack.c.b16 %v1361, %v1329
        %v1842 = vpack.c.b16 %v1362, %v1330
        %v1843 = vpack.c.b16 %v1363, %v1331
        %v1844 = vpack.c.b16 %v1364, %v1332
        %v1845 = vpack.c.b16 %v1365, %v1333
        %v1846 = vpack.c.b16 %v1366, %v1334
        %v1847 = vpack.c.b16 %v1367, %v1335
        %v1848 = vpack.c.b16 %v1368, %v1336
        %v1849 = vpack.c.b16 %v1369, %v1337
        %v1850 = vpack.c.b16 %v1370, %v1338
        %v1851 = vpack.c.b16 %v1371, %v1339
        %v1852 = vpack.c.b16 %v1372, %v1340
        %v1853 = vpack.c.b16 %v1373, %v1341
        %v1854 = vpack.c.b16 %v1374, %v1342
        %v1855 = vpack.c.b16 %v1375, %v1343
        %v1856 = vpack.c.b16 %v1376, %v1344
        %v1857 = vpack.c.b16 %v1377, %v1345
        %v1858 = vpack.c.b16 %v1378, %v1346
        %v1859 = vpack.c.b16 %v1379, %v1347
        %v1860 = vpack.c.b16 %v1380, %v1348
        %v1861 = vpack.c.b16 %v1413, %v1381
        %v1862 = vpack.c.b16 %v1414, %v1382
        %v1863 = vpack.c.b16 %v1415, %v1383
        %v1864 = vpack.c.b16 %v1416, %v1384
        %v1865 = vpack.c.b16 %v1417, %v1385
        %v1866 = vpack.c.b16 %v1418, %v1386
        %v1867 = vpack.c.b16 %v1419, %v1387
        %v1868 = vpack.c.b16 %v1420, %v1388
        %v1869 = vpack.c.b16 %v1421, %v1389
        %v1870 = vpack.c.b16 %v1422, %v1390
        %v1871 = vpack.c.b16 %v1423, %v1391
        %v1872 = vpack.c.b16 %v1424, %v1392
        %v1873 = vpack.c.b16 %v1425, %v1393
        %v1874 = vpack.c.b16 %v1426, %v1394
        %v1875 = vpack.c.b16 %v1427, %v1395
        %v1876 = vpack.c.b16 %v1428, %v1396
        %v1877 = vpack.c.b16 %v1429, %v1397
        %v1878 = vpack.c.b16 %v1430, %v1398
        %v1879 = vpack.c.b16 %v1431, %v1399
        %v1880 = vpack.c.b16 %v1432, %v1400
        %v1881 = vpack.c.b16 %v1433, %v1401
        %v1882 = vpack.c.b16 %v1434, %v1402
        %v1883 = vpack.c.b16 %v1435, %v1403
        %v1884 = vpack.c.b16 %v1436, %v1404
        %v1885 = vpack.c.b16 %v1437, %v1405
        %v1886 = vpack.c.b16 %v1438, %v1406
        %v1887 = vpack.c.b16 %v1439, %v1407
        %v1888 = vpack.c.b16 %v1440, %v1408
        %v1889 = vpack.c.b16 %v1441, %v1409
        %v1890 = vpack.c.b16 %v1442, %v1410
        %v1891 = vpack.c.b16 %v1443, %v1411
        %v1892 = vpack.c.b16 %v1444, %v1412
        %v1893 = vpack.c.b16 %v1477, %v1445
        %v1894 = vpack.c.b16 %v1478, %v1446
        %v1895 = vpack.c.b16 %v1479, %v1447
        %v1896 = vpack.c.b16 %v1480, %v1448
        %v1897 = vpack.c.b16 %v1481, %v1449
        %v1898 = vpack.c.b16 %v1482, %v1450
        %v1899 = vpack.c.b16 %v1483, %v1451
        %v1900 = vpack.c.b16 %v1484, %v1452
        %v1901 = vpack.c.b16 %v1485, %v1453
        %v1902 = vpack.c.b16 %v1486, %v1454
        %v1903 = vpack.c.b16 %v1487, %v1455
        %v1904 = vpack.c.b16 %v1488, %v1456
        %v1905 = vpack.c.b16 %v1489, %v1457
        %v1906 = vpack.c.b16 %v1490, %v1458
        %v1907 = vpack.c.b16 %v1491, %v1459
        %v1908 = vpack.c.b16 %v1492, %v1460
        %v1909 = vpack.c.b16 %v1493, %v1461
        %v1910 = vpack.c.b16 %v1494, %v1462
        %v1911 = vpack.c.b16 %v1495, %v1463
        %v1912 = vpack.c.b16 %v1496, %v1464
        %v1913 = vpack.c.b16 %v1497, %v1465
        %v1914 = vpack.c.b16 %v1498, %v1466
        %v1915 = vpack.c.b16 %v1499, %v1467
        %v1916 = vpack.c.b16 %v1500, %v1468
        %v1917 = vpack.c.b16 %v1501, %v1469
        %v1918 = vpack.c.b16 %v1502, %v1470
        %v1919 = vpack.c.b16 %v1503, %v1471
        %v1920 = vpack.c.b16 %v1504, %v1472
        %v1921 = vpack.c.b16 %v1505, %v1473
        %v1922 = vpack.c.b16 %v1506, %v1474
        %v1923 = vpack.c.b16 %v1507, %v1475
        %v1924 = vpack.c.b16 %v1508, %v1476
        %v1925 = vpack.c.b16 %v1541, %v1509
        %v1926 = vpack.c.b16 %v1542, %v1510
        %v1927 = vpack.c.b16 %v1543, %v1511
        %v1928 = vpack.c.b16 %v1544, %v1512
        %v1929 = vpack.c.b16 %v1545, %v1513
        %v1930 = vpack.c.b16 %v1546, %v1514
        %v1931 = vpack.c.b16 %v1547, %v1515
        %v1932 = vpack.c.b16 %v1548, %v1516
        %v1933 = vpack.c.b16 %v1549, %v1517
        %v1934 = vpack.c.b16 %v1550, %v1518
        %v1935 = vpack.c.b16 %v1551, %v1519
        %v1936 = vpack.c.b16 %v1552, %v1520
        %v1937 = vpack.c.b16 %v1553, %v1521
        %v1938 = vpack.c.b16 %v1554, %v1522
        %v1939 = vpack.c.b16 %v1555, %v1523
        %v1940 = vpack.c.b16 %v1556, %v1524
        %v1941 = vpack.c.b16 %v1557, %v1525
        %v1942 = vpack.c.b16 %v1558, %v1526
        %v1943 = vpack.c.b16 %v1559, %v1527
        %v1944 = vpack.c.b16 %v1560, %v1528
        %v1945 = vpack.c.b16 %v1561, %v1529
        %v1946 = vpack.c.b16 %v1562, %v1530
        %v1947 = vpack.c.b16 %v1563, %v1531
        %v1948 = vpack.c.b16 %v1564, %v1532
        %v1949 = vpack.c.b16 %v1565, %v1533
        %v1950 = vpack.c.b16 %v1566, %v1534
        %v1951 = vpack.c.b16 %v1567, %v1535
        %v1952 = vpack.c.b16 %v1568, %v1536
        %v1953 = vpack.c.b16 %v1569, %v1537
        %v1954 = vpack.c.b16 %v1570, %v1538
        %v1955 = vpack.c.b16 %v1571, %v1539
        %v1956 = vpack.c.b16 %v1572, %v1540
        %v1957 = vpack.c.b16 %v1605, %v1573
        %v1958 = vpack.c.b16 %v1606, %v1574
        %v1959 = vpack.c.b16 %v1607, %v1575
        %v1960 = vpack.c.b16 %v1608, %v1576
        %v1961 = vpack.c.b16 %v1609, %v1577
        %v1962 = vpack.c.b16 %v1610, %v1578
        %v1963 = vpack.c.b16 %v1611, %v1579
        %v1964 = vpack.c.b16 %v1612, %v1580
        %v1965 = vpack.c.b16 %v1613, %v1581
        %v1966 = vpack.c.b16 %v1614, %v1582
        %v1967 = vpack.c.b16 %v1615, %v1583
        %v1968 = vpack.c.b16 %v1616, %v1584
        %v1969 = vpack.c.b16 %v1617, %v1585
        %v1970 = vpack.c.b16 %v1618, %v1586
        %v1971 = vpack.c.b16 %v1619, %v1587
        %v1972 = vpack.c.b16 %v1620, %v1588
        %v1973 = vpack.c.b16 %v1621, %v1589
        %v1974 = vpack.c.b16 %v1622, %v1590
        %v1975 = vpack.c.b16 %v1623, %v1591
        %v1976 = vpack.c.b16 %v1624, %v1592
        %v1977 = vpack.c.b16 %v1625, %v1593
        %v1978 = vpack.c.b16 %v1626, %v1594
        %v1979 = vpack.c.b16 %v1627, %v1595
        %v1980 = vpack.c.b16 %v1628, %v1596
        %v1981 = vpack.c.b16 %v1629, %v1597
        %v1982 = vpack.c.b16 %v1630, %v1598
        %v1983 = vpack.c.b16 %v1631, %v1599
        %v1984 = vpack.c.b16 %v1632, %v1600
        %v1985 = vpack.c.b16 %v1633, %v1601
        %v1986 = vpack.c.b16 %v1634, %v1602
        %v1987 = vpack.c.b16 %v1635, %v1603
        %v1988 = vpack.c.b16 %v1636, %v1604
        %v1989 = vpack.c.b16 %v1669, %v1637
        %v1990 = vpack.c.b16 %v1670, %v1638
        %v1991 = vpack.c.b16 %v1671, %v1639
        %v1992 = vpack.c.b16 %v1672, %v1640
        %v1993 = vpack.c.b16 %v1673, %v1641
        %v1994 = vpack.c.b16 %v1674, %v1642
        %v1995 = vpack.c.b16 %v1675, %v1643
        %v1996 = vpack.c.b16 %v1676, %v1644
        %v1997 = vpack.c.b16 %v1677, %v1645
        %v1998 = vpack.c.b16 %v1678, %v1646
        %v1999 = vpack.c.b16 %v1679, %v1647
        %v2000 = vpack.c.b16 %v1680, %v1648
        %v2001 = vpack.c.b16 %v1681, %v1649
        %v2002 = vpack.c.b16 %v1682, %v1650
        %v2003 = vpack.c.b16 %v1683, %v1651
        %v2004 = vpack.c.b16 %v1684, %v1652
        %v2005 = vpack.c.b16 %v1685, %v1653
        %v2006 = vpack.c.b16 %v1686, %v1654
        %v2007 = vpack.c.b16 %v1687, %v1655
        %v2008 = vpack.c.b16 %v1688, %v1656
        %v2009 = vpack.c.b16 %v1689, %v1657
        %v2010 = vpack.c.b16 %v1690, %v1658
        %v2011 = vpack.c.b16 %v1691, %v1659
        %v2012 = vpack.c.b16 %v1692, %v1660
        %v2013 = vpack.c.b16 %v1693, %v1661
        %v2014 = vpack.c.b16 %v1694, %v1662
        %v2015 = vpack.c.b16 %v1695, %v1663
        %v2016 = vpack.c.b16 %v1696, %v1664
        %v2017 = vpack.c.b16 %v1697, %v1665
        %v2018 = vpack.c.b16 %v1698, %v1666
        %v2019 = vpack.c.b16 %v1699, %v1667
        %v2020 = vpack.c.b16 %v1700, %v1668
        %v2021 = vpack.c.b16 %v1733, %v1701
        %v2022 = vpack.c.b16 %v1734, %v1702
        %v2023 = vpack.c.b16 %v1735, %v1703
        %v2024 = vpack.c.b16 %v1736, %v1704
        %v2025 = vpack.c.b16 %v1737, %v1705
        %v2026 = vpack.c.b16 %v1738, %v1706
        %v2027 = vpack.c.b16 %v1739, %v1707
        %v2028 = vpack.c.b16 %v1740, %v1708
        %v2029 = vpack.c.b16 %v1741, %v1709
        %v2030 = vpack.c.b16 %v1742, %v1710
        %v2031 = vpack.c.b16 %v1743, %v1711
        %v2032 = vpack.c.b16 %v1744, %v1712
        %v2033 = vpack.c.b16 %v1745, %v1713
        %v2034 = vpack.c.b16 %v1746, %v1714
        %v2035 = vpack.c.b16 %v1747, %v1715
        %v2036 = vpack.c.b16 %v1748, %v1716
        %v2037 = vpack.c.b16 %v1749, %v1717
        %v2038 = vpack.c.b16 %v1750, %v1718
        %v2039 = vpack.c.b16 %v1751, %v1719
        %v2040 = vpack.c.b16 %v1752, %v1720
        %v2041 = vpack.c.b16 %v1753, %v1721
        %v2042 = vpack.c.b16 %v1754, %v1722
        %v2043 = vpack.c.b16 %v1755, %v1723
        %v2044 = vpack.c.b16 %v1756, %v1724
        %v2045 = vpack.c.b16 %v1757, %v1725
        %v2046 = vpack.c.b16 %v1758, %v1726
        %v2047 = vpack.c.b16 %v1759, %v1727
        %v2048 = vpack.c.b16 %v1760, %v1728
        %v2049 = vpack.c.b16 %v1761, %v1729
        %v2050 = vpack.c.b16 %v1762, %v1730
        %v2051 = vpack.c.b16 %v1763, %v1731
        %v2052 = vpack.c.b16 %v1764, %v1732
        %v2053 = vpack.c.b16 %v1797, %v1765
        %v2054 = vpack.c.b16 %v1798, %v1766
        %v2055 = vpack.c.b16 %v1799, %v1767
        %v2056 = vpack.c.b16 %v1800, %v1768
        %v2057 = vpack.c.b16 %v1801, %v1769
        %v2058 = vpack.c.b16 %v1802, %v1770
        %v2059 = vpack.c.b16 %v1803, %v1771
        %v2060 = vpack.c.b16 %v1804, %v1772
        %v2061 = vpack.c.b16 %v1805, %v1773
        %v2062 = vpack.c.b16 %v1806, %v1774
        %v2063 = vpack.c.b16 %v1807, %v1775
        %v2064 = vpack.c.b16 %v1808, %v1776
        %v2065 = vpack.c.b16 %v1809, %v1777
        %v2066 = vpack.c.b16 %v1810, %v1778
        %v2067 = vpack.c.b16 %v1811, %v1779
        %v2068 = vpack.c.b16 %v1812, %v1780
        %v2069 = vpack.c.b16 %v1813, %v1781
        %v2070 = vpack.c.b16 %v1814, %v1782
        %v2071 = vpack.c.b16 %v1815, %v1783
        %v2072 = vpack.c.b16 %v1816, %v1784
        %v2073 = vpack.c.b16 %v1817, %v1785
        %v2074 = vpack.c.b16 %v1818, %v1786
        %v2075 = vpack.c.b16 %v1819, %v1787
        %v2076 = vpack.c.b16 %v1820, %v1788
        %v2077 = vpack.c.b16 %v1821, %v1789
        %v2078 = vpack.c.b16 %v1822, %v1790
        %v2079 = vpack.c.b16 %v1823, %v1791
        %v2080 = vpack.c.b16 %v1824, %v1792
        %v2081 = vpack.c.b16 %v1825, %v1793
        %v2082 = vpack.c.b16 %v1826, %v1794
        %v2083 = vpack.c.b16 %v1827, %v1795
        %v2084 = vpack.c.b16 %v1828, %v1796
        %2341 = vmatprep.subr.bf16.mxu0 %v2054
        %2342 = vmatpush1.bf16.msra.mxu0 %v2053
        %2343 = vmatprep.subr.bf16.mxu0 %v2022
        %2344 = vmatpush1.bf16.msra.mxu0 %v2021
        %2345 = vmatprep.subr.bf16.mxu0 %v1990
        %2346 = vmatpush1.bf16.msra.mxu0 %v1989
        %2347 = vmatprep.subr.bf16.mxu0 %v1958
        %2348 = vmatpush1.bf16.msra.mxu0 %v1957
        %2349 = vmatprep.subr.bf16.mxu0 %v1926
        %2350 = vmatpush1.bf16.msra.mxu0 %v1925
        %2351 = vmatprep.subr.bf16.mxu0 %v1894
        %2352 = vmatpush1.bf16.msra.mxu0 %v1893
        %2353 = vmatprep.subr.bf16.mxu0 %v1862
        %2354 = vmatpush1.bf16.msra.mxu0 %v1861
        %2355 = vmatprep.subr.bf16.mxu0 %v1830
        %2356 = vmatpush1.bf16.msra.mxu0 %v1829
        %2357 = vmatprep.subr.bf16.mxu0 0
        %2358 = vmatpush2.bf16.msra.mxu0 0
        %2359 = vmatprep.subr.bf16.mxu0 0
        %2360 = vmatpush2.bf16.msra.mxu0 0
        %2361 = vmatprep.subr.bf16.mxu0 0
        %2362 = vmatpush2.bf16.msra.mxu0 0
        %2363 = vmatprep.subr.bf16.mxu0 0
        %2364 = vmatpush2.bf16.msra.mxu0 0
        %2365 = vmatprep.subr.bf16.mxu0 0
        %2366 = vmatpush2.bf16.msra.mxu0 0
        %2367 = vmatprep.subr.bf16.mxu0 0
        %2368 = vmatpush2.bf16.msra.mxu0 0
        %2369 = vmatprep.subr.bf16.mxu0 0
        %2370 = vmatpush2.bf16.msra.mxu0 0
        %2371 = vmatprep.subr.bf16.mxu0 0
        %2372 = vmatpush2.bf16.msra.mxu0 0
        %2373 = vmatprep.mubr.bf16.mxu0 0
        %2374 = vmatmul.mubr.bf16.gmra.mxu0 %v804
        %v2375 = vpop.f32.mrf.mxu0
        %v2376 = vadd.f32 0.0, %v2375
        %v2377 = vpop.f32.mrf.mxu0
        %v2378 = vadd.f32 0.0, %v2377
        %v2379 = vpop.f32.mrf.mxu0
        %v2380 = vpop.f32.mrf.mxu0
        %2381 = vdwg.mxu0
        %2382 = vmatprep.subr.bf16.mxu0 %v2056
        %2383 = vmatpush1.bf16.msra.mxu0 %v2055
        %2384 = vmatprep.subr.bf16.mxu0 %v2024
        %2385 = vmatpush1.bf16.msra.mxu0 %v2023
        %2386 = vmatprep.subr.bf16.mxu0 %v1992
        %2387 = vmatpush1.bf16.msra.mxu0 %v1991
        %2388 = vmatprep.subr.bf16.mxu0 %v1960
        %2389 = vmatpush1.bf16.msra.mxu0 %v1959
        %2390 = vmatprep.subr.bf16.mxu0 %v1928
        %2391 = vmatpush1.bf16.msra.mxu0 %v1927
        %2392 = vmatprep.subr.bf16.mxu0 %v1896
        %2393 = vmatpush1.bf16.msra.mxu0 %v1895
        %2394 = vmatprep.subr.bf16.mxu0 %v1864
        %2395 = vmatpush1.bf16.msra.mxu0 %v1863
        %2396 = vmatprep.subr.bf16.mxu0 %v1832
        %2397 = vmatpush1.bf16.msra.mxu0 %v1831
        %2398 = vmatprep.subr.bf16.mxu0 0
        %2399 = vmatpush2.bf16.msra.mxu0 0
        %2400 = vmatprep.subr.bf16.mxu0 0
        %2401 = vmatpush2.bf16.msra.mxu0 0
        %2402 = vmatprep.subr.bf16.mxu0 0
        %2403 = vmatpush2.bf16.msra.mxu0 0
        %2404 = vmatprep.subr.bf16.mxu0 0
        %2405 = vmatpush2.bf16.msra.mxu0 0
        %2406 = vmatprep.subr.bf16.mxu0 0
        %2407 = vmatpush2.bf16.msra.mxu0 0
        %2408 = vmatprep.subr.bf16.mxu0 0
        %2409 = vmatpush2.bf16.msra.mxu0 0
        %2410 = vmatprep.subr.bf16.mxu0 0
        %2411 = vmatpush2.bf16.msra.mxu0 0
        %2412 = vmatprep.subr.bf16.mxu0 0
        %2413 = vmatpush2.bf16.msra.mxu0 0
        %2414 = vmatprep.mubr.bf16.mxu0 0
        %2415 = vmatmul.mubr.bf16.gmra.mxu0 %v804
        %v2416 = vpop.f32.mrf.mxu0
        %v2417 = vadd.f32 0.0, %v2416
        %v2418 = vpop.f32.mrf.mxu0
        %v2419 = vadd.f32 0.0, %v2418
        %v2420 = vpop.f32.mrf.mxu0
        %v2421 = vpop.f32.mrf.mxu0
        %2422 = vdwg.mxu0
        %2423 = vmatprep.subr.bf16.mxu0 %v2058
        %2424 = vmatpush1.bf16.msra.mxu0 %v2057
        %2425 = vmatprep.subr.bf16.mxu0 %v2026
        %2426 = vmatpush1.bf16.msra.mxu0 %v2025
        %2427 = vmatprep.subr.bf16.mxu0 %v1994
        %2428 = vmatpush1.bf16.msra.mxu0 %v1993
        %2429 = vmatprep.subr.bf16.mxu0 %v1962
        %2430 = vmatpush1.bf16.msra.mxu0 %v1961
        %2431 = vmatprep.subr.bf16.mxu0 %v1930
        %2432 = vmatpush1.bf16.msra.mxu0 %v1929
        %2433 = vmatprep.subr.bf16.mxu0 %v1898
        %2434 = vmatpush1.bf16.msra.mxu0 %v1897
        %2435 = vmatprep.subr.bf16.mxu0 %v1866
        %2436 = vmatpush1.bf16.msra.mxu0 %v1865
        %2437 = vmatprep.subr.bf16.mxu0 %v1834
        %2438 = vmatpush1.bf16.msra.mxu0 %v1833
        %2439 = vmatprep.subr.bf16.mxu0 0
        %2440 = vmatpush2.bf16.msra.mxu0 0
        %2441 = vmatprep.subr.bf16.mxu0 0
        %2442 = vmatpush2.bf16.msra.mxu0 0
        %2443 = vmatprep.subr.bf16.mxu0 0
        %2444 = vmatpush2.bf16.msra.mxu0 0
        %2445 = vmatprep.subr.bf16.mxu0 0
        %2446 = vmatpush2.bf16.msra.mxu0 0
        %2447 = vmatprep.subr.bf16.mxu0 0
        %2448 = vmatpush2.bf16.msra.mxu0 0
        %2449 = vmatprep.subr.bf16.mxu0 0
        %2450 = vmatpush2.bf16.msra.mxu0 0
        %2451 = vmatprep.subr.bf16.mxu0 0
        %2452 = vmatpush2.bf16.msra.mxu0 0
        %2453 = vmatprep.subr.bf16.mxu0 0
        %2454 = vmatpush2.bf16.msra.mxu0 0
        %2455 = vmatprep.mubr.bf16.mxu0 0
        %2456 = vmatmul.mubr.bf16.gmra.mxu0 %v804
        %v2457 = vpop.f32.mrf.mxu0
        %v2458 = vadd.f32 0.0, %v2457
        %v2459 = vpop.f32.mrf.mxu0
        %v2460 = vadd.f32 0.0, %v2459
        %v2461 = vpop.f32.mrf.mxu0
        %v2462 = vpop.f32.mrf.mxu0
        %2463 = vdwg.mxu0
        %2464 = vmatprep.subr.bf16.mxu0 %v2060
        %2465 = vmatpush1.bf16.msra.mxu0 %v2059
        %2466 = vmatprep.subr.bf16.mxu0 %v2028
        %2467 = vmatpush1.bf16.msra.mxu0 %v2027
        %2468 = vmatprep.subr.bf16.mxu0 %v1996
        %2469 = vmatpush1.bf16.msra.mxu0 %v1995
        %2470 = vmatprep.subr.bf16.mxu0 %v1964
        %2471 = vmatpush1.bf16.msra.mxu0 %v1963
        %2472 = vmatprep.subr.bf16.mxu0 %v1932
        %2473 = vmatpush1.bf16.msra.mxu0 %v1931
        %2474 = vmatprep.subr.bf16.mxu0 %v1900
        %2475 = vmatpush1.bf16.msra.mxu0 %v1899
        %2476 = vmatprep.subr.bf16.mxu0 %v1868
        %2477 = vmatpush1.bf16.msra.mxu0 %v1867
        %2478 = vmatprep.subr.bf16.mxu0 %v1836
        %2479 = vmatpush1.bf16.msra.mxu0 %v1835
        %2480 = vmatprep.subr.bf16.mxu0 0
        %2481 = vmatpush2.bf16.msra.mxu0 0
        %2482 = vmatprep.subr.bf16.mxu0 0
        %2483 = vmatpush2.bf16.msra.mxu0 0
        %2484 = vmatprep.subr.bf16.mxu0 0
        %2485 = vmatpush2.bf16.msra.mxu0 0
        %2486 = vmatprep.subr.bf16.mxu0 0
        %2487 = vmatpush2.bf16.msra.mxu0 0
        %2488 = vmatprep.subr.bf16.mxu0 0
        %2489 = vmatpush2.bf16.msra.mxu0 0
        %2490 = vmatprep.subr.bf16.mxu0 0
        %2491 = vmatpush2.bf16.msra.mxu0 0
        %2492 = vmatprep.subr.bf16.mxu0 0
        %2493 = vmatpush2.bf16.msra.mxu0 0
        %2494 = vmatprep.subr.bf16.mxu0 0
        %2495 = vmatpush2.bf16.msra.mxu0 0
        %2496 = vmatprep.mubr.bf16.mxu0 0
        %2497 = vmatmul.mubr.bf16.gmra.mxu0 %v804
        %v2498 = vpop.f32.mrf.mxu0
        %v2499 = vadd.f32 0.0, %v2498
        %v2500 = vpop.f32.mrf.mxu0
        %v2501 = vadd.f32 0.0, %v2500
        %v2502 = vpop.f32.mrf.mxu0
        %v2503 = vpop.f32.mrf.mxu0
        %2504 = vdwg.mxu0
        %2505 = vmatprep.subr.bf16.mxu0 %v2062
        %2506 = vmatpush1.bf16.msra.mxu0 %v2061
        %2507 = vmatprep.subr.bf16.mxu0 %v2030
        %2508 = vmatpush1.bf16.msra.mxu0 %v2029
        %2509 = vmatprep.subr.bf16.mxu0 %v1998
        %2510 = vmatpush1.bf16.msra.mxu0 %v1997
        %2511 = vmatprep.subr.bf16.mxu0 %v1966
        %2512 = vmatpush1.bf16.msra.mxu0 %v1965
        %2513 = vmatprep.subr.bf16.mxu0 %v1934
        %2514 = vmatpush1.bf16.msra.mxu0 %v1933
        %2515 = vmatprep.subr.bf16.mxu0 %v1902
        %2516 = vmatpush1.bf16.msra.mxu0 %v1901
        %2517 = vmatprep.subr.bf16.mxu0 %v1870
        %2518 = vmatpush1.bf16.msra.mxu0 %v1869
        %2519 = vmatprep.subr.bf16.mxu0 %v1838
        %2520 = vmatpush1.bf16.msra.mxu0 %v1837
        %2521 = vmatprep.subr.bf16.mxu0 0
        %2522 = vmatpush2.bf16.msra.mxu0 0
        %2523 = vmatprep.subr.bf16.mxu0 0
        %2524 = vmatpush2.bf16.msra.mxu0 0
        %2525 = vmatprep.subr.bf16.mxu0 0
        %2526 = vmatpush2.bf16.msra.mxu0 0
        %2527 = vmatprep.subr.bf16.mxu0 0
        %2528 = vmatpush2.bf16.msra.mxu0 0
        %2529 = vmatprep.subr.bf16.mxu0 0
        %2530 = vmatpush2.bf16.msra.mxu0 0
        %2531 = vmatprep.subr.bf16.mxu0 0
        %2532 = vmatpush2.bf16.msra.mxu0 0
        %2533 = vmatprep.subr.bf16.mxu0 0
        %2534 = vmatpush2.bf16.msra.mxu0 0
        %2535 = vmatprep.subr.bf16.mxu0 0
        %2536 = vmatpush2.bf16.msra.mxu0 0
        %2537 = vmatprep.mubr.bf16.mxu0 0
        %2538 = vmatmul.mubr.bf16.gmra.mxu0 %v804
        %v2539 = vpop.f32.mrf.mxu0
        %v2540 = vadd.f32 0.0, %v2539
        %v2541 = vpop.f32.mrf.mxu0
        %v2542 = vadd.f32 0.0, %v2541
        %v2543 = vpop.f32.mrf.mxu0
        %v2544 = vpop.f32.mrf.mxu0
        %2545 = vdwg.mxu0
        %2546 = vmatprep.subr.bf16.mxu0 %v2064
        %2547 = vmatpush1.bf16.msra.mxu0 %v2063
        %2548 = vmatprep.subr.bf16.mxu0 %v2032
        %2549 = vmatpush1.bf16.msra.mxu0 %v2031
        %2550 = vmatprep.subr.bf16.mxu0 %v2000
        %2551 = vmatpush1.bf16.msra.mxu0 %v1999
        %2552 = vmatprep.subr.bf16.mxu0 %v1968
        %2553 = vmatpush1.bf16.msra.mxu0 %v1967
        %2554 = vmatprep.subr.bf16.mxu0 %v1936
        %2555 = vmatpush1.bf16.msra.mxu0 %v1935
        %2556 = vmatprep.subr.bf16.mxu0 %v1904
        %2557 = vmatpush1.bf16.msra.mxu0 %v1903
        %2558 = vmatprep.subr.bf16.mxu0 %v1872
        %2559 = vmatpush1.bf16.msra.mxu0 %v1871
        %2560 = vmatprep.subr.bf16.mxu0 %v1840
        %2561 = vmatpush1.bf16.msra.mxu0 %v1839
        %2562 = vmatprep.subr.bf16.mxu0 0
        %2563 = vmatpush2.bf16.msra.mxu0 0
        %2564 = vmatprep.subr.bf16.mxu0 0
        %2565 = vmatpush2.bf16.msra.mxu0 0
        %2566 = vmatprep.subr.bf16.mxu0 0
        %2567 = vmatpush2.bf16.msra.mxu0 0
        %2568 = vmatprep.subr.bf16.mxu0 0
        %2569 = vmatpush2.bf16.msra.mxu0 0
        %2570 = vmatprep.subr.bf16.mxu0 0
        %2571 = vmatpush2.bf16.msra.mxu0 0
        %2572 = vmatprep.subr.bf16.mxu0 0
        %2573 = vmatpush2.bf16.msra.mxu0 0
        %2574 = vmatprep.subr.bf16.mxu0 0
        %2575 = vmatpush2.bf16.msra.mxu0 0
        %2576 = vmatprep.subr.bf16.mxu0 0
        %2577 = vmatpush2.bf16.msra.mxu0 0
        %2578 = vmatprep.mubr.bf16.mxu0 0
        %2579 = vmatmul.mubr.bf16.gmra.mxu0 %v804
        %v2580 = vpop.f32.mrf.mxu0
        %v2581 = vadd.f32 0.0, %v2580
        %v2582 = vpop.f32.mrf.mxu0
        %v2583 = vadd.f32 0.0, %v2582
        %v2584 = vpop.f32.mrf.mxu0
        %v2585 = vpop.f32.mrf.mxu0
        %2586 = vdwg.mxu0
        %2587 = vmatprep.subr.bf16.mxu0 %v2066
        %2588 = vmatpush1.bf16.msra.mxu0 %v2065
        %2589 = vmatprep.subr.bf16.mxu0 %v2034
        %2590 = vmatpush1.bf16.msra.mxu0 %v2033
        %2591 = vmatprep.subr.bf16.mxu0 %v2002
        %2592 = vmatpush1.bf16.msra.mxu0 %v2001
        %2593 = vmatprep.subr.bf16.mxu0 %v1970
        %2594 = vmatpush1.bf16.msra.mxu0 %v1969
        %2595 = vmatprep.subr.bf16.mxu0 %v1938
        %2596 = vmatpush1.bf16.msra.mxu0 %v1937
        %2597 = vmatprep.subr.bf16.mxu0 %v1906
        %2598 = vmatpush1.bf16.msra.mxu0 %v1905
        %2599 = vmatprep.subr.bf16.mxu0 %v1874
        %2600 = vmatpush1.bf16.msra.mxu0 %v1873
        %2601 = vmatprep.subr.bf16.mxu0 %v1842
        %2602 = vmatpush1.bf16.msra.mxu0 %v1841
        %2603 = vmatprep.subr.bf16.mxu0 0
        %2604 = vmatpush2.bf16.msra.mxu0 0
        %2605 = vmatprep.subr.bf16.mxu0 0
        %2606 = vmatpush2.bf16.msra.mxu0 0
        %2607 = vmatprep.subr.bf16.mxu0 0
        %2608 = vmatpush2.bf16.msra.mxu0 0
        %2609 = vmatprep.subr.bf16.mxu0 0
        %2610 = vmatpush2.bf16.msra.mxu0 0
        %2611 = vmatprep.subr.bf16.mxu0 0
        %2612 = vmatpush2.bf16.msra.mxu0 0
        %2613 = vmatprep.subr.bf16.mxu0 0
        %2614 = vmatpush2.bf16.msra.mxu0 0
        %2615 = vmatprep.subr.bf16.mxu0 0
        %2616 = vmatpush2.bf16.msra.mxu0 0
        %2617 = vmatprep.subr.bf16.mxu0 0
        %2618 = vmatpush2.bf16.msra.mxu0 0
        %2619 = vmatprep.mubr.bf16.mxu0 0
        %2620 = vmatmul.mubr.bf16.gmra.mxu0 %v804
        %v2621 = vpop.f32.mrf.mxu0
        %v2622 = vadd.f32 0.0, %v2621
        %v2623 = vpop.f32.mrf.mxu0
        %v2624 = vadd.f32 0.0, %v2623
        %v2625 = vpop.f32.mrf.mxu0
        %v2626 = vpop.f32.mrf.mxu0
        %2627 = vdwg.mxu0
        %2628 = vmatprep.subr.bf16.mxu0 %v2068
        %2629 = vmatpush1.bf16.msra.mxu0 %v2067
        %2630 = vmatprep.subr.bf16.mxu0 %v2036
        %2631 = vmatpush1.bf16.msra.mxu0 %v2035
        %2632 = vmatprep.subr.bf16.mxu0 %v2004
        %2633 = vmatpush1.bf16.msra.mxu0 %v2003
        %2634 = vmatprep.subr.bf16.mxu0 %v1972
        %2635 = vmatpush1.bf16.msra.mxu0 %v1971
        %2636 = vmatprep.subr.bf16.mxu0 %v1940
        %2637 = vmatpush1.bf16.msra.mxu0 %v1939
        %2638 = vmatprep.subr.bf16.mxu0 %v1908
        %2639 = vmatpush1.bf16.msra.mxu0 %v1907
        %2640 = vmatprep.subr.bf16.mxu0 %v1876
        %2641 = vmatpush1.bf16.msra.mxu0 %v1875
        %2642 = vmatprep.subr.bf16.mxu0 %v1844
        %2643 = vmatpush1.bf16.msra.mxu0 %v1843
        %2644 = vmatprep.subr.bf16.mxu0 0
        %2645 = vmatpush2.bf16.msra.mxu0 0
        %2646 = vmatprep.subr.bf16.mxu0 0
        %2647 = vmatpush2.bf16.msra.mxu0 0
        %2648 = vmatprep.subr.bf16.mxu0 0
        %2649 = vmatpush2.bf16.msra.mxu0 0
        %2650 = vmatprep.subr.bf16.mxu0 0
        %2651 = vmatpush2.bf16.msra.mxu0 0
        %2652 = vmatprep.subr.bf16.mxu0 0
        %2653 = vmatpush2.bf16.msra.mxu0 0
        %2654 = vmatprep.subr.bf16.mxu0 0
        %2655 = vmatpush2.bf16.msra.mxu0 0
        %2656 = vmatprep.subr.bf16.mxu0 0
        %2657 = vmatpush2.bf16.msra.mxu0 0
        %2658 = vmatprep.subr.bf16.mxu0 0
        %2659 = vmatpush2.bf16.msra.mxu0 0
        %2660 = vmatprep.mubr.bf16.mxu0 0
        %2661 = vmatmul.mubr.bf16.gmra.mxu0 %v804
        %v2662 = vpop.f32.mrf.mxu0
        %v2663 = vadd.f32 0.0, %v2662
        %v2664 = vpop.f32.mrf.mxu0
        %v2665 = vadd.f32 0.0, %v2664
        %v2666 = vpop.f32.mrf.mxu0
        %v2667 = vpop.f32.mrf.mxu0
        %2668 = vdwg.mxu0
        %2669 = vmatprep.subr.bf16.mxu0 %v2070
        %2670 = vmatpush1.bf16.msra.mxu0 %v2069
        %2671 = vmatprep.subr.bf16.mxu0 %v2038
        %2672 = vmatpush1.bf16.msra.mxu0 %v2037
        %2673 = vmatprep.subr.bf16.mxu0 %v2006
        %2674 = vmatpush1.bf16.msra.mxu0 %v2005
        %2675 = vmatprep.subr.bf16.mxu0 %v1974
        %2676 = vmatpush1.bf16.msra.mxu0 %v1973
        %2677 = vmatprep.subr.bf16.mxu0 %v1942
        %2678 = vmatpush1.bf16.msra.mxu0 %v1941
        %2679 = vmatprep.subr.bf16.mxu0 %v1910
        %2680 = vmatpush1.bf16.msra.mxu0 %v1909
        %2681 = vmatprep.subr.bf16.mxu0 %v1878
        %2682 = vmatpush1.bf16.msra.mxu0 %v1877
        %2683 = vmatprep.subr.bf16.mxu0 %v1846
        %2684 = vmatpush1.bf16.msra.mxu0 %v1845
        %2685 = vmatprep.subr.bf16.mxu0 0
        %2686 = vmatpush2.bf16.msra.mxu0 0
        %2687 = vmatprep.subr.bf16.mxu0 0
        %2688 = vmatpush2.bf16.msra.mxu0 0
        %2689 = vmatprep.subr.bf16.mxu0 0
        %2690 = vmatpush2.bf16.msra.mxu0 0
        %2691 = vmatprep.subr.bf16.mxu0 0
        %2692 = vmatpush2.bf16.msra.mxu0 0
        %2693 = vmatprep.subr.bf16.mxu0 0
        %2694 = vmatpush2.bf16.msra.mxu0 0
        %2695 = vmatprep.subr.bf16.mxu0 0
        %2696 = vmatpush2.bf16.msra.mxu0 0
        %2697 = vmatprep.subr.bf16.mxu0 0
        %2698 = vmatpush2.bf16.msra.mxu0 0
        %2699 = vmatprep.subr.bf16.mxu0 0
        %2700 = vmatpush2.bf16.msra.mxu0 0
        %2701 = vmatprep.mubr.bf16.mxu0 0
        %2702 = vmatmul.mubr.bf16.gmra.mxu0 %v804
        %v2703 = vpop.f32.mrf.mxu0
        %v2704 = vadd.f32 0.0, %v2703
        %v2705 = vpop.f32.mrf.mxu0
        %v2706 = vadd.f32 0.0, %v2705
        %v2707 = vpop.f32.mrf.mxu0
        %v2708 = vpop.f32.mrf.mxu0
        %2709 = vdwg.mxu0
        %2710 = vmatprep.subr.bf16.mxu0 %v2072
        %2711 = vmatpush1.bf16.msra.mxu0 %v2071
        %2712 = vmatprep.subr.bf16.mxu0 %v2040
        %2713 = vmatpush1.bf16.msra.mxu0 %v2039
        %2714 = vmatprep.subr.bf16.mxu0 %v2008
        %2715 = vmatpush1.bf16.msra.mxu0 %v2007
        %2716 = vmatprep.subr.bf16.mxu0 %v1976
        %2717 = vmatpush1.bf16.msra.mxu0 %v1975
        %2718 = vmatprep.subr.bf16.mxu0 %v1944
        %2719 = vmatpush1.bf16.msra.mxu0 %v1943
        %2720 = vmatprep.subr.bf16.mxu0 %v1912
        %2721 = vmatpush1.bf16.msra.mxu0 %v1911
        %2722 = vmatprep.subr.bf16.mxu0 %v1880
        %2723 = vmatpush1.bf16.msra.mxu0 %v1879
        %2724 = vmatprep.subr.bf16.mxu0 %v1848
        %2725 = vmatpush1.bf16.msra.mxu0 %v1847
        %2726 = vmatprep.subr.bf16.mxu0 0
        %2727 = vmatpush2.bf16.msra.mxu0 0
        %2728 = vmatprep.subr.bf16.mxu0 0
        %2729 = vmatpush2.bf16.msra.mxu0 0
        %2730 = vmatprep.subr.bf16.mxu0 0
        %2731 = vmatpush2.bf16.msra.mxu0 0
        %2732 = vmatprep.subr.bf16.mxu0 0
        %2733 = vmatpush2.bf16.msra.mxu0 0
        %2734 = vmatprep.subr.bf16.mxu0 0
        %2735 = vmatpush2.bf16.msra.mxu0 0
        %2736 = vmatprep.subr.bf16.mxu0 0
        %2737 = vmatpush2.bf16.msra.mxu0 0
        %2738 = vmatprep.subr.bf16.mxu0 0
        %2739 = vmatpush2.bf16.msra.mxu0 0
        %2740 = vmatprep.subr.bf16.mxu0 0
        %2741 = vmatpush2.bf16.msra.mxu0 0
        %2742 = vmatprep.mubr.bf16.mxu0 0
        %2743 = vmatmul.mubr.bf16.gmra.mxu0 %v804
        %v2744 = vpop.f32.mrf.mxu0
        %v2745 = vadd.f32 0.0, %v2744
        %v2746 = vpop.f32.mrf.mxu0
        %v2747 = vadd.f32 0.0, %v2746
        %v2748 = vpop.f32.mrf.mxu0
        %v2749 = vpop.f32.mrf.mxu0
        %2750 = vdwg.mxu0
        %2751 = vmatprep.subr.bf16.mxu0 %v2074
        %2752 = vmatpush1.bf16.msra.mxu0 %v2073
        %2753 = vmatprep.subr.bf16.mxu0 %v2042
        %2754 = vmatpush1.bf16.msra.mxu0 %v2041
        %2755 = vmatprep.subr.bf16.mxu0 %v2010
        %2756 = vmatpush1.bf16.msra.mxu0 %v2009
        %2757 = vmatprep.subr.bf16.mxu0 %v1978
        %2758 = vmatpush1.bf16.msra.mxu0 %v1977
        %2759 = vmatprep.subr.bf16.mxu0 %v1946
        %2760 = vmatpush1.bf16.msra.mxu0 %v1945
        %2761 = vmatprep.subr.bf16.mxu0 %v1914
        %2762 = vmatpush1.bf16.msra.mxu0 %v1913
        %2763 = vmatprep.subr.bf16.mxu0 %v1882
        %2764 = vmatpush1.bf16.msra.mxu0 %v1881
        %2765 = vmatprep.subr.bf16.mxu0 %v1850
        %2766 = vmatpush1.bf16.msra.mxu0 %v1849
        %2767 = vmatprep.subr.bf16.mxu0 0
        %2768 = vmatpush2.bf16.msra.mxu0 0
        %2769 = vmatprep.subr.bf16.mxu0 0
        %2770 = vmatpush2.bf16.msra.mxu0 0
        %2771 = vmatprep.subr.bf16.mxu0 0
        %2772 = vmatpush2.bf16.msra.mxu0 0
        %2773 = vmatprep.subr.bf16.mxu0 0
        %2774 = vmatpush2.bf16.msra.mxu0 0
        %2775 = vmatprep.subr.bf16.mxu0 0
        %2776 = vmatpush2.bf16.msra.mxu0 0
        %2777 = vmatprep.subr.bf16.mxu0 0
        %2778 = vmatpush2.bf16.msra.mxu0 0
        %2779 = vmatprep.subr.bf16.mxu0 0
        %2780 = vmatpush2.bf16.msra.mxu0 0
        %2781 = vmatprep.subr.bf16.mxu0 0
        %2782 = vmatpush2.bf16.msra.mxu0 0
        %2783 = vmatprep.mubr.bf16.mxu0 0
        %2784 = vmatmul.mubr.bf16.gmra.mxu0 %v804
        %v2785 = vpop.f32.mrf.mxu0
        %v2786 = vadd.f32 0.0, %v2785
        %v2787 = vpop.f32.mrf.mxu0
        %v2788 = vadd.f32 0.0, %v2787
        %v2789 = vpop.f32.mrf.mxu0
        %v2790 = vpop.f32.mrf.mxu0
        %2791 = vdwg.mxu0
        %2792 = vmatprep.subr.bf16.mxu0 %v2076
        %2793 = vmatpush1.bf16.msra.mxu0 %v2075
        %2794 = vmatprep.subr.bf16.mxu0 %v2044
        %2795 = vmatpush1.bf16.msra.mxu0 %v2043
        %2796 = vmatprep.subr.bf16.mxu0 %v2012
        %2797 = vmatpush1.bf16.msra.mxu0 %v2011
        %2798 = vmatprep.subr.bf16.mxu0 %v1980
        %2799 = vmatpush1.bf16.msra.mxu0 %v1979
        %2800 = vmatprep.subr.bf16.mxu0 %v1948
        %2801 = vmatpush1.bf16.msra.mxu0 %v1947
        %2802 = vmatprep.subr.bf16.mxu0 %v1916
        %2803 = vmatpush1.bf16.msra.mxu0 %v1915
        %2804 = vmatprep.subr.bf16.mxu0 %v1884
        %2805 = vmatpush1.bf16.msra.mxu0 %v1883
        %2806 = vmatprep.subr.bf16.mxu0 %v1852
        %2807 = vmatpush1.bf16.msra.mxu0 %v1851
        %2808 = vmatprep.subr.bf16.mxu0 0
        %2809 = vmatpush2.bf16.msra.mxu0 0
        %2810 = vmatprep.subr.bf16.mxu0 0
        %2811 = vmatpush2.bf16.msra.mxu0 0
        %2812 = vmatprep.subr.bf16.mxu0 0
        %2813 = vmatpush2.bf16.msra.mxu0 0
        %2814 = vmatprep.subr.bf16.mxu0 0
        %2815 = vmatpush2.bf16.msra.mxu0 0
        %2816 = vmatprep.subr.bf16.mxu0 0
        %2817 = vmatpush2.bf16.msra.mxu0 0
        %2818 = vmatprep.subr.bf16.mxu0 0
        %2819 = vmatpush2.bf16.msra.mxu0 0
        %2820 = vmatprep.subr.bf16.mxu0 0
        %2821 = vmatpush2.bf16.msra.mxu0 0
        %2822 = vmatprep.subr.bf16.mxu0 0
        %2823 = vmatpush2.bf16.msra.mxu0 0
        %2824 = vmatprep.mubr.bf16.mxu0 0
        %2825 = vmatmul.mubr.bf16.gmra.mxu0 %v804
        %v2826 = vpop.f32.mrf.mxu0
        %v2827 = vadd.f32 0.0, %v2826
        %v2828 = vpop.f32.mrf.mxu0
        %v2829 = vadd.f32 0.0, %v2828
        %v2830 = vpop.f32.mrf.mxu0
        %v2831 = vpop.f32.mrf.mxu0
        %2832 = vdwg.mxu0
        %2833 = vmatprep.subr.bf16.mxu0 %v2078
        %2834 = vmatpush1.bf16.msra.mxu0 %v2077
        %2835 = vmatprep.subr.bf16.mxu0 %v2046
        %2836 = vmatpush1.bf16.msra.mxu0 %v2045
        %2837 = vmatprep.subr.bf16.mxu0 %v2014
        %2838 = vmatpush1.bf16.msra.mxu0 %v2013
        %2839 = vmatprep.subr.bf16.mxu0 %v1982
        %2840 = vmatpush1.bf16.msra.mxu0 %v1981
        %2841 = vmatprep.subr.bf16.mxu0 %v1950
        %2842 = vmatpush1.bf16.msra.mxu0 %v1949
        %2843 = vmatprep.subr.bf16.mxu0 %v1918
        %2844 = vmatpush1.bf16.msra.mxu0 %v1917
        %2845 = vmatprep.subr.bf16.mxu0 %v1886
        %2846 = vmatpush1.bf16.msra.mxu0 %v1885
        %2847 = vmatprep.subr.bf16.mxu0 %v1854
        %2848 = vmatpush1.bf16.msra.mxu0 %v1853
        %2849 = vmatprep.subr.bf16.mxu0 0
        %2850 = vmatpush2.bf16.msra.mxu0 0
        %2851 = vmatprep.subr.bf16.mxu0 0
        %2852 = vmatpush2.bf16.msra.mxu0 0
        %2853 = vmatprep.subr.bf16.mxu0 0
        %2854 = vmatpush2.bf16.msra.mxu0 0
        %2855 = vmatprep.subr.bf16.mxu0 0
        %2856 = vmatpush2.bf16.msra.mxu0 0
        %2857 = vmatprep.subr.bf16.mxu0 0
        %2858 = vmatpush2.bf16.msra.mxu0 0
        %2859 = vmatprep.subr.bf16.mxu0 0
        %2860 = vmatpush2.bf16.msra.mxu0 0
        %2861 = vmatprep.subr.bf16.mxu0 0
        %2862 = vmatpush2.bf16.msra.mxu0 0
        %2863 = vmatprep.subr.bf16.mxu0 0
        %2864 = vmatpush2.bf16.msra.mxu0 0
        %2865 = vmatprep.mubr.bf16.mxu0 0
        %2866 = vmatmul.mubr.bf16.gmra.mxu0 %v804
        %v2867 = vpop.f32.mrf.mxu0
        %v2868 = vadd.f32 0.0, %v2867
        %v2869 = vpop.f32.mrf.mxu0
        %v2870 = vadd.f32 0.0, %v2869
        %v2871 = vpop.f32.mrf.mxu0
        %v2872 = vpop.f32.mrf.mxu0
        %2873 = vdwg.mxu0
        %2874 = vmatprep.subr.bf16.mxu0 %v2080
        %2875 = vmatpush1.bf16.msra.mxu0 %v2079
        %2876 = vmatprep.subr.bf16.mxu0 %v2048
        %2877 = vmatpush1.bf16.msra.mxu0 %v2047
        %2878 = vmatprep.subr.bf16.mxu0 %v2016
        %2879 = vmatpush1.bf16.msra.mxu0 %v2015
        %2880 = vmatprep.subr.bf16.mxu0 %v1984
        %2881 = vmatpush1.bf16.msra.mxu0 %v1983
        %2882 = vmatprep.subr.bf16.mxu0 %v1952
        %2883 = vmatpush1.bf16.msra.mxu0 %v1951
        %2884 = vmatprep.subr.bf16.mxu0 %v1920
        %2885 = vmatpush1.bf16.msra.mxu0 %v1919
        %2886 = vmatprep.subr.bf16.mxu0 %v1888
        %2887 = vmatpush1.bf16.msra.mxu0 %v1887
        %2888 = vmatprep.subr.bf16.mxu0 %v1856
        %2889 = vmatpush1.bf16.msra.mxu0 %v1855
        %2890 = vmatprep.subr.bf16.mxu0 0
        %2891 = vmatpush2.bf16.msra.mxu0 0
        %2892 = vmatprep.subr.bf16.mxu0 0
        %2893 = vmatpush2.bf16.msra.mxu0 0
        %2894 = vmatprep.subr.bf16.mxu0 0
        %2895 = vmatpush2.bf16.msra.mxu0 0
        %2896 = vmatprep.subr.bf16.mxu0 0
        %2897 = vmatpush2.bf16.msra.mxu0 0
        %2898 = vmatprep.subr.bf16.mxu0 0
        %2899 = vmatpush2.bf16.msra.mxu0 0
        %2900 = vmatprep.subr.bf16.mxu0 0
        %2901 = vmatpush2.bf16.msra.mxu0 0
        %2902 = vmatprep.subr.bf16.mxu0 0
        %2903 = vmatpush2.bf16.msra.mxu0 0
        %2904 = vmatprep.subr.bf16.mxu0 0
        %2905 = vmatpush2.bf16.msra.mxu0 0
        %2906 = vmatprep.mubr.bf16.mxu0 0
        %2907 = vmatmul.mubr.bf16.gmra.mxu0 %v804
        %v2908 = vpop.f32.mrf.mxu0
        %v2909 = vadd.f32 0.0, %v2908
        %v2910 = vpop.f32.mrf.mxu0
        %v2911 = vadd.f32 0.0, %v2910
        %v2912 = vpop.f32.mrf.mxu0
        %v2913 = vpop.f32.mrf.mxu0
        %2914 = vdwg.mxu0
        %2915 = vmatprep.subr.bf16.mxu0 %v2082
        %2916 = vmatpush1.bf16.msra.mxu0 %v2081
        %2917 = vmatprep.subr.bf16.mxu0 %v2050
        %2918 = vmatpush1.bf16.msra.mxu0 %v2049
        %2919 = vmatprep.subr.bf16.mxu0 %v2018
        %2920 = vmatpush1.bf16.msra.mxu0 %v2017
        %2921 = vmatprep.subr.bf16.mxu0 %v1986
        %2922 = vmatpush1.bf16.msra.mxu0 %v1985
        %2923 = vmatprep.subr.bf16.mxu0 %v1954
        %2924 = vmatpush1.bf16.msra.mxu0 %v1953
        %2925 = vmatprep.subr.bf16.mxu0 %v1922
        %2926 = vmatpush1.bf16.msra.mxu0 %v1921
        %2927 = vmatprep.subr.bf16.mxu0 %v1890
        %2928 = vmatpush1.bf16.msra.mxu0 %v1889
        %2929 = vmatprep.subr.bf16.mxu0 %v1858
        %2930 = vmatpush1.bf16.msra.mxu0 %v1857
        %2931 = vmatprep.subr.bf16.mxu0 0
        %2932 = vmatpush2.bf16.msra.mxu0 0
        %2933 = vmatprep.subr.bf16.mxu0 0
        %2934 = vmatpush2.bf16.msra.mxu0 0
        %2935 = vmatprep.subr.bf16.mxu0 0
        %2936 = vmatpush2.bf16.msra.mxu0 0
        %2937 = vmatprep.subr.bf16.mxu0 0
        %2938 = vmatpush2.bf16.msra.mxu0 0
        %2939 = vmatprep.subr.bf16.mxu0 0
        %2940 = vmatpush2.bf16.msra.mxu0 0
        %2941 = vmatprep.subr.bf16.mxu0 0
        %2942 = vmatpush2.bf16.msra.mxu0 0
        %2943 = vmatprep.subr.bf16.mxu0 0
        %2944 = vmatpush2.bf16.msra.mxu0 0
        %2945 = vmatprep.subr.bf16.mxu0 0
        %2946 = vmatpush2.bf16.msra.mxu0 0
        %2947 = vmatprep.mubr.bf16.mxu0 0
        %2948 = vmatmul.mubr.bf16.gmra.mxu0 %v804
        %v2949 = vpop.f32.mrf.mxu0
        %v2950 = vadd.f32 0.0, %v2949
        %v2951 = vpop.f32.mrf.mxu0
        %v2952 = vadd.f32 0.0, %v2951
        %v2953 = vpop.f32.mrf.mxu0
        %v2954 = vpop.f32.mrf.mxu0
        %2955 = vdwg.mxu0
        %2956 = vmatprep.subr.bf16.mxu0 %v2084
        %2957 = vmatpush1.bf16.msra.mxu0 %v2083
        %2958 = vmatprep.subr.bf16.mxu0 %v2052
        %2959 = vmatpush1.bf16.msra.mxu0 %v2051
        %2960 = vmatprep.subr.bf16.mxu0 %v2020
        %2961 = vmatpush1.bf16.msra.mxu0 %v2019
        %2962 = vmatprep.subr.bf16.mxu0 %v1988
        %2963 = vmatpush1.bf16.msra.mxu0 %v1987
        %2964 = vmatprep.subr.bf16.mxu0 %v1956
        %2965 = vmatpush1.bf16.msra.mxu0 %v1955
        %2966 = vmatprep.subr.bf16.mxu0 %v1924
        %2967 = vmatpush1.bf16.msra.mxu0 %v1923
        %2968 = vmatprep.subr.bf16.mxu0 %v1892
        %2969 = vmatpush1.bf16.msra.mxu0 %v1891
        %2970 = vmatprep.subr.bf16.mxu0 %v1860
        %2971 = vmatpush1.bf16.msra.mxu0 %v1859
        %2972 = vmatprep.subr.bf16.mxu0 0
        %2973 = vmatpush2.bf16.msra.mxu0 0
        %2974 = vmatprep.subr.bf16.mxu0 0
        %2975 = vmatpush2.bf16.msra.mxu0 0
        %2976 = vmatprep.subr.bf16.mxu0 0
        %2977 = vmatpush2.bf16.msra.mxu0 0
        %2978 = vmatprep.subr.bf16.mxu0 0
        %2979 = vmatpush2.bf16.msra.mxu0 0
        %2980 = vmatprep.subr.bf16.mxu0 0
        %2981 = vmatpush2.bf16.msra.mxu0 0
        %2982 = vmatprep.subr.bf16.mxu0 0
        %2983 = vmatpush2.bf16.msra.mxu0 0
        %2984 = vmatprep.subr.bf16.mxu0 0
        %2985 = vmatpush2.bf16.msra.mxu0 0
        %2986 = vmatprep.subr.bf16.mxu0 0
        %2987 = vmatpush2.bf16.msra.mxu0 0
        %2988 = vmatprep.mubr.bf16.mxu0 0
        %2989 = vmatmul.mubr.bf16.gmra.mxu0 %v804
        %v2990 = vpop.f32.mrf.mxu0
        %v2991 = vadd.f32 0.0, %v2990
        %v2992 = vpop.f32.mrf.mxu0
        %v2993 = vadd.f32 0.0, %v2992
        %v2994 = vpop.f32.mrf.mxu0
        %v2995 = vpop.f32.mrf.mxu0
        %2996 = vdwg.mxu0
        %2997 = vst [vmem:[%s789] sm:$0xff] %v2376
        %2998 = vst [vmem:[%s789 + $0x8] sm:$0xff] %v2378
        %2999 = vst [vmem:[%s789 + $0x10] sm:$0xff] %v2417
        %3000 = vst [vmem:[%s789 + $0x18] sm:$0xff] %v2419
        %3001 = vst [vmem:[%s789 + $0x20] sm:$0xff] %v2458
        %3002 = vst [vmem:[%s789 + $0x28] sm:$0xff] %v2460
        %3003 = vst [vmem:[%s789 + $0x30] sm:$0xff] %v2499
        %3004 = vst [vmem:[%s789 + $0x38] sm:$0xff] %v2501
        %3005 = vst [vmem:[%s789 + $0x40] sm:$0xff] %v2540
        %3006 = vst [vmem:[%s789 + $0x48] sm:$0xff] %v2542
        %3007 = vst [vmem:[%s789 + $0x50] sm:$0xff] %v2581
        %3008 = vst [vmem:[%s789 + $0x58] sm:$0xff] %v2583
        %3009 = vst [vmem:[%s789 + $0x60] sm:$0xff] %v2622
        %3010 = vst [vmem:[%s789 + $0x68] sm:$0xff] %v2624
        %3011 = vst [vmem:[%s789 + $0x70] sm:$0xff] %v2663
        %3012 = vst [vmem:[%s789 + $0x78] sm:$0xff] %v2665
        %3013 = vst [vmem:[%s789 + $0x80] sm:$0xff] %v2704
        %3014 = vst [vmem:[%s789 + $0x88] sm:$0xff] %v2706
        %3015 = vst [vmem:[%s789 + $0x90] sm:$0xff] %v2745
        %3016 = vst [vmem:[%s789 + $0x98] sm:$0xff] %v2747
        %3017 = vst [vmem:[%s789 + $0xa0] sm:$0xff] %v2786
        %3018 = vst [vmem:[%s789 + $0xa8] sm:$0xff] %v2788
        %3019 = vst [vmem:[%s789 + $0xb0] sm:$0xff] %v2827
        %3020 = vst [vmem:[%s789 + $0xb8] sm:$0xff] %v2829
        %3021 = vst [vmem:[%s789 + $0xc0] sm:$0xff] %v2868
        %3022 = vst [vmem:[%s789 + $0xc8] sm:$0xff] %v2870
        %3023 = vst [vmem:[%s789 + $0xd0] sm:$0xff] %v2909
        %3024 = vst [vmem:[%s789 + $0xd8] sm:$0xff] %v2911
        %3025 = vst [vmem:[%s789 + $0xe0] sm:$0xff] %v2950
        %3026 = vst [vmem:[%s789 + $0xe8] sm:$0xff] %v2952
        %3027 = vst [vmem:[%s789 + $0xf0] sm:$0xff] %v2991
        %3028 = vst [vmem:[%s789 + $0xf8] sm:$0xff] %v2993
        %v3029 = vrot.slane %v2376, 4
        %v3030 = vadd.f32 %v2376, %v3029
        %v3031 = vrot.slane %v3030, 2
        %v3032 = vadd.f32 %v3030, %v3031
        %v3033 = vrot.slane %v3032, 1
        %v3034 = vadd.f32 %v3032, %v3033
        %v3035 = vrot.slane %v2378, 4
        %v3036 = vadd.f32 %v2378, %v3035
        %v3037 = vrot.slane %v3036, 2
        %v3038 = vadd.f32 %v3036, %v3037
        %v3039 = vrot.slane %v3038, 1
        %v3040 = vadd.f32 %v3038, %v3039
        %v3041 = vrot.slane %v2417, 4
        %v3042 = vadd.f32 %v2417, %v3041
        %v3043 = vrot.slane %v3042, 2
        %v3044 = vadd.f32 %v3042, %v3043
        %v3045 = vrot.slane %v3044, 1
        %v3046 = vadd.f32 %v3044, %v3045
        %v3047 = vrot.slane %v2419, 4
        %v3048 = vadd.f32 %v2419, %v3047
        %v3049 = vrot.slane %v3048, 2
        %v3050 = vadd.f32 %v3048, %v3049
        %v3051 = vrot.slane %v3050, 1
        %v3052 = vadd.f32 %v3050, %v3051
        %v3053 = vrot.slane %v2458, 4
        %v3054 = vadd.f32 %v2458, %v3053
        %v3055 = vrot.slane %v3054, 2
        %v3056 = vadd.f32 %v3054, %v3055
        %v3057 = vrot.slane %v3056, 1
        %v3058 = vadd.f32 %v3056, %v3057
        %v3059 = vrot.slane %v2460, 4
        %v3060 = vadd.f32 %v2460, %v3059
        %v3061 = vrot.slane %v3060, 2
        %v3062 = vadd.f32 %v3060, %v3061
        %v3063 = vrot.slane %v3062, 1
        %v3064 = vadd.f32 %v3062, %v3063
        %v3065 = vrot.slane %v2499, 4
        %v3066 = vadd.f32 %v2499, %v3065
        %v3067 = vrot.slane %v3066, 2
        %v3068 = vadd.f32 %v3066, %v3067
        %v3069 = vrot.slane %v3068, 1
        %v3070 = vadd.f32 %v3068, %v3069
        %v3071 = vrot.slane %v2501, 4
        %v3072 = vadd.f32 %v2501, %v3071
        %v3073 = vrot.slane %v3072, 2
        %v3074 = vadd.f32 %v3072, %v3073
        %v3075 = vrot.slane %v3074, 1
        %v3076 = vadd.f32 %v3074, %v3075
        %v3077 = vrot.slane %v2540, 4
        %v3078 = vadd.f32 %v2540, %v3077
        %v3079 = vrot.slane %v3078, 2
        %v3080 = vadd.f32 %v3078, %v3079
        %v3081 = vrot.slane %v3080, 1
        %v3082 = vadd.f32 %v3080, %v3081
        %v3083 = vrot.slane %v2542, 4
        %v3084 = vadd.f32 %v2542, %v3083
        %v3085 = vrot.slane %v3084, 2
        %v3086 = vadd.f32 %v3084, %v3085
        %v3087 = vrot.slane %v3086, 1
        %v3088 = vadd.f32 %v3086, %v3087
        %v3089 = vrot.slane %v2581, 4
        %v3090 = vadd.f32 %v2581, %v3089
        %v3091 = vrot.slane %v3090, 2
        %v3092 = vadd.f32 %v3090, %v3091
        %v3093 = vrot.slane %v3092, 1
        %v3094 = vadd.f32 %v3092, %v3093
        %v3095 = vrot.slane %v2583, 4
        %v3096 = vadd.f32 %v2583, %v3095
        %v3097 = vrot.slane %v3096, 2
        %v3098 = vadd.f32 %v3096, %v3097
        %v3099 = vrot.slane %v3098, 1
        %v3100 = vadd.f32 %v3098, %v3099
        %v3101 = vrot.slane %v2622, 4
        %v3102 = vadd.f32 %v2622, %v3101
        %v3103 = vrot.slane %v3102, 2
        %v3104 = vadd.f32 %v3102, %v3103
        %v3105 = vrot.slane %v3104, 1
        %v3106 = vadd.f32 %v3104, %v3105
        %v3107 = vrot.slane %v2624, 4
        %v3108 = vadd.f32 %v2624, %v3107
        %v3109 = vrot.slane %v3108, 2
        %v3110 = vadd.f32 %v3108, %v3109
        %v3111 = vrot.slane %v3110, 1
        %v3112 = vadd.f32 %v3110, %v3111
        %v3113 = vrot.slane %v2663, 4
        %v3114 = vadd.f32 %v2663, %v3113
        %v3115 = vrot.slane %v3114, 2
        %v3116 = vadd.f32 %v3114, %v3115
        %v3117 = vrot.slane %v3116, 1
        %v3118 = vadd.f32 %v3116, %v3117
        %v3119 = vrot.slane %v2665, 4
        %v3120 = vadd.f32 %v2665, %v3119
        %v3121 = vrot.slane %v3120, 2
        %v3122 = vadd.f32 %v3120, %v3121
        %v3123 = vrot.slane %v3122, 1
        %v3124 = vadd.f32 %v3122, %v3123
        %v3125 = vrot.slane %v2704, 4
        %v3126 = vadd.f32 %v2704, %v3125
        %v3127 = vrot.slane %v3126, 2
        %v3128 = vadd.f32 %v3126, %v3127
        %v3129 = vrot.slane %v3128, 1
        %v3130 = vadd.f32 %v3128, %v3129
        %v3131 = vrot.slane %v2706, 4
        %v3132 = vadd.f32 %v2706, %v3131
        %v3133 = vrot.slane %v3132, 2
        %v3134 = vadd.f32 %v3132, %v3133
        %v3135 = vrot.slane %v3134, 1
        %v3136 = vadd.f32 %v3134, %v3135
        %v3137 = vrot.slane %v2745, 4
        %v3138 = vadd.f32 %v2745, %v3137
        %v3139 = vrot.slane %v3138, 2
        %v3140 = vadd.f32 %v3138, %v3139
        %v3141 = vrot.slane %v3140, 1
        %v3142 = vadd.f32 %v3140, %v3141
        %v3143 = vrot.slane %v2747, 4
        %v3144 = vadd.f32 %v2747, %v3143
        %v3145 = vrot.slane %v3144, 2
        %v3146 = vadd.f32 %v3144, %v3145
        %v3147 = vrot.slane %v3146, 1
        %v3148 = vadd.f32 %v3146, %v3147
        %v3149 = vrot.slane %v2786, 4
        %v3150 = vadd.f32 %v2786, %v3149
        %v3151 = vrot.slane %v3150, 2
        %v3152 = vadd.f32 %v3150, %v3151
        %v3153 = vrot.slane %v3152, 1
        %v3154 = vadd.f32 %v3152, %v3153
        %v3155 = vrot.slane %v2788, 4
        %v3156 = vadd.f32 %v2788, %v3155
        %v3157 = vrot.slane %v3156, 2
        %v3158 = vadd.f32 %v3156, %v3157
        %v3159 = vrot.slane %v3158, 1
        %v3160 = vadd.f32 %v3158, %v3159
        %v3161 = vrot.slane %v2827, 4
        %v3162 = vadd.f32 %v2827, %v3161
        %v3163 = vrot.slane %v3162, 2
        %v3164 = vadd.f32 %v3162, %v3163
        %v3165 = vrot.slane %v3164, 1
        %v3166 = vadd.f32 %v3164, %v3165
        %v3167 = vrot.slane %v2829, 4
        %v3168 = vadd.f32 %v2829, %v3167
        %v3169 = vrot.slane %v3168, 2
        %v3170 = vadd.f32 %v3168, %v3169
        %v3171 = vrot.slane %v3170, 1
        %v3172 = vadd.f32 %v3170, %v3171
        %v3173 = vrot.slane %v2868, 4
        %v3174 = vadd.f32 %v2868, %v3173
        %v3175 = vrot.slane %v3174, 2
        %v3176 = vadd.f32 %v3174, %v3175
        %v3177 = vrot.slane %v3176, 1
        %v3178 = vadd.f32 %v3176, %v3177
        %v3179 = vrot.slane %v2870, 4
        %v3180 = vadd.f32 %v2870, %v3179
        %v3181 = vrot.slane %v3180, 2
        %v3182 = vadd.f32 %v3180, %v3181
        %v3183 = vrot.slane %v3182, 1
        %v3184 = vadd.f32 %v3182, %v3183
        %v3185 = vrot.slane %v2909, 4
        %v3186 = vadd.f32 %v2909, %v3185
        %v3187 = vrot.slane %v3186, 2
        %v3188 = vadd.f32 %v3186, %v3187
        %v3189 = vrot.slane %v3188, 1
        %v3190 = vadd.f32 %v3188, %v3189
        %v3191 = vrot.slane %v2911, 4
        %v3192 = vadd.f32 %v2911, %v3191
        %v3193 = vrot.slane %v3192, 2
        %v3194 = vadd.f32 %v3192, %v3193
        %v3195 = vrot.slane %v3194, 1
        %v3196 = vadd.f32 %v3194, %v3195
        %v3197 = vrot.slane %v2950, 4
        %v3198 = vadd.f32 %v2950, %v3197
        %v3199 = vrot.slane %v3198, 2
        %v3200 = vadd.f32 %v3198, %v3199
        %v3201 = vrot.slane %v3200, 1
        %v3202 = vadd.f32 %v3200, %v3201
        %v3203 = vrot.slane %v2952, 4
        %v3204 = vadd.f32 %v2952, %v3203
        %v3205 = vrot.slane %v3204, 2
        %v3206 = vadd.f32 %v3204, %v3205
        %v3207 = vrot.slane %v3206, 1
        %v3208 = vadd.f32 %v3206, %v3207
        %v3209 = vrot.slane %v2991, 4
        %v3210 = vadd.f32 %v2991, %v3209
        %v3211 = vrot.slane %v3210, 2
        %v3212 = vadd.f32 %v3210, %v3211
        %v3213 = vrot.slane %v3212, 1
        %v3214 = vadd.f32 %v3212, %v3213
        %v3215 = vrot.slane %v2993, 4
        %v3216 = vadd.f32 %v2993, %v3215
        %v3217 = vrot.slane %v3216, 2
        %v3218 = vadd.f32 %v3216, %v3217
        %v3219 = vrot.slane %v3218, 1
        %v3220 = vadd.f32 %v3218, %v3219
        %v3253 = vcombine.low %v3034, %v3040
        %v3254 = vcombine.low %v3046, %v3052
        %v3255 = vcombine.low %v3058, %v3064
        %v3256 = vcombine.low %v3070, %v3076
        %v3258 = vunpack.c.l.s4 1966171168
        %v3259 = vunpack.c.0.s8 %v3258
        %v3260 = vlaneseq
        %v3261 = vshrl.u32 %v3260, 7
        %v3262 = vsub.s32 %v3259, %v3261
        %v3263 = vrot.slane %v3253, %v3262
        %v3265 = vunpack.c.l.s4 1966171168
        %v3266 = vunpack.c.0.s8 %v3265
        %v3267 = vlaneseq
        %v3268 = vshrl.u32 %v3267, 7
        %v3269 = vsub.s32 %v3266, %v3268
        %v3270 = vrot.slane %v3254, %v3269
        %v3272 = vunpack.c.l.s4 1966171168
        %v3273 = vunpack.c.0.s8 %v3272
        %v3274 = vlaneseq
        %v3275 = vshrl.u32 %v3274, 7
        %v3276 = vsub.s32 %v3273, %v3275
        %v3277 = vrot.slane %v3255, %v3276
        %v3279 = vunpack.c.l.s4 1966171168
        %v3280 = vunpack.c.0.s8 %v3279
        %v3281 = vlaneseq
        %v3282 = vshrl.u32 %v3281, 7
        %v3283 = vsub.s32 %v3280, %v3282
        %v3284 = vrot.slane %v3256, %v3283
        %v3285 = vcombine.low %v3263, %v3270
        %v3286 = vcombine.low %v3277, %v3284
        %v3288 = vunpack.c.l.s4 1966171168
        %v3289 = vunpack.c.0.s8 %v3288
        %v3290 = vlaneseq
        %v3291 = vshrl.u32 %v3290, 7
        %v3292 = vsub.s32 %v3289, %v3291
        %v3293 = vrot.slane %v3285, %v3292
        %v3295 = vunpack.c.l.s4 1966171168
        %v3296 = vunpack.c.0.s8 %v3295
        %v3297 = vlaneseq
        %v3298 = vshrl.u32 %v3297, 7
        %v3299 = vsub.s32 %v3296, %v3298
        %v3300 = vrot.slane %v3286, %v3299
        %v3301 = vcombine.low %v3293, %v3300
        %v3302 = vcombine.low %v3082, %v3088
        %v3303 = vcombine.low %v3094, %v3100
        %v3304 = vcombine.low %v3106, %v3112
        %v3305 = vcombine.low %v3118, %v3124
        %v3307 = vunpack.c.l.s4 1966171168
        %v3308 = vunpack.c.0.s8 %v3307
        %v3309 = vlaneseq
        %v3310 = vshrl.u32 %v3309, 7
        %v3311 = vsub.s32 %v3308, %v3310
        %v3312 = vrot.slane %v3302, %v3311
        %v3314 = vunpack.c.l.s4 1966171168
        %v3315 = vunpack.c.0.s8 %v3314
        %v3316 = vlaneseq
        %v3317 = vshrl.u32 %v3316, 7
        %v3318 = vsub.s32 %v3315, %v3317
        %v3319 = vrot.slane %v3303, %v3318
        %v3321 = vunpack.c.l.s4 1966171168
        %v3322 = vunpack.c.0.s8 %v3321
        %v3323 = vlaneseq
        %v3324 = vshrl.u32 %v3323, 7
        %v3325 = vsub.s32 %v3322, %v3324
        %v3326 = vrot.slane %v3304, %v3325
        %v3328 = vunpack.c.l.s4 1966171168
        %v3329 = vunpack.c.0.s8 %v3328
        %v3330 = vlaneseq
        %v3331 = vshrl.u32 %v3330, 7
        %v3332 = vsub.s32 %v3329, %v3331
        %v3333 = vrot.slane %v3305, %v3332
        %v3334 = vcombine.low %v3312, %v3319
        %v3335 = vcombine.low %v3326, %v3333
        %v3337 = vunpack.c.l.s4 1966171168
        %v3338 = vunpack.c.0.s8 %v3337
        %v3339 = vlaneseq
        %v3340 = vshrl.u32 %v3339, 7
        %v3341 = vsub.s32 %v3338, %v3340
        %v3342 = vrot.slane %v3334, %v3341
        %v3344 = vunpack.c.l.s4 1966171168
        %v3345 = vunpack.c.0.s8 %v3344
        %v3346 = vlaneseq
        %v3347 = vshrl.u32 %v3346, 7
        %v3348 = vsub.s32 %v3345, %v3347
        %v3349 = vrot.slane %v3335, %v3348
        %v3350 = vcombine.low %v3342, %v3349
        %v3351 = vcombine.low %v3130, %v3136
        %v3352 = vcombine.low %v3142, %v3148
        %v3353 = vcombine.low %v3154, %v3160
        %v3354 = vcombine.low %v3166, %v3172
        %v3356 = vunpack.c.l.s4 1966171168
        %v3357 = vunpack.c.0.s8 %v3356
        %v3358 = vlaneseq
        %v3359 = vshrl.u32 %v3358, 7
        %v3360 = vsub.s32 %v3357, %v3359
        %v3361 = vrot.slane %v3351, %v3360
        %v3363 = vunpack.c.l.s4 1966171168
        %v3364 = vunpack.c.0.s8 %v3363
        %v3365 = vlaneseq
        %v3366 = vshrl.u32 %v3365, 7
        %v3367 = vsub.s32 %v3364, %v3366
        %v3368 = vrot.slane %v3352, %v3367
        %v3370 = vunpack.c.l.s4 1966171168
        %v3371 = vunpack.c.0.s8 %v3370
        %v3372 = vlaneseq
        %v3373 = vshrl.u32 %v3372, 7
        %v3374 = vsub.s32 %v3371, %v3373
        %v3375 = vrot.slane %v3353, %v3374
        %v3377 = vunpack.c.l.s4 1966171168
        %v3378 = vunpack.c.0.s8 %v3377
        %v3379 = vlaneseq
        %v3380 = vshrl.u32 %v3379, 7
        %v3381 = vsub.s32 %v3378, %v3380
        %v3382 = vrot.slane %v3354, %v3381
        %v3383 = vcombine.low %v3361, %v3368
        %v3384 = vcombine.low %v3375, %v3382
        %v3386 = vunpack.c.l.s4 1966171168
        %v3387 = vunpack.c.0.s8 %v3386
        %v3388 = vlaneseq
        %v3389 = vshrl.u32 %v3388, 7
        %v3390 = vsub.s32 %v3387, %v3389
        %v3391 = vrot.slane %v3383, %v3390
        %v3393 = vunpack.c.l.s4 1966171168
        %v3394 = vunpack.c.0.s8 %v3393
        %v3395 = vlaneseq
        %v3396 = vshrl.u32 %v3395, 7
        %v3397 = vsub.s32 %v3394, %v3396
        %v3398 = vrot.slane %v3384, %v3397
        %v3399 = vcombine.low %v3391, %v3398
        %v3400 = vcombine.low %v3178, %v3184
        %v3401 = vcombine.low %v3190, %v3196
        %v3402 = vcombine.low %v3202, %v3208
        %v3403 = vcombine.low %v3214, %v3220
        %v3405 = vunpack.c.l.s4 1966171168
        %v3406 = vunpack.c.0.s8 %v3405
        %v3407 = vlaneseq
        %v3408 = vshrl.u32 %v3407, 7
        %v3409 = vsub.s32 %v3406, %v3408
        %v3410 = vrot.slane %v3400, %v3409
        %v3412 = vunpack.c.l.s4 1966171168
        %v3413 = vunpack.c.0.s8 %v3412
        %v3414 = vlaneseq
        %v3415 = vshrl.u32 %v3414, 7
        %v3416 = vsub.s32 %v3413, %v3415
        %v3417 = vrot.slane %v3401, %v3416
        %v3419 = vunpack.c.l.s4 1966171168
        %v3420 = vunpack.c.0.s8 %v3419
        %v3421 = vlaneseq
        %v3422 = vshrl.u32 %v3421, 7
        %v3423 = vsub.s32 %v3420, %v3422
        %v3424 = vrot.slane %v3402, %v3423
        %v3426 = vunpack.c.l.s4 1966171168
        %v3427 = vunpack.c.0.s8 %v3426
        %v3428 = vlaneseq
        %v3429 = vshrl.u32 %v3428, 7
        %v3430 = vsub.s32 %v3427, %v3429
        %v3431 = vrot.slane %v3403, %v3430
        %v3432 = vcombine.low %v3410, %v3417
        %v3433 = vcombine.low %v3424, %v3431
        %v3435 = vunpack.c.l.s4 1966171168
        %v3436 = vunpack.c.0.s8 %v3435
        %v3437 = vlaneseq
        %v3438 = vshrl.u32 %v3437, 7
        %v3439 = vsub.s32 %v3436, %v3438
        %v3440 = vrot.slane %v3432, %v3439
        %v3442 = vunpack.c.l.s4 1966171168
        %v3443 = vunpack.c.0.s8 %v3442
        %v3444 = vlaneseq
        %v3445 = vshrl.u32 %v3444, 7
        %v3446 = vsub.s32 %v3443, %v3445
        %v3447 = vrot.slane %v3433, %v3446
        %v3448 = vcombine.low %v3440, %v3447
        %3453 = vst [vmem:[%s800] ss:$2 sm:$0xff] %v3301
        %s3454 = scalar_lea.vmem %s800, 16
        %3455 = vst [vmem:[%s3454] ss:$2 sm:$0xff] %v3350
        %s3456 = scalar_lea.vmem %s800, 32
        %3457 = vst [vmem:[%s3456] ss:$2 sm:$0xff] %v3399
        %s3458 = scalar_lea.vmem %s800, 48
        %3459 = vst [vmem:[%s3458] ss:$2 sm:$0xff] %v3448
        %v3460 = vmul.f32 %v2376, %v2376
        %v3461 = vmul.f32 %v2378, %v2378
        %v3462 = vmul.f32 %v2417, %v2417
        %v3463 = vmul.f32 %v2419, %v2419
        %v3464 = vmul.f32 %v2458, %v2458
        %v3465 = vmul.f32 %v2460, %v2460
        %v3466 = vmul.f32 %v2499, %v2499
        %v3467 = vmul.f32 %v2501, %v2501
        %v3468 = vmul.f32 %v2540, %v2540
        %v3469 = vmul.f32 %v2542, %v2542
        %v3470 = vmul.f32 %v2581, %v2581
        %v3471 = vmul.f32 %v2583, %v2583
        %v3472 = vmul.f32 %v2622, %v2622
        %v3473 = vmul.f32 %v2624, %v2624
        %v3474 = vmul.f32 %v2663, %v2663
        %v3475 = vmul.f32 %v2665, %v2665
        %v3476 = vmul.f32 %v2704, %v2704
        %v3477 = vmul.f32 %v2706, %v2706
        %v3478 = vmul.f32 %v2745, %v2745
        %v3479 = vmul.f32 %v2747, %v2747
        %v3480 = vmul.f32 %v2786, %v2786
        %v3481 = vmul.f32 %v2788, %v2788
        %v3482 = vmul.f32 %v2827, %v2827
        %v3483 = vmul.f32 %v2829, %v2829
        %v3484 = vmul.f32 %v2868, %v2868
        %v3485 = vmul.f32 %v2870, %v2870
        %v3486 = vmul.f32 %v2909, %v2909
        %v3487 = vmul.f32 %v2911, %v2911
        %v3488 = vmul.f32 %v2950, %v2950
        %v3489 = vmul.f32 %v2952, %v2952
        %v3490 = vmul.f32 %v2991, %v2991
        %v3491 = vmul.f32 %v2993, %v2993
        %v3492 = vrot.slane %v3460, 4
        %v3493 = vadd.f32 %v3460, %v3492
        %v3494 = vrot.slane %v3493, 2
        %v3495 = vadd.f32 %v3493, %v3494
        %v3496 = vrot.slane %v3495, 1
        %v3497 = vadd.f32 %v3495, %v3496
        %v3498 = vrot.slane %v3461, 4
        %v3499 = vadd.f32 %v3461, %v3498
        %v3500 = vrot.slane %v3499, 2
        %v3501 = vadd.f32 %v3499, %v3500
        %v3502 = vrot.slane %v3501, 1
        %v3503 = vadd.f32 %v3501, %v3502
        %v3504 = vrot.slane %v3462, 4
        %v3505 = vadd.f32 %v3462, %v3504
        %v3506 = vrot.slane %v3505, 2
        %v3507 = vadd.f32 %v3505, %v3506
        %v3508 = vrot.slane %v3507, 1
        %v3509 = vadd.f32 %v3507, %v3508
        %v3510 = vrot.slane %v3463, 4
        %v3511 = vadd.f32 %v3463, %v3510
        %v3512 = vrot.slane %v3511, 2
        %v3513 = vadd.f32 %v3511, %v3512
        %v3514 = vrot.slane %v3513, 1
        %v3515 = vadd.f32 %v3513, %v3514
        %v3516 = vrot.slane %v3464, 4
        %v3517 = vadd.f32 %v3464, %v3516
        %v3518 = vrot.slane %v3517, 2
        %v3519 = vadd.f32 %v3517, %v3518
        %v3520 = vrot.slane %v3519, 1
        %v3521 = vadd.f32 %v3519, %v3520
        %v3522 = vrot.slane %v3465, 4
        %v3523 = vadd.f32 %v3465, %v3522
        %v3524 = vrot.slane %v3523, 2
        %v3525 = vadd.f32 %v3523, %v3524
        %v3526 = vrot.slane %v3525, 1
        %v3527 = vadd.f32 %v3525, %v3526
        %v3528 = vrot.slane %v3466, 4
        %v3529 = vadd.f32 %v3466, %v3528
        %v3530 = vrot.slane %v3529, 2
        %v3531 = vadd.f32 %v3529, %v3530
        %v3532 = vrot.slane %v3531, 1
        %v3533 = vadd.f32 %v3531, %v3532
        %v3534 = vrot.slane %v3467, 4
        %v3535 = vadd.f32 %v3467, %v3534
        %v3536 = vrot.slane %v3535, 2
        %v3537 = vadd.f32 %v3535, %v3536
        %v3538 = vrot.slane %v3537, 1
        %v3539 = vadd.f32 %v3537, %v3538
        %v3540 = vrot.slane %v3468, 4
        %v3541 = vadd.f32 %v3468, %v3540
        %v3542 = vrot.slane %v3541, 2
        %v3543 = vadd.f32 %v3541, %v3542
        %v3544 = vrot.slane %v3543, 1
        %v3545 = vadd.f32 %v3543, %v3544
        %v3546 = vrot.slane %v3469, 4
        %v3547 = vadd.f32 %v3469, %v3546
        %v3548 = vrot.slane %v3547, 2
        %v3549 = vadd.f32 %v3547, %v3548
        %v3550 = vrot.slane %v3549, 1
        %v3551 = vadd.f32 %v3549, %v3550
        %v3552 = vrot.slane %v3470, 4
        %v3553 = vadd.f32 %v3470, %v3552
        %v3554 = vrot.slane %v3553, 2
        %v3555 = vadd.f32 %v3553, %v3554
        %v3556 = vrot.slane %v3555, 1
        %v3557 = vadd.f32 %v3555, %v3556
        %v3558 = vrot.slane %v3471, 4
        %v3559 = vadd.f32 %v3471, %v3558
        %v3560 = vrot.slane %v3559, 2
        %v3561 = vadd.f32 %v3559, %v3560
        %v3562 = vrot.slane %v3561, 1
        %v3563 = vadd.f32 %v3561, %v3562
        %v3564 = vrot.slane %v3472, 4
        %v3565 = vadd.f32 %v3472, %v3564
        %v3566 = vrot.slane %v3565, 2
        %v3567 = vadd.f32 %v3565, %v3566
        %v3568 = vrot.slane %v3567, 1
        %v3569 = vadd.f32 %v3567, %v3568
        %v3570 = vrot.slane %v3473, 4
        %v3571 = vadd.f32 %v3473, %v3570
        %v3572 = vrot.slane %v3571, 2
        %v3573 = vadd.f32 %v3571, %v3572
        %v3574 = vrot.slane %v3573, 1
        %v3575 = vadd.f32 %v3573, %v3574
        %v3576 = vrot.slane %v3474, 4
        %v3577 = vadd.f32 %v3474, %v3576
        %v3578 = vrot.slane %v3577, 2
        %v3579 = vadd.f32 %v3577, %v3578
        %v3580 = vrot.slane %v3579, 1
        %v3581 = vadd.f32 %v3579, %v3580
        %v3582 = vrot.slane %v3475, 4
        %v3583 = vadd.f32 %v3475, %v3582
        %v3584 = vrot.slane %v3583, 2
        %v3585 = vadd.f32 %v3583, %v3584
        %v3586 = vrot.slane %v3585, 1
        %v3587 = vadd.f32 %v3585, %v3586
        %v3588 = vrot.slane %v3476, 4
        %v3589 = vadd.f32 %v3476, %v3588
        %v3590 = vrot.slane %v3589, 2
        %v3591 = vadd.f32 %v3589, %v3590
        %v3592 = vrot.slane %v3591, 1
        %v3593 = vadd.f32 %v3591, %v3592
        %v3594 = vrot.slane %v3477, 4
        %v3595 = vadd.f32 %v3477, %v3594
        %v3596 = vrot.slane %v3595, 2
        %v3597 = vadd.f32 %v3595, %v3596
        %v3598 = vrot.slane %v3597, 1
        %v3599 = vadd.f32 %v3597, %v3598
        %v3600 = vrot.slane %v3478, 4
        %v3601 = vadd.f32 %v3478, %v3600
        %v3602 = vrot.slane %v3601, 2
        %v3603 = vadd.f32 %v3601, %v3602
        %v3604 = vrot.slane %v3603, 1
        %v3605 = vadd.f32 %v3603, %v3604
        %v3606 = vrot.slane %v3479, 4
        %v3607 = vadd.f32 %v3479, %v3606
        %v3608 = vrot.slane %v3607, 2
        %v3609 = vadd.f32 %v3607, %v3608
        %v3610 = vrot.slane %v3609, 1
        %v3611 = vadd.f32 %v3609, %v3610
        %v3612 = vrot.slane %v3480, 4
        %v3613 = vadd.f32 %v3480, %v3612
        %v3614 = vrot.slane %v3613, 2
        %v3615 = vadd.f32 %v3613, %v3614
        %v3616 = vrot.slane %v3615, 1
        %v3617 = vadd.f32 %v3615, %v3616
        %v3618 = vrot.slane %v3481, 4
        %v3619 = vadd.f32 %v3481, %v3618
        %v3620 = vrot.slane %v3619, 2
        %v3621 = vadd.f32 %v3619, %v3620
        %v3622 = vrot.slane %v3621, 1
        %v3623 = vadd.f32 %v3621, %v3622
        %v3624 = vrot.slane %v3482, 4
        %v3625 = vadd.f32 %v3482, %v3624
        %v3626 = vrot.slane %v3625, 2
        %v3627 = vadd.f32 %v3625, %v3626
        %v3628 = vrot.slane %v3627, 1
        %v3629 = vadd.f32 %v3627, %v3628
        %v3630 = vrot.slane %v3483, 4
        %v3631 = vadd.f32 %v3483, %v3630
        %v3632 = vrot.slane %v3631, 2
        %v3633 = vadd.f32 %v3631, %v3632
        %v3634 = vrot.slane %v3633, 1
        %v3635 = vadd.f32 %v3633, %v3634
        %v3636 = vrot.slane %v3484, 4
        %v3637 = vadd.f32 %v3484, %v3636
        %v3638 = vrot.slane %v3637, 2
        %v3639 = vadd.f32 %v3637, %v3638
        %v3640 = vrot.slane %v3639, 1
        %v3641 = vadd.f32 %v3639, %v3640
        %v3642 = vrot.slane %v3485, 4
        %v3643 = vadd.f32 %v3485, %v3642
        %v3644 = vrot.slane %v3643, 2
        %v3645 = vadd.f32 %v3643, %v3644
        %v3646 = vrot.slane %v3645, 1
        %v3647 = vadd.f32 %v3645, %v3646
        %v3648 = vrot.slane %v3486, 4
        %v3649 = vadd.f32 %v3486, %v3648
        %v3650 = vrot.slane %v3649, 2
        %v3651 = vadd.f32 %v3649, %v3650
        %v3652 = vrot.slane %v3651, 1
        %v3653 = vadd.f32 %v3651, %v3652
        %v3654 = vrot.slane %v3487, 4
        %v3655 = vadd.f32 %v3487, %v3654
        %v3656 = vrot.slane %v3655, 2
        %v3657 = vadd.f32 %v3655, %v3656
        %v3658 = vrot.slane %v3657, 1
        %v3659 = vadd.f32 %v3657, %v3658
        %v3660 = vrot.slane %v3488, 4
        %v3661 = vadd.f32 %v3488, %v3660
        %v3662 = vrot.slane %v3661, 2
        %v3663 = vadd.f32 %v3661, %v3662
        %v3664 = vrot.slane %v3663, 1
        %v3665 = vadd.f32 %v3663, %v3664
        %v3666 = vrot.slane %v3489, 4
        %v3667 = vadd.f32 %v3489, %v3666
        %v3668 = vrot.slane %v3667, 2
        %v3669 = vadd.f32 %v3667, %v3668
        %v3670 = vrot.slane %v3669, 1
        %v3671 = vadd.f32 %v3669, %v3670
        %v3672 = vrot.slane %v3490, 4
        %v3673 = vadd.f32 %v3490, %v3672
        %v3674 = vrot.slane %v3673, 2
        %v3675 = vadd.f32 %v3673, %v3674
        %v3676 = vrot.slane %v3675, 1
        %v3677 = vadd.f32 %v3675, %v3676
        %v3678 = vrot.slane %v3491, 4
        %v3679 = vadd.f32 %v3491, %v3678
        %v3680 = vrot.slane %v3679, 2
        %v3681 = vadd.f32 %v3679, %v3680
        %v3682 = vrot.slane %v3681, 1
        %v3683 = vadd.f32 %v3681, %v3682
        %v3716 = vcombine.low %v3497, %v3503
        %v3717 = vcombine.low %v3509, %v3515
        %v3718 = vcombine.low %v3521, %v3527
        %v3719 = vcombine.low %v3533, %v3539
        %v3721 = vunpack.c.l.s4 1966171168
        %v3722 = vunpack.c.0.s8 %v3721
        %v3723 = vlaneseq
        %v3724 = vshrl.u32 %v3723, 7
        %v3725 = vsub.s32 %v3722, %v3724
        %v3726 = vrot.slane %v3716, %v3725
        %v3728 = vunpack.c.l.s4 1966171168
        %v3729 = vunpack.c.0.s8 %v3728
        %v3730 = vlaneseq
        %v3731 = vshrl.u32 %v3730, 7
        %v3732 = vsub.s32 %v3729, %v3731
        %v3733 = vrot.slane %v3717, %v3732
        %v3735 = vunpack.c.l.s4 1966171168
        %v3736 = vunpack.c.0.s8 %v3735
        %v3737 = vlaneseq
        %v3738 = vshrl.u32 %v3737, 7
        %v3739 = vsub.s32 %v3736, %v3738
        %v3740 = vrot.slane %v3718, %v3739
        %v3742 = vunpack.c.l.s4 1966171168
        %v3743 = vunpack.c.0.s8 %v3742
        %v3744 = vlaneseq
        %v3745 = vshrl.u32 %v3744, 7
        %v3746 = vsub.s32 %v3743, %v3745
        %v3747 = vrot.slane %v3719, %v3746
        %v3748 = vcombine.low %v3726, %v3733
        %v3749 = vcombine.low %v3740, %v3747
        %v3751 = vunpack.c.l.s4 1966171168
        %v3752 = vunpack.c.0.s8 %v3751
        %v3753 = vlaneseq
        %v3754 = vshrl.u32 %v3753, 7
        %v3755 = vsub.s32 %v3752, %v3754
        %v3756 = vrot.slane %v3748, %v3755
        %v3758 = vunpack.c.l.s4 1966171168
        %v3759 = vunpack.c.0.s8 %v3758
        %v3760 = vlaneseq
        %v3761 = vshrl.u32 %v3760, 7
        %v3762 = vsub.s32 %v3759, %v3761
        %v3763 = vrot.slane %v3749, %v3762
        %v3764 = vcombine.low %v3756, %v3763
        %v3765 = vcombine.low %v3545, %v3551
        %v3766 = vcombine.low %v3557, %v3563
        %v3767 = vcombine.low %v3569, %v3575
        %v3768 = vcombine.low %v3581, %v3587
        %v3770 = vunpack.c.l.s4 1966171168
        %v3771 = vunpack.c.0.s8 %v3770
        %v3772 = vlaneseq
        %v3773 = vshrl.u32 %v3772, 7
        %v3774 = vsub.s32 %v3771, %v3773
        %v3775 = vrot.slane %v3765, %v3774
        %v3777 = vunpack.c.l.s4 1966171168
        %v3778 = vunpack.c.0.s8 %v3777
        %v3779 = vlaneseq
        %v3780 = vshrl.u32 %v3779, 7
        %v3781 = vsub.s32 %v3778, %v3780
        %v3782 = vrot.slane %v3766, %v3781
        %v3784 = vunpack.c.l.s4 1966171168
        %v3785 = vunpack.c.0.s8 %v3784
        %v3786 = vlaneseq
        %v3787 = vshrl.u32 %v3786, 7
        %v3788 = vsub.s32 %v3785, %v3787
        %v3789 = vrot.slane %v3767, %v3788
        %v3791 = vunpack.c.l.s4 1966171168
        %v3792 = vunpack.c.0.s8 %v3791
        %v3793 = vlaneseq
        %v3794 = vshrl.u32 %v3793, 7
        %v3795 = vsub.s32 %v3792, %v3794
        %v3796 = vrot.slane %v3768, %v3795
        %v3797 = vcombine.low %v3775, %v3782
        %v3798 = vcombine.low %v3789, %v3796
        %v3800 = vunpack.c.l.s4 1966171168
        %v3801 = vunpack.c.0.s8 %v3800
        %v3802 = vlaneseq
        %v3803 = vshrl.u32 %v3802, 7
        %v3804 = vsub.s32 %v3801, %v3803
        %v3805 = vrot.slane %v3797, %v3804
        %v3807 = vunpack.c.l.s4 1966171168
        %v3808 = vunpack.c.0.s8 %v3807
        %v3809 = vlaneseq
        %v3810 = vshrl.u32 %v3809, 7
        %v3811 = vsub.s32 %v3808, %v3810
        %v3812 = vrot.slane %v3798, %v3811
        %v3813 = vcombine.low %v3805, %v3812
        %v3814 = vcombine.low %v3593, %v3599
        %v3815 = vcombine.low %v3605, %v3611
        %v3816 = vcombine.low %v3617, %v3623
        %v3817 = vcombine.low %v3629, %v3635
        %v3819 = vunpack.c.l.s4 1966171168
        %v3820 = vunpack.c.0.s8 %v3819
        %v3821 = vlaneseq
        %v3822 = vshrl.u32 %v3821, 7
        %v3823 = vsub.s32 %v3820, %v3822
        %v3824 = vrot.slane %v3814, %v3823
        %v3826 = vunpack.c.l.s4 1966171168
        %v3827 = vunpack.c.0.s8 %v3826
        %v3828 = vlaneseq
        %v3829 = vshrl.u32 %v3828, 7
        %v3830 = vsub.s32 %v3827, %v3829
        %v3831 = vrot.slane %v3815, %v3830
        %v3833 = vunpack.c.l.s4 1966171168
        %v3834 = vunpack.c.0.s8 %v3833
        %v3835 = vlaneseq
        %v3836 = vshrl.u32 %v3835, 7
        %v3837 = vsub.s32 %v3834, %v3836
        %v3838 = vrot.slane %v3816, %v3837
        %v3840 = vunpack.c.l.s4 1966171168
        %v3841 = vunpack.c.0.s8 %v3840
        %v3842 = vlaneseq
        %v3843 = vshrl.u32 %v3842, 7
        %v3844 = vsub.s32 %v3841, %v3843
        %v3845 = vrot.slane %v3817, %v3844
        %v3846 = vcombine.low %v3824, %v3831
        %v3847 = vcombine.low %v3838, %v3845
        %v3849 = vunpack.c.l.s4 1966171168
        %v3850 = vunpack.c.0.s8 %v3849
        %v3851 = vlaneseq
        %v3852 = vshrl.u32 %v3851, 7
        %v3853 = vsub.s32 %v3850, %v3852
        %v3854 = vrot.slane %v3846, %v3853
        %v3856 = vunpack.c.l.s4 1966171168
        %v3857 = vunpack.c.0.s8 %v3856
        %v3858 = vlaneseq
        %v3859 = vshrl.u32 %v3858, 7
        %v3860 = vsub.s32 %v3857, %v3859
        %v3861 = vrot.slane %v3847, %v3860
        %v3862 = vcombine.low %v3854, %v3861
        %v3863 = vcombine.low %v3641, %v3647
        %v3864 = vcombine.low %v3653, %v3659
        %v3865 = vcombine.low %v3665, %v3671
        %v3866 = vcombine.low %v3677, %v3683
        %v3868 = vunpack.c.l.s4 1966171168
        %v3869 = vunpack.c.0.s8 %v3868
        %v3870 = vlaneseq
        %v3871 = vshrl.u32 %v3870, 7
        %v3872 = vsub.s32 %v3869, %v3871
        %v3873 = vrot.slane %v3863, %v3872
        %v3875 = vunpack.c.l.s4 1966171168
        %v3876 = vunpack.c.0.s8 %v3875
        %v3877 = vlaneseq
        %v3878 = vshrl.u32 %v3877, 7
        %v3879 = vsub.s32 %v3876, %v3878
        %v3880 = vrot.slane %v3864, %v3879
        %v3882 = vunpack.c.l.s4 1966171168
        %v3883 = vunpack.c.0.s8 %v3882
        %v3884 = vlaneseq
        %v3885 = vshrl.u32 %v3884, 7
        %v3886 = vsub.s32 %v3883, %v3885
        %v3887 = vrot.slane %v3865, %v3886
        %v3889 = vunpack.c.l.s4 1966171168
        %v3890 = vunpack.c.0.s8 %v3889
        %v3891 = vlaneseq
        %v3892 = vshrl.u32 %v3891, 7
        %v3893 = vsub.s32 %v3890, %v3892
        %v3894 = vrot.slane %v3866, %v3893
        %v3895 = vcombine.low %v3873, %v3880
        %v3896 = vcombine.low %v3887, %v3894
        %v3898 = vunpack.c.l.s4 1966171168
        %v3899 = vunpack.c.0.s8 %v3898
        %v3900 = vlaneseq
        %v3901 = vshrl.u32 %v3900, 7
        %v3902 = vsub.s32 %v3899, %v3901
        %v3903 = vrot.slane %v3895, %v3902
        %v3905 = vunpack.c.l.s4 1966171168
        %v3906 = vunpack.c.0.s8 %v3905
        %v3907 = vlaneseq
        %v3908 = vshrl.u32 %v3907, 7
        %v3909 = vsub.s32 %v3906, %v3908
        %v3910 = vrot.slane %v3896, %v3909
        %v3911 = vcombine.low %v3903, %v3910
        %s3916 = scalar_lea.vmem %s800, 1
        %3917 = vst [vmem:[%s3916] ss:$2 sm:$0xff] %v3764
        %s3918 = scalar_lea.vmem %s800, 17
        %3919 = vst [vmem:[%s3918] ss:$2 sm:$0xff] %v3813
        %s3920 = scalar_lea.vmem %s800, 33
        %3921 = vst [vmem:[%s3920] ss:$2 sm:$0xff] %v3862
        %s3922 = scalar_lea.vmem %s800, 49
        %3923 = vst [vmem:[%s3922] ss:$2 sm:$0xff] %v3911
        %s3924 = smul.u32 32, %s22
        %p3925 = scmp.lt.s32.totalorder %s20, 0
        %s3926 = scalar_select %p3925, %s20, 0
        %p3927 = scmp.lt.s32.totalorder %s21, 0
        %s3928 = scalar_select %p3927, %s21, 0
        %p3929 = scmp.lt.s32.totalorder %s3924, 63
        %s3930 = scalar_select %p3929, %s3924, 63
        %s3931 = smul.addr %s3928, 64
        %s3932 = sadd.s32 %s3930, %s3931
        %s3933 = smul.addr %s3926, 64
        %s3934 = sadd.s32 %s3932, %s3933
        %s3935 = smul.addr %s3934, 8
        %s3936 = scalar_lea.vmem %s2, %s3935
        %s3937 = sadd.s32 %s20, %s21
        %s3938 = smul.u32 32, %s22
        %p3939 = scmp.lt.s32.totalorder %s3937, 0
        %s3940 = scalar_select %p3939, %s3937, 0
        %p3941 = scmp.lt.s32.totalorder %s3938, 63
        %s3942 = scalar_select %p3941, %s3938, 63
        %s3943 = smul.addr %s3940, 64
        %s3944 = sadd.s32 %s3942, %s3943
        %s3945 = smul.addr %s3944, 2
        %s3946 = scalar_lea.vmem %s3, %s3945
        // Predicated region
        $region52: #{gen_forward.5} parent=46 // pred_check
          %p3947 = pneg %p112
        $region53: #{gen_forward.5} parent=46 // pred_check_branch
          %3949 = sbr.rel (%p3947) target = $region55
        $region54: #{gen_forward.5} parent=46 // pred_region
          %s3950 = smul.u32 32, %s22
        $region55: #{gen_forward.5} parent=46 // pred_fallthru
          _
        // Predicated region
        $region56: #{gen_forward.5} parent=46 // pred_check
          %p3951 = pneg %p142
        $region57: #{gen_forward.5} parent=46 // pred_check_branch
          %3953 = sbr.rel (%p3951) target = $region59
        $region58: #{gen_forward.5} parent=46 // pred_region
          %s3954 = sadd.s32 %s20, %s21
          %s3955 = smul.u32 32, %s22
        $region59: #{gen_forward.5} parent=46 // pred_fallthru
          _
      $region47: #{gen_forward.5} parent=5 // pred_fallthru
        _
      %p3956 = scmp.le.s32.totalorder 2, %s10
      // Predicated region
      $region60: #{gen_forward.5} parent=5 // pred_check
        %p3957 = pneg %p3956
      $region61: #{gen_forward.5} parent=5 // pred_check_branch
        %3959 = sbr.rel (%p3957) target = $region63
      $region62: #{gen_forward.5} parent=5 // pred_region
        %s3960 = ssub.s32 %s10, 2
        // Predicated region
        $region64: #{gen_forward.5} parent=62 // pred_check
          %p3961 = pneg %p118
        $region65: #{gen_forward.5} parent=62 // pred_check_branch
          %3963 = sbr.rel (%p3961) target = $region67
        $region66: #{gen_forward.5} parent=62 // pred_region
          %s3964 = smul.u32 32, %s25
          %p3965 = scmp.lt.s32.totalorder %s23, 0
          %s3966 = scalar_select %p3965, %s23, 0
          %p3967 = scmp.lt.s32.totalorder %s24, 0
          %s3968 = scalar_select %p3967, %s24, 0
          %p3969 = scmp.lt.s32.totalorder %s3964, 63
          %s3970 = scalar_select %p3969, %s3964, 63
          %s3971 = smul.addr %s3968, 64
          %s3972 = sadd.s32 %s3970, %s3971
          %s3973 = smul.addr %s3966, 64
          %s3974 = sadd.s32 %s3972, %s3973
          %s3975 = smul.addr %s3974, 8
          %s3976 = scalar_lea.vmem %s2, %s3975
        $region67: #{gen_forward.5} parent=62 // pred_fallthru
          _
        // Predicated region
        $region68: #{gen_forward.5} parent=62 // pred_check
          %p3977 = pneg %p148
        $region69: #{gen_forward.5} parent=62 // pred_check_branch
          %3979 = sbr.rel (%p3977) target = $region71
        $region70: #{gen_forward.5} parent=62 // pred_region
          %s3980 = sadd.s32 %s23, %s24
          %s3981 = smul.u32 32, %s25
          %p3982 = scmp.lt.s32.totalorder %s3980, 0
          %s3983 = scalar_select %p3982, %s3980, 0
          %p3984 = scmp.lt.s32.totalorder %s3981, 63
          %s3985 = scalar_select %p3984, %s3981, 63
          %s3986 = smul.addr %s3983, 64
          %s3987 = sadd.s32 %s3985, %s3986
          %s3988 = smul.addr %s3987, 2
          %s3989 = scalar_lea.vmem %s3, %s3988
        $region71: #{gen_forward.5} parent=62 // pred_fallthru
          _
      $region63: #{gen_forward.5} parent=5 // pred_fallthru
        _
    $region6: #{gen_forward.5} parent=1 // loop_footer
      %s14 = sadd.s32 1, %s10
    $region7: #{gen_forward.5} parent=1 // loop_footer_branch
      %9 = sbr.rel target = $region3
    $region8: #{gen_forward.5} parent=1 // loop_exit
      _

// kernel: gen_forward.6
$region0: #{gen_forward.6}
  #allocation0 [shape = 'u32[]', space=smem, size = 0x4, offset = 0x4, fixed_abs, tag = 'smem constant byte address 0x4 - core index']
  #allocation1 [shape = 'u32[144,128]{1,0:T(1,128)}', space=vmem, size = 0x12000, scoped, tag = 'internal scratch']
  %s0 = inlined_call_operand.vmem [shape: bf16[4,32,2048], index: 0, kind: input, shape index: {}]
  %s1 = inlined_call_operand.vmem [shape: bf16[4,2048,256], index: 1, kind: input, shape index: {}]
  %s2 = inlined_call_operand.vmem [shape: f32[4,32,256], index: 2, kind: output, shape index: {0}]
  %s3 = inlined_call_operand.vmem [shape: f32[4,2,256], index: 3, kind: output, shape index: {1}]
  %4 = xla_tuple %s2, %s3
  %s5 = sld [smem:[#allocation0]]
  $region49: #{gen_forward.6} parent=0
    _
  %s7 = ssub.s32 1, %s5
  %s8 = scalar_select 0, %s7, %s5
  loop: start=0, step=1, limit=6
  $region2: #{gen_forward.6} parent=0 // loop_pre_header
    _
  $region3: #{gen_forward.6} parent=0 // loop_header
    %s10 = sphi 0, %s14
    %p11 = scmp.ge.s32.totalorder %s10, 6
    %s17 = sphi 0, %s36
    %s18 = sphi 0, %s32
    %s19 = sphi 0, %s28
    %s20 = sphi 0, %s17
    %s21 = sphi 0, %s18
    %s22 = sphi 0, %s19
    %s23 = sphi 0, %s20
    %s24 = sphi 0, %s21
    %s25 = sphi 0, %s22
    %s41 = sphi 0, %s43
    %s44 = sphi 0, %s41
    %s45 = sphi 0, %s44
    %s61 = sphi 0, %s45
    %s69 = sphi 0, %s71
    %s72 = sphi 0, %s69
    %s73 = sphi 0, %s72
    %s89 = sphi 0, %s73
    %s99 = sphi 0, %s101
    %s102 = sphi 0, %s99
    %s103 = sphi 0, %s102
    %s119 = sphi 0, %s103
    %s129 = sphi 0, %s131
    %s132 = sphi 0, %s129
    %s133 = sphi 0, %s132
    %s149 = sphi 0, %s133
  $region4: #{gen_forward.6} parent=0 // loop_header_branch
    %13 = sbr.rel (%p11) target = $region8
  $region5: #{gen_forward.6} parent=0 // loop_body
    %s15 = ssub.s32 %s10, 1
    %s16 = ssub.s32 %s10, 2
    %s26 = sadd.s32 1, %s19
    %p27 = scmp.ge.s32.totalorder %s26, 1
    %s28 = scalar_select %p27, 0, %s26
    %s29 = sadd.s32 1, %s18
    %s30 = scalar_select %p27, %s29, %s18
    %p31 = scmp.ge.s32.totalorder %s30, 1
    %s32 = scalar_select %p31, 0, %s30
    %s33 = sadd.s32 1, %s17
    %s34 = scalar_select %p31, %s33, %s17
    %p35 = scmp.ge.s32.totalorder %s34, 4
    %s36 = scalar_select %p35, 0, %s34
    %s37 = ssub.s32 %s17, %s36
    %s38 = ssub.s32 %s18, %s32
    %s39 = sor.u32 %s37, %s38
    %p40 = scmp.eq.s32.totalorder %s39, 0
    %s42 = sadd.s32 %s41, 1
    %s43 = scalar_select %p40, %s41, %s42
    %p46 = pneg %p40
    %p47 = scmp.eq.s32.totalorder %s10, 3
    %p48 = por %p46, %p47
    %p49 = scmp.ne.s32.totalorder %s41, %s44
    %p50 = scmp.eq.s32.totalorder %s10, 0
    %p51 = por %p49, %p50
    %p52 = scmp.ne.s32.totalorder %s41, %s44
    %p53 = scmp.eq.s32.totalorder %s15, 3
    %p54 = por %p52, %p53
    %p55 = scmp.ne.s32.totalorder %s44, %s45
    %p56 = scmp.eq.s32.totalorder %s15, 0
    %p57 = por %p55, %p56
    %p58 = scmp.ne.s32.totalorder %s44, %s45
    %p59 = scmp.eq.s32.totalorder %s16, 3
    %p60 = por %p58, %p59
    %p62 = scmp.ne.s32.totalorder %s45, %s61
    %p63 = scmp.eq.s32.totalorder %s16, 0
    %p64 = por %p62, %p63
    %s65 = ssub.s32 %s17, %s36
    %s66 = ssub.s32 %s19, %s28
    %s67 = sor.u32 %s65, %s66
    %p68 = scmp.eq.s32.totalorder %s67, 0
    %s70 = sadd.s32 %s69, 1
    %s71 = scalar_select %p68, %s69, %s70
    %p74 = pneg %p68
    %p75 = scmp.eq.s32.totalorder %s10, 3
    %p76 = por %p74, %p75
    %p77 = scmp.ne.s32.totalorder %s69, %s72
    %p78 = scmp.eq.s32.totalorder %s10, 0
    %p79 = por %p77, %p78
    %p80 = scmp.ne.s32.totalorder %s69, %s72
    %p81 = scmp.eq.s32.totalorder %s15, 3
    %p82 = por %p80, %p81
    %p83 = scmp.ne.s32.totalorder %s72, %s73
    %p84 = scmp.eq.s32.totalorder %s15, 0
    %p85 = por %p83, %p84
    %p86 = scmp.ne.s32.totalorder %s72, %s73
    %p87 = scmp.eq.s32.totalorder %s16, 3
    %p88 = por %p86, %p87
    %p90 = scmp.ne.s32.totalorder %s73, %s89
    %p91 = scmp.eq.s32.totalorder %s16, 0
    %p92 = por %p90, %p91
    %s93 = ssub.s32 %s17, %s36
    %s94 = ssub.s32 %s18, %s32
    %s95 = sor.u32 %s93, %s94
    %s96 = ssub.s32 %s19, %s28
    %s97 = sor.u32 %s95, %s96
    %p98 = scmp.eq.s32.totalorder %s97, 0
    %s100 = sadd.s32 %s99, 1
    %s101 = scalar_select %p98, %s99, %s100
    %p104 = pneg %p98
    %p105 = scmp.eq.s32.totalorder %s10, 3
    %p106 = por %p104, %p105
    %p107 = scmp.ne.s32.totalorder %s99, %s102
    %p108 = scmp.eq.s32.totalorder %s10, 0
    %p109 = por %p107, %p108
    %p110 = scmp.ne.s32.totalorder %s99, %s102
    %p111 = scmp.eq.s32.totalorder %s15, 3
    %p112 = por %p110, %p111
    %p113 = scmp.ne.s32.totalorder %s102, %s103
    %p114 = scmp.eq.s32.totalorder %s15, 0
    %p115 = por %p113, %p114
    %p116 = scmp.ne.s32.totalorder %s102, %s103
    %p117 = scmp.eq.s32.totalorder %s16, 3
    %p118 = por %p116, %p117
    %p120 = scmp.ne.s32.totalorder %s103, %s119
    %p121 = scmp.eq.s32.totalorder %s16, 0
    %p122 = por %p120, %p121
    %s123 = sadd.s32 %s17, %s18
    %s124 = sadd.s32 %s36, %s32
    %s125 = ssub.s32 %s123, %s124
    %s126 = ssub.s32 %s19, %s28
    %s127 = sor.u32 %s125, %s126
    %p128 = scmp.eq.s32.totalorder %s127, 0
    %s130 = sadd.s32 %s129, 1
    %s131 = scalar_select %p128, %s129, %s130
    %p134 = pneg %p128
    %p135 = scmp.eq.s32.totalorder %s10, 3
    %p136 = por %p134, %p135
    %p137 = scmp.ne.s32.totalorder %s129, %s132
    %p138 = scmp.eq.s32.totalorder %s10, 0
    %p139 = por %p137, %p138
    %p140 = scmp.ne.s32.totalorder %s129, %s132
    %p141 = scmp.eq.s32.totalorder %s15, 3
    %p142 = por %p140, %p141
    %p143 = scmp.ne.s32.totalorder %s132, %s133
    %p144 = scmp.eq.s32.totalorder %s15, 0
    %p145 = por %p143, %p144
    %p146 = scmp.ne.s32.totalorder %s132, %s133
    %p147 = scmp.eq.s32.totalorder %s16, 3
    %p148 = por %p146, %p147
    %p150 = scmp.ne.s32.totalorder %s133, %s149
    %p151 = scmp.eq.s32.totalorder %s16, 0
    %p152 = por %p150, %p151
    %p153 = scmp.le.s32.totalorder 1, %s10
    %p154 = scmp.lt.s32.totalorder %s10, 5
    %p155 = pnand %p153, %p154
    %p156 = pneg %p155
    // Predicated region
    $region9: #{gen_forward.6} parent=5 // pred_check
      _
    $region10: #{gen_forward.6} parent=5 // pred_check_branch
      %158 = sbr.rel (%p155) target = $region12
    $region11: #{gen_forward.6} parent=5 // pred_region
      %s159 = ssub.s32 %s10, 1
    $region12: #{gen_forward.6} parent=5 // pred_fallthru
      _
    %p160 = scmp.lt.s32.totalorder %s10, 4
    // Predicated region
    $region13: #{gen_forward.6} parent=5 // pred_check
      %p161 = pneg %p160
    $region14: #{gen_forward.6} parent=5 // pred_check_branch
      %163 = sbr.rel (%p161) target = $region16
    $region15: #{gen_forward.6} parent=5 // pred_region
      // Predicated region
      $region17: #{gen_forward.6} parent=15 // pred_check
        %p164 = pneg %p51
      $region18: #{gen_forward.6} parent=15 // pred_check_branch
        %166 = sbr.rel (%p164) target = $region20
      $region19: #{gen_forward.6} parent=15 // pred_region
        %s167 = smul.u32 4, %s18
        %p168 = scmp.lt.s32.totalorder %s17, 3
        %s169 = scalar_select %p168, %s17, 3
        %p170 = scmp.lt.s32.totalorder %s167, 3
        %s171 = scalar_select %p170, %s167, 3
        %s172 = smul.addr %s171, 16
        %s173 = smul.addr %s169, 64
        %s174 = sadd.s32 %s172, %s173
        %s175 = smul.addr %s174, 4
        %s176 = scalar_lea.vmem %s0, %s175
        %s177 = smul.u32 4, %s18
      $region20: #{gen_forward.6} parent=15 // pred_fallthru
        _
      // Predicated region
      $region21: #{gen_forward.6} parent=15 // pred_check
        %p178 = pneg %p79
      $region22: #{gen_forward.6} parent=15 // pred_check_branch
        %180 = sbr.rel (%p178) target = $region24
      $region23: #{gen_forward.6} parent=15 // pred_region
        %s181 = smul.u32 2, %s19
        %p182 = scmp.lt.s32.totalorder %s17, 3
        %s183 = scalar_select %p182, %s17, 3
        %p184 = scmp.lt.s32.totalorder %s181, 1
        %s185 = scalar_select %p184, %s181, 1
        %s186 = smul.addr %s183, 512
        %s187 = sadd.s32 %s185, %s186
        %s188 = smul.addr %s187, 4
        %s189 = scalar_lea.vmem %s1, %s188
        %s190 = smul.u32 2, %s19
      $region24: #{gen_forward.6} parent=15 // pred_fallthru
        _
    $region16: #{gen_forward.6} parent=5 // pred_fallthru
      _
    %p191 = scmp.le.s32.totalorder 1, %s10
    %p192 = scmp.lt.s32.totalorder %s10, 5
    %p193 = pnand %p191, %p192
    %p194 = pneg %p193
    // Predicated region
    $region25: #{gen_forward.6} parent=5 // pred_check
      _
    $region26: #{gen_forward.6} parent=5 // pred_check_branch
      %196 = sbr.rel (%p193) target = $region28
    $region27: #{gen_forward.6} parent=5 // pred_region
      %s197 = ssub.s32 %s10, 1
      %s198 = smul.u32 4, %s21
      %p199 = scmp.lt.s32.totalorder %s20, 3
      %s200 = scalar_select %p199, %s20, 3
      %p201 = scmp.lt.s32.totalorder %s198, 3
      %s202 = scalar_select %p201, %s198, 3
      %s203 = smul.addr %s202, 16
      %s204 = smul.addr %s200, 64
      %s205 = sadd.s32 %s203, %s204
      %s206 = smul.addr %s205, 4
      %s207 = scalar_lea.vmem %s0, %s206
      %p208 = pneg %p57
      %p209 = pneg %p54
      %s210 = smul.u32 2, %s22
      %p211 = scmp.lt.s32.totalorder %s20, 3
      %s212 = scalar_select %p211, %s20, 3
      %p213 = scmp.lt.s32.totalorder %s210, 1
      %s214 = scalar_select %p213, %s210, 1
      %s215 = smul.addr %s212, 512
      %s216 = sadd.s32 %s214, %s215
      %s217 = smul.addr %s216, 4
      %s218 = scalar_lea.vmem %s1, %s217
      %p219 = pneg %p85
      %p220 = pneg %p82
      %p221 = pneg %p115
      %p222 = pneg %p112
      %s223 = smul.u32 4, %s21
      %s224 = smul.u32 2, %s22
      %p225 = scmp.lt.s32.totalorder %s20, 3
      %s226 = scalar_select %p225, %s20, 3
      %p227 = scmp.lt.s32.totalorder %s223, 3
      %s228 = scalar_select %p227, %s223, 3
      %p229 = scmp.lt.s32.totalorder %s224, 1
      %s230 = scalar_select %p229, %s224, 1
      %s231 = smul.addr %s228, 2
      %s232 = sadd.s32 %s230, %s231
      %s233 = smul.addr %s226, 8
      %s234 = sadd.s32 %s232, %s233
      %s235 = smul.addr %s234, 8
      %s236 = scalar_lea.vmem %s2, %s235
      %p237 = pneg %p145
      %p238 = pneg %p142
      %s239 = sadd.s32 %s20, %s21
      %s240 = smul.u32 2, %s22
      %p241 = scmp.lt.s32.totalorder %s239, 3
      %s242 = scalar_select %p241, %s239, 3
      %p243 = scmp.lt.s32.totalorder %s240, 1
      %s244 = scalar_select %p243, %s240, 1
      %s245 = smul.addr %s242, 2
      %s246 = sadd.s32 %s244, %s245
      %s247 = smul.addr %s246, 2
      %s248 = scalar_lea.vmem %s3, %s247
      %s249 = smul.u32 4, %s21
      %p250 = scmp.lt.s32.totalorder %s20, 3
      %s251 = scalar_select %p250, %s20, 3
      %p252 = scmp.lt.s32.totalorder %s249, 3
      %s253 = scalar_select %p252, %s249, 3
      %s254 = smul.addr %s253, 16
      %s255 = smul.addr %s251, 64
      %s256 = sadd.s32 %s254, %s255
      %s257 = smul.addr %s256, 4
      %s258 = scalar_lea.vmem %s0, %s257
      %s259 = smul.u32 4, %s21
      %s260 = smul.u32 2, %s22
      %p261 = scmp.lt.s32.totalorder %s20, 3
      %s262 = scalar_select %p261, %s20, 3
      %p263 = scmp.lt.s32.totalorder %s260, 1
      %s264 = scalar_select %p263, %s260, 1
      %s265 = smul.addr %s262, 512
      %s266 = sadd.s32 %s264, %s265
      %s267 = smul.addr %s266, 4
      %s268 = scalar_lea.vmem %s1, %s267
      %s269 = smul.u32 2, %s22
      %s270 = smul.u32 4, %s21
      %s271 = smul.u32 2, %s22
      %p272 = scmp.lt.s32.totalorder %s20, 3
      %s273 = scalar_select %p272, %s20, 3
      %p274 = scmp.lt.s32.totalorder %s270, 3
      %s275 = scalar_select %p274, %s270, 3
      %p276 = scmp.lt.s32.totalorder %s271, 1
      %s277 = scalar_select %p276, %s271, 1
      %s278 = smul.addr %s275, 2
      %s279 = sadd.s32 %s277, %s278
      %s280 = smul.addr %s273, 8
      %s281 = sadd.s32 %s279, %s280
      %s282 = smul.addr %s281, 8
      %s283 = scalar_lea.vmem %s2, %s282
      %s284 = smul.u32 4, %s21
      %s285 = smul.u32 2, %s22
      %s286 = sadd.s32 %s20, %s21
      %s287 = smul.u32 2, %s22
      %p288 = scmp.lt.s32.totalorder %s286, 3
      %s289 = scalar_select %p288, %s286, 3
      %p290 = scmp.lt.s32.totalorder %s287, 1
      %s291 = scalar_select %p290, %s287, 1
      %s292 = smul.addr %s289, 2
      %s293 = sadd.s32 %s291, %s292
      %s294 = smul.addr %s293, 2
      %s295 = scalar_lea.vmem %s3, %s294
      %s296 = sadd.s32 %s20, %s21
      %s297 = smul.u32 2, %s22
      %v298 = vld [vmem:[%s258] sm:$0xff]
      %v299 = vld [vmem:[%s258 + $0x8] sm:$0xff]
      %v300 = vld [vmem:[%s258 + $0x10] sm:$0xff]
      %v301 = vld [vmem:[%s258 + $0x18] sm:$0xff]
      %v302 = vld [vmem:[%s258 + $0x20] sm:$0xff]
      %v303 = vld [vmem:[%s258 + $0x28] sm:$0xff]
      %v304 = vld [vmem:[%s258 + $0x30] sm:$0xff]
      %v305 = vld [vmem:[%s258 + $0x38] sm:$0xff]
      %v306 = vld [vmem:[%s258 + $0x40] sm:$0xff]
      %v307 = vld [vmem:[%s258 + $0x48] sm:$0xff]
      %v308 = vld [vmem:[%s258 + $0x50] sm:$0xff]
      %v309 = vld [vmem:[%s258 + $0x58] sm:$0xff]
      %v310 = vld [vmem:[%s258 + $0x60] sm:$0xff]
      %v311 = vld [vmem:[%s258 + $0x68] sm:$0xff]
      %v312 = vld [vmem:[%s258 + $0x70] sm:$0xff]
      %v313 = vld [vmem:[%s258 + $0x78] sm:$0xff]
      %v314 = vld [vmem:[%s258 + $0x80] sm:$0xff]
      %v315 = vld [vmem:[%s258 + $0x88] sm:$0xff]
      %v316 = vld [vmem:[%s258 + $0x90] sm:$0xff]
      %v317 = vld [vmem:[%s258 + $0x98] sm:$0xff]
      %v318 = vld [vmem:[%s258 + $0xa0] sm:$0xff]
      %v319 = vld [vmem:[%s258 + $0xa8] sm:$0xff]
      %v320 = vld [vmem:[%s258 + $0xb0] sm:$0xff]
      %v321 = vld [vmem:[%s258 + $0xb8] sm:$0xff]
      %v322 = vld [vmem:[%s258 + $0xc0] sm:$0xff]
      %v323 = vld [vmem:[%s258 + $0xc8] sm:$0xff]
      %v324 = vld [vmem:[%s258 + $0xd0] sm:$0xff]
      %v325 = vld [vmem:[%s258 + $0xd8] sm:$0xff]
      %v326 = vld [vmem:[%s258 + $0xe0] sm:$0xff]
      %v327 = vld [vmem:[%s258 + $0xe8] sm:$0xff]
      %v328 = vld [vmem:[%s258 + $0xf0] sm:$0xff]
      %v329 = vld [vmem:[%s258 + $0xf8] sm:$0xff]
      %v330 = vld [vmem:[%s268] sm:$0xff]
      %v331 = vld [vmem:[%s268 + $0x8] sm:$0xff]
      %v332 = vld [vmem:[%s268 + $0x10] sm:$0xff]
      %v333 = vld [vmem:[%s268 + $0x18] sm:$0xff]
      %v334 = vld [vmem:[%s268 + $0x20] sm:$0xff]
      %v335 = vld [vmem:[%s268 + $0x28] sm:$0xff]
      %v336 = vld [vmem:[%s268 + $0x30] sm:$0xff]
      %v337 = vld [vmem:[%s268 + $0x38] sm:$0xff]
      %v338 = vld [vmem:[%s268 + $0x40] sm:$0xff]
      %v339 = vld [vmem:[%s268 + $0x48] sm:$0xff]
      %v340 = vld [vmem:[%s268 + $0x50] sm:$0xff]
      %v341 = vld [vmem:[%s268 + $0x58] sm:$0xff]
      %v342 = vld [vmem:[%s268 + $0x60] sm:$0xff]
      %v343 = vld [vmem:[%s268 + $0x68] sm:$0xff]
      %v344 = vld [vmem:[%s268 + $0x70] sm:$0xff]
      %v345 = vld [vmem:[%s268 + $0x78] sm:$0xff]
      %v346 = vld [vmem:[%s268 + $0x80] sm:$0xff]
      %v347 = vld [vmem:[%s268 + $0x88] sm:$0xff]
      %v348 = vld [vmem:[%s268 + $0x90] sm:$0xff]
      %v349 = vld [vmem:[%s268 + $0x98] sm:$0xff]
      %v350 = vld [vmem:[%s268 + $0xa0] sm:$0xff]
      %v351 = vld [vmem:[%s268 + $0xa8] sm:$0xff]
      %v352 = vld [vmem:[%s268 + $0xb0] sm:$0xff]
      %v353 = vld [vmem:[%s268 + $0xb8] sm:$0xff]
      %v354 = vld [vmem:[%s268 + $0xc0] sm:$0xff]
      %v355 = vld [vmem:[%s268 + $0xc8] sm:$0xff]
      %v356 = vld [vmem:[%s268 + $0xd0] sm:$0xff]
      %v357 = vld [vmem:[%s268 + $0xd8] sm:$0xff]
      %v358 = vld [vmem:[%s268 + $0xe0] sm:$0xff]
      %v359 = vld [vmem:[%s268 + $0xe8] sm:$0xff]
      %v360 = vld [vmem:[%s268 + $0xf0] sm:$0xff]
      %v361 = vld [vmem:[%s268 + $0xf8] sm:$0xff]
      %v362 = vld [vmem:[%s268 + $0x100] sm:$0xff]
      %v363 = vld [vmem:[%s268 + $0x108] sm:$0xff]
      %v364 = vld [vmem:[%s268 + $0x110] sm:$0xff]
      %v365 = vld [vmem:[%s268 + $0x118] sm:$0xff]
      %v366 = vld [vmem:[%s268 + $0x120] sm:$0xff]
      %v367 = vld [vmem:[%s268 + $0x128] sm:$0xff]
      %v368 = vld [vmem:[%s268 + $0x130] sm:$0xff]
      %v369 = vld [vmem:[%s268 + $0x138] sm:$0xff]
      %v370 = vld [vmem:[%s268 + $0x140] sm:$0xff]
      %v371 = vld [vmem:[%s268 + $0x148] sm:$0xff]
      %v372 = vld [vmem:[%s268 + $0x150] sm:$0xff]
      %v373 = vld [vmem:[%s268 + $0x158] sm:$0xff]
      %v374 = vld [vmem:[%s268 + $0x160] sm:$0xff]
      %v375 = vld [vmem:[%s268 + $0x168] sm:$0xff]
      %v376 = vld [vmem:[%s268 + $0x170] sm:$0xff]
      %v377 = vld [vmem:[%s268 + $0x178] sm:$0xff]
      %v378 = vld [vmem:[%s268 + $0x180] sm:$0xff]
      %v379 = vld [vmem:[%s268 + $0x188] sm:$0xff]
      %v380 = vld [vmem:[%s268 + $0x190] sm:$0xff]
      %v381 = vld [vmem:[%s268 + $0x198] sm:$0xff]
      %v382 = vld [vmem:[%s268 + $0x1a0] sm:$0xff]
      %v383 = vld [vmem:[%s268 + $0x1a8] sm:$0xff]
      %v384 = vld [vmem:[%s268 + $0x1b0] sm:$0xff]
      %v385 = vld [vmem:[%s268 + $0x1b8] sm:$0xff]
      %v386 = vld [vmem:[%s268 + $0x1c0] sm:$0xff]
      %v387 = vld [vmem:[%s268 + $0x1c8] sm:$0xff]
      %v388 = vld [vmem:[%s268 + $0x1d0] sm:$0xff]
      %v389 = vld [vmem:[%s268 + $0x1d8] sm:$0xff]
      %v390 = vld [vmem:[%s268 + $0x1e0] sm:$0xff]
      %v391 = vld [vmem:[%s268 + $0x1e8] sm:$0xff]
      %v392 = vld [vmem:[%s268 + $0x1f0] sm:$0xff]
      %v393 = vld [vmem:[%s268 + $0x1f8] sm:$0xff]
      %v394 = vld [vmem:[%s268 + $0x200] sm:$0xff]
      %v395 = vld [vmem:[%s268 + $0x208] sm:$0xff]
      %v396 = vld [vmem:[%s268 + $0x210] sm:$0xff]
      %v397 = vld [vmem:[%s268 + $0x218] sm:$0xff]
      %v398 = vld [vmem:[%s268 + $0x220] sm:$0xff]
      %v399 = vld [vmem:[%s268 + $0x228] sm:$0xff]
      %v400 = vld [vmem:[%s268 + $0x230] sm:$0xff]
      %v401 = vld [vmem:[%s268 + $0x238] sm:$0xff]
      %v402 = vld [vmem:[%s268 + $0x240] sm:$0xff]
      %v403 = vld [vmem:[%s268 + $0x248] sm:$0xff]
      %v404 = vld [vmem:[%s268 + $0x250] sm:$0xff]
      %v405 = vld [vmem:[%s268 + $0x258] sm:$0xff]
      %v406 = vld [vmem:[%s268 + $0x260] sm:$0xff]
      %v407 = vld [vmem:[%s268 + $0x268] sm:$0xff]
      %v408 = vld [vmem:[%s268 + $0x270] sm:$0xff]
      %v409 = vld [vmem:[%s268 + $0x278] sm:$0xff]
      %v410 = vld [vmem:[%s268 + $0x280] sm:$0xff]
      %v411 = vld [vmem:[%s268 + $0x288] sm:$0xff]
      %v412 = vld [vmem:[%s268 + $0x290] sm:$0xff]
      %v413 = vld [vmem:[%s268 + $0x298] sm:$0xff]
      %v414 = vld [vmem:[%s268 + $0x2a0] sm:$0xff]
      %v415 = vld [vmem:[%s268 + $0x2a8] sm:$0xff]
      %v416 = vld [vmem:[%s268 + $0x2b0] sm:$0xff]
      %v417 = vld [vmem:[%s268 + $0x2b8] sm:$0xff]
      %v418 = vld [vmem:[%s268 + $0x2c0] sm:$0xff]
      %v419 = vld [vmem:[%s268 + $0x2c8] sm:$0xff]
      %v420 = vld [vmem:[%s268 + $0x2d0] sm:$0xff]
      %v421 = vld [vmem:[%s268 + $0x2d8] sm:$0xff]
      %v422 = vld [vmem:[%s268 + $0x2e0] sm:$0xff]
      %v423 = vld [vmem:[%s268 + $0x2e8] sm:$0xff]
      %v424 = vld [vmem:[%s268 + $0x2f0] sm:$0xff]
      %v425 = vld [vmem:[%s268 + $0x2f8] sm:$0xff]
      %v426 = vld [vmem:[%s268 + $0x300] sm:$0xff]
      %v427 = vld [vmem:[%s268 + $0x308] sm:$0xff]
      %v428 = vld [vmem:[%s268 + $0x310] sm:$0xff]
      %v429 = vld [vmem:[%s268 + $0x318] sm:$0xff]
      %v430 = vld [vmem:[%s268 + $0x320] sm:$0xff]
      %v431 = vld [vmem:[%s268 + $0x328] sm:$0xff]
      %v432 = vld [vmem:[%s268 + $0x330] sm:$0xff]
      %v433 = vld [vmem:[%s268 + $0x338] sm:$0xff]
      %v434 = vld [vmem:[%s268 + $0x340] sm:$0xff]
      %v435 = vld [vmem:[%s268 + $0x348] sm:$0xff]
      %v436 = vld [vmem:[%s268 + $0x350] sm:$0xff]
      %v437 = vld [vmem:[%s268 + $0x358] sm:$0xff]
      %v438 = vld [vmem:[%s268 + $0x360] sm:$0xff]
      %v439 = vld [vmem:[%s268 + $0x368] sm:$0xff]
      %v440 = vld [vmem:[%s268 + $0x370] sm:$0xff]
      %v441 = vld [vmem:[%s268 + $0x378] sm:$0xff]
      %v442 = vld [vmem:[%s268 + $0x380] sm:$0xff]
      %v443 = vld [vmem:[%s268 + $0x388] sm:$0xff]
      %v444 = vld [vmem:[%s268 + $0x390] sm:$0xff]
      %v445 = vld [vmem:[%s268 + $0x398] sm:$0xff]
      %v446 = vld [vmem:[%s268 + $0x3a0] sm:$0xff]
      %v447 = vld [vmem:[%s268 + $0x3a8] sm:$0xff]
      %v448 = vld [vmem:[%s268 + $0x3b0] sm:$0xff]
      %v449 = vld [vmem:[%s268 + $0x3b8] sm:$0xff]
      %v450 = vld [vmem:[%s268 + $0x3c0] sm:$0xff]
      %v451 = vld [vmem:[%s268 + $0x3c8] sm:$0xff]
      %v452 = vld [vmem:[%s268 + $0x3d0] sm:$0xff]
      %v453 = vld [vmem:[%s268 + $0x3d8] sm:$0xff]
      %v454 = vld [vmem:[%s268 + $0x3e0] sm:$0xff]
      %v455 = vld [vmem:[%s268 + $0x3e8] sm:$0xff]
      %v456 = vld [vmem:[%s268 + $0x3f0] sm:$0xff]
      %v457 = vld [vmem:[%s268 + $0x3f8] sm:$0xff]
      %v458 = vld [vmem:[%s268 + $0x400] sm:$0xff]
      %v459 = vld [vmem:[%s268 + $0x408] sm:$0xff]
      %v460 = vld [vmem:[%s268 + $0x410] sm:$0xff]
      %v461 = vld [vmem:[%s268 + $0x418] sm:$0xff]
      %v462 = vld [vmem:[%s268 + $0x420] sm:$0xff]
      %v463 = vld [vmem:[%s268 + $0x428] sm:$0xff]
      %v464 = vld [vmem:[%s268 + $0x430] sm:$0xff]
      %v465 = vld [vmem:[%s268 + $0x438] sm:$0xff]
      %v466 = vld [vmem:[%s268 + $0x440] sm:$0xff]
      %v467 = vld [vmem:[%s268 + $0x448] sm:$0xff]
      %v468 = vld [vmem:[%s268 + $0x450] sm:$0xff]
      %v469 = vld [vmem:[%s268 + $0x458] sm:$0xff]
      %v470 = vld [vmem:[%s268 + $0x460] sm:$0xff]
      %v471 = vld [vmem:[%s268 + $0x468] sm:$0xff]
      %v472 = vld [vmem:[%s268 + $0x470] sm:$0xff]
      %v473 = vld [vmem:[%s268 + $0x478] sm:$0xff]
      %v474 = vld [vmem:[%s268 + $0x480] sm:$0xff]
      %v475 = vld [vmem:[%s268 + $0x488] sm:$0xff]
      %v476 = vld [vmem:[%s268 + $0x490] sm:$0xff]
      %v477 = vld [vmem:[%s268 + $0x498] sm:$0xff]
      %v478 = vld [vmem:[%s268 + $0x4a0] sm:$0xff]
      %v479 = vld [vmem:[%s268 + $0x4a8] sm:$0xff]
      %v480 = vld [vmem:[%s268 + $0x4b0] sm:$0xff]
      %v481 = vld [vmem:[%s268 + $0x4b8] sm:$0xff]
      %v482 = vld [vmem:[%s268 + $0x4c0] sm:$0xff]
      %v483 = vld [vmem:[%s268 + $0x4c8] sm:$0xff]
      %v484 = vld [vmem:[%s268 + $0x4d0] sm:$0xff]
      %v485 = vld [vmem:[%s268 + $0x4d8] sm:$0xff]
      %v486 = vld [vmem:[%s268 + $0x4e0] sm:$0xff]
      %v487 = vld [vmem:[%s268 + $0x4e8] sm:$0xff]
      %v488 = vld [vmem:[%s268 + $0x4f0] sm:$0xff]
      %v489 = vld [vmem:[%s268 + $0x4f8] sm:$0xff]
      %v490 = vld [vmem:[%s268 + $0x500] sm:$0xff]
      %v491 = vld [vmem:[%s268 + $0x508] sm:$0xff]
      %v492 = vld [vmem:[%s268 + $0x510] sm:$0xff]
      %v493 = vld [vmem:[%s268 + $0x518] sm:$0xff]
      %v494 = vld [vmem:[%s268 + $0x520] sm:$0xff]
      %v495 = vld [vmem:[%s268 + $0x528] sm:$0xff]
      %v496 = vld [vmem:[%s268 + $0x530] sm:$0xff]
      %v497 = vld [vmem:[%s268 + $0x538] sm:$0xff]
      %v498 = vld [vmem:[%s268 + $0x540] sm:$0xff]
      %v499 = vld [vmem:[%s268 + $0x548] sm:$0xff]
      %v500 = vld [vmem:[%s268 + $0x550] sm:$0xff]
      %v501 = vld [vmem:[%s268 + $0x558] sm:$0xff]
      %v502 = vld [vmem:[%s268 + $0x560] sm:$0xff]
      %v503 = vld [vmem:[%s268 + $0x568] sm:$0xff]
      %v504 = vld [vmem:[%s268 + $0x570] sm:$0xff]
      %v505 = vld [vmem:[%s268 + $0x578] sm:$0xff]
      %v506 = vld [vmem:[%s268 + $0x580] sm:$0xff]
      %v507 = vld [vmem:[%s268 + $0x588] sm:$0xff]
      %v508 = vld [vmem:[%s268 + $0x590] sm:$0xff]
      %v509 = vld [vmem:[%s268 + $0x598] sm:$0xff]
      %v510 = vld [vmem:[%s268 + $0x5a0] sm:$0xff]
      %v511 = vld [vmem:[%s268 + $0x5a8] sm:$0xff]
      %v512 = vld [vmem:[%s268 + $0x5b0] sm:$0xff]
      %v513 = vld [vmem:[%s268 + $0x5b8] sm:$0xff]
      %v514 = vld [vmem:[%s268 + $0x5c0] sm:$0xff]
      %v515 = vld [vmem:[%s268 + $0x5c8] sm:$0xff]
      %v516 = vld [vmem:[%s268 + $0x5d0] sm:$0xff]
      %v517 = vld [vmem:[%s268 + $0x5d8] sm:$0xff]
      %v518 = vld [vmem:[%s268 + $0x5e0] sm:$0xff]
      %v519 = vld [vmem:[%s268 + $0x5e8] sm:$0xff]
      %v520 = vld [vmem:[%s268 + $0x5f0] sm:$0xff]
      %v521 = vld [vmem:[%s268 + $0x5f8] sm:$0xff]
      %v522 = vld [vmem:[%s268 + $0x600] sm:$0xff]
      %v523 = vld [vmem:[%s268 + $0x608] sm:$0xff]
      %v524 = vld [vmem:[%s268 + $0x610] sm:$0xff]
      %v525 = vld [vmem:[%s268 + $0x618] sm:$0xff]
      %v526 = vld [vmem:[%s268 + $0x620] sm:$0xff]
      %v527 = vld [vmem:[%s268 + $0x628] sm:$0xff]
      %v528 = vld [vmem:[%s268 + $0x630] sm:$0xff]
      %v529 = vld [vmem:[%s268 + $0x638] sm:$0xff]
      %v530 = vld [vmem:[%s268 + $0x640] sm:$0xff]
      %v531 = vld [vmem:[%s268 + $0x648] sm:$0xff]
      %v532 = vld [vmem:[%s268 + $0x650] sm:$0xff]
      %v533 = vld [vmem:[%s268 + $0x658] sm:$0xff]
      %v534 = vld [vmem:[%s268 + $0x660] sm:$0xff]
      %v535 = vld [vmem:[%s268 + $0x668] sm:$0xff]
      %v536 = vld [vmem:[%s268 + $0x670] sm:$0xff]
      %v537 = vld [vmem:[%s268 + $0x678] sm:$0xff]
      %v538 = vld [vmem:[%s268 + $0x680] sm:$0xff]
      %v539 = vld [vmem:[%s268 + $0x688] sm:$0xff]
      %v540 = vld [vmem:[%s268 + $0x690] sm:$0xff]
      %v541 = vld [vmem:[%s268 + $0x698] sm:$0xff]
      %v542 = vld [vmem:[%s268 + $0x6a0] sm:$0xff]
      %v543 = vld [vmem:[%s268 + $0x6a8] sm:$0xff]
      %v544 = vld [vmem:[%s268 + $0x6b0] sm:$0xff]
      %v545 = vld [vmem:[%s268 + $0x6b8] sm:$0xff]
      %v546 = vld [vmem:[%s268 + $0x6c0] sm:$0xff]
      %v547 = vld [vmem:[%s268 + $0x6c8] sm:$0xff]
      %v548 = vld [vmem:[%s268 + $0x6d0] sm:$0xff]
      %v549 = vld [vmem:[%s268 + $0x6d8] sm:$0xff]
      %v550 = vld [vmem:[%s268 + $0x6e0] sm:$0xff]
      %v551 = vld [vmem:[%s268 + $0x6e8] sm:$0xff]
      %v552 = vld [vmem:[%s268 + $0x6f0] sm:$0xff]
      %v553 = vld [vmem:[%s268 + $0x6f8] sm:$0xff]
      %v554 = vld [vmem:[%s268 + $0x700] sm:$0xff]
      %v555 = vld [vmem:[%s268 + $0x708] sm:$0xff]
      %v556 = vld [vmem:[%s268 + $0x710] sm:$0xff]
      %v557 = vld [vmem:[%s268 + $0x718] sm:$0xff]
      %v558 = vld [vmem:[%s268 + $0x720] sm:$0xff]
      %v559 = vld [vmem:[%s268 + $0x728] sm:$0xff]
      %v560 = vld [vmem:[%s268 + $0x730] sm:$0xff]
      %v561 = vld [vmem:[%s268 + $0x738] sm:$0xff]
      %v562 = vld [vmem:[%s268 + $0x740] sm:$0xff]
      %v563 = vld [vmem:[%s268 + $0x748] sm:$0xff]
      %v564 = vld [vmem:[%s268 + $0x750] sm:$0xff]
      %v565 = vld [vmem:[%s268 + $0x758] sm:$0xff]
      %v566 = vld [vmem:[%s268 + $0x760] sm:$0xff]
      %v567 = vld [vmem:[%s268 + $0x768] sm:$0xff]
      %v568 = vld [vmem:[%s268 + $0x770] sm:$0xff]
      %v569 = vld [vmem:[%s268 + $0x778] sm:$0xff]
      %v570 = vld [vmem:[%s268 + $0x780] sm:$0xff]
      %v571 = vld [vmem:[%s268 + $0x788] sm:$0xff]
      %v572 = vld [vmem:[%s268 + $0x790] sm:$0xff]
      %v573 = vld [vmem:[%s268 + $0x798] sm:$0xff]
      %v574 = vld [vmem:[%s268 + $0x7a0] sm:$0xff]
      %v575 = vld [vmem:[%s268 + $0x7a8] sm:$0xff]
      %v576 = vld [vmem:[%s268 + $0x7b0] sm:$0xff]
      %v577 = vld [vmem:[%s268 + $0x7b8] sm:$0xff]
      %v578 = vld [vmem:[%s268 + $0x7c0] sm:$0xff]
      %v579 = vld [vmem:[%s268 + $0x7c8] sm:$0xff]
      %v580 = vld [vmem:[%s268 + $0x7d0] sm:$0xff]
      %v581 = vld [vmem:[%s268 + $0x7d8] sm:$0xff]
      %v582 = vld [vmem:[%s268 + $0x7e0] sm:$0xff]
      %v583 = vld [vmem:[%s268 + $0x7e8] sm:$0xff]
      %v584 = vld [vmem:[%s268 + $0x7f0] sm:$0xff]
      %v585 = vld [vmem:[%s268 + $0x7f8] sm:$0xff]
      %v618 = vunpack.c.l.b16 %v298
      %v619 = vunpack.c.h.b16 %v298
      %v620 = vunpack.c.l.b16 %v299
      %v621 = vunpack.c.h.b16 %v299
      %v622 = vunpack.c.l.b16 %v300
      %v623 = vunpack.c.h.b16 %v300
      %v624 = vunpack.c.l.b16 %v301
      %v625 = vunpack.c.h.b16 %v301
      %v626 = vunpack.c.l.b16 %v302
      %v627 = vunpack.c.h.b16 %v302
      %v628 = vunpack.c.l.b16 %v303
      %v629 = vunpack.c.h.b16 %v303
      %v630 = vunpack.c.l.b16 %v304
      %v631 = vunpack.c.h.b16 %v304
      %v632 = vunpack.c.l.b16 %v305
      %v633 = vunpack.c.h.b16 %v305
      %v634 = vunpack.c.l.b16 %v306
      %v635 = vunpack.c.h.b16 %v306
      %v636 = vunpack.c.l.b16 %v307
      %v637 = vunpack.c.h.b16 %v307
      %v638 = vunpack.c.l.b16 %v308
      %v639 = vunpack.c.h.b16 %v308
      %v640 = vunpack.c.l.b16 %v309
      %v641 = vunpack.c.h.b16 %v309
      %v642 = vunpack.c.l.b16 %v310
      %v643 = vunpack.c.h.b16 %v310
      %v644 = vunpack.c.l.b16 %v311
      %v645 = vunpack.c.h.b16 %v311
      %v646 = vunpack.c.l.b16 %v312
      %v647 = vunpack.c.h.b16 %v312
      %v648 = vunpack.c.l.b16 %v313
      %v649 = vunpack.c.h.b16 %v313
      %v650 = vunpack.c.l.b16 %v314
      %v651 = vunpack.c.h.b16 %v314
      %v652 = vunpack.c.l.b16 %v315
      %v653 = vunpack.c.h.b16 %v315
      %v654 = vunpack.c.l.b16 %v316
      %v655 = vunpack.c.h.b16 %v316
      %v656 = vunpack.c.l.b16 %v317
      %v657 = vunpack.c.h.b16 %v317
      %v658 = vunpack.c.l.b16 %v318
      %v659 = vunpack.c.h.b16 %v318
      %v660 = vunpack.c.l.b16 %v319
      %v661 = vunpack.c.h.b16 %v319
      %v662 = vunpack.c.l.b16 %v320
      %v663 = vunpack.c.h.b16 %v320
      %v664 = vunpack.c.l.b16 %v321
      %v665 = vunpack.c.h.b16 %v321
      %v666 = vunpack.c.l.b16 %v322
      %v667 = vunpack.c.h.b16 %v322
      %v668 = vunpack.c.l.b16 %v323
      %v669 = vunpack.c.h.b16 %v323
      %v670 = vunpack.c.l.b16 %v324
      %v671 = vunpack.c.h.b16 %v324
      %v672 = vunpack.c.l.b16 %v325
      %v673 = vunpack.c.h.b16 %v325
      %v674 = vunpack.c.l.b16 %v326
      %v675 = vunpack.c.h.b16 %v326
      %v676 = vunpack.c.l.b16 %v327
      %v677 = vunpack.c.h.b16 %v327
      %v678 = vunpack.c.l.b16 %v328
      %v679 = vunpack.c.h.b16 %v328
      %v680 = vunpack.c.l.b16 %v329
      %v681 = vunpack.c.h.b16 %v329
      %v682 = vpack.c.b16 %v634, %v618
      %v683 = vpack.c.b16 %v635, %v619
      %v684 = vpack.c.b16 %v636, %v620
      %v685 = vpack.c.b16 %v637, %v621
      %v686 = vpack.c.b16 %v638, %v622
      %v687 = vpack.c.b16 %v639, %v623
      %v688 = vpack.c.b16 %v640, %v624
      %v689 = vpack.c.b16 %v641, %v625
      %v690 = vpack.c.b16 %v642, %v626
      %v691 = vpack.c.b16 %v643, %v627
      %v692 = vpack.c.b16 %v644, %v628
      %v693 = vpack.c.b16 %v645, %v629
      %v694 = vpack.c.b16 %v646, %v630
      %v695 = vpack.c.b16 %v647, %v631
      %v696 = vpack.c.b16 %v648, %v632
      %v697 = vpack.c.b16 %v649, %v633
      %v698 = vpack.c.b16 %v666, %v650
      %v699 = vpack.c.b16 %v667, %v651
      %v700 = vpack.c.b16 %v668, %v652
      %v701 = vpack.c.b16 %v669, %v653
      %v702 = vpack.c.b16 %v670, %v654
      %v703 = vpack.c.b16 %v671, %v655
      %v704 = vpack.c.b16 %v672, %v656
      %v705 = vpack.c.b16 %v673, %v657
      %v706 = vpack.c.b16 %v674, %v658
      %v707 = vpack.c.b16 %v675, %v659
      %v708 = vpack.c.b16 %v676, %v660
      %v709 = vpack.c.b16 %v677, %v661
      %v710 = vpack.c.b16 %v678, %v662
      %v711 = vpack.c.b16 %v679, %v663
      %v712 = vpack.c.b16 %v680, %v664
      %v713 = vpack.c.b16 %v681, %v665
      %v1002 = vunpack.c.l.b16 %v330
      %v1003 = vunpack.c.h.b16 %v330
      %v1004 = vunpack.c.l.b16 %v331
      %v1005 = vunpack.c.h.b16 %v331
      %v1006 = vunpack.c.l.b16 %v332
      %v1007 = vunpack.c.h.b16 %v332
      %v1008 = vunpack.c.l.b16 %v333
      %v1009 = vunpack.c.h.b16 %v333
      %v1010 = vunpack.c.l.b16 %v334
      %v1011 = vunpack.c.h.b16 %v334
      %v1012 = vunpack.c.l.b16 %v335
      %v1013 = vunpack.c.h.b16 %v335
      %v1014 = vunpack.c.l.b16 %v336
      %v1015 = vunpack.c.h.b16 %v336
      %v1016 = vunpack.c.l.b16 %v337
      %v1017 = vunpack.c.h.b16 %v337
      %v1018 = vunpack.c.l.b16 %v338
      %v1019 = vunpack.c.h.b16 %v338
      %v1020 = vunpack.c.l.b16 %v339
      %v1021 = vunpack.c.h.b16 %v339
      %v1022 = vunpack.c.l.b16 %v340
      %v1023 = vunpack.c.h.b16 %v340
      %v1024 = vunpack.c.l.b16 %v341
      %v1025 = vunpack.c.h.b16 %v341
      %v1026 = vunpack.c.l.b16 %v342
      %v1027 = vunpack.c.h.b16 %v342
      %v1028 = vunpack.c.l.b16 %v343
      %v1029 = vunpack.c.h.b16 %v343
      %v1030 = vunpack.c.l.b16 %v344
      %v1031 = vunpack.c.h.b16 %v344
      %v1032 = vunpack.c.l.b16 %v345
      %v1033 = vunpack.c.h.b16 %v345
      %v1034 = vunpack.c.l.b16 %v346
      %v1035 = vunpack.c.h.b16 %v346
      %v1036 = vunpack.c.l.b16 %v347
      %v1037 = vunpack.c.h.b16 %v347
      %v1038 = vunpack.c.l.b16 %v348
      %v1039 = vunpack.c.h.b16 %v348
      %v1040 = vunpack.c.l.b16 %v349
      %v1041 = vunpack.c.h.b16 %v349
      %v1042 = vunpack.c.l.b16 %v350
      %v1043 = vunpack.c.h.b16 %v350
      %v1044 = vunpack.c.l.b16 %v351
      %v1045 = vunpack.c.h.b16 %v351
      %v1046 = vunpack.c.l.b16 %v352
      %v1047 = vunpack.c.h.b16 %v352
      %v1048 = vunpack.c.l.b16 %v353
      %v1049 = vunpack.c.h.b16 %v353
      %v1050 = vunpack.c.l.b16 %v354
      %v1051 = vunpack.c.h.b16 %v354
      %v1052 = vunpack.c.l.b16 %v355
      %v1053 = vunpack.c.h.b16 %v355
      %v1054 = vunpack.c.l.b16 %v356
      %v1055 = vunpack.c.h.b16 %v356
      %v1056 = vunpack.c.l.b16 %v357
      %v1057 = vunpack.c.h.b16 %v357
      %v1058 = vunpack.c.l.b16 %v358
      %v1059 = vunpack.c.h.b16 %v358
      %v1060 = vunpack.c.l.b16 %v359
      %v1061 = vunpack.c.h.b16 %v359
      %v1062 = vunpack.c.l.b16 %v360
      %v1063 = vunpack.c.h.b16 %v360
      %v1064 = vunpack.c.l.b16 %v361
      %v1065 = vunpack.c.h.b16 %v361
      %v1066 = vunpack.c.l.b16 %v362
      %v1067 = vunpack.c.h.b16 %v362
      %v1068 = vunpack.c.l.b16 %v363
      %v1069 = vunpack.c.h.b16 %v363
      %v1070 = vunpack.c.l.b16 %v364
      %v1071 = vunpack.c.h.b16 %v364
      %v1072 = vunpack.c.l.b16 %v365
      %v1073 = vunpack.c.h.b16 %v365
      %v1074 = vunpack.c.l.b16 %v366
      %v1075 = vunpack.c.h.b16 %v366
      %v1076 = vunpack.c.l.b16 %v367
      %v1077 = vunpack.c.h.b16 %v367
      %v1078 = vunpack.c.l.b16 %v368
      %v1079 = vunpack.c.h.b16 %v368
      %v1080 = vunpack.c.l.b16 %v369
      %v1081 = vunpack.c.h.b16 %v369
      %v1082 = vunpack.c.l.b16 %v370
      %v1083 = vunpack.c.h.b16 %v370
      %v1084 = vunpack.c.l.b16 %v371
      %v1085 = vunpack.c.h.b16 %v371
      %v1086 = vunpack.c.l.b16 %v372
      %v1087 = vunpack.c.h.b16 %v372
      %v1088 = vunpack.c.l.b16 %v373
      %v1089 = vunpack.c.h.b16 %v373
      %v1090 = vunpack.c.l.b16 %v374
      %v1091 = vunpack.c.h.b16 %v374
      %v1092 = vunpack.c.l.b16 %v375
      %v1093 = vunpack.c.h.b16 %v375
      %v1094 = vunpack.c.l.b16 %v376
      %v1095 = vunpack.c.h.b16 %v376
      %v1096 = vunpack.c.l.b16 %v377
      %v1097 = vunpack.c.h.b16 %v377
      %v1098 = vunpack.c.l.b16 %v378
      %v1099 = vunpack.c.h.b16 %v378
      %v1100 = vunpack.c.l.b16 %v379
      %v1101 = vunpack.c.h.b16 %v379
      %v1102 = vunpack.c.l.b16 %v380
      %v1103 = vunpack.c.h.b16 %v380
      %v1104 = vunpack.c.l.b16 %v381
      %v1105 = vunpack.c.h.b16 %v381
      %v1106 = vunpack.c.l.b16 %v382
      %v1107 = vunpack.c.h.b16 %v382
      %v1108 = vunpack.c.l.b16 %v383
      %v1109 = vunpack.c.h.b16 %v383
      %v1110 = vunpack.c.l.b16 %v384
      %v1111 = vunpack.c.h.b16 %v384
      %v1112 = vunpack.c.l.b16 %v385
      %v1113 = vunpack.c.h.b16 %v385
      %v1114 = vunpack.c.l.b16 %v386
      %v1115 = vunpack.c.h.b16 %v386
      %v1116 = vunpack.c.l.b16 %v387
      %v1117 = vunpack.c.h.b16 %v387
      %v1118 = vunpack.c.l.b16 %v388
      %v1119 = vunpack.c.h.b16 %v388
      %v1120 = vunpack.c.l.b16 %v389
      %v1121 = vunpack.c.h.b16 %v389
      %v1122 = vunpack.c.l.b16 %v390
      %v1123 = vunpack.c.h.b16 %v390
      %v1124 = vunpack.c.l.b16 %v391
      %v1125 = vunpack.c.h.b16 %v391
      %v1126 = vunpack.c.l.b16 %v392
      %v1127 = vunpack.c.h.b16 %v392
      %v1128 = vunpack.c.l.b16 %v393
      %v1129 = vunpack.c.h.b16 %v393
      %v1130 = vunpack.c.l.b16 %v394
      %v1131 = vunpack.c.h.b16 %v394
      %v1132 = vunpack.c.l.b16 %v395
      %v1133 = vunpack.c.h.b16 %v395
      %v1134 = vunpack.c.l.b16 %v396
      %v1135 = vunpack.c.h.b16 %v396
      %v1136 = vunpack.c.l.b16 %v397
      %v1137 = vunpack.c.h.b16 %v397
      %v1138 = vunpack.c.l.b16 %v398
      %v1139 = vunpack.c.h.b16 %v398
      %v1140 = vunpack.c.l.b16 %v399
      %v1141 = vunpack.c.h.b16 %v399
      %v1142 = vunpack.c.l.b16 %v400
      %v1143 = vunpack.c.h.b16 %v400
      %v1144 = vunpack.c.l.b16 %v401
      %v1145 = vunpack.c.h.b16 %v401
      %v1146 = vunpack.c.l.b16 %v402
      %v1147 = vunpack.c.h.b16 %v402
      %v1148 = vunpack.c.l.b16 %v403
      %v1149 = vunpack.c.h.b16 %v403
      %v1150 = vunpack.c.l.b16 %v404
      %v1151 = vunpack.c.h.b16 %v404
      %v1152 = vunpack.c.l.b16 %v405
      %v1153 = vunpack.c.h.b16 %v405
      %v1154 = vunpack.c.l.b16 %v406
      %v1155 = vunpack.c.h.b16 %v406
      %v1156 = vunpack.c.l.b16 %v407
      %v1157 = vunpack.c.h.b16 %v407
      %v1158 = vunpack.c.l.b16 %v408
      %v1159 = vunpack.c.h.b16 %v408
      %v1160 = vunpack.c.l.b16 %v409
      %v1161 = vunpack.c.h.b16 %v409
      %v1162 = vunpack.c.l.b16 %v410
      %v1163 = vunpack.c.h.b16 %v410
      %v1164 = vunpack.c.l.b16 %v411
      %v1165 = vunpack.c.h.b16 %v411
      %v1166 = vunpack.c.l.b16 %v412
      %v1167 = vunpack.c.h.b16 %v412
      %v1168 = vunpack.c.l.b16 %v413
      %v1169 = vunpack.c.h.b16 %v413
      %v1170 = vunpack.c.l.b16 %v414
      %v1171 = vunpack.c.h.b16 %v414
      %v1172 = vunpack.c.l.b16 %v415
      %v1173 = vunpack.c.h.b16 %v415
      %v1174 = vunpack.c.l.b16 %v416
      %v1175 = vunpack.c.h.b16 %v416
      %v1176 = vunpack.c.l.b16 %v417
      %v1177 = vunpack.c.h.b16 %v417
      %v1178 = vunpack.c.l.b16 %v418
      %v1179 = vunpack.c.h.b16 %v418
      %v1180 = vunpack.c.l.b16 %v419
      %v1181 = vunpack.c.h.b16 %v419
      %v1182 = vunpack.c.l.b16 %v420
      %v1183 = vunpack.c.h.b16 %v420
      %v1184 = vunpack.c.l.b16 %v421
      %v1185 = vunpack.c.h.b16 %v421
      %v1186 = vunpack.c.l.b16 %v422
      %v1187 = vunpack.c.h.b16 %v422
      %v1188 = vunpack.c.l.b16 %v423
      %v1189 = vunpack.c.h.b16 %v423
      %v1190 = vunpack.c.l.b16 %v424
      %v1191 = vunpack.c.h.b16 %v424
      %v1192 = vunpack.c.l.b16 %v425
      %v1193 = vunpack.c.h.b16 %v425
      %v1194 = vunpack.c.l.b16 %v426
      %v1195 = vunpack.c.h.b16 %v426
      %v1196 = vunpack.c.l.b16 %v427
      %v1197 = vunpack.c.h.b16 %v427
      %v1198 = vunpack.c.l.b16 %v428
      %v1199 = vunpack.c.h.b16 %v428
      %v1200 = vunpack.c.l.b16 %v429
      %v1201 = vunpack.c.h.b16 %v429
      %v1202 = vunpack.c.l.b16 %v430
      %v1203 = vunpack.c.h.b16 %v430
      %v1204 = vunpack.c.l.b16 %v431
      %v1205 = vunpack.c.h.b16 %v431
      %v1206 = vunpack.c.l.b16 %v432
      %v1207 = vunpack.c.h.b16 %v432
      %v1208 = vunpack.c.l.b16 %v433
      %v1209 = vunpack.c.h.b16 %v433
      %v1210 = vunpack.c.l.b16 %v434
      %v1211 = vunpack.c.h.b16 %v434
      %v1212 = vunpack.c.l.b16 %v435
      %v1213 = vunpack.c.h.b16 %v435
      %v1214 = vunpack.c.l.b16 %v436
      %v1215 = vunpack.c.h.b16 %v436
      %v1216 = vunpack.c.l.b16 %v437
      %v1217 = vunpack.c.h.b16 %v437
      %v1218 = vunpack.c.l.b16 %v438
      %v1219 = vunpack.c.h.b16 %v438
      %v1220 = vunpack.c.l.b16 %v439
      %v1221 = vunpack.c.h.b16 %v439
      %v1222 = vunpack.c.l.b16 %v440
      %v1223 = vunpack.c.h.b16 %v440
      %v1224 = vunpack.c.l.b16 %v441
      %v1225 = vunpack.c.h.b16 %v441
      %v1226 = vunpack.c.l.b16 %v442
      %v1227 = vunpack.c.h.b16 %v442
      %v1228 = vunpack.c.l.b16 %v443
      %v1229 = vunpack.c.h.b16 %v443
      %v1230 = vunpack.c.l.b16 %v444
      %v1231 = vunpack.c.h.b16 %v444
      %v1232 = vunpack.c.l.b16 %v445
      %v1233 = vunpack.c.h.b16 %v445
      %v1234 = vunpack.c.l.b16 %v446
      %v1235 = vunpack.c.h.b16 %v446
      %v1236 = vunpack.c.l.b16 %v447
      %v1237 = vunpack.c.h.b16 %v447
      %v1238 = vunpack.c.l.b16 %v448
      %v1239 = vunpack.c.h.b16 %v448
      %v1240 = vunpack.c.l.b16 %v449
      %v1241 = vunpack.c.h.b16 %v449
      %v1242 = vunpack.c.l.b16 %v450
      %v1243 = vunpack.c.h.b16 %v450
      %v1244 = vunpack.c.l.b16 %v451
      %v1245 = vunpack.c.h.b16 %v451
      %v1246 = vunpack.c.l.b16 %v452
      %v1247 = vunpack.c.h.b16 %v452
      %v1248 = vunpack.c.l.b16 %v453
      %v1249 = vunpack.c.h.b16 %v453
      %v1250 = vunpack.c.l.b16 %v454
      %v1251 = vunpack.c.h.b16 %v454
      %v1252 = vunpack.c.l.b16 %v455
      %v1253 = vunpack.c.h.b16 %v455
      %v1254 = vunpack.c.l.b16 %v456
      %v1255 = vunpack.c.h.b16 %v456
      %v1256 = vunpack.c.l.b16 %v457
      %v1257 = vunpack.c.h.b16 %v457
      %v1258 = vunpack.c.l.b16 %v458
      %v1259 = vunpack.c.h.b16 %v458
      %v1260 = vunpack.c.l.b16 %v459
      %v1261 = vunpack.c.h.b16 %v459
      %v1262 = vunpack.c.l.b16 %v460
      %v1263 = vunpack.c.h.b16 %v460
      %v1264 = vunpack.c.l.b16 %v461
      %v1265 = vunpack.c.h.b16 %v461
      %v1266 = vunpack.c.l.b16 %v462
      %v1267 = vunpack.c.h.b16 %v462
      %v1268 = vunpack.c.l.b16 %v463
      %v1269 = vunpack.c.h.b16 %v463
      %v1270 = vunpack.c.l.b16 %v464
      %v1271 = vunpack.c.h.b16 %v464
      %v1272 = vunpack.c.l.b16 %v465
      %v1273 = vunpack.c.h.b16 %v465
      %v1274 = vunpack.c.l.b16 %v466
      %v1275 = vunpack.c.h.b16 %v466
      %v1276 = vunpack.c.l.b16 %v467
      %v1277 = vunpack.c.h.b16 %v467
      %v1278 = vunpack.c.l.b16 %v468
      %v1279 = vunpack.c.h.b16 %v468
      %v1280 = vunpack.c.l.b16 %v469
      %v1281 = vunpack.c.h.b16 %v469
      %v1282 = vunpack.c.l.b16 %v470
      %v1283 = vunpack.c.h.b16 %v470
      %v1284 = vunpack.c.l.b16 %v471
      %v1285 = vunpack.c.h.b16 %v471
      %v1286 = vunpack.c.l.b16 %v472
      %v1287 = vunpack.c.h.b16 %v472
      %v1288 = vunpack.c.l.b16 %v473
      %v1289 = vunpack.c.h.b16 %v473
      %v1290 = vunpack.c.l.b16 %v474
      %v1291 = vunpack.c.h.b16 %v474
      %v1292 = vunpack.c.l.b16 %v475
      %v1293 = vunpack.c.h.b16 %v475
      %v1294 = vunpack.c.l.b16 %v476
      %v1295 = vunpack.c.h.b16 %v476
      %v1296 = vunpack.c.l.b16 %v477
      %v1297 = vunpack.c.h.b16 %v477
      %v1298 = vunpack.c.l.b16 %v478
      %v1299 = vunpack.c.h.b16 %v478
      %v1300 = vunpack.c.l.b16 %v479
      %v1301 = vunpack.c.h.b16 %v479
      %v1302 = vunpack.c.l.b16 %v480
      %v1303 = vunpack.c.h.b16 %v480
      %v1304 = vunpack.c.l.b16 %v481
      %v1305 = vunpack.c.h.b16 %v481
      %v1306 = vunpack.c.l.b16 %v482
      %v1307 = vunpack.c.h.b16 %v482
      %v1308 = vunpack.c.l.b16 %v483
      %v1309 = vunpack.c.h.b16 %v483
      %v1310 = vunpack.c.l.b16 %v484
      %v1311 = vunpack.c.h.b16 %v484
      %v1312 = vunpack.c.l.b16 %v485
      %v1313 = vunpack.c.h.b16 %v485
      %v1314 = vunpack.c.l.b16 %v486
      %v1315 = vunpack.c.h.b16 %v486
      %v1316 = vunpack.c.l.b16 %v487
      %v1317 = vunpack.c.h.b16 %v487
      %v1318 = vunpack.c.l.b16 %v488
      %v1319 = vunpack.c.h.b16 %v488
      %v1320 = vunpack.c.l.b16 %v489
      %v1321 = vunpack.c.h.b16 %v489
      %v1322 = vunpack.c.l.b16 %v490
      %v1323 = vunpack.c.h.b16 %v490
      %v1324 = vunpack.c.l.b16 %v491
      %v1325 = vunpack.c.h.b16 %v491
      %v1326 = vunpack.c.l.b16 %v492
      %v1327 = vunpack.c.h.b16 %v492
      %v1328 = vunpack.c.l.b16 %v493
      %v1329 = vunpack.c.h.b16 %v493
      %v1330 = vunpack.c.l.b16 %v494
      %v1331 = vunpack.c.h.b16 %v494
      %v1332 = vunpack.c.l.b16 %v495
      %v1333 = vunpack.c.h.b16 %v495
      %v1334 = vunpack.c.l.b16 %v496
      %v1335 = vunpack.c.h.b16 %v496
      %v1336 = vunpack.c.l.b16 %v497
      %v1337 = vunpack.c.h.b16 %v497
      %v1338 = vunpack.c.l.b16 %v498
      %v1339 = vunpack.c.h.b16 %v498
      %v1340 = vunpack.c.l.b16 %v499
      %v1341 = vunpack.c.h.b16 %v499
      %v1342 = vunpack.c.l.b16 %v500
      %v1343 = vunpack.c.h.b16 %v500
      %v1344 = vunpack.c.l.b16 %v501
      %v1345 = vunpack.c.h.b16 %v501
      %v1346 = vunpack.c.l.b16 %v502
      %v1347 = vunpack.c.h.b16 %v502
      %v1348 = vunpack.c.l.b16 %v503
      %v1349 = vunpack.c.h.b16 %v503
      %v1350 = vunpack.c.l.b16 %v504
      %v1351 = vunpack.c.h.b16 %v504
      %v1352 = vunpack.c.l.b16 %v505
      %v1353 = vunpack.c.h.b16 %v505
      %v1354 = vunpack.c.l.b16 %v506
      %v1355 = vunpack.c.h.b16 %v506
      %v1356 = vunpack.c.l.b16 %v507
      %v1357 = vunpack.c.h.b16 %v507
      %v1358 = vunpack.c.l.b16 %v508
      %v1359 = vunpack.c.h.b16 %v508
      %v1360 = vunpack.c.l.b16 %v509
      %v1361 = vunpack.c.h.b16 %v509
      %v1362 = vunpack.c.l.b16 %v510
      %v1363 = vunpack.c.h.b16 %v510
      %v1364 = vunpack.c.l.b16 %v511
      %v1365 = vunpack.c.h.b16 %v511
      %v1366 = vunpack.c.l.b16 %v512
      %v1367 = vunpack.c.h.b16 %v512
      %v1368 = vunpack.c.l.b16 %v513
      %v1369 = vunpack.c.h.b16 %v513
      %v1370 = vunpack.c.l.b16 %v514
      %v1371 = vunpack.c.h.b16 %v514
      %v1372 = vunpack.c.l.b16 %v515
      %v1373 = vunpack.c.h.b16 %v515
      %v1374 = vunpack.c.l.b16 %v516
      %v1375 = vunpack.c.h.b16 %v516
      %v1376 = vunpack.c.l.b16 %v517
      %v1377 = vunpack.c.h.b16 %v517
      %v1378 = vunpack.c.l.b16 %v518
      %v1379 = vunpack.c.h.b16 %v518
      %v1380 = vunpack.c.l.b16 %v519
      %v1381 = vunpack.c.h.b16 %v519
      %v1382 = vunpack.c.l.b16 %v520
      %v1383 = vunpack.c.h.b16 %v520
      %v1384 = vunpack.c.l.b16 %v521
      %v1385 = vunpack.c.h.b16 %v521
      %v1386 = vunpack.c.l.b16 %v522
      %v1387 = vunpack.c.h.b16 %v522
      %v1388 = vunpack.c.l.b16 %v523
      %v1389 = vunpack.c.h.b16 %v523
      %v1390 = vunpack.c.l.b16 %v524
      %v1391 = vunpack.c.h.b16 %v524
      %v1392 = vunpack.c.l.b16 %v525
      %v1393 = vunpack.c.h.b16 %v525
      %v1394 = vunpack.c.l.b16 %v526
      %v1395 = vunpack.c.h.b16 %v526
      %v1396 = vunpack.c.l.b16 %v527
      %v1397 = vunpack.c.h.b16 %v527
      %v1398 = vunpack.c.l.b16 %v528
      %v1399 = vunpack.c.h.b16 %v528
      %v1400 = vunpack.c.l.b16 %v529
      %v1401 = vunpack.c.h.b16 %v529
      %v1402 = vunpack.c.l.b16 %v530
      %v1403 = vunpack.c.h.b16 %v530
      %v1404 = vunpack.c.l.b16 %v531
      %v1405 = vunpack.c.h.b16 %v531
      %v1406 = vunpack.c.l.b16 %v532
      %v1407 = vunpack.c.h.b16 %v532
      %v1408 = vunpack.c.l.b16 %v533
      %v1409 = vunpack.c.h.b16 %v533
      %v1410 = vunpack.c.l.b16 %v534
      %v1411 = vunpack.c.h.b16 %v534
      %v1412 = vunpack.c.l.b16 %v535
      %v1413 = vunpack.c.h.b16 %v535
      %v1414 = vunpack.c.l.b16 %v536
      %v1415 = vunpack.c.h.b16 %v536
      %v1416 = vunpack.c.l.b16 %v537
      %v1417 = vunpack.c.h.b16 %v537
      %v1418 = vunpack.c.l.b16 %v538
      %v1419 = vunpack.c.h.b16 %v538
      %v1420 = vunpack.c.l.b16 %v539
      %v1421 = vunpack.c.h.b16 %v539
      %v1422 = vunpack.c.l.b16 %v540
      %v1423 = vunpack.c.h.b16 %v540
      %v1424 = vunpack.c.l.b16 %v541
      %v1425 = vunpack.c.h.b16 %v541
      %v1426 = vunpack.c.l.b16 %v542
      %v1427 = vunpack.c.h.b16 %v542
      %v1428 = vunpack.c.l.b16 %v543
      %v1429 = vunpack.c.h.b16 %v543
      %v1430 = vunpack.c.l.b16 %v544
      %v1431 = vunpack.c.h.b16 %v544
      %v1432 = vunpack.c.l.b16 %v545
      %v1433 = vunpack.c.h.b16 %v545
      %v1434 = vunpack.c.l.b16 %v546
      %v1435 = vunpack.c.h.b16 %v546
      %v1436 = vunpack.c.l.b16 %v547
      %v1437 = vunpack.c.h.b16 %v547
      %v1438 = vunpack.c.l.b16 %v548
      %v1439 = vunpack.c.h.b16 %v548
      %v1440 = vunpack.c.l.b16 %v549
      %v1441 = vunpack.c.h.b16 %v549
      %v1442 = vunpack.c.l.b16 %v550
      %v1443 = vunpack.c.h.b16 %v550
      %v1444 = vunpack.c.l.b16 %v551
      %v1445 = vunpack.c.h.b16 %v551
      %v1446 = vunpack.c.l.b16 %v552
      %v1447 = vunpack.c.h.b16 %v552
      %v1448 = vunpack.c.l.b16 %v553
      %v1449 = vunpack.c.h.b16 %v553
      %v1450 = vunpack.c.l.b16 %v554
      %v1451 = vunpack.c.h.b16 %v554
      %v1452 = vunpack.c.l.b16 %v555
      %v1453 = vunpack.c.h.b16 %v555
      %v1454 = vunpack.c.l.b16 %v556
      %v1455 = vunpack.c.h.b16 %v556
      %v1456 = vunpack.c.l.b16 %v557
      %v1457 = vunpack.c.h.b16 %v557
      %v1458 = vunpack.c.l.b16 %v558
      %v1459 = vunpack.c.h.b16 %v558
      %v1460 = vunpack.c.l.b16 %v559
      %v1461 = vunpack.c.h.b16 %v559
      %v1462 = vunpack.c.l.b16 %v560
      %v1463 = vunpack.c.h.b16 %v560
      %v1464 = vunpack.c.l.b16 %v561
      %v1465 = vunpack.c.h.b16 %v561
      %v1466 = vunpack.c.l.b16 %v562
      %v1467 = vunpack.c.h.b16 %v562
      %v1468 = vunpack.c.l.b16 %v563
      %v1469 = vunpack.c.h.b16 %v563
      %v1470 = vunpack.c.l.b16 %v564
      %v1471 = vunpack.c.h.b16 %v564
      %v1472 = vunpack.c.l.b16 %v565
      %v1473 = vunpack.c.h.b16 %v565
      %v1474 = vunpack.c.l.b16 %v566
      %v1475 = vunpack.c.h.b16 %v566
      %v1476 = vunpack.c.l.b16 %v567
      %v1477 = vunpack.c.h.b16 %v567
      %v1478 = vunpack.c.l.b16 %v568
      %v1479 = vunpack.c.h.b16 %v568
      %v1480 = vunpack.c.l.b16 %v569
      %v1481 = vunpack.c.h.b16 %v569
      %v1482 = vunpack.c.l.b16 %v570
      %v1483 = vunpack.c.h.b16 %v570
      %v1484 = vunpack.c.l.b16 %v571
      %v1485 = vunpack.c.h.b16 %v571
      %v1486 = vunpack.c.l.b16 %v572
      %v1487 = vunpack.c.h.b16 %v572
      %v1488 = vunpack.c.l.b16 %v573
      %v1489 = vunpack.c.h.b16 %v573
      %v1490 = vunpack.c.l.b16 %v574
      %v1491 = vunpack.c.h.b16 %v574
      %v1492 = vunpack.c.l.b16 %v575
      %v1493 = vunpack.c.h.b16 %v575
      %v1494 = vunpack.c.l.b16 %v576
      %v1495 = vunpack.c.h.b16 %v576
      %v1496 = vunpack.c.l.b16 %v577
      %v1497 = vunpack.c.h.b16 %v577
      %v1498 = vunpack.c.l.b16 %v578
      %v1499 = vunpack.c.h.b16 %v578
      %v1500 = vunpack.c.l.b16 %v579
      %v1501 = vunpack.c.h.b16 %v579
      %v1502 = vunpack.c.l.b16 %v580
      %v1503 = vunpack.c.h.b16 %v580
      %v1504 = vunpack.c.l.b16 %v581
      %v1505 = vunpack.c.h.b16 %v581
      %v1506 = vunpack.c.l.b16 %v582
      %v1507 = vunpack.c.h.b16 %v582
      %v1508 = vunpack.c.l.b16 %v583
      %v1509 = vunpack.c.h.b16 %v583
      %v1510 = vunpack.c.l.b16 %v584
      %v1511 = vunpack.c.h.b16 %v584
      %v1512 = vunpack.c.l.b16 %v585
      %v1513 = vunpack.c.h.b16 %v585
      %v1514 = vpack.c.b16 %v1004, %v1002
      %v1515 = vpack.c.b16 %v1005, %v1003
      %v1516 = vpack.c.b16 %v1008, %v1006
      %v1517 = vpack.c.b16 %v1009, %v1007
      %v1518 = vpack.c.b16 %v1012, %v1010
      %v1519 = vpack.c.b16 %v1013, %v1011
      %v1520 = vpack.c.b16 %v1016, %v1014
      %v1521 = vpack.c.b16 %v1017, %v1015
      %v1522 = vpack.c.b16 %v1020, %v1018
      %v1523 = vpack.c.b16 %v1021, %v1019
      %v1524 = vpack.c.b16 %v1024, %v1022
      %v1525 = vpack.c.b16 %v1025, %v1023
      %v1526 = vpack.c.b16 %v1028, %v1026
      %v1527 = vpack.c.b16 %v1029, %v1027
      %v1528 = vpack.c.b16 %v1032, %v1030
      %v1529 = vpack.c.b16 %v1033, %v1031
      %v1530 = vpack.c.b16 %v1036, %v1034
      %v1531 = vpack.c.b16 %v1037, %v1035
      %v1532 = vpack.c.b16 %v1040, %v1038
      %v1533 = vpack.c.b16 %v1041, %v1039
      %v1534 = vpack.c.b16 %v1044, %v1042
      %v1535 = vpack.c.b16 %v1045, %v1043
      %v1536 = vpack.c.b16 %v1048, %v1046
      %v1537 = vpack.c.b16 %v1049, %v1047
      %v1538 = vpack.c.b16 %v1052, %v1050
      %v1539 = vpack.c.b16 %v1053, %v1051
      %v1540 = vpack.c.b16 %v1056, %v1054
      %v1541 = vpack.c.b16 %v1057, %v1055
      %v1542 = vpack.c.b16 %v1060, %v1058
      %v1543 = vpack.c.b16 %v1061, %v1059
      %v1544 = vpack.c.b16 %v1064, %v1062
      %v1545 = vpack.c.b16 %v1065, %v1063
      %v1546 = vpack.c.b16 %v1068, %v1066
      %v1547 = vpack.c.b16 %v1069, %v1067
      %v1548 = vpack.c.b16 %v1072, %v1070
      %v1549 = vpack.c.b16 %v1073, %v1071
      %v1550 = vpack.c.b16 %v1076, %v1074
      %v1551 = vpack.c.b16 %v1077, %v1075
      %v1552 = vpack.c.b16 %v1080, %v1078
      %v1553 = vpack.c.b16 %v1081, %v1079
      %v1554 = vpack.c.b16 %v1084, %v1082
      %v1555 = vpack.c.b16 %v1085, %v1083
      %v1556 = vpack.c.b16 %v1088, %v1086
      %v1557 = vpack.c.b16 %v1089, %v1087
      %v1558 = vpack.c.b16 %v1092, %v1090
      %v1559 = vpack.c.b16 %v1093, %v1091
      %v1560 = vpack.c.b16 %v1096, %v1094
      %v1561 = vpack.c.b16 %v1097, %v1095
      %v1562 = vpack.c.b16 %v1100, %v1098
      %v1563 = vpack.c.b16 %v1101, %v1099
      %v1564 = vpack.c.b16 %v1104, %v1102
      %v1565 = vpack.c.b16 %v1105, %v1103
      %v1566 = vpack.c.b16 %v1108, %v1106
      %v1567 = vpack.c.b16 %v1109, %v1107
      %v1568 = vpack.c.b16 %v1112, %v1110
      %v1569 = vpack.c.b16 %v1113, %v1111
      %v1570 = vpack.c.b16 %v1116, %v1114
      %v1571 = vpack.c.b16 %v1117, %v1115
      %v1572 = vpack.c.b16 %v1120, %v1118
      %v1573 = vpack.c.b16 %v1121, %v1119
      %v1574 = vpack.c.b16 %v1124, %v1122
      %v1575 = vpack.c.b16 %v1125, %v1123
      %v1576 = vpack.c.b16 %v1128, %v1126
      %v1577 = vpack.c.b16 %v1129, %v1127
      %v1578 = vpack.c.b16 %v1132, %v1130
      %v1579 = vpack.c.b16 %v1133, %v1131
      %v1580 = vpack.c.b16 %v1136, %v1134
      %v1581 = vpack.c.b16 %v1137, %v1135
      %v1582 = vpack.c.b16 %v1140, %v1138
      %v1583 = vpack.c.b16 %v1141, %v1139
      %v1584 = vpack.c.b16 %v1144, %v1142
      %v1585 = vpack.c.b16 %v1145, %v1143
      %v1586 = vpack.c.b16 %v1148, %v1146
      %v1587 = vpack.c.b16 %v1149, %v1147
      %v1588 = vpack.c.b16 %v1152, %v1150
      %v1589 = vpack.c.b16 %v1153, %v1151
      %v1590 = vpack.c.b16 %v1156, %v1154
      %v1591 = vpack.c.b16 %v1157, %v1155
      %v1592 = vpack.c.b16 %v1160, %v1158
      %v1593 = vpack.c.b16 %v1161, %v1159
      %v1594 = vpack.c.b16 %v1164, %v1162
      %v1595 = vpack.c.b16 %v1165, %v1163
      %v1596 = vpack.c.b16 %v1168, %v1166
      %v1597 = vpack.c.b16 %v1169, %v1167
      %v1598 = vpack.c.b16 %v1172, %v1170
      %v1599 = vpack.c.b16 %v1173, %v1171
      %v1600 = vpack.c.b16 %v1176, %v1174
      %v1601 = vpack.c.b16 %v1177, %v1175
      %v1602 = vpack.c.b16 %v1180, %v1178
      %v1603 = vpack.c.b16 %v1181, %v1179
      %v1604 = vpack.c.b16 %v1184, %v1182
      %v1605 = vpack.c.b16 %v1185, %v1183
      %v1606 = vpack.c.b16 %v1188, %v1186
      %v1607 = vpack.c.b16 %v1189, %v1187
      %v1608 = vpack.c.b16 %v1192, %v1190
      %v1609 = vpack.c.b16 %v1193, %v1191
      %v1610 = vpack.c.b16 %v1196, %v1194
      %v1611 = vpack.c.b16 %v1197, %v1195
      %v1612 = vpack.c.b16 %v1200, %v1198
      %v1613 = vpack.c.b16 %v1201, %v1199
      %v1614 = vpack.c.b16 %v1204, %v1202
      %v1615 = vpack.c.b16 %v1205, %v1203
      %v1616 = vpack.c.b16 %v1208, %v1206
      %v1617 = vpack.c.b16 %v1209, %v1207
      %v1618 = vpack.c.b16 %v1212, %v1210
      %v1619 = vpack.c.b16 %v1213, %v1211
      %v1620 = vpack.c.b16 %v1216, %v1214
      %v1621 = vpack.c.b16 %v1217, %v1215
      %v1622 = vpack.c.b16 %v1220, %v1218
      %v1623 = vpack.c.b16 %v1221, %v1219
      %v1624 = vpack.c.b16 %v1224, %v1222
      %v1625 = vpack.c.b16 %v1225, %v1223
      %v1626 = vpack.c.b16 %v1228, %v1226
      %v1627 = vpack.c.b16 %v1229, %v1227
      %v1628 = vpack.c.b16 %v1232, %v1230
      %v1629 = vpack.c.b16 %v1233, %v1231
      %v1630 = vpack.c.b16 %v1236, %v1234
      %v1631 = vpack.c.b16 %v1237, %v1235
      %v1632 = vpack.c.b16 %v1240, %v1238
      %v1633 = vpack.c.b16 %v1241, %v1239
      %v1634 = vpack.c.b16 %v1244, %v1242
      %v1635 = vpack.c.b16 %v1245, %v1243
      %v1636 = vpack.c.b16 %v1248, %v1246
      %v1637 = vpack.c.b16 %v1249, %v1247
      %v1638 = vpack.c.b16 %v1252, %v1250
      %v1639 = vpack.c.b16 %v1253, %v1251
      %v1640 = vpack.c.b16 %v1256, %v1254
      %v1641 = vpack.c.b16 %v1257, %v1255
      %v1642 = vpack.c.b16 %v1260, %v1258
      %v1643 = vpack.c.b16 %v1261, %v1259
      %v1644 = vpack.c.b16 %v1264, %v1262
      %v1645 = vpack.c.b16 %v1265, %v1263
      %v1646 = vpack.c.b16 %v1268, %v1266
      %v1647 = vpack.c.b16 %v1269, %v1267
      %v1648 = vpack.c.b16 %v1272, %v1270
      %v1649 = vpack.c.b16 %v1273, %v1271
      %v1650 = vpack.c.b16 %v1276, %v1274
      %v1651 = vpack.c.b16 %v1277, %v1275
      %v1652 = vpack.c.b16 %v1280, %v1278
      %v1653 = vpack.c.b16 %v1281, %v1279
      %v1654 = vpack.c.b16 %v1284, %v1282
      %v1655 = vpack.c.b16 %v1285, %v1283
      %v1656 = vpack.c.b16 %v1288, %v1286
      %v1657 = vpack.c.b16 %v1289, %v1287
      %v1658 = vpack.c.b16 %v1292, %v1290
      %v1659 = vpack.c.b16 %v1293, %v1291
      %v1660 = vpack.c.b16 %v1296, %v1294
      %v1661 = vpack.c.b16 %v1297, %v1295
      %v1662 = vpack.c.b16 %v1300, %v1298
      %v1663 = vpack.c.b16 %v1301, %v1299
      %v1664 = vpack.c.b16 %v1304, %v1302
      %v1665 = vpack.c.b16 %v1305, %v1303
      %v1666 = vpack.c.b16 %v1308, %v1306
      %v1667 = vpack.c.b16 %v1309, %v1307
      %v1668 = vpack.c.b16 %v1312, %v1310
      %v1669 = vpack.c.b16 %v1313, %v1311
      %v1670 = vpack.c.b16 %v1316, %v1314
      %v1671 = vpack.c.b16 %v1317, %v1315
      %v1672 = vpack.c.b16 %v1320, %v1318
      %v1673 = vpack.c.b16 %v1321, %v1319
      %v1674 = vpack.c.b16 %v1324, %v1322
      %v1675 = vpack.c.b16 %v1325, %v1323
      %v1676 = vpack.c.b16 %v1328, %v1326
      %v1677 = vpack.c.b16 %v1329, %v1327
      %v1678 = vpack.c.b16 %v1332, %v1330
      %v1679 = vpack.c.b16 %v1333, %v1331
      %v1680 = vpack.c.b16 %v1336, %v1334
      %v1681 = vpack.c.b16 %v1337, %v1335
      %v1682 = vpack.c.b16 %v1340, %v1338
      %v1683 = vpack.c.b16 %v1341, %v1339
      %v1684 = vpack.c.b16 %v1344, %v1342
      %v1685 = vpack.c.b16 %v1345, %v1343
      %v1686 = vpack.c.b16 %v1348, %v1346
      %v1687 = vpack.c.b16 %v1349, %v1347
      %v1688 = vpack.c.b16 %v1352, %v1350
      %v1689 = vpack.c.b16 %v1353, %v1351
      %v1690 = vpack.c.b16 %v1356, %v1354
      %v1691 = vpack.c.b16 %v1357, %v1355
      %v1692 = vpack.c.b16 %v1360, %v1358
      %v1693 = vpack.c.b16 %v1361, %v1359
      %v1694 = vpack.c.b16 %v1364, %v1362
      %v1695 = vpack.c.b16 %v1365, %v1363
      %v1696 = vpack.c.b16 %v1368, %v1366
      %v1697 = vpack.c.b16 %v1369, %v1367
      %v1698 = vpack.c.b16 %v1372, %v1370
      %v1699 = vpack.c.b16 %v1373, %v1371
      %v1700 = vpack.c.b16 %v1376, %v1374
      %v1701 = vpack.c.b16 %v1377, %v1375
      %v1702 = vpack.c.b16 %v1380, %v1378
      %v1703 = vpack.c.b16 %v1381, %v1379
      %v1704 = vpack.c.b16 %v1384, %v1382
      %v1705 = vpack.c.b16 %v1385, %v1383
      %v1706 = vpack.c.b16 %v1388, %v1386
      %v1707 = vpack.c.b16 %v1389, %v1387
      %v1708 = vpack.c.b16 %v1392, %v1390
      %v1709 = vpack.c.b16 %v1393, %v1391
      %v1710 = vpack.c.b16 %v1396, %v1394
      %v1711 = vpack.c.b16 %v1397, %v1395
      %v1712 = vpack.c.b16 %v1400, %v1398
      %v1713 = vpack.c.b16 %v1401, %v1399
      %v1714 = vpack.c.b16 %v1404, %v1402
      %v1715 = vpack.c.b16 %v1405, %v1403
      %v1716 = vpack.c.b16 %v1408, %v1406
      %v1717 = vpack.c.b16 %v1409, %v1407
      %v1718 = vpack.c.b16 %v1412, %v1410
      %v1719 = vpack.c.b16 %v1413, %v1411
      %v1720 = vpack.c.b16 %v1416, %v1414
      %v1721 = vpack.c.b16 %v1417, %v1415
      %v1722 = vpack.c.b16 %v1420, %v1418
      %v1723 = vpack.c.b16 %v1421, %v1419
      %v1724 = vpack.c.b16 %v1424, %v1422
      %v1725 = vpack.c.b16 %v1425, %v1423
      %v1726 = vpack.c.b16 %v1428, %v1426
      %v1727 = vpack.c.b16 %v1429, %v1427
      %v1728 = vpack.c.b16 %v1432, %v1430
      %v1729 = vpack.c.b16 %v1433, %v1431
      %v1730 = vpack.c.b16 %v1436, %v1434
      %v1731 = vpack.c.b16 %v1437, %v1435
      %v1732 = vpack.c.b16 %v1440, %v1438
      %v1733 = vpack.c.b16 %v1441, %v1439
      %v1734 = vpack.c.b16 %v1444, %v1442
      %v1735 = vpack.c.b16 %v1445, %v1443
      %v1736 = vpack.c.b16 %v1448, %v1446
      %v1737 = vpack.c.b16 %v1449, %v1447
      %v1738 = vpack.c.b16 %v1452, %v1450
      %v1739 = vpack.c.b16 %v1453, %v1451
      %v1740 = vpack.c.b16 %v1456, %v1454
      %v1741 = vpack.c.b16 %v1457, %v1455
      %v1742 = vpack.c.b16 %v1460, %v1458
      %v1743 = vpack.c.b16 %v1461, %v1459
      %v1744 = vpack.c.b16 %v1464, %v1462
      %v1745 = vpack.c.b16 %v1465, %v1463
      %v1746 = vpack.c.b16 %v1468, %v1466
      %v1747 = vpack.c.b16 %v1469, %v1467
      %v1748 = vpack.c.b16 %v1472, %v1470
      %v1749 = vpack.c.b16 %v1473, %v1471
      %v1750 = vpack.c.b16 %v1476, %v1474
      %v1751 = vpack.c.b16 %v1477, %v1475
      %v1752 = vpack.c.b16 %v1480, %v1478
      %v1753 = vpack.c.b16 %v1481, %v1479
      %v1754 = vpack.c.b16 %v1484, %v1482
      %v1755 = vpack.c.b16 %v1485, %v1483
      %v1756 = vpack.c.b16 %v1488, %v1486
      %v1757 = vpack.c.b16 %v1489, %v1487
      %v1758 = vpack.c.b16 %v1492, %v1490
      %v1759 = vpack.c.b16 %v1493, %v1491
      %v1760 = vpack.c.b16 %v1496, %v1494
      %v1761 = vpack.c.b16 %v1497, %v1495
      %v1762 = vpack.c.b16 %v1500, %v1498
      %v1763 = vpack.c.b16 %v1501, %v1499
      %v1764 = vpack.c.b16 %v1504, %v1502
      %v1765 = vpack.c.b16 %v1505, %v1503
      %v1766 = vpack.c.b16 %v1508, %v1506
      %v1767 = vpack.c.b16 %v1509, %v1507
      %v1768 = vpack.c.b16 %v1512, %v1510
      %v1769 = vpack.c.b16 %v1513, %v1511
      %2026 = vmatprep.subr.bf16.mxu0 %v1529
      %2027 = vmatpush1.bf16.msra.mxu0 %v1528
      %2028 = vmatprep.subr.bf16.mxu0 %v1527
      %2029 = vmatpush1.bf16.msra.mxu0 %v1526
      %2030 = vmatprep.subr.bf16.mxu0 %v1525
      %2031 = vmatpush1.bf16.msra.mxu0 %v1524
      %2032 = vmatprep.subr.bf16.mxu0 %v1523
      %2033 = vmatpush1.bf16.msra.mxu0 %v1522
      %2034 = vmatprep.subr.bf16.mxu0 %v1521
      %2035 = vmatpush1.bf16.msra.mxu0 %v1520
      %2036 = vmatprep.subr.bf16.mxu0 %v1519
      %2037 = vmatpush1.bf16.msra.mxu0 %v1518
      %2038 = vmatprep.subr.bf16.mxu0 %v1517
      %2039 = vmatpush1.bf16.msra.mxu0 %v1516
      %2040 = vmatprep.subr.bf16.mxu0 %v1515
      %2041 = vmatpush1.bf16.msra.mxu0 %v1514
      %2042 = vmatprep.subr.bf16.mxu0 %v1545
      %2043 = vmatpush2.bf16.msra.mxu0 %v1544
      %2044 = vmatprep.subr.bf16.mxu0 %v1543
      %2045 = vmatpush2.bf16.msra.mxu0 %v1542
      %2046 = vmatprep.subr.bf16.mxu0 %v1541
      %2047 = vmatpush2.bf16.msra.mxu0 %v1540
      %2048 = vmatprep.subr.bf16.mxu0 %v1539
      %2049 = vmatpush2.bf16.msra.mxu0 %v1538
      %2050 = vmatprep.subr.bf16.mxu0 %v1537
      %2051 = vmatpush2.bf16.msra.mxu0 %v1536
      %2052 = vmatprep.subr.bf16.mxu0 %v1535
      %2053 = vmatpush2.bf16.msra.mxu0 %v1534
      %2054 = vmatprep.subr.bf16.mxu0 %v1533
      %2055 = vmatpush2.bf16.msra.mxu0 %v1532
      %2056 = vmatprep.subr.bf16.mxu0 %v1531
      %2057 = vmatpush2.bf16.msra.mxu0 %v1530
      %2058 = vmatprep.mubr.bf16.mxu0 %v683
      %2059 = vmatmul.mubr.bf16.gmra.mxu0 %v682
      %v2060 = vpop.f32.mrf.mxu0
      %v2061 = vadd.f32 0.0, %v2060
      %v2062 = vpop.f32.mrf.mxu0
      %v2063 = vadd.f32 0.0, %v2062
      %v2064 = vpop.f32.mrf.mxu0
      %v2065 = vadd.f32 0.0, %v2064
      %v2066 = vpop.f32.mrf.mxu0
      %v2067 = vadd.f32 0.0, %v2066
      %2068 = vmatprep.mubr.bf16.mxu0 %v699
      %2069 = vmatmul.mubr.bf16.gmra.mxu0 %v698
      %v2070 = vpop.f32.mrf.mxu0
      %v2071 = vadd.f32 0.0, %v2070
      %v2072 = vpop.f32.mrf.mxu0
      %v2073 = vadd.f32 0.0, %v2072
      %v2074 = vpop.f32.mrf.mxu0
      %v2075 = vadd.f32 0.0, %v2074
      %v2076 = vpop.f32.mrf.mxu0
      %v2077 = vadd.f32 0.0, %v2076
      %2078 = vdwg.mxu0
      %2079 = vmatprep.subr.bf16.mxu0 %v1561
      %2080 = vmatpush1.bf16.msra.mxu0 %v1560
      %2081 = vmatprep.subr.bf16.mxu0 %v1559
      %2082 = vmatpush1.bf16.msra.mxu0 %v1558
      %2083 = vmatprep.subr.bf16.mxu0 %v1557
      %2084 = vmatpush1.bf16.msra.mxu0 %v1556
      %2085 = vmatprep.subr.bf16.mxu0 %v1555
      %2086 = vmatpush1.bf16.msra.mxu0 %v1554
      %2087 = vmatprep.subr.bf16.mxu0 %v1553
      %2088 = vmatpush1.bf16.msra.mxu0 %v1552
      %2089 = vmatprep.subr.bf16.mxu0 %v1551
      %2090 = vmatpush1.bf16.msra.mxu0 %v1550
      %2091 = vmatprep.subr.bf16.mxu0 %v1549
      %2092 = vmatpush1.bf16.msra.mxu0 %v1548
      %2093 = vmatprep.subr.bf16.mxu0 %v1547
      %2094 = vmatpush1.bf16.msra.mxu0 %v1546
      %2095 = vmatprep.subr.bf16.mxu0 %v1577
      %2096 = vmatpush2.bf16.msra.mxu0 %v1576
      %2097 = vmatprep.subr.bf16.mxu0 %v1575
      %2098 = vmatpush2.bf16.msra.mxu0 %v1574
      %2099 = vmatprep.subr.bf16.mxu0 %v1573
      %2100 = vmatpush2.bf16.msra.mxu0 %v1572
      %2101 = vmatprep.subr.bf16.mxu0 %v1571
      %2102 = vmatpush2.bf16.msra.mxu0 %v1570
      %2103 = vmatprep.subr.bf16.mxu0 %v1569
      %2104 = vmatpush2.bf16.msra.mxu0 %v1568
      %2105 = vmatprep.subr.bf16.mxu0 %v1567
      %2106 = vmatpush2.bf16.msra.mxu0 %v1566
      %2107 = vmatprep.subr.bf16.mxu0 %v1565
      %2108 = vmatpush2.bf16.msra.mxu0 %v1564
      %2109 = vmatprep.subr.bf16.mxu0 %v1563
      %2110 = vmatpush2.bf16.msra.mxu0 %v1562
      %2111 = vmatprep.mubr.bf16.mxu0 %v685
      %2112 = vmatmul.mubr.bf16.gmra.mxu0 %v684
      %v2113 = vpop.f32.mrf.mxu0
      %v2114 = vadd.f32 %v2061, %v2113
      %v2115 = vpop.f32.mrf.mxu0
      %v2116 = vadd.f32 %v2063, %v2115
      %v2117 = vpop.f32.mrf.mxu0
      %v2118 = vadd.f32 %v2065, %v2117
      %v2119 = vpop.f32.mrf.mxu0
      %v2120 = vadd.f32 %v2067, %v2119
      %2121 = vmatprep.mubr.bf16.mxu0 %v701
      %2122 = vmatmul.mubr.bf16.gmra.mxu0 %v700
      %v2123 = vpop.f32.mrf.mxu0
      %v2124 = vadd.f32 %v2071, %v2123
      %v2125 = vpop.f32.mrf.mxu0
      %v2126 = vadd.f32 %v2073, %v2125
      %v2127 = vpop.f32.mrf.mxu0
      %v2128 = vadd.f32 %v2075, %v2127
      %v2129 = vpop.f32.mrf.mxu0
      %v2130 = vadd.f32 %v2077, %v2129
      %2131 = vdwg.mxu0
      %2132 = vmatprep.subr.bf16.mxu0 %v1593
      %2133 = vmatpush1.bf16.msra.mxu0 %v1592
      %2134 = vmatprep.subr.bf16.mxu0 %v1591
      %2135 = vmatpush1.bf16.msra.mxu0 %v1590
      %2136 = vmatprep.subr.bf16.mxu0 %v1589
      %2137 = vmatpush1.bf16.msra.mxu0 %v1588
      %2138 = vmatprep.subr.bf16.mxu0 %v1587
      %2139 = vmatpush1.bf16.msra.mxu0 %v1586
      %2140 = vmatprep.subr.bf16.mxu0 %v1585
      %2141 = vmatpush1.bf16.msra.mxu0 %v1584
      %2142 = vmatprep.subr.bf16.mxu0 %v1583
      %2143 = vmatpush1.bf16.msra.mxu0 %v1582
      %2144 = vmatprep.subr.bf16.mxu0 %v1581
      %2145 = vmatpush1.bf16.msra.mxu0 %v1580
      %2146 = vmatprep.subr.bf16.mxu0 %v1579
      %2147 = vmatpush1.bf16.msra.mxu0 %v1578
      %2148 = vmatprep.subr.bf16.mxu0 %v1609
      %2149 = vmatpush2.bf16.msra.mxu0 %v1608
      %2150 = vmatprep.subr.bf16.mxu0 %v1607
      %2151 = vmatpush2.bf16.msra.mxu0 %v1606
      %2152 = vmatprep.subr.bf16.mxu0 %v1605
      %2153 = vmatpush2.bf16.msra.mxu0 %v1604
      %2154 = vmatprep.subr.bf16.mxu0 %v1603
      %2155 = vmatpush2.bf16.msra.mxu0 %v1602
      %2156 = vmatprep.subr.bf16.mxu0 %v1601
      %2157 = vmatpush2.bf16.msra.mxu0 %v1600
      %2158 = vmatprep.subr.bf16.mxu0 %v1599
      %2159 = vmatpush2.bf16.msra.mxu0 %v1598
      %2160 = vmatprep.subr.bf16.mxu0 %v1597
      %2161 = vmatpush2.bf16.msra.mxu0 %v1596
      %2162 = vmatprep.subr.bf16.mxu0 %v1595
      %2163 = vmatpush2.bf16.msra.mxu0 %v1594
      %2164 = vmatprep.mubr.bf16.mxu0 %v687
      %2165 = vmatmul.mubr.bf16.gmra.mxu0 %v686
      %v2166 = vpop.f32.mrf.mxu0
      %v2167 = vadd.f32 %v2114, %v2166
      %v2168 = vpop.f32.mrf.mxu0
      %v2169 = vadd.f32 %v2116, %v2168
      %v2170 = vpop.f32.mrf.mxu0
      %v2171 = vadd.f32 %v2118, %v2170
      %v2172 = vpop.f32.mrf.mxu0
      %v2173 = vadd.f32 %v2120, %v2172
      %2174 = vmatprep.mubr.bf16.mxu0 %v703
      %2175 = vmatmul.mubr.bf16.gmra.mxu0 %v702
      %v2176 = vpop.f32.mrf.mxu0
      %v2177 = vadd.f32 %v2124, %v2176
      %v2178 = vpop.f32.mrf.mxu0
      %v2179 = vadd.f32 %v2126, %v2178
      %v2180 = vpop.f32.mrf.mxu0
      %v2181 = vadd.f32 %v2128, %v2180
      %v2182 = vpop.f32.mrf.mxu0
      %v2183 = vadd.f32 %v2130, %v2182
      %2184 = vdwg.mxu0
      %2185 = vmatprep.subr.bf16.mxu0 %v1625
      %2186 = vmatpush1.bf16.msra.mxu0 %v1624
      %2187 = vmatprep.subr.bf16.mxu0 %v1623
      %2188 = vmatpush1.bf16.msra.mxu0 %v1622
      %2189 = vmatprep.subr.bf16.mxu0 %v1621
      %2190 = vmatpush1.bf16.msra.mxu0 %v1620
      %2191 = vmatprep.subr.bf16.mxu0 %v1619
      %2192 = vmatpush1.bf16.msra.mxu0 %v1618
      %2193 = vmatprep.subr.bf16.mxu0 %v1617
      %2194 = vmatpush1.bf16.msra.mxu0 %v1616
      %2195 = vmatprep.subr.bf16.mxu0 %v1615
      %2196 = vmatpush1.bf16.msra.mxu0 %v1614
      %2197 = vmatprep.subr.bf16.mxu0 %v1613
      %2198 = vmatpush1.bf16.msra.mxu0 %v1612
      %2199 = vmatprep.subr.bf16.mxu0 %v1611
      %2200 = vmatpush1.bf16.msra.mxu0 %v1610
      %2201 = vmatprep.subr.bf16.mxu0 %v1641
      %2202 = vmatpush2.bf16.msra.mxu0 %v1640
      %2203 = vmatprep.subr.bf16.mxu0 %v1639
      %2204 = vmatpush2.bf16.msra.mxu0 %v1638
      %2205 = vmatprep.subr.bf16.mxu0 %v1637
      %2206 = vmatpush2.bf16.msra.mxu0 %v1636
      %2207 = vmatprep.subr.bf16.mxu0 %v1635
      %2208 = vmatpush2.bf16.msra.mxu0 %v1634
      %2209 = vmatprep.subr.bf16.mxu0 %v1633
      %2210 = vmatpush2.bf16.msra.mxu0 %v1632
      %2211 = vmatprep.subr.bf16.mxu0 %v1631
      %2212 = vmatpush2.bf16.msra.mxu0 %v1630
      %2213 = vmatprep.subr.bf16.mxu0 %v1629
      %2214 = vmatpush2.bf16.msra.mxu0 %v1628
      %2215 = vmatprep.subr.bf16.mxu0 %v1627
      %2216 = vmatpush2.bf16.msra.mxu0 %v1626
      %2217 = vmatprep.mubr.bf16.mxu0 %v689
      %2218 = vmatmul.mubr.bf16.gmra.mxu0 %v688
      %v2219 = vpop.f32.mrf.mxu0
      %v2220 = vadd.f32 %v2167, %v2219
      %v2221 = vpop.f32.mrf.mxu0
      %v2222 = vadd.f32 %v2169, %v2221
      %v2223 = vpop.f32.mrf.mxu0
      %v2224 = vadd.f32 %v2171, %v2223
      %v2225 = vpop.f32.mrf.mxu0
      %v2226 = vadd.f32 %v2173, %v2225
      %2227 = vmatprep.mubr.bf16.mxu0 %v705
      %2228 = vmatmul.mubr.bf16.gmra.mxu0 %v704
      %v2229 = vpop.f32.mrf.mxu0
      %v2230 = vadd.f32 %v2177, %v2229
      %v2231 = vpop.f32.mrf.mxu0
      %v2232 = vadd.f32 %v2179, %v2231
      %v2233 = vpop.f32.mrf.mxu0
      %v2234 = vadd.f32 %v2181, %v2233
      %v2235 = vpop.f32.mrf.mxu0
      %v2236 = vadd.f32 %v2183, %v2235
      %2237 = vdwg.mxu0
      %2238 = vmatprep.subr.bf16.mxu0 %v1657
      %2239 = vmatpush1.bf16.msra.mxu0 %v1656
      %2240 = vmatprep.subr.bf16.mxu0 %v1655
      %2241 = vmatpush1.bf16.msra.mxu0 %v1654
      %2242 = vmatprep.subr.bf16.mxu0 %v1653
      %2243 = vmatpush1.bf16.msra.mxu0 %v1652
      %2244 = vmatprep.subr.bf16.mxu0 %v1651
      %2245 = vmatpush1.bf16.msra.mxu0 %v1650
      %2246 = vmatprep.subr.bf16.mxu0 %v1649
      %2247 = vmatpush1.bf16.msra.mxu0 %v1648
      %2248 = vmatprep.subr.bf16.mxu0 %v1647
      %2249 = vmatpush1.bf16.msra.mxu0 %v1646
      %2250 = vmatprep.subr.bf16.mxu0 %v1645
      %2251 = vmatpush1.bf16.msra.mxu0 %v1644
      %2252 = vmatprep.subr.bf16.mxu0 %v1643
      %2253 = vmatpush1.bf16.msra.mxu0 %v1642
      %2254 = vmatprep.subr.bf16.mxu0 %v1673
      %2255 = vmatpush2.bf16.msra.mxu0 %v1672
      %2256 = vmatprep.subr.bf16.mxu0 %v1671
      %2257 = vmatpush2.bf16.msra.mxu0 %v1670
      %2258 = vmatprep.subr.bf16.mxu0 %v1669
      %2259 = vmatpush2.bf16.msra.mxu0 %v1668
      %2260 = vmatprep.subr.bf16.mxu0 %v1667
      %2261 = vmatpush2.bf16.msra.mxu0 %v1666
      %2262 = vmatprep.subr.bf16.mxu0 %v1665
      %2263 = vmatpush2.bf16.msra.mxu0 %v1664
      %2264 = vmatprep.subr.bf16.mxu0 %v1663
      %2265 = vmatpush2.bf16.msra.mxu0 %v1662
      %2266 = vmatprep.subr.bf16.mxu0 %v1661
      %2267 = vmatpush2.bf16.msra.mxu0 %v1660
      %2268 = vmatprep.subr.bf16.mxu0 %v1659
      %2269 = vmatpush2.bf16.msra.mxu0 %v1658
      %2270 = vmatprep.mubr.bf16.mxu0 %v691
      %2271 = vmatmul.mubr.bf16.gmra.mxu0 %v690
      %v2272 = vpop.f32.mrf.mxu0
      %v2273 = vadd.f32 %v2220, %v2272
      %v2274 = vpop.f32.mrf.mxu0
      %v2275 = vadd.f32 %v2222, %v2274
      %v2276 = vpop.f32.mrf.mxu0
      %v2277 = vadd.f32 %v2224, %v2276
      %v2278 = vpop.f32.mrf.mxu0
      %v2279 = vadd.f32 %v2226, %v2278
      %2280 = vmatprep.mubr.bf16.mxu0 %v707
      %2281 = vmatmul.mubr.bf16.gmra.mxu0 %v706
      %v2282 = vpop.f32.mrf.mxu0
      %v2283 = vadd.f32 %v2230, %v2282
      %v2284 = vpop.f32.mrf.mxu0
      %v2285 = vadd.f32 %v2232, %v2284
      %v2286 = vpop.f32.mrf.mxu0
      %v2287 = vadd.f32 %v2234, %v2286
      %v2288 = vpop.f32.mrf.mxu0
      %v2289 = vadd.f32 %v2236, %v2288
      %2290 = vdwg.mxu0
      %2291 = vmatprep.subr.bf16.mxu0 %v1689
      %2292 = vmatpush1.bf16.msra.mxu0 %v1688
      %2293 = vmatprep.subr.bf16.mxu0 %v1687
      %2294 = vmatpush1.bf16.msra.mxu0 %v1686
      %2295 = vmatprep.subr.bf16.mxu0 %v1685
      %2296 = vmatpush1.bf16.msra.mxu0 %v1684
      %2297 = vmatprep.subr.bf16.mxu0 %v1683
      %2298 = vmatpush1.bf16.msra.mxu0 %v1682
      %2299 = vmatprep.subr.bf16.mxu0 %v1681
      %2300 = vmatpush1.bf16.msra.mxu0 %v1680
      %2301 = vmatprep.subr.bf16.mxu0 %v1679
      %2302 = vmatpush1.bf16.msra.mxu0 %v1678
      %2303 = vmatprep.subr.bf16.mxu0 %v1677
      %2304 = vmatpush1.bf16.msra.mxu0 %v1676
      %2305 = vmatprep.subr.bf16.mxu0 %v1675
      %2306 = vmatpush1.bf16.msra.mxu0 %v1674
      %2307 = vmatprep.subr.bf16.mxu0 %v1705
      %2308 = vmatpush2.bf16.msra.mxu0 %v1704
      %2309 = vmatprep.subr.bf16.mxu0 %v1703
      %2310 = vmatpush2.bf16.msra.mxu0 %v1702
      %2311 = vmatprep.subr.bf16.mxu0 %v1701
      %2312 = vmatpush2.bf16.msra.mxu0 %v1700
      %2313 = vmatprep.subr.bf16.mxu0 %v1699
      %2314 = vmatpush2.bf16.msra.mxu0 %v1698
      %2315 = vmatprep.subr.bf16.mxu0 %v1697
      %2316 = vmatpush2.bf16.msra.mxu0 %v1696
      %2317 = vmatprep.subr.bf16.mxu0 %v1695
      %2318 = vmatpush2.bf16.msra.mxu0 %v1694
      %2319 = vmatprep.subr.bf16.mxu0 %v1693
      %2320 = vmatpush2.bf16.msra.mxu0 %v1692
      %2321 = vmatprep.subr.bf16.mxu0 %v1691
      %2322 = vmatpush2.bf16.msra.mxu0 %v1690
      %2323 = vmatprep.mubr.bf16.mxu0 %v693
      %2324 = vmatmul.mubr.bf16.gmra.mxu0 %v692
      %v2325 = vpop.f32.mrf.mxu0
      %v2326 = vadd.f32 %v2273, %v2325
      %v2327 = vpop.f32.mrf.mxu0
      %v2328 = vadd.f32 %v2275, %v2327
      %v2329 = vpop.f32.mrf.mxu0
      %v2330 = vadd.f32 %v2277, %v2329
      %v2331 = vpop.f32.mrf.mxu0
      %v2332 = vadd.f32 %v2279, %v2331
      %2333 = vmatprep.mubr.bf16.mxu0 %v709
      %2334 = vmatmul.mubr.bf16.gmra.mxu0 %v708
      %v2335 = vpop.f32.mrf.mxu0
      %v2336 = vadd.f32 %v2283, %v2335
      %v2337 = vpop.f32.mrf.mxu0
      %v2338 = vadd.f32 %v2285, %v2337
      %v2339 = vpop.f32.mrf.mxu0
      %v2340 = vadd.f32 %v2287, %v2339
      %v2341 = vpop.f32.mrf.mxu0
      %v2342 = vadd.f32 %v2289, %v2341
      %2343 = vdwg.mxu0
      %2344 = vmatprep.subr.bf16.mxu0 %v1721
      %2345 = vmatpush1.bf16.msra.mxu0 %v1720
      %2346 = vmatprep.subr.bf16.mxu0 %v1719
      %2347 = vmatpush1.bf16.msra.mxu0 %v1718
      %2348 = vmatprep.subr.bf16.mxu0 %v1717
      %2349 = vmatpush1.bf16.msra.mxu0 %v1716
      %2350 = vmatprep.subr.bf16.mxu0 %v1715
      %2351 = vmatpush1.bf16.msra.mxu0 %v1714
      %2352 = vmatprep.subr.bf16.mxu0 %v1713
      %2353 = vmatpush1.bf16.msra.mxu0 %v1712
      %2354 = vmatprep.subr.bf16.mxu0 %v1711
      %2355 = vmatpush1.bf16.msra.mxu0 %v1710
      %2356 = vmatprep.subr.bf16.mxu0 %v1709
      %2357 = vmatpush1.bf16.msra.mxu0 %v1708
      %2358 = vmatprep.subr.bf16.mxu0 %v1707
      %2359 = vmatpush1.bf16.msra.mxu0 %v1706
      %2360 = vmatprep.subr.bf16.mxu0 %v1737
      %2361 = vmatpush2.bf16.msra.mxu0 %v1736
      %2362 = vmatprep.subr.bf16.mxu0 %v1735
      %2363 = vmatpush2.bf16.msra.mxu0 %v1734
      %2364 = vmatprep.subr.bf16.mxu0 %v1733
      %2365 = vmatpush2.bf16.msra.mxu0 %v1732
      %2366 = vmatprep.subr.bf16.mxu0 %v1731
      %2367 = vmatpush2.bf16.msra.mxu0 %v1730
      %2368 = vmatprep.subr.bf16.mxu0 %v1729
      %2369 = vmatpush2.bf16.msra.mxu0 %v1728
      %2370 = vmatprep.subr.bf16.mxu0 %v1727
      %2371 = vmatpush2.bf16.msra.mxu0 %v1726
      %2372 = vmatprep.subr.bf16.mxu0 %v1725
      %2373 = vmatpush2.bf16.msra.mxu0 %v1724
      %2374 = vmatprep.subr.bf16.mxu0 %v1723
      %2375 = vmatpush2.bf16.msra.mxu0 %v1722
      %2376 = vmatprep.mubr.bf16.mxu0 %v695
      %2377 = vmatmul.mubr.bf16.gmra.mxu0 %v694
      %v2378 = vpop.f32.mrf.mxu0
      %v2379 = vadd.f32 %v2326, %v2378
      %v2380 = vpop.f32.mrf.mxu0
      %v2381 = vadd.f32 %v2328, %v2380
      %v2382 = vpop.f32.mrf.mxu0
      %v2383 = vadd.f32 %v2330, %v2382
      %v2384 = vpop.f32.mrf.mxu0
      %v2385 = vadd.f32 %v2332, %v2384
      %2386 = vmatprep.mubr.bf16.mxu0 %v711
      %2387 = vmatmul.mubr.bf16.gmra.mxu0 %v710
      %v2388 = vpop.f32.mrf.mxu0
      %v2389 = vadd.f32 %v2336, %v2388
      %v2390 = vpop.f32.mrf.mxu0
      %v2391 = vadd.f32 %v2338, %v2390
      %v2392 = vpop.f32.mrf.mxu0
      %v2393 = vadd.f32 %v2340, %v2392
      %v2394 = vpop.f32.mrf.mxu0
      %v2395 = vadd.f32 %v2342, %v2394
      %2396 = vdwg.mxu0
      %2397 = vmatprep.subr.bf16.mxu0 %v1753
      %2398 = vmatpush1.bf16.msra.mxu0 %v1752
      %2399 = vmatprep.subr.bf16.mxu0 %v1751
      %2400 = vmatpush1.bf16.msra.mxu0 %v1750
      %2401 = vmatprep.subr.bf16.mxu0 %v1749
      %2402 = vmatpush1.bf16.msra.mxu0 %v1748
      %2403 = vmatprep.subr.bf16.mxu0 %v1747
      %2404 = vmatpush1.bf16.msra.mxu0 %v1746
      %2405 = vmatprep.subr.bf16.mxu0 %v1745
      %2406 = vmatpush1.bf16.msra.mxu0 %v1744
      %2407 = vmatprep.subr.bf16.mxu0 %v1743
      %2408 = vmatpush1.bf16.msra.mxu0 %v1742
      %2409 = vmatprep.subr.bf16.mxu0 %v1741
      %2410 = vmatpush1.bf16.msra.mxu0 %v1740
      %2411 = vmatprep.subr.bf16.mxu0 %v1739
      %2412 = vmatpush1.bf16.msra.mxu0 %v1738
      %2413 = vmatprep.subr.bf16.mxu0 %v1769
      %2414 = vmatpush2.bf16.msra.mxu0 %v1768
      %2415 = vmatprep.subr.bf16.mxu0 %v1767
      %2416 = vmatpush2.bf16.msra.mxu0 %v1766
      %2417 = vmatprep.subr.bf16.mxu0 %v1765
      %2418 = vmatpush2.bf16.msra.mxu0 %v1764
      %2419 = vmatprep.subr.bf16.mxu0 %v1763
      %2420 = vmatpush2.bf16.msra.mxu0 %v1762
      %2421 = vmatprep.subr.bf16.mxu0 %v1761
      %2422 = vmatpush2.bf16.msra.mxu0 %v1760
      %2423 = vmatprep.subr.bf16.mxu0 %v1759
      %2424 = vmatpush2.bf16.msra.mxu0 %v1758
      %2425 = vmatprep.subr.bf16.mxu0 %v1757
      %2426 = vmatpush2.bf16.msra.mxu0 %v1756
      %2427 = vmatprep.subr.bf16.mxu0 %v1755
      %2428 = vmatpush2.bf16.msra.mxu0 %v1754
      %2429 = vmatprep.mubr.bf16.mxu0 %v697
      %2430 = vmatmul.mubr.bf16.gmra.mxu0 %v696
      %v2431 = vpop.f32.mrf.mxu0
      %v2432 = vadd.f32 %v2379, %v2431
      %v2433 = vpop.f32.mrf.mxu0
      %v2434 = vadd.f32 %v2381, %v2433
      %v2435 = vpop.f32.mrf.mxu0
      %v2436 = vadd.f32 %v2383, %v2435
      %v2437 = vpop.f32.mrf.mxu0
      %v2438 = vadd.f32 %v2385, %v2437
      %2439 = vmatprep.mubr.bf16.mxu0 %v713
      %2440 = vmatmul.mubr.bf16.gmra.mxu0 %v712
      %v2441 = vpop.f32.mrf.mxu0
      %v2442 = vadd.f32 %v2389, %v2441
      %v2443 = vpop.f32.mrf.mxu0
      %v2444 = vadd.f32 %v2391, %v2443
      %v2445 = vpop.f32.mrf.mxu0
      %v2446 = vadd.f32 %v2393, %v2445
      %v2447 = vpop.f32.mrf.mxu0
      %v2448 = vadd.f32 %v2395, %v2447
      %2449 = vdwg.mxu0
      %2450 = vst [vmem:[%s283] sm:$0xff] %v2432
      %2451 = vst [vmem:[%s283 + $0x8] sm:$0xff] %v2434
      %2452 = vst [vmem:[%s283 + $0x10] sm:$0xff] %v2436
      %2453 = vst [vmem:[%s283 + $0x18] sm:$0xff] %v2438
      %2454 = vst [vmem:[%s283 + $0x20] sm:$0xff] %v2442
      %2455 = vst [vmem:[%s283 + $0x28] sm:$0xff] %v2444
      %2456 = vst [vmem:[%s283 + $0x30] sm:$0xff] %v2446
      %2457 = vst [vmem:[%s283 + $0x38] sm:$0xff] %v2448
      %v2458 = vadd.f32 %v2432, %v2436
      %v2459 = vadd.f32 %v2458, %v2442
      %v2460 = vadd.f32 %v2459, %v2446
      %v2461 = vrot.slane %v2460, 4
      %v2462 = vadd.f32 %v2460, %v2461
      %v2463 = vrot.slane %v2462, 2
      %v2464 = vadd.f32 %v2462, %v2463
      %v2465 = vrot.slane %v2464, 1
      %v2466 = vadd.f32 %v2464, %v2465
      %v2467 = vadd.f32 %v2434, %v2438
      %v2468 = vadd.f32 %v2467, %v2444
      %v2469 = vadd.f32 %v2468, %v2448
      %v2470 = vrot.slane %v2469, 4
      %v2471 = vadd.f32 %v2469, %v2470
      %v2472 = vrot.slane %v2471, 2
      %v2473 = vadd.f32 %v2471, %v2472
      %v2474 = vrot.slane %v2473, 1
      %v2475 = vadd.f32 %v2473, %v2474
      %v2478 = vcombine.low %v2466, %v2475
      %v2480 = vunpack.c.l.s4 1966171168
      %v2481 = vunpack.c.0.s8 %v2480
      %v2482 = vlaneseq
      %v2483 = vshrl.u32 %v2482, 7
      %v2484 = vsub.s32 %v2481, %v2483
      %v2485 = vrot.slane %v2478, %v2484
      %v2487 = vunpack.c.l.s4 1966171168
      %v2488 = vunpack.c.0.s8 %v2487
      %v2489 = vlaneseq
      %v2490 = vshrl.u32 %v2489, 7
      %v2491 = vsub.s32 %v2488, %v2490
      %v2492 = vrot.slane %v2485, %v2491
      %v2494 = vlaneseq
      %vm2495 = vcmp.ge.s32.totalorder %v2494, 0
      %vm2496 = vcmp.lt.s32.totalorder %v2494, 256
      %vm2497 = vmand %vm2495, %vm2496
      %2498 = vst.msk [vmem:[%s295] ss:$2 sm:$0x3] %vm2497, %v2492
      %v2499 = vmul.f32 %v2432, %v2432
      %v2500 = vmul.f32 %v2434, %v2434
      %v2501 = vmul.f32 %v2436, %v2436
      %v2502 = vmul.f32 %v2438, %v2438
      %v2503 = vmul.f32 %v2442, %v2442
      %v2504 = vmul.f32 %v2444, %v2444
      %v2505 = vmul.f32 %v2446, %v2446
      %v2506 = vmul.f32 %v2448, %v2448
      %v2507 = vadd.f32 %v2499, %v2501
      %v2508 = vadd.f32 %v2507, %v2503
      %v2509 = vadd.f32 %v2508, %v2505
      %v2510 = vrot.slane %v2509, 4
      %v2511 = vadd.f32 %v2509, %v2510
      %v2512 = vrot.slane %v2511, 2
      %v2513 = vadd.f32 %v2511, %v2512
      %v2514 = vrot.slane %v2513, 1
      %v2515 = vadd.f32 %v2513, %v2514
      %v2516 = vadd.f32 %v2500, %v2502
      %v2517 = vadd.f32 %v2516, %v2504
      %v2518 = vadd.f32 %v2517, %v2506
      %v2519 = vrot.slane %v2518, 4
      %v2520 = vadd.f32 %v2518, %v2519
      %v2521 = vrot.slane %v2520, 2
      %v2522 = vadd.f32 %v2520, %v2521
      %v2523 = vrot.slane %v2522, 1
      %v2524 = vadd.f32 %v2522, %v2523
      %v2527 = vcombine.low %v2515, %v2524
      %v2529 = vunpack.c.l.s4 1966171168
      %v2530 = vunpack.c.0.s8 %v2529
      %v2531 = vlaneseq
      %v2532 = vshrl.u32 %v2531, 7
      %v2533 = vsub.s32 %v2530, %v2532
      %v2534 = vrot.slane %v2527, %v2533
      %v2536 = vunpack.c.l.s4 1966171168
      %v2537 = vunpack.c.0.s8 %v2536
      %v2538 = vlaneseq
      %v2539 = vshrl.u32 %v2538, 7
      %v2540 = vsub.s32 %v2537, %v2539
      %v2541 = vrot.slane %v2534, %v2540
      %s2543 = scalar_lea.vmem %s295, 1
      %2544 = vst.msk [vmem:[%s2543] ss:$2 sm:$0x3] %vm2497, %v2541
      %s2545 = smul.u32 4, %s21
      %s2546 = smul.u32 2, %s22
      %p2547 = scmp.lt.s32.totalorder %s20, 3
      %s2548 = scalar_select %p2547, %s20, 3
      %p2549 = scmp.lt.s32.totalorder %s2545, 3
      %s2550 = scalar_select %p2549, %s2545, 3
      %p2551 = scmp.lt.s32.totalorder %s2546, 1
      %s2552 = scalar_select %p2551, %s2546, 1
      %s2553 = smul.addr %s2550, 2
      %s2554 = sadd.s32 %s2552, %s2553
      %s2555 = smul.addr %s2548, 8
      %s2556 = sadd.s32 %s2554, %s2555
      %s2557 = smul.addr %s2556, 8
      %s2558 = scalar_lea.vmem %s2, %s2557
      %s2559 = sadd.s32 %s20, %s21
      %s2560 = smul.u32 2, %s22
      %p2561 = scmp.lt.s32.totalorder %s2559, 3
      %s2562 = scalar_select %p2561, %s2559, 3
      %p2563 = scmp.lt.s32.totalorder %s2560, 1
      %s2564 = scalar_select %p2563, %s2560, 1
      %s2565 = smul.addr %s2562, 2
      %s2566 = sadd.s32 %s2564, %s2565
      %s2567 = smul.addr %s2566, 2
      %s2568 = scalar_lea.vmem %s3, %s2567
      // Predicated region
      $region29: #{gen_forward.6} parent=27 // pred_check
        %p2569 = pneg %p112
      $region30: #{gen_forward.6} parent=27 // pred_check_branch
        %2571 = sbr.rel (%p2569) target = $region32
      $region31: #{gen_forward.6} parent=27 // pred_region
        %s2572 = smul.u32 4, %s21
        %s2573 = smul.u32 2, %s22
      $region32: #{gen_forward.6} parent=27 // pred_fallthru
        _
      // Predicated region
      $region33: #{gen_forward.6} parent=27 // pred_check
        %p2574 = pneg %p142
      $region34: #{gen_forward.6} parent=27 // pred_check_branch
        %2576 = sbr.rel (%p2574) target = $region36
      $region35: #{gen_forward.6} parent=27 // pred_region
        %s2577 = sadd.s32 %s20, %s21
        %s2578 = smul.u32 2, %s22
      $region36: #{gen_forward.6} parent=27 // pred_fallthru
        _
    $region28: #{gen_forward.6} parent=5 // pred_fallthru
      _
    %p2579 = scmp.le.s32.totalorder 2, %s10
    // Predicated region
    $region37: #{gen_forward.6} parent=5 // pred_check
      %p2580 = pneg %p2579
    $region38: #{gen_forward.6} parent=5 // pred_check_branch
      %2582 = sbr.rel (%p2580) target = $region40
    $region39: #{gen_forward.6} parent=5 // pred_region
      %s2583 = ssub.s32 %s10, 2
      // Predicated region
      $region41: #{gen_forward.6} parent=39 // pred_check
        %p2584 = pneg %p118
      $region42: #{gen_forward.6} parent=39 // pred_check_branch
        %2586 = sbr.rel (%p2584) target = $region44
      $region43: #{gen_forward.6} parent=39 // pred_region
        %s2587 = smul.u32 4, %s24
        %s2588 = smul.u32 2, %s25
        %p2589 = scmp.lt.s32.totalorder %s23, 3
        %s2590 = scalar_select %p2589, %s23, 3
        %p2591 = scmp.lt.s32.totalorder %s2587, 3
        %s2592 = scalar_select %p2591, %s2587, 3
        %p2593 = scmp.lt.s32.totalorder %s2588, 1
        %s2594 = scalar_select %p2593, %s2588, 1
        %s2595 = smul.addr %s2592, 2
        %s2596 = sadd.s32 %s2594, %s2595
        %s2597 = smul.addr %s2590, 8
        %s2598 = sadd.s32 %s2596, %s2597
        %s2599 = smul.addr %s2598, 8
        %s2600 = scalar_lea.vmem %s2, %s2599
      $region44: #{gen_forward.6} parent=39 // pred_fallthru
        _
      // Predicated region
      $region45: #{gen_forward.6} parent=39 // pred_check
        %p2601 = pneg %p148
      $region46: #{gen_forward.6} parent=39 // pred_check_branch
        %2603 = sbr.rel (%p2601) target = $region48
      $region47: #{gen_forward.6} parent=39 // pred_region
        %s2604 = sadd.s32 %s23, %s24
        %s2605 = smul.u32 2, %s25
        %p2606 = scmp.lt.s32.totalorder %s2604, 3
        %s2607 = scalar_select %p2606, %s2604, 3
        %p2608 = scmp.lt.s32.totalorder %s2605, 1
        %s2609 = scalar_select %p2608, %s2605, 1
        %s2610 = smul.addr %s2607, 2
        %s2611 = sadd.s32 %s2609, %s2610
        %s2612 = smul.addr %s2611, 2
        %s2613 = scalar_lea.vmem %s3, %s2612
      $region48: #{gen_forward.6} parent=39 // pred_fallthru
        _
    $region40: #{gen_forward.6} parent=5 // pred_fallthru
      _
  $region6: #{gen_forward.6} parent=0 // loop_footer
    %s14 = sadd.s32 1, %s10
  $region7: #{gen_forward.6} parent=0 // loop_footer_branch
    %9 = sbr.rel target = $region3
  $region8: #{gen_forward.6} parent=0 // loop_exit
    _

// kernel: gen_forward.7
$region0: #{gen_forward.7}
  #allocation0 [shape = 'u32[]', space=smem, size = 0x4, offset = 0x4, fixed_abs, tag = 'smem constant byte address 0x4 - core index']
  #allocation1 [shape = 'u32[144,128]{1,0:T(1,128)}', space=vmem, size = 0x12000, scoped, tag = 'internal scratch']
  %s0 = inlined_call_operand.vmem [shape: bf16[4,128,1024], index: 0, kind: input, shape index: {}]
  %s1 = inlined_call_operand.vmem [shape: bf16[4,1024,128], index: 1, kind: input, shape index: {}]
  %s2 = inlined_call_operand.vmem [shape: f32[4,128,128], index: 2, kind: output, shape index: {0}]
  %s3 = inlined_call_operand.vmem [shape: f32[4,2,128], index: 3, kind: output, shape index: {1}]
  %4 = xla_tuple %s2, %s3
  %s5 = sld [smem:[#allocation0]]
  $region49: #{gen_forward.7} parent=0
    _
  %s7 = ssub.s32 1, %s5
  %s8 = scalar_select 0, %s7, %s5
  loop: start=0, step=1, limit=6
  $region2: #{gen_forward.7} parent=0 // loop_pre_header
    _
  $region3: #{gen_forward.7} parent=0 // loop_header
    %s10 = sphi 0, %s14
    %p11 = scmp.ge.s32.totalorder %s10, 6
    %s17 = sphi 0, %s36
    %s18 = sphi 0, %s32
    %s19 = sphi 0, %s28
    %s20 = sphi 0, %s17
    %s21 = sphi 0, %s18
    %s22 = sphi 0, %s19
    %s23 = sphi 0, %s20
    %s24 = sphi 0, %s21
    %s25 = sphi 0, %s22
    %s41 = sphi 0, %s43
    %s44 = sphi 0, %s41
    %s45 = sphi 0, %s44
    %s61 = sphi 0, %s45
    %s69 = sphi 0, %s71
    %s72 = sphi 0, %s69
    %s73 = sphi 0, %s72
    %s89 = sphi 0, %s73
    %s99 = sphi 0, %s101
    %s102 = sphi 0, %s99
    %s103 = sphi 0, %s102
    %s119 = sphi 0, %s103
    %s129 = sphi 0, %s131
    %s132 = sphi 0, %s129
    %s133 = sphi 0, %s132
    %s149 = sphi 0, %s133
  $region4: #{gen_forward.7} parent=0 // loop_header_branch
    %13 = sbr.rel (%p11) target = $region8
  $region5: #{gen_forward.7} parent=0 // loop_body
    %s15 = ssub.s32 %s10, 1
    %s16 = ssub.s32 %s10, 2
    %s26 = sadd.s32 1, %s19
    %p27 = scmp.ge.s32.totalorder %s26, 1
    %s28 = scalar_select %p27, 0, %s26
    %s29 = sadd.s32 1, %s18
    %s30 = scalar_select %p27, %s29, %s18
    %p31 = scmp.ge.s32.totalorder %s30, 1
    %s32 = scalar_select %p31, 0, %s30
    %s33 = sadd.s32 1, %s17
    %s34 = scalar_select %p31, %s33, %s17
    %p35 = scmp.ge.s32.totalorder %s34, 4
    %s36 = scalar_select %p35, 0, %s34
    %s37 = ssub.s32 %s17, %s36
    %s38 = ssub.s32 %s18, %s32
    %s39 = sor.u32 %s37, %s38
    %p40 = scmp.eq.s32.totalorder %s39, 0
    %s42 = sadd.s32 %s41, 1
    %s43 = scalar_select %p40, %s41, %s42
    %p46 = pneg %p40
    %p47 = scmp.eq.s32.totalorder %s10, 3
    %p48 = por %p46, %p47
    %p49 = scmp.ne.s32.totalorder %s41, %s44
    %p50 = scmp.eq.s32.totalorder %s10, 0
    %p51 = por %p49, %p50
    %p52 = scmp.ne.s32.totalorder %s41, %s44
    %p53 = scmp.eq.s32.totalorder %s15, 3
    %p54 = por %p52, %p53
    %p55 = scmp.ne.s32.totalorder %s44, %s45
    %p56 = scmp.eq.s32.totalorder %s15, 0
    %p57 = por %p55, %p56
    %p58 = scmp.ne.s32.totalorder %s44, %s45
    %p59 = scmp.eq.s32.totalorder %s16, 3
    %p60 = por %p58, %p59
    %p62 = scmp.ne.s32.totalorder %s45, %s61
    %p63 = scmp.eq.s32.totalorder %s16, 0
    %p64 = por %p62, %p63
    %s65 = ssub.s32 %s17, %s36
    %s66 = ssub.s32 %s19, %s28
    %s67 = sor.u32 %s65, %s66
    %p68 = scmp.eq.s32.totalorder %s67, 0
    %s70 = sadd.s32 %s69, 1
    %s71 = scalar_select %p68, %s69, %s70
    %p74 = pneg %p68
    %p75 = scmp.eq.s32.totalorder %s10, 3
    %p76 = por %p74, %p75
    %p77 = scmp.ne.s32.totalorder %s69, %s72
    %p78 = scmp.eq.s32.totalorder %s10, 0
    %p79 = por %p77, %p78
    %p80 = scmp.ne.s32.totalorder %s69, %s72
    %p81 = scmp.eq.s32.totalorder %s15, 3
    %p82 = por %p80, %p81
    %p83 = scmp.ne.s32.totalorder %s72, %s73
    %p84 = scmp.eq.s32.totalorder %s15, 0
    %p85 = por %p83, %p84
    %p86 = scmp.ne.s32.totalorder %s72, %s73
    %p87 = scmp.eq.s32.totalorder %s16, 3
    %p88 = por %p86, %p87
    %p90 = scmp.ne.s32.totalorder %s73, %s89
    %p91 = scmp.eq.s32.totalorder %s16, 0
    %p92 = por %p90, %p91
    %s93 = ssub.s32 %s17, %s36
    %s94 = ssub.s32 %s18, %s32
    %s95 = sor.u32 %s93, %s94
    %s96 = ssub.s32 %s19, %s28
    %s97 = sor.u32 %s95, %s96
    %p98 = scmp.eq.s32.totalorder %s97, 0
    %s100 = sadd.s32 %s99, 1
    %s101 = scalar_select %p98, %s99, %s100
    %p104 = pneg %p98
    %p105 = scmp.eq.s32.totalorder %s10, 3
    %p106 = por %p104, %p105
    %p107 = scmp.ne.s32.totalorder %s99, %s102
    %p108 = scmp.eq.s32.totalorder %s10, 0
    %p109 = por %p107, %p108
    %p110 = scmp.ne.s32.totalorder %s99, %s102
    %p111 = scmp.eq.s32.totalorder %s15, 3
    %p112 = por %p110, %p111
    %p113 = scmp.ne.s32.totalorder %s102, %s103
    %p114 = scmp.eq.s32.totalorder %s15, 0
    %p115 = por %p113, %p114
    %p116 = scmp.ne.s32.totalorder %s102, %s103
    %p117 = scmp.eq.s32.totalorder %s16, 3
    %p118 = por %p116, %p117
    %p120 = scmp.ne.s32.totalorder %s103, %s119
    %p121 = scmp.eq.s32.totalorder %s16, 0
    %p122 = por %p120, %p121
    %s123 = sadd.s32 %s17, %s18
    %s124 = sadd.s32 %s36, %s32
    %s125 = ssub.s32 %s123, %s124
    %s126 = ssub.s32 %s19, %s28
    %s127 = sor.u32 %s125, %s126
    %p128 = scmp.eq.s32.totalorder %s127, 0
    %s130 = sadd.s32 %s129, 1
    %s131 = scalar_select %p128, %s129, %s130
    %p134 = pneg %p128
    %p135 = scmp.eq.s32.totalorder %s10, 3
    %p136 = por %p134, %p135
    %p137 = scmp.ne.s32.totalorder %s129, %s132
    %p138 = scmp.eq.s32.totalorder %s10, 0
    %p139 = por %p137, %p138
    %p140 = scmp.ne.s32.totalorder %s129, %s132
    %p141 = scmp.eq.s32.totalorder %s15, 3
    %p142 = por %p140, %p141
    %p143 = scmp.ne.s32.totalorder %s132, %s133
    %p144 = scmp.eq.s32.totalorder %s15, 0
    %p145 = por %p143, %p144
    %p146 = scmp.ne.s32.totalorder %s132, %s133
    %p147 = scmp.eq.s32.totalorder %s16, 3
    %p148 = por %p146, %p147
    %p150 = scmp.ne.s32.totalorder %s133, %s149
    %p151 = scmp.eq.s32.totalorder %s16, 0
    %p152 = por %p150, %p151
    %p153 = scmp.le.s32.totalorder 1, %s10
    %p154 = scmp.lt.s32.totalorder %s10, 5
    %p155 = pnand %p153, %p154
    %p156 = pneg %p155
    // Predicated region
    $region9: #{gen_forward.7} parent=5 // pred_check
      _
    $region10: #{gen_forward.7} parent=5 // pred_check_branch
      %158 = sbr.rel (%p155) target = $region12
    $region11: #{gen_forward.7} parent=5 // pred_region
      %s159 = ssub.s32 %s10, 1
    $region12: #{gen_forward.7} parent=5 // pred_fallthru
      _
    %p160 = scmp.lt.s32.totalorder %s10, 4
    // Predicated region
    $region13: #{gen_forward.7} parent=5 // pred_check
      %p161 = pneg %p160
    $region14: #{gen_forward.7} parent=5 // pred_check_branch
      %163 = sbr.rel (%p161) target = $region16
    $region15: #{gen_forward.7} parent=5 // pred_region
      // Predicated region
      $region17: #{gen_forward.7} parent=15 // pred_check
        %p164 = pneg %p51
      $region18: #{gen_forward.7} parent=15 // pred_check_branch
        %166 = sbr.rel (%p164) target = $region20
      $region19: #{gen_forward.7} parent=15 // pred_region
        %s167 = smul.u32 16, %s18
        %p168 = scmp.lt.s32.totalorder %s17, 3
        %s169 = scalar_select %p168, %s17, 3
        %p170 = scmp.lt.s32.totalorder %s167, 15
        %s171 = scalar_select %p170, %s167, 15
        %s172 = smul.addr %s171, 8
        %s173 = smul.addr %s169, 128
        %s174 = sadd.s32 %s172, %s173
        %s175 = smul.addr %s174, 4
        %s176 = scalar_lea.vmem %s0, %s175
        %s177 = smul.u32 16, %s18
      $region20: #{gen_forward.7} parent=15 // pred_fallthru
        _
      // Predicated region
      $region21: #{gen_forward.7} parent=15 // pred_check
        %p178 = pneg %p79
      $region22: #{gen_forward.7} parent=15 // pred_check_branch
        %180 = sbr.rel (%p178) target = $region24
      $region23: #{gen_forward.7} parent=15 // pred_region
        %p181 = scmp.lt.s32.totalorder %s17, 3
        %s182 = scalar_select %p181, %s17, 3
        %p183 = scmp.lt.s32.totalorder %s19, 0
        %s184 = scalar_select %p183, %s19, 0
        %s185 = smul.addr %s182, 128
        %s186 = sadd.s32 %s184, %s185
        %s187 = smul.addr %s186, 4
        %s188 = scalar_lea.vmem %s1, %s187
      $region24: #{gen_forward.7} parent=15 // pred_fallthru
        _
    $region16: #{gen_forward.7} parent=5 // pred_fallthru
      _
    %p189 = scmp.le.s32.totalorder 1, %s10
    %p190 = scmp.lt.s32.totalorder %s10, 5
    %p191 = pnand %p189, %p190
    %p192 = pneg %p191
    // Predicated region
    $region25: #{gen_forward.7} parent=5 // pred_check
      _
    $region26: #{gen_forward.7} parent=5 // pred_check_branch
      %194 = sbr.rel (%p191) target = $region28
    $region27: #{gen_forward.7} parent=5 // pred_region
      %s195 = ssub.s32 %s10, 1
      %s196 = smul.u32 16, %s21
      %p197 = scmp.lt.s32.totalorder %s20, 3
      %s198 = scalar_select %p197, %s20, 3
      %p199 = scmp.lt.s32.totalorder %s196, 15
      %s200 = scalar_select %p199, %s196, 15
      %s201 = smul.addr %s200, 8
      %s202 = smul.addr %s198, 128
      %s203 = sadd.s32 %s201, %s202
      %s204 = smul.addr %s203, 4
      %s205 = scalar_lea.vmem %s0, %s204
      %p206 = pneg %p57
      %p207 = pneg %p54
      %p208 = scmp.lt.s32.totalorder %s20, 3
      %s209 = scalar_select %p208, %s20, 3
      %p210 = scmp.lt.s32.totalorder %s22, 0
      %s211 = scalar_select %p210, %s22, 0
      %s212 = smul.addr %s209, 128
      %s213 = sadd.s32 %s211, %s212
      %s214 = smul.addr %s213, 4
      %s215 = scalar_lea.vmem %s1, %s214
      %p216 = pneg %p85
      %p217 = pneg %p82
      %p218 = pneg %p115
      %p219 = pneg %p112
      %s220 = smul.u32 16, %s21
      %p221 = scmp.lt.s32.totalorder %s20, 3
      %s222 = scalar_select %p221, %s20, 3
      %p223 = scmp.lt.s32.totalorder %s220, 15
      %s224 = scalar_select %p223, %s220, 15
      %p225 = scmp.lt.s32.totalorder %s22, 0
      %s226 = scalar_select %p225, %s22, 0
      %s227 = sadd.s32 %s226, %s224
      %s228 = smul.addr %s222, 16
      %s229 = sadd.s32 %s227, %s228
      %s230 = smul.addr %s229, 8
      %s231 = scalar_lea.vmem %s2, %s230
      %p232 = pneg %p145
      %p233 = pneg %p142
      %s234 = sadd.s32 %s20, %s21
      %p235 = scmp.lt.s32.totalorder %s234, 3
      %s236 = scalar_select %p235, %s234, 3
      %p237 = scmp.lt.s32.totalorder %s22, 0
      %s238 = scalar_select %p237, %s22, 0
      %s239 = sadd.s32 %s238, %s236
      %s240 = smul.addr %s239, 2
      %s241 = scalar_lea.vmem %s3, %s240
      %s242 = smul.u32 16, %s21
      %p243 = scmp.lt.s32.totalorder %s20, 3
      %s244 = scalar_select %p243, %s20, 3
      %p245 = scmp.lt.s32.totalorder %s242, 15
      %s246 = scalar_select %p245, %s242, 15
      %s247 = smul.addr %s246, 8
      %s248 = smul.addr %s244, 128
      %s249 = sadd.s32 %s247, %s248
      %s250 = smul.addr %s249, 4
      %s251 = scalar_lea.vmem %s0, %s250
      %s252 = smul.u32 16, %s21
      %p253 = scmp.lt.s32.totalorder %s20, 3
      %s254 = scalar_select %p253, %s20, 3
      %p255 = scmp.lt.s32.totalorder %s22, 0
      %s256 = scalar_select %p255, %s22, 0
      %s257 = smul.addr %s254, 128
      %s258 = sadd.s32 %s256, %s257
      %s259 = smul.addr %s258, 4
      %s260 = scalar_lea.vmem %s1, %s259
      %s261 = smul.u32 16, %s21
      %p262 = scmp.lt.s32.totalorder %s20, 3
      %s263 = scalar_select %p262, %s20, 3
      %p264 = scmp.lt.s32.totalorder %s261, 15
      %s265 = scalar_select %p264, %s261, 15
      %p266 = scmp.lt.s32.totalorder %s22, 0
      %s267 = scalar_select %p266, %s22, 0
      %s268 = sadd.s32 %s267, %s265
      %s269 = smul.addr %s263, 16
      %s270 = sadd.s32 %s268, %s269
      %s271 = smul.addr %s270, 8
      %s272 = scalar_lea.vmem %s2, %s271
      %s273 = smul.u32 16, %s21
      %s274 = sadd.s32 %s20, %s21
      %p275 = scmp.lt.s32.totalorder %s274, 3
      %s276 = scalar_select %p275, %s274, 3
      %p277 = scmp.lt.s32.totalorder %s22, 0
      %s278 = scalar_select %p277, %s22, 0
      %s279 = sadd.s32 %s278, %s276
      %s280 = smul.addr %s279, 2
      %s281 = scalar_lea.vmem %s3, %s280
      %s282 = sadd.s32 %s20, %s21
      %v284 = vld [vmem:[%s251] sm:$0xff]
      %v285 = vld [vmem:[%s251 + $0x8] sm:$0xff]
      %v286 = vld [vmem:[%s251 + $0x10] sm:$0xff]
      %v287 = vld [vmem:[%s251 + $0x18] sm:$0xff]
      %v288 = vld [vmem:[%s251 + $0x20] sm:$0xff]
      %v289 = vld [vmem:[%s251 + $0x28] sm:$0xff]
      %v290 = vld [vmem:[%s251 + $0x30] sm:$0xff]
      %v291 = vld [vmem:[%s251 + $0x38] sm:$0xff]
      %v292 = vld [vmem:[%s251 + $0x40] sm:$0xff]
      %v293 = vld [vmem:[%s251 + $0x48] sm:$0xff]
      %v294 = vld [vmem:[%s251 + $0x50] sm:$0xff]
      %v295 = vld [vmem:[%s251 + $0x58] sm:$0xff]
      %v296 = vld [vmem:[%s251 + $0x60] sm:$0xff]
      %v297 = vld [vmem:[%s251 + $0x68] sm:$0xff]
      %v298 = vld [vmem:[%s251 + $0x70] sm:$0xff]
      %v299 = vld [vmem:[%s251 + $0x78] sm:$0xff]
      %v300 = vld [vmem:[%s251 + $0x80] sm:$0xff]
      %v301 = vld [vmem:[%s251 + $0x88] sm:$0xff]
      %v302 = vld [vmem:[%s251 + $0x90] sm:$0xff]
      %v303 = vld [vmem:[%s251 + $0x98] sm:$0xff]
      %v304 = vld [vmem:[%s251 + $0xa0] sm:$0xff]
      %v305 = vld [vmem:[%s251 + $0xa8] sm:$0xff]
      %v306 = vld [vmem:[%s251 + $0xb0] sm:$0xff]
      %v307 = vld [vmem:[%s251 + $0xb8] sm:$0xff]
      %v308 = vld [vmem:[%s251 + $0xc0] sm:$0xff]
      %v309 = vld [vmem:[%s251 + $0xc8] sm:$0xff]
      %v310 = vld [vmem:[%s251 + $0xd0] sm:$0xff]
      %v311 = vld [vmem:[%s251 + $0xd8] sm:$0xff]
      %v312 = vld [vmem:[%s251 + $0xe0] sm:$0xff]
      %v313 = vld [vmem:[%s251 + $0xe8] sm:$0xff]
      %v314 = vld [vmem:[%s251 + $0xf0] sm:$0xff]
      %v315 = vld [vmem:[%s251 + $0xf8] sm:$0xff]
      %v316 = vld [vmem:[%s251 + $0x100] sm:$0xff]
      %v317 = vld [vmem:[%s251 + $0x108] sm:$0xff]
      %v318 = vld [vmem:[%s251 + $0x110] sm:$0xff]
      %v319 = vld [vmem:[%s251 + $0x118] sm:$0xff]
      %v320 = vld [vmem:[%s251 + $0x120] sm:$0xff]
      %v321 = vld [vmem:[%s251 + $0x128] sm:$0xff]
      %v322 = vld [vmem:[%s251 + $0x130] sm:$0xff]
      %v323 = vld [vmem:[%s251 + $0x138] sm:$0xff]
      %v324 = vld [vmem:[%s251 + $0x140] sm:$0xff]
      %v325 = vld [vmem:[%s251 + $0x148] sm:$0xff]
      %v326 = vld [vmem:[%s251 + $0x150] sm:$0xff]
      %v327 = vld [vmem:[%s251 + $0x158] sm:$0xff]
      %v328 = vld [vmem:[%s251 + $0x160] sm:$0xff]
      %v329 = vld [vmem:[%s251 + $0x168] sm:$0xff]
      %v330 = vld [vmem:[%s251 + $0x170] sm:$0xff]
      %v331 = vld [vmem:[%s251 + $0x178] sm:$0xff]
      %v332 = vld [vmem:[%s251 + $0x180] sm:$0xff]
      %v333 = vld [vmem:[%s251 + $0x188] sm:$0xff]
      %v334 = vld [vmem:[%s251 + $0x190] sm:$0xff]
      %v335 = vld [vmem:[%s251 + $0x198] sm:$0xff]
      %v336 = vld [vmem:[%s251 + $0x1a0] sm:$0xff]
      %v337 = vld [vmem:[%s251 + $0x1a8] sm:$0xff]
      %v338 = vld [vmem:[%s251 + $0x1b0] sm:$0xff]
      %v339 = vld [vmem:[%s251 + $0x1b8] sm:$0xff]
      %v340 = vld [vmem:[%s251 + $0x1c0] sm:$0xff]
      %v341 = vld [vmem:[%s251 + $0x1c8] sm:$0xff]
      %v342 = vld [vmem:[%s251 + $0x1d0] sm:$0xff]
      %v343 = vld [vmem:[%s251 + $0x1d8] sm:$0xff]
      %v344 = vld [vmem:[%s251 + $0x1e0] sm:$0xff]
      %v345 = vld [vmem:[%s251 + $0x1e8] sm:$0xff]
      %v346 = vld [vmem:[%s251 + $0x1f0] sm:$0xff]
      %v347 = vld [vmem:[%s251 + $0x1f8] sm:$0xff]
      %v348 = vld [vmem:[%s260] sm:$0xf]
      %v349 = vld [vmem:[%s260 + $0x4] sm:$0xf]
      %v350 = vld [vmem:[%s260 + $0x8] sm:$0xf]
      %v351 = vld [vmem:[%s260 + $0xc] sm:$0xf]
      %v352 = vld [vmem:[%s260 + $0x10] sm:$0xf]
      %v353 = vld [vmem:[%s260 + $0x14] sm:$0xf]
      %v354 = vld [vmem:[%s260 + $0x18] sm:$0xf]
      %v355 = vld [vmem:[%s260 + $0x1c] sm:$0xf]
      %v356 = vld [vmem:[%s260 + $0x20] sm:$0xf]
      %v357 = vld [vmem:[%s260 + $0x24] sm:$0xf]
      %v358 = vld [vmem:[%s260 + $0x28] sm:$0xf]
      %v359 = vld [vmem:[%s260 + $0x2c] sm:$0xf]
      %v360 = vld [vmem:[%s260 + $0x30] sm:$0xf]
      %v361 = vld [vmem:[%s260 + $0x34] sm:$0xf]
      %v362 = vld [vmem:[%s260 + $0x38] sm:$0xf]
      %v363 = vld [vmem:[%s260 + $0x3c] sm:$0xf]
      %v364 = vld [vmem:[%s260 + $0x40] sm:$0xf]
      %v365 = vld [vmem:[%s260 + $0x44] sm:$0xf]
      %v366 = vld [vmem:[%s260 + $0x48] sm:$0xf]
      %v367 = vld [vmem:[%s260 + $0x4c] sm:$0xf]
      %v368 = vld [vmem:[%s260 + $0x50] sm:$0xf]
      %v369 = vld [vmem:[%s260 + $0x54] sm:$0xf]
      %v370 = vld [vmem:[%s260 + $0x58] sm:$0xf]
      %v371 = vld [vmem:[%s260 + $0x5c] sm:$0xf]
      %v372 = vld [vmem:[%s260 + $0x60] sm:$0xf]
      %v373 = vld [vmem:[%s260 + $0x64] sm:$0xf]
      %v374 = vld [vmem:[%s260 + $0x68] sm:$0xf]
      %v375 = vld [vmem:[%s260 + $0x6c] sm:$0xf]
      %v376 = vld [vmem:[%s260 + $0x70] sm:$0xf]
      %v377 = vld [vmem:[%s260 + $0x74] sm:$0xf]
      %v378 = vld [vmem:[%s260 + $0x78] sm:$0xf]
      %v379 = vld [vmem:[%s260 + $0x7c] sm:$0xf]
      %v380 = vld [vmem:[%s260 + $0x80] sm:$0xf]
      %v381 = vld [vmem:[%s260 + $0x84] sm:$0xf]
      %v382 = vld [vmem:[%s260 + $0x88] sm:$0xf]
      %v383 = vld [vmem:[%s260 + $0x8c] sm:$0xf]
      %v384 = vld [vmem:[%s260 + $0x90] sm:$0xf]
      %v385 = vld [vmem:[%s260 + $0x94] sm:$0xf]
      %v386 = vld [vmem:[%s260 + $0x98] sm:$0xf]
      %v387 = vld [vmem:[%s260 + $0x9c] sm:$0xf]
      %v388 = vld [vmem:[%s260 + $0xa0] sm:$0xf]
      %v389 = vld [vmem:[%s260 + $0xa4] sm:$0xf]
      %v390 = vld [vmem:[%s260 + $0xa8] sm:$0xf]
      %v391 = vld [vmem:[%s260 + $0xac] sm:$0xf]
      %v392 = vld [vmem:[%s260 + $0xb0] sm:$0xf]
      %v393 = vld [vmem:[%s260 + $0xb4] sm:$0xf]
      %v394 = vld [vmem:[%s260 + $0xb8] sm:$0xf]
      %v395 = vld [vmem:[%s260 + $0xbc] sm:$0xf]
      %v396 = vld [vmem:[%s260 + $0xc0] sm:$0xf]
      %v397 = vld [vmem:[%s260 + $0xc4] sm:$0xf]
      %v398 = vld [vmem:[%s260 + $0xc8] sm:$0xf]
      %v399 = vld [vmem:[%s260 + $0xcc] sm:$0xf]
      %v400 = vld [vmem:[%s260 + $0xd0] sm:$0xf]
      %v401 = vld [vmem:[%s260 + $0xd4] sm:$0xf]
      %v402 = vld [vmem:[%s260 + $0xd8] sm:$0xf]
      %v403 = vld [vmem:[%s260 + $0xdc] sm:$0xf]
      %v404 = vld [vmem:[%s260 + $0xe0] sm:$0xf]
      %v405 = vld [vmem:[%s260 + $0xe4] sm:$0xf]
      %v406 = vld [vmem:[%s260 + $0xe8] sm:$0xf]
      %v407 = vld [vmem:[%s260 + $0xec] sm:$0xf]
      %v408 = vld [vmem:[%s260 + $0xf0] sm:$0xf]
      %v409 = vld [vmem:[%s260 + $0xf4] sm:$0xf]
      %v410 = vld [vmem:[%s260 + $0xf8] sm:$0xf]
      %v411 = vld [vmem:[%s260 + $0xfc] sm:$0xf]
      %v412 = vld [vmem:[%s260 + $0x100] sm:$0xf]
      %v413 = vld [vmem:[%s260 + $0x104] sm:$0xf]
      %v414 = vld [vmem:[%s260 + $0x108] sm:$0xf]
      %v415 = vld [vmem:[%s260 + $0x10c] sm:$0xf]
      %v416 = vld [vmem:[%s260 + $0x110] sm:$0xf]
      %v417 = vld [vmem:[%s260 + $0x114] sm:$0xf]
      %v418 = vld [vmem:[%s260 + $0x118] sm:$0xf]
      %v419 = vld [vmem:[%s260 + $0x11c] sm:$0xf]
      %v420 = vld [vmem:[%s260 + $0x120] sm:$0xf]
      %v421 = vld [vmem:[%s260 + $0x124] sm:$0xf]
      %v422 = vld [vmem:[%s260 + $0x128] sm:$0xf]
      %v423 = vld [vmem:[%s260 + $0x12c] sm:$0xf]
      %v424 = vld [vmem:[%s260 + $0x130] sm:$0xf]
      %v425 = vld [vmem:[%s260 + $0x134] sm:$0xf]
      %v426 = vld [vmem:[%s260 + $0x138] sm:$0xf]
      %v427 = vld [vmem:[%s260 + $0x13c] sm:$0xf]
      %v428 = vld [vmem:[%s260 + $0x140] sm:$0xf]
      %v429 = vld [vmem:[%s260 + $0x144] sm:$0xf]
      %v430 = vld [vmem:[%s260 + $0x148] sm:$0xf]
      %v431 = vld [vmem:[%s260 + $0x14c] sm:$0xf]
      %v432 = vld [vmem:[%s260 + $0x150] sm:$0xf]
      %v433 = vld [vmem:[%s260 + $0x154] sm:$0xf]
      %v434 = vld [vmem:[%s260 + $0x158] sm:$0xf]
      %v435 = vld [vmem:[%s260 + $0x15c] sm:$0xf]
      %v436 = vld [vmem:[%s260 + $0x160] sm:$0xf]
      %v437 = vld [vmem:[%s260 + $0x164] sm:$0xf]
      %v438 = vld [vmem:[%s260 + $0x168] sm:$0xf]
      %v439 = vld [vmem:[%s260 + $0x16c] sm:$0xf]
      %v440 = vld [vmem:[%s260 + $0x170] sm:$0xf]
      %v441 = vld [vmem:[%s260 + $0x174] sm:$0xf]
      %v442 = vld [vmem:[%s260 + $0x178] sm:$0xf]
      %v443 = vld [vmem:[%s260 + $0x17c] sm:$0xf]
      %v444 = vld [vmem:[%s260 + $0x180] sm:$0xf]
      %v445 = vld [vmem:[%s260 + $0x184] sm:$0xf]
      %v446 = vld [vmem:[%s260 + $0x188] sm:$0xf]
      %v447 = vld [vmem:[%s260 + $0x18c] sm:$0xf]
      %v448 = vld [vmem:[%s260 + $0x190] sm:$0xf]
      %v449 = vld [vmem:[%s260 + $0x194] sm:$0xf]
      %v450 = vld [vmem:[%s260 + $0x198] sm:$0xf]
      %v451 = vld [vmem:[%s260 + $0x19c] sm:$0xf]
      %v452 = vld [vmem:[%s260 + $0x1a0] sm:$0xf]
      %v453 = vld [vmem:[%s260 + $0x1a4] sm:$0xf]
      %v454 = vld [vmem:[%s260 + $0x1a8] sm:$0xf]
      %v455 = vld [vmem:[%s260 + $0x1ac] sm:$0xf]
      %v456 = vld [vmem:[%s260 + $0x1b0] sm:$0xf]
      %v457 = vld [vmem:[%s260 + $0x1b4] sm:$0xf]
      %v458 = vld [vmem:[%s260 + $0x1b8] sm:$0xf]
      %v459 = vld [vmem:[%s260 + $0x1bc] sm:$0xf]
      %v460 = vld [vmem:[%s260 + $0x1c0] sm:$0xf]
      %v461 = vld [vmem:[%s260 + $0x1c4] sm:$0xf]
      %v462 = vld [vmem:[%s260 + $0x1c8] sm:$0xf]
      %v463 = vld [vmem:[%s260 + $0x1cc] sm:$0xf]
      %v464 = vld [vmem:[%s260 + $0x1d0] sm:$0xf]
      %v465 = vld [vmem:[%s260 + $0x1d4] sm:$0xf]
      %v466 = vld [vmem:[%s260 + $0x1d8] sm:$0xf]
      %v467 = vld [vmem:[%s260 + $0x1dc] sm:$0xf]
      %v468 = vld [vmem:[%s260 + $0x1e0] sm:$0xf]
      %v469 = vld [vmem:[%s260 + $0x1e4] sm:$0xf]
      %v470 = vld [vmem:[%s260 + $0x1e8] sm:$0xf]
      %v471 = vld [vmem:[%s260 + $0x1ec] sm:$0xf]
      %v472 = vld [vmem:[%s260 + $0x1f0] sm:$0xf]
      %v473 = vld [vmem:[%s260 + $0x1f4] sm:$0xf]
      %v474 = vld [vmem:[%s260 + $0x1f8] sm:$0xf]
      %v475 = vld [vmem:[%s260 + $0x1fc] sm:$0xf]
      %v540 = vunpack.c.l.b16 %v284
      %v541 = vunpack.c.h.b16 %v284
      %v542 = vunpack.c.l.b16 %v285
      %v543 = vunpack.c.h.b16 %v285
      %v544 = vunpack.c.l.b16 %v286
      %v545 = vunpack.c.h.b16 %v286
      %v546 = vunpack.c.l.b16 %v287
      %v547 = vunpack.c.h.b16 %v287
      %v548 = vunpack.c.l.b16 %v288
      %v549 = vunpack.c.h.b16 %v288
      %v550 = vunpack.c.l.b16 %v289
      %v551 = vunpack.c.h.b16 %v289
      %v552 = vunpack.c.l.b16 %v290
      %v553 = vunpack.c.h.b16 %v290
      %v554 = vunpack.c.l.b16 %v291
      %v555 = vunpack.c.h.b16 %v291
      %v556 = vunpack.c.l.b16 %v292
      %v557 = vunpack.c.h.b16 %v292
      %v558 = vunpack.c.l.b16 %v293
      %v559 = vunpack.c.h.b16 %v293
      %v560 = vunpack.c.l.b16 %v294
      %v561 = vunpack.c.h.b16 %v294
      %v562 = vunpack.c.l.b16 %v295
      %v563 = vunpack.c.h.b16 %v295
      %v564 = vunpack.c.l.b16 %v296
      %v565 = vunpack.c.h.b16 %v296
      %v566 = vunpack.c.l.b16 %v297
      %v567 = vunpack.c.h.b16 %v297
      %v568 = vunpack.c.l.b16 %v298
      %v569 = vunpack.c.h.b16 %v298
      %v570 = vunpack.c.l.b16 %v299
      %v571 = vunpack.c.h.b16 %v299
      %v572 = vunpack.c.l.b16 %v300
      %v573 = vunpack.c.h.b16 %v300
      %v574 = vunpack.c.l.b16 %v301
      %v575 = vunpack.c.h.b16 %v301
      %v576 = vunpack.c.l.b16 %v302
      %v577 = vunpack.c.h.b16 %v302
      %v578 = vunpack.c.l.b16 %v303
      %v579 = vunpack.c.h.b16 %v303
      %v580 = vunpack.c.l.b16 %v304
      %v581 = vunpack.c.h.b16 %v304
      %v582 = vunpack.c.l.b16 %v305
      %v583 = vunpack.c.h.b16 %v305
      %v584 = vunpack.c.l.b16 %v306
      %v585 = vunpack.c.h.b16 %v306
      %v586 = vunpack.c.l.b16 %v307
      %v587 = vunpack.c.h.b16 %v307
      %v588 = vunpack.c.l.b16 %v308
      %v589 = vunpack.c.h.b16 %v308
      %v590 = vunpack.c.l.b16 %v309
      %v591 = vunpack.c.h.b16 %v309
      %v592 = vunpack.c.l.b16 %v310
      %v593 = vunpack.c.h.b16 %v310
      %v594 = vunpack.c.l.b16 %v311
      %v595 = vunpack.c.h.b16 %v311
      %v596 = vunpack.c.l.b16 %v312
      %v597 = vunpack.c.h.b16 %v312
      %v598 = vunpack.c.l.b16 %v313
      %v599 = vunpack.c.h.b16 %v313
      %v600 = vunpack.c.l.b16 %v314
      %v601 = vunpack.c.h.b16 %v314
      %v602 = vunpack.c.l.b16 %v315
      %v603 = vunpack.c.h.b16 %v315
      %v604 = vunpack.c.l.b16 %v316
      %v605 = vunpack.c.h.b16 %v316
      %v606 = vunpack.c.l.b16 %v317
      %v607 = vunpack.c.h.b16 %v317
      %v608 = vunpack.c.l.b16 %v318
      %v609 = vunpack.c.h.b16 %v318
      %v610 = vunpack.c.l.b16 %v319
      %v611 = vunpack.c.h.b16 %v319
      %v612 = vunpack.c.l.b16 %v320
      %v613 = vunpack.c.h.b16 %v320
      %v614 = vunpack.c.l.b16 %v321
      %v615 = vunpack.c.h.b16 %v321
      %v616 = vunpack.c.l.b16 %v322
      %v617 = vunpack.c.h.b16 %v322
      %v618 = vunpack.c.l.b16 %v323
      %v619 = vunpack.c.h.b16 %v323
      %v620 = vunpack.c.l.b16 %v324
      %v621 = vunpack.c.h.b16 %v324
      %v622 = vunpack.c.l.b16 %v325
      %v623 = vunpack.c.h.b16 %v325
      %v624 = vunpack.c.l.b16 %v326
      %v625 = vunpack.c.h.b16 %v326
      %v626 = vunpack.c.l.b16 %v327
      %v627 = vunpack.c.h.b16 %v327
      %v628 = vunpack.c.l.b16 %v328
      %v629 = vunpack.c.h.b16 %v328
      %v630 = vunpack.c.l.b16 %v329
      %v631 = vunpack.c.h.b16 %v329
      %v632 = vunpack.c.l.b16 %v330
      %v633 = vunpack.c.h.b16 %v330
      %v634 = vunpack.c.l.b16 %v331
      %v635 = vunpack.c.h.b16 %v331
      %v636 = vunpack.c.l.b16 %v332
      %v637 = vunpack.c.h.b16 %v332
      %v638 = vunpack.c.l.b16 %v333
      %v639 = vunpack.c.h.b16 %v333
      %v640 = vunpack.c.l.b16 %v334
      %v641 = vunpack.c.h.b16 %v334
      %v642 = vunpack.c.l.b16 %v335
      %v643 = vunpack.c.h.b16 %v335
      %v644 = vunpack.c.l.b16 %v336
      %v645 = vunpack.c.h.b16 %v336
      %v646 = vunpack.c.l.b16 %v337
      %v647 = vunpack.c.h.b16 %v337
      %v648 = vunpack.c.l.b16 %v338
      %v649 = vunpack.c.h.b16 %v338
      %v650 = vunpack.c.l.b16 %v339
      %v651 = vunpack.c.h.b16 %v339
      %v652 = vunpack.c.l.b16 %v340
      %v653 = vunpack.c.h.b16 %v340
      %v654 = vunpack.c.l.b16 %v341
      %v655 = vunpack.c.h.b16 %v341
      %v656 = vunpack.c.l.b16 %v342
      %v657 = vunpack.c.h.b16 %v342
      %v658 = vunpack.c.l.b16 %v343
      %v659 = vunpack.c.h.b16 %v343
      %v660 = vunpack.c.l.b16 %v344
      %v661 = vunpack.c.h.b16 %v344
      %v662 = vunpack.c.l.b16 %v345
      %v663 = vunpack.c.h.b16 %v345
      %v664 = vunpack.c.l.b16 %v346
      %v665 = vunpack.c.h.b16 %v346
      %v666 = vunpack.c.l.b16 %v347
      %v667 = vunpack.c.h.b16 %v347
      %v668 = vpack.c.b16 %v548, %v540
      %v669 = vpack.c.b16 %v549, %v541
      %v670 = vpack.c.b16 %v550, %v542
      %v671 = vpack.c.b16 %v551, %v543
      %v672 = vpack.c.b16 %v552, %v544
      %v673 = vpack.c.b16 %v553, %v545
      %v674 = vpack.c.b16 %v554, %v546
      %v675 = vpack.c.b16 %v555, %v547
      %v676 = vpack.c.b16 %v564, %v556
      %v677 = vpack.c.b16 %v565, %v557
      %v678 = vpack.c.b16 %v566, %v558
      %v679 = vpack.c.b16 %v567, %v559
      %v680 = vpack.c.b16 %v568, %v560
      %v681 = vpack.c.b16 %v569, %v561
      %v682 = vpack.c.b16 %v570, %v562
      %v683 = vpack.c.b16 %v571, %v563
      %v684 = vpack.c.b16 %v580, %v572
      %v685 = vpack.c.b16 %v581, %v573
      %v686 = vpack.c.b16 %v582, %v574
      %v687 = vpack.c.b16 %v583, %v575
      %v688 = vpack.c.b16 %v584, %v576
      %v689 = vpack.c.b16 %v585, %v577
      %v690 = vpack.c.b16 %v586, %v578
      %v691 = vpack.c.b16 %v587, %v579
      %v692 = vpack.c.b16 %v596, %v588
      %v693 = vpack.c.b16 %v597, %v589
      %v694 = vpack.c.b16 %v598, %v590
      %v695 = vpack.c.b16 %v599, %v591
      %v696 = vpack.c.b16 %v600, %v592
      %v697 = vpack.c.b16 %v601, %v593
      %v698 = vpack.c.b16 %v602, %v594
      %v699 = vpack.c.b16 %v603, %v595
      %v700 = vpack.c.b16 %v612, %v604
      %v701 = vpack.c.b16 %v613, %v605
      %v702 = vpack.c.b16 %v614, %v606
      %v703 = vpack.c.b16 %v615, %v607
      %v704 = vpack.c.b16 %v616, %v608
      %v705 = vpack.c.b16 %v617, %v609
      %v706 = vpack.c.b16 %v618, %v610
      %v707 = vpack.c.b16 %v619, %v611
      %v708 = vpack.c.b16 %v628, %v620
      %v709 = vpack.c.b16 %v629, %v621
      %v710 = vpack.c.b16 %v630, %v622
      %v711 = vpack.c.b16 %v631, %v623
      %v712 = vpack.c.b16 %v632, %v624
      %v713 = vpack.c.b16 %v633, %v625
      %v714 = vpack.c.b16 %v634, %v626
      %v715 = vpack.c.b16 %v635, %v627
      %v716 = vpack.c.b16 %v644, %v636
      %v717 = vpack.c.b16 %v645, %v637
      %v718 = vpack.c.b16 %v646, %v638
      %v719 = vpack.c.b16 %v647, %v639
      %v720 = vpack.c.b16 %v648, %v640
      %v721 = vpack.c.b16 %v649, %v641
      %v722 = vpack.c.b16 %v650, %v642
      %v723 = vpack.c.b16 %v651, %v643
      %v724 = vpack.c.b16 %v660, %v652
      %v725 = vpack.c.b16 %v661, %v653
      %v726 = vpack.c.b16 %v662, %v654
      %v727 = vpack.c.b16 %v663, %v655
      %v728 = vpack.c.b16 %v664, %v656
      %v729 = vpack.c.b16 %v665, %v657
      %v730 = vpack.c.b16 %v666, %v658
      %v731 = vpack.c.b16 %v667, %v659
      %v924 = vunpack.c.l.b16 %v348
      %v925 = vunpack.c.l.b16 %v349
      %v926 = vunpack.c.l.b16 %v350
      %v927 = vunpack.c.l.b16 %v351
      %v928 = vunpack.c.l.b16 %v352
      %v929 = vunpack.c.l.b16 %v353
      %v930 = vunpack.c.l.b16 %v354
      %v931 = vunpack.c.l.b16 %v355
      %v932 = vunpack.c.l.b16 %v356
      %v933 = vunpack.c.l.b16 %v357
      %v934 = vunpack.c.l.b16 %v358
      %v935 = vunpack.c.l.b16 %v359
      %v936 = vunpack.c.l.b16 %v360
      %v937 = vunpack.c.l.b16 %v361
      %v938 = vunpack.c.l.b16 %v362
      %v939 = vunpack.c.l.b16 %v363
      %v940 = vunpack.c.l.b16 %v364
      %v941 = vunpack.c.l.b16 %v365
      %v942 = vunpack.c.l.b16 %v366
      %v943 = vunpack.c.l.b16 %v367
      %v944 = vunpack.c.l.b16 %v368
      %v945 = vunpack.c.l.b16 %v369
      %v946 = vunpack.c.l.b16 %v370
      %v947 = vunpack.c.l.b16 %v371
      %v948 = vunpack.c.l.b16 %v372
      %v949 = vunpack.c.l.b16 %v373
      %v950 = vunpack.c.l.b16 %v374
      %v951 = vunpack.c.l.b16 %v375
      %v952 = vunpack.c.l.b16 %v376
      %v953 = vunpack.c.l.b16 %v377
      %v954 = vunpack.c.l.b16 %v378
      %v955 = vunpack.c.l.b16 %v379
      %v956 = vunpack.c.l.b16 %v380
      %v957 = vunpack.c.l.b16 %v381
      %v958 = vunpack.c.l.b16 %v382
      %v959 = vunpack.c.l.b16 %v383
      %v960 = vunpack.c.l.b16 %v384
      %v961 = vunpack.c.l.b16 %v385
      %v962 = vunpack.c.l.b16 %v386
      %v963 = vunpack.c.l.b16 %v387
      %v964 = vunpack.c.l.b16 %v388
      %v965 = vunpack.c.l.b16 %v389
      %v966 = vunpack.c.l.b16 %v390
      %v967 = vunpack.c.l.b16 %v391
      %v968 = vunpack.c.l.b16 %v392
      %v969 = vunpack.c.l.b16 %v393
      %v970 = vunpack.c.l.b16 %v394
      %v971 = vunpack.c.l.b16 %v395
      %v972 = vunpack.c.l.b16 %v396
      %v973 = vunpack.c.l.b16 %v397
      %v974 = vunpack.c.l.b16 %v398
      %v975 = vunpack.c.l.b16 %v399
      %v976 = vunpack.c.l.b16 %v400
      %v977 = vunpack.c.l.b16 %v401
      %v978 = vunpack.c.l.b16 %v402
      %v979 = vunpack.c.l.b16 %v403
      %v980 = vunpack.c.l.b16 %v404
      %v981 = vunpack.c.l.b16 %v405
      %v982 = vunpack.c.l.b16 %v406
      %v983 = vunpack.c.l.b16 %v407
      %v984 = vunpack.c.l.b16 %v408
      %v985 = vunpack.c.l.b16 %v409
      %v986 = vunpack.c.l.b16 %v410
      %v987 = vunpack.c.l.b16 %v411
      %v988 = vunpack.c.l.b16 %v412
      %v989 = vunpack.c.l.b16 %v413
      %v990 = vunpack.c.l.b16 %v414
      %v991 = vunpack.c.l.b16 %v415
      %v992 = vunpack.c.l.b16 %v416
      %v993 = vunpack.c.l.b16 %v417
      %v994 = vunpack.c.l.b16 %v418
      %v995 = vunpack.c.l.b16 %v419
      %v996 = vunpack.c.l.b16 %v420
      %v997 = vunpack.c.l.b16 %v421
      %v998 = vunpack.c.l.b16 %v422
      %v999 = vunpack.c.l.b16 %v423
      %v1000 = vunpack.c.l.b16 %v424
      %v1001 = vunpack.c.l.b16 %v425
      %v1002 = vunpack.c.l.b16 %v426
      %v1003 = vunpack.c.l.b16 %v427
      %v1004 = vunpack.c.l.b16 %v428
      %v1005 = vunpack.c.l.b16 %v429
      %v1006 = vunpack.c.l.b16 %v430
      %v1007 = vunpack.c.l.b16 %v431
      %v1008 = vunpack.c.l.b16 %v432
      %v1009 = vunpack.c.l.b16 %v433
      %v1010 = vunpack.c.l.b16 %v434
      %v1011 = vunpack.c.l.b16 %v435
      %v1012 = vunpack.c.l.b16 %v436
      %v1013 = vunpack.c.l.b16 %v437
      %v1014 = vunpack.c.l.b16 %v438
      %v1015 = vunpack.c.l.b16 %v439
      %v1016 = vunpack.c.l.b16 %v440
      %v1017 = vunpack.c.l.b16 %v441
      %v1018 = vunpack.c.l.b16 %v442
      %v1019 = vunpack.c.l.b16 %v443
      %v1020 = vunpack.c.l.b16 %v444
      %v1021 = vunpack.c.l.b16 %v445
      %v1022 = vunpack.c.l.b16 %v446
      %v1023 = vunpack.c.l.b16 %v447
      %v1024 = vunpack.c.l.b16 %v448
      %v1025 = vunpack.c.l.b16 %v449
      %v1026 = vunpack.c.l.b16 %v450
      %v1027 = vunpack.c.l.b16 %v451
      %v1028 = vunpack.c.l.b16 %v452
      %v1029 = vunpack.c.l.b16 %v453
      %v1030 = vunpack.c.l.b16 %v454
      %v1031 = vunpack.c.l.b16 %v455
      %v1032 = vunpack.c.l.b16 %v456
      %v1033 = vunpack.c.l.b16 %v457
      %v1034 = vunpack.c.l.b16 %v458
      %v1035 = vunpack.c.l.b16 %v459
      %v1036 = vunpack.c.l.b16 %v460
      %v1037 = vunpack.c.l.b16 %v461
      %v1038 = vunpack.c.l.b16 %v462
      %v1039 = vunpack.c.l.b16 %v463
      %v1040 = vunpack.c.l.b16 %v464
      %v1041 = vunpack.c.l.b16 %v465
      %v1042 = vunpack.c.l.b16 %v466
      %v1043 = vunpack.c.l.b16 %v467
      %v1044 = vunpack.c.l.b16 %v468
      %v1045 = vunpack.c.l.b16 %v469
      %v1046 = vunpack.c.l.b16 %v470
      %v1047 = vunpack.c.l.b16 %v471
      %v1048 = vunpack.c.l.b16 %v472
      %v1049 = vunpack.c.l.b16 %v473
      %v1050 = vunpack.c.l.b16 %v474
      %v1051 = vunpack.c.l.b16 %v475
      %v1052 = vpack.c.b16 %v925, %v924
      %v1053 = vpack.c.b16 %v927, %v926
      %v1054 = vpack.c.b16 %v929, %v928
      %v1055 = vpack.c.b16 %v931, %v930
      %v1056 = vpack.c.b16 %v933, %v932
      %v1057 = vpack.c.b16 %v935, %v934
      %v1058 = vpack.c.b16 %v937, %v936
      %v1059 = vpack.c.b16 %v939, %v938
      %v1060 = vpack.c.b16 %v941, %v940
      %v1061 = vpack.c.b16 %v943, %v942
      %v1062 = vpack.c.b16 %v945, %v944
      %v1063 = vpack.c.b16 %v947, %v946
      %v1064 = vpack.c.b16 %v949, %v948
      %v1065 = vpack.c.b16 %v951, %v950
      %v1066 = vpack.c.b16 %v953, %v952
      %v1067 = vpack.c.b16 %v955, %v954
      %v1068 = vpack.c.b16 %v957, %v956
      %v1069 = vpack.c.b16 %v959, %v958
      %v1070 = vpack.c.b16 %v961, %v960
      %v1071 = vpack.c.b16 %v963, %v962
      %v1072 = vpack.c.b16 %v965, %v964
      %v1073 = vpack.c.b16 %v967, %v966
      %v1074 = vpack.c.b16 %v969, %v968
      %v1075 = vpack.c.b16 %v971, %v970
      %v1076 = vpack.c.b16 %v973, %v972
      %v1077 = vpack.c.b16 %v975, %v974
      %v1078 = vpack.c.b16 %v977, %v976
      %v1079 = vpack.c.b16 %v979, %v978
      %v1080 = vpack.c.b16 %v981, %v980
      %v1081 = vpack.c.b16 %v983, %v982
      %v1082 = vpack.c.b16 %v985, %v984
      %v1083 = vpack.c.b16 %v987, %v986
      %v1084 = vpack.c.b16 %v989, %v988
      %v1085 = vpack.c.b16 %v991, %v990
      %v1086 = vpack.c.b16 %v993, %v992
      %v1087 = vpack.c.b16 %v995, %v994
      %v1088 = vpack.c.b16 %v997, %v996
      %v1089 = vpack.c.b16 %v999, %v998
      %v1090 = vpack.c.b16 %v1001, %v1000
      %v1091 = vpack.c.b16 %v1003, %v1002
      %v1092 = vpack.c.b16 %v1005, %v1004
      %v1093 = vpack.c.b16 %v1007, %v1006
      %v1094 = vpack.c.b16 %v1009, %v1008
      %v1095 = vpack.c.b16 %v1011, %v1010
      %v1096 = vpack.c.b16 %v1013, %v1012
      %v1097 = vpack.c.b16 %v1015, %v1014
      %v1098 = vpack.c.b16 %v1017, %v1016
      %v1099 = vpack.c.b16 %v1019, %v1018
      %v1100 = vpack.c.b16 %v1021, %v1020
      %v1101 = vpack.c.b16 %v1023, %v1022
      %v1102 = vpack.c.b16 %v1025, %v1024
      %v1103 = vpack.c.b16 %v1027, %v1026
      %v1104 = vpack.c.b16 %v1029, %v1028
      %v1105 = vpack.c.b16 %v1031, %v1030
      %v1106 = vpack.c.b16 %v1033, %v1032
      %v1107 = vpack.c.b16 %v1035, %v1034
      %v1108 = vpack.c.b16 %v1037, %v1036
      %v1109 = vpack.c.b16 %v1039, %v1038
      %v1110 = vpack.c.b16 %v1041, %v1040
      %v1111 = vpack.c.b16 %v1043, %v1042
      %v1112 = vpack.c.b16 %v1045, %v1044
      %v1113 = vpack.c.b16 %v1047, %v1046
      %v1114 = vpack.c.b16 %v1049, %v1048
      %v1115 = vpack.c.b16 %v1051, %v1050
      %1180 = vmatprep.subr.bf16.mxu0 0
      %1181 = vmatpush1.bf16.msra.mxu0 %v1059
      %1182 = vmatprep.subr.bf16.mxu0 0
      %1183 = vmatpush1.bf16.msra.mxu0 %v1058
      %1184 = vmatprep.subr.bf16.mxu0 0
      %1185 = vmatpush1.bf16.msra.mxu0 %v1057
      %1186 = vmatprep.subr.bf16.mxu0 0
      %1187 = vmatpush1.bf16.msra.mxu0 %v1056
      %1188 = vmatprep.subr.bf16.mxu0 0
      %1189 = vmatpush1.bf16.msra.mxu0 %v1055
      %1190 = vmatprep.subr.bf16.mxu0 0
      %1191 = vmatpush1.bf16.msra.mxu0 %v1054
      %1192 = vmatprep.subr.bf16.mxu0 0
      %1193 = vmatpush1.bf16.msra.mxu0 %v1053
      %1194 = vmatprep.subr.bf16.mxu0 0
      %1195 = vmatpush1.bf16.msra.mxu0 %v1052
      %1196 = vmatprep.subr.bf16.mxu0 0
      %1197 = vmatpush2.bf16.msra.mxu0 %v1067
      %1198 = vmatprep.subr.bf16.mxu0 0
      %1199 = vmatpush2.bf16.msra.mxu0 %v1066
      %1200 = vmatprep.subr.bf16.mxu0 0
      %1201 = vmatpush2.bf16.msra.mxu0 %v1065
      %1202 = vmatprep.subr.bf16.mxu0 0
      %1203 = vmatpush2.bf16.msra.mxu0 %v1064
      %1204 = vmatprep.subr.bf16.mxu0 0
      %1205 = vmatpush2.bf16.msra.mxu0 %v1063
      %1206 = vmatprep.subr.bf16.mxu0 0
      %1207 = vmatpush2.bf16.msra.mxu0 %v1062
      %1208 = vmatprep.subr.bf16.mxu0 0
      %1209 = vmatpush2.bf16.msra.mxu0 %v1061
      %1210 = vmatprep.subr.bf16.mxu0 0
      %1211 = vmatpush2.bf16.msra.mxu0 %v1060
      %1212 = vmatprep.mubr.bf16.mxu0 %v669
      %1213 = vmatmul.mubr.bf16.gmra.mxu0 %v668
      %v1214 = vpop.f32.mrf.mxu0
      %v1215 = vadd.f32 0.0, %v1214
      %v1216 = vpop.f32.mrf.mxu0
      %v1217 = vpop.f32.mrf.mxu0
      %v1218 = vadd.f32 0.0, %v1217
      %v1219 = vpop.f32.mrf.mxu0
      %1220 = vmatprep.mubr.bf16.mxu0 %v677
      %1221 = vmatmul.mubr.bf16.gmra.mxu0 %v676
      %v1222 = vpop.f32.mrf.mxu0
      %v1223 = vadd.f32 0.0, %v1222
      %v1224 = vpop.f32.mrf.mxu0
      %v1225 = vpop.f32.mrf.mxu0
      %v1226 = vadd.f32 0.0, %v1225
      %v1227 = vpop.f32.mrf.mxu0
      %1228 = vmatprep.mubr.bf16.mxu0 %v685
      %1229 = vmatmul.mubr.bf16.gmra.mxu0 %v684
      %v1230 = vpop.f32.mrf.mxu0
      %v1231 = vadd.f32 0.0, %v1230
      %v1232 = vpop.f32.mrf.mxu0
      %v1233 = vpop.f32.mrf.mxu0
      %v1234 = vadd.f32 0.0, %v1233
      %v1235 = vpop.f32.mrf.mxu0
      %1236 = vmatprep.mubr.bf16.mxu0 %v693
      %1237 = vmatmul.mubr.bf16.gmra.mxu0 %v692
      %v1238 = vpop.f32.mrf.mxu0
      %v1239 = vadd.f32 0.0, %v1238
      %v1240 = vpop.f32.mrf.mxu0
      %v1241 = vpop.f32.mrf.mxu0
      %v1242 = vadd.f32 0.0, %v1241
      %v1243 = vpop.f32.mrf.mxu0
      %1244 = vmatprep.mubr.bf16.mxu0 %v701
      %1245 = vmatmul.mubr.bf16.gmra.mxu0 %v700
      %v1246 = vpop.f32.mrf.mxu0
      %v1247 = vadd.f32 0.0, %v1246
      %v1248 = vpop.f32.mrf.mxu0
      %v1249 = vpop.f32.mrf.mxu0
      %v1250 = vadd.f32 0.0, %v1249
      %v1251 = vpop.f32.mrf.mxu0
      %1252 = vmatprep.mubr.bf16.mxu0 %v709
      %1253 = vmatmul.mubr.bf16.gmra.mxu0 %v708
      %v1254 = vpop.f32.mrf.mxu0
      %v1255 = vadd.f32 0.0, %v1254
      %v1256 = vpop.f32.mrf.mxu0
      %v1257 = vpop.f32.mrf.mxu0
      %v1258 = vadd.f32 0.0, %v1257
      %v1259 = vpop.f32.mrf.mxu0
      %1260 = vmatprep.mubr.bf16.mxu0 %v717
      %1261 = vmatmul.mubr.bf16.gmra.mxu0 %v716
      %v1262 = vpop.f32.mrf.mxu0
      %v1263 = vadd.f32 0.0, %v1262
      %v1264 = vpop.f32.mrf.mxu0
      %v1265 = vpop.f32.mrf.mxu0
      %v1266 = vadd.f32 0.0, %v1265
      %v1267 = vpop.f32.mrf.mxu0
      %1268 = vmatprep.mubr.bf16.mxu0 %v725
      %1269 = vmatmul.mubr.bf16.gmra.mxu0 %v724
      %v1270 = vpop.f32.mrf.mxu0
      %v1271 = vadd.f32 0.0, %v1270
      %v1272 = vpop.f32.mrf.mxu0
      %v1273 = vpop.f32.mrf.mxu0
      %v1274 = vadd.f32 0.0, %v1273
      %v1275 = vpop.f32.mrf.mxu0
      %1276 = vdwg.mxu0
      %1277 = vmatprep.subr.bf16.mxu0 0
      %1278 = vmatpush1.bf16.msra.mxu0 %v1075
      %1279 = vmatprep.subr.bf16.mxu0 0
      %1280 = vmatpush1.bf16.msra.mxu0 %v1074
      %1281 = vmatprep.subr.bf16.mxu0 0
      %1282 = vmatpush1.bf16.msra.mxu0 %v1073
      %1283 = vmatprep.subr.bf16.mxu0 0
      %1284 = vmatpush1.bf16.msra.mxu0 %v1072
      %1285 = vmatprep.subr.bf16.mxu0 0
      %1286 = vmatpush1.bf16.msra.mxu0 %v1071
      %1287 = vmatprep.subr.bf16.mxu0 0
      %1288 = vmatpush1.bf16.msra.mxu0 %v1070
      %1289 = vmatprep.subr.bf16.mxu0 0
      %1290 = vmatpush1.bf16.msra.mxu0 %v1069
      %1291 = vmatprep.subr.bf16.mxu0 0
      %1292 = vmatpush1.bf16.msra.mxu0 %v1068
      %1293 = vmatprep.subr.bf16.mxu0 0
      %1294 = vmatpush2.bf16.msra.mxu0 %v1083
      %1295 = vmatprep.subr.bf16.mxu0 0
      %1296 = vmatpush2.bf16.msra.mxu0 %v1082
      %1297 = vmatprep.subr.bf16.mxu0 0
      %1298 = vmatpush2.bf16.msra.mxu0 %v1081
      %1299 = vmatprep.subr.bf16.mxu0 0
      %1300 = vmatpush2.bf16.msra.mxu0 %v1080
      %1301 = vmatprep.subr.bf16.mxu0 0
      %1302 = vmatpush2.bf16.msra.mxu0 %v1079
      %1303 = vmatprep.subr.bf16.mxu0 0
      %1304 = vmatpush2.bf16.msra.mxu0 %v1078
      %1305 = vmatprep.subr.bf16.mxu0 0
      %1306 = vmatpush2.bf16.msra.mxu0 %v1077
      %1307 = vmatprep.subr.bf16.mxu0 0
      %1308 = vmatpush2.bf16.msra.mxu0 %v1076
      %1309 = vmatprep.mubr.bf16.mxu0 %v671
      %1310 = vmatmul.mubr.bf16.gmra.mxu0 %v670
      %v1311 = vpop.f32.mrf.mxu0
      %v1312 = vadd.f32 %v1215, %v1311
      %v1313 = vpop.f32.mrf.mxu0
      %v1314 = vpop.f32.mrf.mxu0
      %v1315 = vadd.f32 %v1218, %v1314
      %v1316 = vpop.f32.mrf.mxu0
      %1317 = vmatprep.mubr.bf16.mxu0 %v679
      %1318 = vmatmul.mubr.bf16.gmra.mxu0 %v678
      %v1319 = vpop.f32.mrf.mxu0
      %v1320 = vadd.f32 %v1223, %v1319
      %v1321 = vpop.f32.mrf.mxu0
      %v1322 = vpop.f32.mrf.mxu0
      %v1323 = vadd.f32 %v1226, %v1322
      %v1324 = vpop.f32.mrf.mxu0
      %1325 = vmatprep.mubr.bf16.mxu0 %v687
      %1326 = vmatmul.mubr.bf16.gmra.mxu0 %v686
      %v1327 = vpop.f32.mrf.mxu0
      %v1328 = vadd.f32 %v1231, %v1327
      %v1329 = vpop.f32.mrf.mxu0
      %v1330 = vpop.f32.mrf.mxu0
      %v1331 = vadd.f32 %v1234, %v1330
      %v1332 = vpop.f32.mrf.mxu0
      %1333 = vmatprep.mubr.bf16.mxu0 %v695
      %1334 = vmatmul.mubr.bf16.gmra.mxu0 %v694
      %v1335 = vpop.f32.mrf.mxu0
      %v1336 = vadd.f32 %v1239, %v1335
      %v1337 = vpop.f32.mrf.mxu0
      %v1338 = vpop.f32.mrf.mxu0
      %v1339 = vadd.f32 %v1242, %v1338
      %v1340 = vpop.f32.mrf.mxu0
      %1341 = vmatprep.mubr.bf16.mxu0 %v703
      %1342 = vmatmul.mubr.bf16.gmra.mxu0 %v702
      %v1343 = vpop.f32.mrf.mxu0
      %v1344 = vadd.f32 %v1247, %v1343
      %v1345 = vpop.f32.mrf.mxu0
      %v1346 = vpop.f32.mrf.mxu0
      %v1347 = vadd.f32 %v1250, %v1346
      %v1348 = vpop.f32.mrf.mxu0
      %1349 = vmatprep.mubr.bf16.mxu0 %v711
      %1350 = vmatmul.mubr.bf16.gmra.mxu0 %v710
      %v1351 = vpop.f32.mrf.mxu0
      %v1352 = vadd.f32 %v1255, %v1351
      %v1353 = vpop.f32.mrf.mxu0
      %v1354 = vpop.f32.mrf.mxu0
      %v1355 = vadd.f32 %v1258, %v1354
      %v1356 = vpop.f32.mrf.mxu0
      %1357 = vmatprep.mubr.bf16.mxu0 %v719
      %1358 = vmatmul.mubr.bf16.gmra.mxu0 %v718
      %v1359 = vpop.f32.mrf.mxu0
      %v1360 = vadd.f32 %v1263, %v1359
      %v1361 = vpop.f32.mrf.mxu0
      %v1362 = vpop.f32.mrf.mxu0
      %v1363 = vadd.f32 %v1266, %v1362
      %v1364 = vpop.f32.mrf.mxu0
      %1365 = vmatprep.mubr.bf16.mxu0 %v727
      %1366 = vmatmul.mubr.bf16.gmra.mxu0 %v726
      %v1367 = vpop.f32.mrf.mxu0
      %v1368 = vadd.f32 %v1271, %v1367
      %v1369 = vpop.f32.mrf.mxu0
      %v1370 = vpop.f32.mrf.mxu0
      %v1371 = vadd.f32 %v1274, %v1370
      %v1372 = vpop.f32.mrf.mxu0
      %1373 = vdwg.mxu0
      %1374 = vmatprep.subr.bf16.mxu0 0
      %1375 = vmatpush1.bf16.msra.mxu0 %v1091
      %1376 = vmatprep.subr.bf16.mxu0 0
      %1377 = vmatpush1.bf16.msra.mxu0 %v1090
      %1378 = vmatprep.subr.bf16.mxu0 0
      %1379 = vmatpush1.bf16.msra.mxu0 %v1089
      %1380 = vmatprep.subr.bf16.mxu0 0
      %1381 = vmatpush1.bf16.msra.mxu0 %v1088
      %1382 = vmatprep.subr.bf16.mxu0 0
      %1383 = vmatpush1.bf16.msra.mxu0 %v1087
      %1384 = vmatprep.subr.bf16.mxu0 0
      %1385 = vmatpush1.bf16.msra.mxu0 %v1086
      %1386 = vmatprep.subr.bf16.mxu0 0
      %1387 = vmatpush1.bf16.msra.mxu0 %v1085
      %1388 = vmatprep.subr.bf16.mxu0 0
      %1389 = vmatpush1.bf16.msra.mxu0 %v1084
      %1390 = vmatprep.subr.bf16.mxu0 0
      %1391 = vmatpush2.bf16.msra.mxu0 %v1099
      %1392 = vmatprep.subr.bf16.mxu0 0
      %1393 = vmatpush2.bf16.msra.mxu0 %v1098
      %1394 = vmatprep.subr.bf16.mxu0 0
      %1395 = vmatpush2.bf16.msra.mxu0 %v1097
      %1396 = vmatprep.subr.bf16.mxu0 0
      %1397 = vmatpush2.bf16.msra.mxu0 %v1096
      %1398 = vmatprep.subr.bf16.mxu0 0
      %1399 = vmatpush2.bf16.msra.mxu0 %v1095
      %1400 = vmatprep.subr.bf16.mxu0 0
      %1401 = vmatpush2.bf16.msra.mxu0 %v1094
      %1402 = vmatprep.subr.bf16.mxu0 0
      %1403 = vmatpush2.bf16.msra.mxu0 %v1093
      %1404 = vmatprep.subr.bf16.mxu0 0
      %1405 = vmatpush2.bf16.msra.mxu0 %v1092
      %1406 = vmatprep.mubr.bf16.mxu0 %v673
      %1407 = vmatmul.mubr.bf16.gmra.mxu0 %v672
      %v1408 = vpop.f32.mrf.mxu0
      %v1409 = vadd.f32 %v1312, %v1408
      %v1410 = vpop.f32.mrf.mxu0
      %v1411 = vpop.f32.mrf.mxu0
      %v1412 = vadd.f32 %v1315, %v1411
      %v1413 = vpop.f32.mrf.mxu0
      %1414 = vmatprep.mubr.bf16.mxu0 %v681
      %1415 = vmatmul.mubr.bf16.gmra.mxu0 %v680
      %v1416 = vpop.f32.mrf.mxu0
      %v1417 = vadd.f32 %v1320, %v1416
      %v1418 = vpop.f32.mrf.mxu0
      %v1419 = vpop.f32.mrf.mxu0
      %v1420 = vadd.f32 %v1323, %v1419
      %v1421 = vpop.f32.mrf.mxu0
      %1422 = vmatprep.mubr.bf16.mxu0 %v689
      %1423 = vmatmul.mubr.bf16.gmra.mxu0 %v688
      %v1424 = vpop.f32.mrf.mxu0
      %v1425 = vadd.f32 %v1328, %v1424
      %v1426 = vpop.f32.mrf.mxu0
      %v1427 = vpop.f32.mrf.mxu0
      %v1428 = vadd.f32 %v1331, %v1427
      %v1429 = vpop.f32.mrf.mxu0
      %1430 = vmatprep.mubr.bf16.mxu0 %v697
      %1431 = vmatmul.mubr.bf16.gmra.mxu0 %v696
      %v1432 = vpop.f32.mrf.mxu0
      %v1433 = vadd.f32 %v1336, %v1432
      %v1434 = vpop.f32.mrf.mxu0
      %v1435 = vpop.f32.mrf.mxu0
      %v1436 = vadd.f32 %v1339, %v1435
      %v1437 = vpop.f32.mrf.mxu0
      %1438 = vmatprep.mubr.bf16.mxu0 %v705
      %1439 = vmatmul.mubr.bf16.gmra.mxu0 %v704
      %v1440 = vpop.f32.mrf.mxu0
      %v1441 = vadd.f32 %v1344, %v1440
      %v1442 = vpop.f32.mrf.mxu0
      %v1443 = vpop.f32.mrf.mxu0
      %v1444 = vadd.f32 %v1347, %v1443
      %v1445 = vpop.f32.mrf.mxu0
      %1446 = vmatprep.mubr.bf16.mxu0 %v713
      %1447 = vmatmul.mubr.bf16.gmra.mxu0 %v712
      %v1448 = vpop.f32.mrf.mxu0
      %v1449 = vadd.f32 %v1352, %v1448
      %v1450 = vpop.f32.mrf.mxu0
      %v1451 = vpop.f32.mrf.mxu0
      %v1452 = vadd.f32 %v1355, %v1451
      %v1453 = vpop.f32.mrf.mxu0
      %1454 = vmatprep.mubr.bf16.mxu0 %v721
      %1455 = vmatmul.mubr.bf16.gmra.mxu0 %v720
      %v1456 = vpop.f32.mrf.mxu0
      %v1457 = vadd.f32 %v1360, %v1456
      %v1458 = vpop.f32.mrf.mxu0
      %v1459 = vpop.f32.mrf.mxu0
      %v1460 = vadd.f32 %v1363, %v1459
      %v1461 = vpop.f32.mrf.mxu0
      %1462 = vmatprep.mubr.bf16.mxu0 %v729
      %1463 = vmatmul.mubr.bf16.gmra.mxu0 %v728
      %v1464 = vpop.f32.mrf.mxu0
      %v1465 = vadd.f32 %v1368, %v1464
      %v1466 = vpop.f32.mrf.mxu0
      %v1467 = vpop.f32.mrf.mxu0
      %v1468 = vadd.f32 %v1371, %v1467
      %v1469 = vpop.f32.mrf.mxu0
      %1470 = vdwg.mxu0
      %1471 = vmatprep.subr.bf16.mxu0 0
      %1472 = vmatpush1.bf16.msra.mxu0 %v1107
      %1473 = vmatprep.subr.bf16.mxu0 0
      %1474 = vmatpush1.bf16.msra.mxu0 %v1106
      %1475 = vmatprep.subr.bf16.mxu0 0
      %1476 = vmatpush1.bf16.msra.mxu0 %v1105
      %1477 = vmatprep.subr.bf16.mxu0 0
      %1478 = vmatpush1.bf16.msra.mxu0 %v1104
      %1479 = vmatprep.subr.bf16.mxu0 0
      %1480 = vmatpush1.bf16.msra.mxu0 %v1103
      %1481 = vmatprep.subr.bf16.mxu0 0
      %1482 = vmatpush1.bf16.msra.mxu0 %v1102
      %1483 = vmatprep.subr.bf16.mxu0 0
      %1484 = vmatpush1.bf16.msra.mxu0 %v1101
      %1485 = vmatprep.subr.bf16.mxu0 0
      %1486 = vmatpush1.bf16.msra.mxu0 %v1100
      %1487 = vmatprep.subr.bf16.mxu0 0
      %1488 = vmatpush2.bf16.msra.mxu0 %v1115
      %1489 = vmatprep.subr.bf16.mxu0 0
      %1490 = vmatpush2.bf16.msra.mxu0 %v1114
      %1491 = vmatprep.subr.bf16.mxu0 0
      %1492 = vmatpush2.bf16.msra.mxu0 %v1113
      %1493 = vmatprep.subr.bf16.mxu0 0
      %1494 = vmatpush2.bf16.msra.mxu0 %v1112
      %1495 = vmatprep.subr.bf16.mxu0 0
      %1496 = vmatpush2.bf16.msra.mxu0 %v1111
      %1497 = vmatprep.subr.bf16.mxu0 0
      %1498 = vmatpush2.bf16.msra.mxu0 %v1110
      %1499 = vmatprep.subr.bf16.mxu0 0
      %1500 = vmatpush2.bf16.msra.mxu0 %v1109
      %1501 = vmatprep.subr.bf16.mxu0 0
      %1502 = vmatpush2.bf16.msra.mxu0 %v1108
      %1503 = vmatprep.mubr.bf16.mxu0 %v675
      %1504 = vmatmul.mubr.bf16.gmra.mxu0 %v674
      %v1505 = vpop.f32.mrf.mxu0
      %v1506 = vadd.f32 %v1409, %v1505
      %v1507 = vpop.f32.mrf.mxu0
      %v1508 = vpop.f32.mrf.mxu0
      %v1509 = vadd.f32 %v1412, %v1508
      %v1510 = vpop.f32.mrf.mxu0
      %1511 = vmatprep.mubr.bf16.mxu0 %v683
      %1512 = vmatmul.mubr.bf16.gmra.mxu0 %v682
      %v1513 = vpop.f32.mrf.mxu0
      %v1514 = vadd.f32 %v1417, %v1513
      %v1515 = vpop.f32.mrf.mxu0
      %v1516 = vpop.f32.mrf.mxu0
      %v1517 = vadd.f32 %v1420, %v1516
      %v1518 = vpop.f32.mrf.mxu0
      %1519 = vmatprep.mubr.bf16.mxu0 %v691
      %1520 = vmatmul.mubr.bf16.gmra.mxu0 %v690
      %v1521 = vpop.f32.mrf.mxu0
      %v1522 = vadd.f32 %v1425, %v1521
      %v1523 = vpop.f32.mrf.mxu0
      %v1524 = vpop.f32.mrf.mxu0
      %v1525 = vadd.f32 %v1428, %v1524
      %v1526 = vpop.f32.mrf.mxu0
      %1527 = vmatprep.mubr.bf16.mxu0 %v699
      %1528 = vmatmul.mubr.bf16.gmra.mxu0 %v698
      %v1529 = vpop.f32.mrf.mxu0
      %v1530 = vadd.f32 %v1433, %v1529
      %v1531 = vpop.f32.mrf.mxu0
      %v1532 = vpop.f32.mrf.mxu0
      %v1533 = vadd.f32 %v1436, %v1532
      %v1534 = vpop.f32.mrf.mxu0
      %1535 = vmatprep.mubr.bf16.mxu0 %v707
      %1536 = vmatmul.mubr.bf16.gmra.mxu0 %v706
      %v1537 = vpop.f32.mrf.mxu0
      %v1538 = vadd.f32 %v1441, %v1537
      %v1539 = vpop.f32.mrf.mxu0
      %v1540 = vpop.f32.mrf.mxu0
      %v1541 = vadd.f32 %v1444, %v1540
      %v1542 = vpop.f32.mrf.mxu0
      %1543 = vmatprep.mubr.bf16.mxu0 %v715
      %1544 = vmatmul.mubr.bf16.gmra.mxu0 %v714
      %v1545 = vpop.f32.mrf.mxu0
      %v1546 = vadd.f32 %v1449, %v1545
      %v1547 = vpop.f32.mrf.mxu0
      %v1548 = vpop.f32.mrf.mxu0
      %v1549 = vadd.f32 %v1452, %v1548
      %v1550 = vpop.f32.mrf.mxu0
      %1551 = vmatprep.mubr.bf16.mxu0 %v723
      %1552 = vmatmul.mubr.bf16.gmra.mxu0 %v722
      %v1553 = vpop.f32.mrf.mxu0
      %v1554 = vadd.f32 %v1457, %v1553
      %v1555 = vpop.f32.mrf.mxu0
      %v1556 = vpop.f32.mrf.mxu0
      %v1557 = vadd.f32 %v1460, %v1556
      %v1558 = vpop.f32.mrf.mxu0
      %1559 = vmatprep.mubr.bf16.mxu0 %v731
      %1560 = vmatmul.mubr.bf16.gmra.mxu0 %v730
      %v1561 = vpop.f32.mrf.mxu0
      %v1562 = vadd.f32 %v1465, %v1561
      %v1563 = vpop.f32.mrf.mxu0
      %v1564 = vpop.f32.mrf.mxu0
      %v1565 = vadd.f32 %v1468, %v1564
      %v1566 = vpop.f32.mrf.mxu0
      %1567 = vdwg.mxu0
      %1568 = vst [vmem:[%s272] sm:$0xff] %v1506
      %1569 = vst [vmem:[%s272 + $0x8] sm:$0xff] %v1509
      %1570 = vst [vmem:[%s272 + $0x10] sm:$0xff] %v1514
      %1571 = vst [vmem:[%s272 + $0x18] sm:$0xff] %v1517
      %1572 = vst [vmem:[%s272 + $0x20] sm:$0xff] %v1522
      %1573 = vst [vmem:[%s272 + $0x28] sm:$0xff] %v1525
      %1574 = vst [vmem:[%s272 + $0x30] sm:$0xff] %v1530
      %1575 = vst [vmem:[%s272 + $0x38] sm:$0xff] %v1533
      %1576 = vst [vmem:[%s272 + $0x40] sm:$0xff] %v1538
      %1577 = vst [vmem:[%s272 + $0x48] sm:$0xff] %v1541
      %1578 = vst [vmem:[%s272 + $0x50] sm:$0xff] %v1546
      %1579 = vst [vmem:[%s272 + $0x58] sm:$0xff] %v1549
      %1580 = vst [vmem:[%s272 + $0x60] sm:$0xff] %v1554
      %1581 = vst [vmem:[%s272 + $0x68] sm:$0xff] %v1557
      %1582 = vst [vmem:[%s272 + $0x70] sm:$0xff] %v1562
      %1583 = vst [vmem:[%s272 + $0x78] sm:$0xff] %v1565
      %v1584 = vadd.f32 %v1506, %v1509
      %v1585 = vadd.f32 %v1584, %v1514
      %v1586 = vadd.f32 %v1585, %v1517
      %v1587 = vadd.f32 %v1586, %v1522
      %v1588 = vadd.f32 %v1587, %v1525
      %v1589 = vadd.f32 %v1588, %v1530
      %v1590 = vadd.f32 %v1589, %v1533
      %v1591 = vadd.f32 %v1590, %v1538
      %v1592 = vadd.f32 %v1591, %v1541
      %v1593 = vadd.f32 %v1592, %v1546
      %v1594 = vadd.f32 %v1593, %v1549
      %v1595 = vadd.f32 %v1594, %v1554
      %v1596 = vadd.f32 %v1595, %v1557
      %v1597 = vadd.f32 %v1596, %v1562
      %v1598 = vadd.f32 %v1597, %v1565
      %v1599 = vrot.slane %v1598, 4
      %v1600 = vadd.f32 %v1598, %v1599
      %v1601 = vrot.slane %v1600, 2
      %v1602 = vadd.f32 %v1600, %v1601
      %v1603 = vrot.slane %v1602, 1
      %v1604 = vadd.f32 %v1602, %v1603
      %1605 = vst [vmem:[%s281] sm:$0x1] %v1604
      %v1606 = vmul.f32 %v1506, %v1506
      %v1607 = vmul.f32 %v1509, %v1509
      %v1608 = vmul.f32 %v1514, %v1514
      %v1609 = vmul.f32 %v1517, %v1517
      %v1610 = vmul.f32 %v1522, %v1522
      %v1611 = vmul.f32 %v1525, %v1525
      %v1612 = vmul.f32 %v1530, %v1530
      %v1613 = vmul.f32 %v1533, %v1533
      %v1614 = vmul.f32 %v1538, %v1538
      %v1615 = vmul.f32 %v1541, %v1541
      %v1616 = vmul.f32 %v1546, %v1546
      %v1617 = vmul.f32 %v1549, %v1549
      %v1618 = vmul.f32 %v1554, %v1554
      %v1619 = vmul.f32 %v1557, %v1557
      %v1620 = vmul.f32 %v1562, %v1562
      %v1621 = vmul.f32 %v1565, %v1565
      %v1622 = vadd.f32 %v1606, %v1607
      %v1623 = vadd.f32 %v1622, %v1608
      %v1624 = vadd.f32 %v1623, %v1609
      %v1625 = vadd.f32 %v1624, %v1610
      %v1626 = vadd.f32 %v1625, %v1611
      %v1627 = vadd.f32 %v1626, %v1612
      %v1628 = vadd.f32 %v1627, %v1613
      %v1629 = vadd.f32 %v1628, %v1614
      %v1630 = vadd.f32 %v1629, %v1615
      %v1631 = vadd.f32 %v1630, %v1616
      %v1632 = vadd.f32 %v1631, %v1617
      %v1633 = vadd.f32 %v1632, %v1618
      %v1634 = vadd.f32 %v1633, %v1619
      %v1635 = vadd.f32 %v1634, %v1620
      %v1636 = vadd.f32 %v1635, %v1621
      %v1637 = vrot.slane %v1636, 4
      %v1638 = vadd.f32 %v1636, %v1637
      %v1639 = vrot.slane %v1638, 2
      %v1640 = vadd.f32 %v1638, %v1639
      %v1641 = vrot.slane %v1640, 1
      %v1642 = vadd.f32 %v1640, %v1641
      %1643 = vst [vmem:[%s281 + $0x1] sm:$0x1] %v1642
      %s1644 = smul.u32 16, %s21
      %p1645 = scmp.lt.s32.totalorder %s20, 3
      %s1646 = scalar_select %p1645, %s20, 3
      %p1647 = scmp.lt.s32.totalorder %s1644, 15
      %s1648 = scalar_select %p1647, %s1644, 15
      %p1649 = scmp.lt.s32.totalorder %s22, 0
      %s1650 = scalar_select %p1649, %s22, 0
      %s1651 = sadd.s32 %s1650, %s1648
      %s1652 = smul.addr %s1646, 16
      %s1653 = sadd.s32 %s1651, %s1652
      %s1654 = smul.addr %s1653, 8
      %s1655 = scalar_lea.vmem %s2, %s1654
      %s1656 = sadd.s32 %s20, %s21
      %p1657 = scmp.lt.s32.totalorder %s1656, 3
      %s1658 = scalar_select %p1657, %s1656, 3
      %p1659 = scmp.lt.s32.totalorder %s22, 0
      %s1660 = scalar_select %p1659, %s22, 0
      %s1661 = sadd.s32 %s1660, %s1658
      %s1662 = smul.addr %s1661, 2
      %s1663 = scalar_lea.vmem %s3, %s1662
      // Predicated region
      $region29: #{gen_forward.7} parent=27 // pred_check
        %p1664 = pneg %p112
      $region30: #{gen_forward.7} parent=27 // pred_check_branch
        %1666 = sbr.rel (%p1664) target = $region32
      $region31: #{gen_forward.7} parent=27 // pred_region
        %s1667 = smul.u32 16, %s21
      $region32: #{gen_forward.7} parent=27 // pred_fallthru
        _
      // Predicated region
      $region33: #{gen_forward.7} parent=27 // pred_check
        %p1668 = pneg %p142
      $region34: #{gen_forward.7} parent=27 // pred_check_branch
        %1670 = sbr.rel (%p1668) target = $region36
      $region35: #{gen_forward.7} parent=27 // pred_region
        %s1671 = sadd.s32 %s20, %s21
      $region36: #{gen_forward.7} parent=27 // pred_fallthru
        _
    $region28: #{gen_forward.7} parent=5 // pred_fallthru
      _
    %p1672 = scmp.le.s32.totalorder 2, %s10
    // Predicated region
    $region37: #{gen_forward.7} parent=5 // pred_check
      %p1673 = pneg %p1672
    $region38: #{gen_forward.7} parent=5 // pred_check_branch
      %1675 = sbr.rel (%p1673) target = $region40
    $region39: #{gen_forward.7} parent=5 // pred_region
      %s1676 = ssub.s32 %s10, 2
      // Predicated region
      $region41: #{gen_forward.7} parent=39 // pred_check
        %p1677 = pneg %p118
      $region42: #{gen_forward.7} parent=39 // pred_check_branch
        %1679 = sbr.rel (%p1677) target = $region44
      $region43: #{gen_forward.7} parent=39 // pred_region
        %s1680 = smul.u32 16, %s24
        %p1681 = scmp.lt.s32.totalorder %s23, 3
        %s1682 = scalar_select %p1681, %s23, 3
        %p1683 = scmp.lt.s32.totalorder %s1680, 15
        %s1684 = scalar_select %p1683, %s1680, 15
        %p1685 = scmp.lt.s32.totalorder %s25, 0
        %s1686 = scalar_select %p1685, %s25, 0
        %s1687 = sadd.s32 %s1686, %s1684
        %s1688 = smul.addr %s1682, 16
        %s1689 = sadd.s32 %s1687, %s1688
        %s1690 = smul.addr %s1689, 8
        %s1691 = scalar_lea.vmem %s2, %s1690
      $region44: #{gen_forward.7} parent=39 // pred_fallthru
        _
      // Predicated region
      $region45: #{gen_forward.7} parent=39 // pred_check
        %p1692 = pneg %p148
      $region46: #{gen_forward.7} parent=39 // pred_check_branch
        %1694 = sbr.rel (%p1692) target = $region48
      $region47: #{gen_forward.7} parent=39 // pred_region
        %s1695 = sadd.s32 %s23, %s24
        %p1696 = scmp.lt.s32.totalorder %s1695, 3
        %s1697 = scalar_select %p1696, %s1695, 3
        %p1698 = scmp.lt.s32.totalorder %s25, 0
        %s1699 = scalar_select %p1698, %s25, 0
        %s1700 = sadd.s32 %s1699, %s1697
        %s1701 = smul.addr %s1700, 2
        %s1702 = scalar_lea.vmem %s3, %s1701
      $region48: #{gen_forward.7} parent=39 // pred_fallthru
        _
    $region40: #{gen_forward.7} parent=5 // pred_fallthru
      _
  $region6: #{gen_forward.7} parent=0 // loop_footer
    %s14 = sadd.s32 1, %s10
  $region7: #{gen_forward.7} parent=0 // loop_footer_branch
    %9 = sbr.rel target = $region3
  $region8: #{gen_forward.7} parent=0 // loop_exit
    _

// kernel: gen_forward.8
$region0: #{gen_forward.8}
  #allocation0 [shape = 'u32[]', space=smem, size = 0x4, offset = 0x4, fixed_abs, tag = 'smem constant byte address 0x4 - core index']
  #allocation1 [shape = 'u32[144,128]{1,0:T(1,128)}', space=vmem, size = 0x12000, scoped, tag = 'internal scratch']
  %s0 = inlined_call_operand.vmem [shape: bf16[4,512,512], index: 0, kind: input, shape index: {}]
  %s1 = inlined_call_operand.vmem [shape: bf16[4,512,128], index: 1, kind: input, shape index: {}]
  %s2 = inlined_call_operand.vmem [shape: f32[4,512,128], index: 2, kind: output, shape index: {0}]
  %s3 = inlined_call_operand.vmem [shape: f32[4,2,128], index: 3, kind: output, shape index: {1}]
  %4 = xla_tuple %s2, %s3
  %s5 = sld [smem:[#allocation0]]
  $region49: #{gen_forward.8} parent=0
    _
  %s7 = ssub.s32 1, %s5
  %s8 = scalar_select 0, %s7, %s5
  loop: start=0, step=1, limit=6
  $region2: #{gen_forward.8} parent=0 // loop_pre_header
    _
  $region3: #{gen_forward.8} parent=0 // loop_header
    %s10 = sphi 0, %s14
    %p11 = scmp.ge.s32.totalorder %s10, 6
    %s17 = sphi 0, %s36
    %s18 = sphi 0, %s32
    %s19 = sphi 0, %s28
    %s20 = sphi 0, %s17
    %s21 = sphi 0, %s18
    %s22 = sphi 0, %s19
    %s23 = sphi 0, %s20
    %s24 = sphi 0, %s21
    %s25 = sphi 0, %s22
    %s41 = sphi 0, %s43
    %s44 = sphi 0, %s41
    %s45 = sphi 0, %s44
    %s61 = sphi 0, %s45
    %s69 = sphi 0, %s71
    %s72 = sphi 0, %s69
    %s73 = sphi 0, %s72
    %s89 = sphi 0, %s73
    %s99 = sphi 0, %s101
    %s102 = sphi 0, %s99
    %s103 = sphi 0, %s102
    %s119 = sphi 0, %s103
    %s129 = sphi 0, %s131
    %s132 = sphi 0, %s129
    %s133 = sphi 0, %s132
    %s149 = sphi 0, %s133
  $region4: #{gen_forward.8} parent=0 // loop_header_branch
    %13 = sbr.rel (%p11) target = $region8
  $region5: #{gen_forward.8} parent=0 // loop_body
    %s15 = ssub.s32 %s10, 1
    %s16 = ssub.s32 %s10, 2
    %s26 = sadd.s32 1, %s19
    %p27 = scmp.ge.s32.totalorder %s26, 1
    %s28 = scalar_select %p27, 0, %s26
    %s29 = sadd.s32 1, %s18
    %s30 = scalar_select %p27, %s29, %s18
    %p31 = scmp.ge.s32.totalorder %s30, 1
    %s32 = scalar_select %p31, 0, %s30
    %s33 = sadd.s32 1, %s17
    %s34 = scalar_select %p31, %s33, %s17
    %p35 = scmp.ge.s32.totalorder %s34, 4
    %s36 = scalar_select %p35, 0, %s34
    %s37 = ssub.s32 %s17, %s36
    %s38 = ssub.s32 %s18, %s32
    %s39 = sor.u32 %s37, %s38
    %p40 = scmp.eq.s32.totalorder %s39, 0
    %s42 = sadd.s32 %s41, 1
    %s43 = scalar_select %p40, %s41, %s42
    %p46 = pneg %p40
    %p47 = scmp.eq.s32.totalorder %s10, 3
    %p48 = por %p46, %p47
    %p49 = scmp.ne.s32.totalorder %s41, %s44
    %p50 = scmp.eq.s32.totalorder %s10, 0
    %p51 = por %p49, %p50
    %p52 = scmp.ne.s32.totalorder %s41, %s44
    %p53 = scmp.eq.s32.totalorder %s15, 3
    %p54 = por %p52, %p53
    %p55 = scmp.ne.s32.totalorder %s44, %s45
    %p56 = scmp.eq.s32.totalorder %s15, 0
    %p57 = por %p55, %p56
    %p58 = scmp.ne.s32.totalorder %s44, %s45
    %p59 = scmp.eq.s32.totalorder %s16, 3
    %p60 = por %p58, %p59
    %p62 = scmp.ne.s32.totalorder %s45, %s61
    %p63 = scmp.eq.s32.totalorder %s16, 0
    %p64 = por %p62, %p63
    %s65 = ssub.s32 %s17, %s36
    %s66 = ssub.s32 %s19, %s28
    %s67 = sor.u32 %s65, %s66
    %p68 = scmp.eq.s32.totalorder %s67, 0
    %s70 = sadd.s32 %s69, 1
    %s71 = scalar_select %p68, %s69, %s70
    %p74 = pneg %p68
    %p75 = scmp.eq.s32.totalorder %s10, 3
    %p76 = por %p74, %p75
    %p77 = scmp.ne.s32.totalorder %s69, %s72
    %p78 = scmp.eq.s32.totalorder %s10, 0
    %p79 = por %p77, %p78
    %p80 = scmp.ne.s32.totalorder %s69, %s72
    %p81 = scmp.eq.s32.totalorder %s15, 3
    %p82 = por %p80, %p81
    %p83 = scmp.ne.s32.totalorder %s72, %s73
    %p84 = scmp.eq.s32.totalorder %s15, 0
    %p85 = por %p83, %p84
    %p86 = scmp.ne.s32.totalorder %s72, %s73
    %p87 = scmp.eq.s32.totalorder %s16, 3
    %p88 = por %p86, %p87
    %p90 = scmp.ne.s32.totalorder %s73, %s89
    %p91 = scmp.eq.s32.totalorder %s16, 0
    %p92 = por %p90, %p91
    %s93 = ssub.s32 %s17, %s36
    %s94 = ssub.s32 %s18, %s32
    %s95 = sor.u32 %s93, %s94
    %s96 = ssub.s32 %s19, %s28
    %s97 = sor.u32 %s95, %s96
    %p98 = scmp.eq.s32.totalorder %s97, 0
    %s100 = sadd.s32 %s99, 1
    %s101 = scalar_select %p98, %s99, %s100
    %p104 = pneg %p98
    %p105 = scmp.eq.s32.totalorder %s10, 3
    %p106 = por %p104, %p105
    %p107 = scmp.ne.s32.totalorder %s99, %s102
    %p108 = scmp.eq.s32.totalorder %s10, 0
    %p109 = por %p107, %p108
    %p110 = scmp.ne.s32.totalorder %s99, %s102
    %p111 = scmp.eq.s32.totalorder %s15, 3
    %p112 = por %p110, %p111
    %p113 = scmp.ne.s32.totalorder %s102, %s103
    %p114 = scmp.eq.s32.totalorder %s15, 0
    %p115 = por %p113, %p114
    %p116 = scmp.ne.s32.totalorder %s102, %s103
    %p117 = scmp.eq.s32.totalorder %s16, 3
    %p118 = por %p116, %p117
    %p120 = scmp.ne.s32.totalorder %s103, %s119
    %p121 = scmp.eq.s32.totalorder %s16, 0
    %p122 = por %p120, %p121
    %s123 = sadd.s32 %s17, %s18
    %s124 = sadd.s32 %s36, %s32
    %s125 = ssub.s32 %s123, %s124
    %s126 = ssub.s32 %s19, %s28
    %s127 = sor.u32 %s125, %s126
    %p128 = scmp.eq.s32.totalorder %s127, 0
    %s130 = sadd.s32 %s129, 1
    %s131 = scalar_select %p128, %s129, %s130
    %p134 = pneg %p128
    %p135 = scmp.eq.s32.totalorder %s10, 3
    %p136 = por %p134, %p135
    %p137 = scmp.ne.s32.totalorder %s129, %s132
    %p138 = scmp.eq.s32.totalorder %s10, 0
    %p139 = por %p137, %p138
    %p140 = scmp.ne.s32.totalorder %s129, %s132
    %p141 = scmp.eq.s32.totalorder %s15, 3
    %p142 = por %p140, %p141
    %p143 = scmp.ne.s32.totalorder %s132, %s133
    %p144 = scmp.eq.s32.totalorder %s15, 0
    %p145 = por %p143, %p144
    %p146 = scmp.ne.s32.totalorder %s132, %s133
    %p147 = scmp.eq.s32.totalorder %s16, 3
    %p148 = por %p146, %p147
    %p150 = scmp.ne.s32.totalorder %s133, %s149
    %p151 = scmp.eq.s32.totalorder %s16, 0
    %p152 = por %p150, %p151
    %p153 = scmp.le.s32.totalorder 1, %s10
    %p154 = scmp.lt.s32.totalorder %s10, 5
    %p155 = pnand %p153, %p154
    %p156 = pneg %p155
    // Predicated region
    $region9: #{gen_forward.8} parent=5 // pred_check
      _
    $region10: #{gen_forward.8} parent=5 // pred_check_branch
      %158 = sbr.rel (%p155) target = $region12
    $region11: #{gen_forward.8} parent=5 // pred_region
      %s159 = ssub.s32 %s10, 1
    $region12: #{gen_forward.8} parent=5 // pred_fallthru
      _
    %p160 = scmp.lt.s32.totalorder %s10, 4
    // Predicated region
    $region13: #{gen_forward.8} parent=5 // pred_check
      %p161 = pneg %p160
    $region14: #{gen_forward.8} parent=5 // pred_check_branch
      %163 = sbr.rel (%p161) target = $region16
    $region15: #{gen_forward.8} parent=5 // pred_region
      // Predicated region
      $region17: #{gen_forward.8} parent=15 // pred_check
        %p164 = pneg %p51
      $region18: #{gen_forward.8} parent=15 // pred_check_branch
        %166 = sbr.rel (%p164) target = $region20
      $region19: #{gen_forward.8} parent=15 // pred_region
        %s167 = smul.u32 64, %s18
        %p168 = scmp.lt.s32.totalorder %s17, 3
        %s169 = scalar_select %p168, %s17, 3
        %p170 = scmp.lt.s32.totalorder %s167, 63
        %s171 = scalar_select %p170, %s167, 63
        %s172 = smul.addr %s171, 4
        %s173 = smul.addr %s169, 256
        %s174 = sadd.s32 %s172, %s173
        %s175 = smul.addr %s174, 4
        %s176 = scalar_lea.vmem %s0, %s175
        %s177 = smul.u32 64, %s18
      $region20: #{gen_forward.8} parent=15 // pred_fallthru
        _
      // Predicated region
      $region21: #{gen_forward.8} parent=15 // pred_check
        %p178 = pneg %p79
      $region22: #{gen_forward.8} parent=15 // pred_check_branch
        %180 = sbr.rel (%p178) target = $region24
      $region23: #{gen_forward.8} parent=15 // pred_region
        %p181 = scmp.lt.s32.totalorder %s17, 3
        %s182 = scalar_select %p181, %s17, 3
        %p183 = scmp.lt.s32.totalorder %s19, 0
        %s184 = scalar_select %p183, %s19, 0
        %s185 = smul.addr %s182, 64
        %s186 = sadd.s32 %s184, %s185
        %s187 = smul.addr %s186, 4
        %s188 = scalar_lea.vmem %s1, %s187
      $region24: #{gen_forward.8} parent=15 // pred_fallthru
        _
    $region16: #{gen_forward.8} parent=5 // pred_fallthru
      _
    %p189 = scmp.le.s32.totalorder 1, %s10
    %p190 = scmp.lt.s32.totalorder %s10, 5
    %p191 = pnand %p189, %p190
    %p192 = pneg %p191
    // Predicated region
    $region25: #{gen_forward.8} parent=5 // pred_check
      _
    $region26: #{gen_forward.8} parent=5 // pred_check_branch
      %194 = sbr.rel (%p191) target = $region28
    $region27: #{gen_forward.8} parent=5 // pred_region
      %s195 = ssub.s32 %s10, 1
      %s196 = smul.u32 64, %s21
      %p197 = scmp.lt.s32.totalorder %s20, 3
      %s198 = scalar_select %p197, %s20, 3
      %p199 = scmp.lt.s32.totalorder %s196, 63
      %s200 = scalar_select %p199, %s196, 63
      %s201 = smul.addr %s200, 4
      %s202 = smul.addr %s198, 256
      %s203 = sadd.s32 %s201, %s202
      %s204 = smul.addr %s203, 4
      %s205 = scalar_lea.vmem %s0, %s204
      %p206 = pneg %p57
      %p207 = pneg %p54
      %p208 = scmp.lt.s32.totalorder %s20, 3
      %s209 = scalar_select %p208, %s20, 3
      %p210 = scmp.lt.s32.totalorder %s22, 0
      %s211 = scalar_select %p210, %s22, 0
      %s212 = smul.addr %s209, 64
      %s213 = sadd.s32 %s211, %s212
      %s214 = smul.addr %s213, 4
      %s215 = scalar_lea.vmem %s1, %s214
      %p216 = pneg %p85
      %p217 = pneg %p82
      %p218 = pneg %p115
      %p219 = pneg %p112
      %s220 = smul.u32 64, %s21
      %p221 = scmp.lt.s32.totalorder %s20, 3
      %s222 = scalar_select %p221, %s20, 3
      %p223 = scmp.lt.s32.totalorder %s220, 63
      %s224 = scalar_select %p223, %s220, 63
      %p225 = scmp.lt.s32.totalorder %s22, 0
      %s226 = scalar_select %p225, %s22, 0
      %s227 = sadd.s32 %s226, %s224
      %s228 = smul.addr %s222, 64
      %s229 = sadd.s32 %s227, %s228
      %s230 = smul.addr %s229, 8
      %s231 = scalar_lea.vmem %s2, %s230
      %p232 = pneg %p145
      %p233 = pneg %p142
      %s234 = sadd.s32 %s20, %s21
      %p235 = scmp.lt.s32.totalorder %s234, 3
      %s236 = scalar_select %p235, %s234, 3
      %p237 = scmp.lt.s32.totalorder %s22, 0
      %s238 = scalar_select %p237, %s22, 0
      %s239 = sadd.s32 %s238, %s236
      %s240 = smul.addr %s239, 2
      %s241 = scalar_lea.vmem %s3, %s240
      %s242 = smul.u32 64, %s21
      %p243 = scmp.lt.s32.totalorder %s20, 3
      %s244 = scalar_select %p243, %s20, 3
      %p245 = scmp.lt.s32.totalorder %s242, 63
      %s246 = scalar_select %p245, %s242, 63
      %s247 = smul.addr %s246, 4
      %s248 = smul.addr %s244, 256
      %s249 = sadd.s32 %s247, %s248
      %s250 = smul.addr %s249, 4
      %s251 = scalar_lea.vmem %s0, %s250
      %s252 = smul.u32 64, %s21
      %p253 = scmp.lt.s32.totalorder %s20, 3
      %s254 = scalar_select %p253, %s20, 3
      %p255 = scmp.lt.s32.totalorder %s22, 0
      %s256 = scalar_select %p255, %s22, 0
      %s257 = smul.addr %s254, 64
      %s258 = sadd.s32 %s256, %s257
      %s259 = smul.addr %s258, 4
      %s260 = scalar_lea.vmem %s1, %s259
      %s261 = smul.u32 64, %s21
      %p262 = scmp.lt.s32.totalorder %s20, 3
      %s263 = scalar_select %p262, %s20, 3
      %p264 = scmp.lt.s32.totalorder %s261, 63
      %s265 = scalar_select %p264, %s261, 63
      %p266 = scmp.lt.s32.totalorder %s22, 0
      %s267 = scalar_select %p266, %s22, 0
      %s268 = sadd.s32 %s267, %s265
      %s269 = smul.addr %s263, 64
      %s270 = sadd.s32 %s268, %s269
      %s271 = smul.addr %s270, 8
      %s272 = scalar_lea.vmem %s2, %s271
      %s273 = smul.u32 64, %s21
      %s274 = sadd.s32 %s20, %s21
      %p275 = scmp.lt.s32.totalorder %s274, 3
      %s276 = scalar_select %p275, %s274, 3
      %p277 = scmp.lt.s32.totalorder %s22, 0
      %s278 = scalar_select %p277, %s22, 0
      %s279 = sadd.s32 %s278, %s276
      %s280 = smul.addr %s279, 2
      %s281 = scalar_lea.vmem %s3, %s280
      %s282 = sadd.s32 %s20, %s21
      %v284 = vld [vmem:[%s251] sm:$0xff]
      %v285 = vld [vmem:[%s251 + $0x8] sm:$0xff]
      %v286 = vld [vmem:[%s251 + $0x10] sm:$0xff]
      %v287 = vld [vmem:[%s251 + $0x18] sm:$0xff]
      %v288 = vld [vmem:[%s251 + $0x20] sm:$0xff]
      %v289 = vld [vmem:[%s251 + $0x28] sm:$0xff]
      %v290 = vld [vmem:[%s251 + $0x30] sm:$0xff]
      %v291 = vld [vmem:[%s251 + $0x38] sm:$0xff]
      %v292 = vld [vmem:[%s251 + $0x40] sm:$0xff]
      %v293 = vld [vmem:[%s251 + $0x48] sm:$0xff]
      %v294 = vld [vmem:[%s251 + $0x50] sm:$0xff]
      %v295 = vld [vmem:[%s251 + $0x58] sm:$0xff]
      %v296 = vld [vmem:[%s251 + $0x60] sm:$0xff]
      %v297 = vld [vmem:[%s251 + $0x68] sm:$0xff]
      %v298 = vld [vmem:[%s251 + $0x70] sm:$0xff]
      %v299 = vld [vmem:[%s251 + $0x78] sm:$0xff]
      %v300 = vld [vmem:[%s251 + $0x80] sm:$0xff]
      %v301 = vld [vmem:[%s251 + $0x88] sm:$0xff]
      %v302 = vld [vmem:[%s251 + $0x90] sm:$0xff]
      %v303 = vld [vmem:[%s251 + $0x98] sm:$0xff]
      %v304 = vld [vmem:[%s251 + $0xa0] sm:$0xff]
      %v305 = vld [vmem:[%s251 + $0xa8] sm:$0xff]
      %v306 = vld [vmem:[%s251 + $0xb0] sm:$0xff]
      %v307 = vld [vmem:[%s251 + $0xb8] sm:$0xff]
      %v308 = vld [vmem:[%s251 + $0xc0] sm:$0xff]
      %v309 = vld [vmem:[%s251 + $0xc8] sm:$0xff]
      %v310 = vld [vmem:[%s251 + $0xd0] sm:$0xff]
      %v311 = vld [vmem:[%s251 + $0xd8] sm:$0xff]
      %v312 = vld [vmem:[%s251 + $0xe0] sm:$0xff]
      %v313 = vld [vmem:[%s251 + $0xe8] sm:$0xff]
      %v314 = vld [vmem:[%s251 + $0xf0] sm:$0xff]
      %v315 = vld [vmem:[%s251 + $0xf8] sm:$0xff]
      %v316 = vld [vmem:[%s251 + $0x100] sm:$0xff]
      %v317 = vld [vmem:[%s251 + $0x108] sm:$0xff]
      %v318 = vld [vmem:[%s251 + $0x110] sm:$0xff]
      %v319 = vld [vmem:[%s251 + $0x118] sm:$0xff]
      %v320 = vld [vmem:[%s251 + $0x120] sm:$0xff]
      %v321 = vld [vmem:[%s251 + $0x128] sm:$0xff]
      %v322 = vld [vmem:[%s251 + $0x130] sm:$0xff]
      %v323 = vld [vmem:[%s251 + $0x138] sm:$0xff]
      %v324 = vld [vmem:[%s251 + $0x140] sm:$0xff]
      %v325 = vld [vmem:[%s251 + $0x148] sm:$0xff]
      %v326 = vld [vmem:[%s251 + $0x150] sm:$0xff]
      %v327 = vld [vmem:[%s251 + $0x158] sm:$0xff]
      %v328 = vld [vmem:[%s251 + $0x160] sm:$0xff]
      %v329 = vld [vmem:[%s251 + $0x168] sm:$0xff]
      %v330 = vld [vmem:[%s251 + $0x170] sm:$0xff]
      %v331 = vld [vmem:[%s251 + $0x178] sm:$0xff]
      %v332 = vld [vmem:[%s251 + $0x180] sm:$0xff]
      %v333 = vld [vmem:[%s251 + $0x188] sm:$0xff]
      %v334 = vld [vmem:[%s251 + $0x190] sm:$0xff]
      %v335 = vld [vmem:[%s251 + $0x198] sm:$0xff]
      %v336 = vld [vmem:[%s251 + $0x1a0] sm:$0xff]
      %v337 = vld [vmem:[%s251 + $0x1a8] sm:$0xff]
      %v338 = vld [vmem:[%s251 + $0x1b0] sm:$0xff]
      %v339 = vld [vmem:[%s251 + $0x1b8] sm:$0xff]
      %v340 = vld [vmem:[%s251 + $0x1c0] sm:$0xff]
      %v341 = vld [vmem:[%s251 + $0x1c8] sm:$0xff]
      %v342 = vld [vmem:[%s251 + $0x1d0] sm:$0xff]
      %v343 = vld [vmem:[%s251 + $0x1d8] sm:$0xff]
      %v344 = vld [vmem:[%s251 + $0x1e0] sm:$0xff]
      %v345 = vld [vmem:[%s251 + $0x1e8] sm:$0xff]
      %v346 = vld [vmem:[%s251 + $0x1f0] sm:$0xff]
      %v347 = vld [vmem:[%s251 + $0x1f8] sm:$0xff]
      %v348 = vld [vmem:[%s251 + $0x200] sm:$0xff]
      %v349 = vld [vmem:[%s251 + $0x208] sm:$0xff]
      %v350 = vld [vmem:[%s251 + $0x210] sm:$0xff]
      %v351 = vld [vmem:[%s251 + $0x218] sm:$0xff]
      %v352 = vld [vmem:[%s251 + $0x220] sm:$0xff]
      %v353 = vld [vmem:[%s251 + $0x228] sm:$0xff]
      %v354 = vld [vmem:[%s251 + $0x230] sm:$0xff]
      %v355 = vld [vmem:[%s251 + $0x238] sm:$0xff]
      %v356 = vld [vmem:[%s251 + $0x240] sm:$0xff]
      %v357 = vld [vmem:[%s251 + $0x248] sm:$0xff]
      %v358 = vld [vmem:[%s251 + $0x250] sm:$0xff]
      %v359 = vld [vmem:[%s251 + $0x258] sm:$0xff]
      %v360 = vld [vmem:[%s251 + $0x260] sm:$0xff]
      %v361 = vld [vmem:[%s251 + $0x268] sm:$0xff]
      %v362 = vld [vmem:[%s251 + $0x270] sm:$0xff]
      %v363 = vld [vmem:[%s251 + $0x278] sm:$0xff]
      %v364 = vld [vmem:[%s251 + $0x280] sm:$0xff]
      %v365 = vld [vmem:[%s251 + $0x288] sm:$0xff]
      %v366 = vld [vmem:[%s251 + $0x290] sm:$0xff]
      %v367 = vld [vmem:[%s251 + $0x298] sm:$0xff]
      %v368 = vld [vmem:[%s251 + $0x2a0] sm:$0xff]
      %v369 = vld [vmem:[%s251 + $0x2a8] sm:$0xff]
      %v370 = vld [vmem:[%s251 + $0x2b0] sm:$0xff]
      %v371 = vld [vmem:[%s251 + $0x2b8] sm:$0xff]
      %v372 = vld [vmem:[%s251 + $0x2c0] sm:$0xff]
      %v373 = vld [vmem:[%s251 + $0x2c8] sm:$0xff]
      %v374 = vld [vmem:[%s251 + $0x2d0] sm:$0xff]
      %v375 = vld [vmem:[%s251 + $0x2d8] sm:$0xff]
      %v376 = vld [vmem:[%s251 + $0x2e0] sm:$0xff]
      %v377 = vld [vmem:[%s251 + $0x2e8] sm:$0xff]
      %v378 = vld [vmem:[%s251 + $0x2f0] sm:$0xff]
      %v379 = vld [vmem:[%s251 + $0x2f8] sm:$0xff]
      %v380 = vld [vmem:[%s251 + $0x300] sm:$0xff]
      %v381 = vld [vmem:[%s251 + $0x308] sm:$0xff]
      %v382 = vld [vmem:[%s251 + $0x310] sm:$0xff]
      %v383 = vld [vmem:[%s251 + $0x318] sm:$0xff]
      %v384 = vld [vmem:[%s251 + $0x320] sm:$0xff]
      %v385 = vld [vmem:[%s251 + $0x328] sm:$0xff]
      %v386 = vld [vmem:[%s251 + $0x330] sm:$0xff]
      %v387 = vld [vmem:[%s251 + $0x338] sm:$0xff]
      %v388 = vld [vmem:[%s251 + $0x340] sm:$0xff]
      %v389 = vld [vmem:[%s251 + $0x348] sm:$0xff]
      %v390 = vld [vmem:[%s251 + $0x350] sm:$0xff]
      %v391 = vld [vmem:[%s251 + $0x358] sm:$0xff]
      %v392 = vld [vmem:[%s251 + $0x360] sm:$0xff]
      %v393 = vld [vmem:[%s251 + $0x368] sm:$0xff]
      %v394 = vld [vmem:[%s251 + $0x370] sm:$0xff]
      %v395 = vld [vmem:[%s251 + $0x378] sm:$0xff]
      %v396 = vld [vmem:[%s251 + $0x380] sm:$0xff]
      %v397 = vld [vmem:[%s251 + $0x388] sm:$0xff]
      %v398 = vld [vmem:[%s251 + $0x390] sm:$0xff]
      %v399 = vld [vmem:[%s251 + $0x398] sm:$0xff]
      %v400 = vld [vmem:[%s251 + $0x3a0] sm:$0xff]
      %v401 = vld [vmem:[%s251 + $0x3a8] sm:$0xff]
      %v402 = vld [vmem:[%s251 + $0x3b0] sm:$0xff]
      %v403 = vld [vmem:[%s251 + $0x3b8] sm:$0xff]
      %v404 = vld [vmem:[%s251 + $0x3c0] sm:$0xff]
      %v405 = vld [vmem:[%s251 + $0x3c8] sm:$0xff]
      %v406 = vld [vmem:[%s251 + $0x3d0] sm:$0xff]
      %v407 = vld [vmem:[%s251 + $0x3d8] sm:$0xff]
      %v408 = vld [vmem:[%s251 + $0x3e0] sm:$0xff]
      %v409 = vld [vmem:[%s251 + $0x3e8] sm:$0xff]
      %v410 = vld [vmem:[%s251 + $0x3f0] sm:$0xff]
      %v411 = vld [vmem:[%s251 + $0x3f8] sm:$0xff]
      %v412 = vld [vmem:[%s260] sm:$0xf]
      %v413 = vld [vmem:[%s260 + $0x4] sm:$0xf]
      %v414 = vld [vmem:[%s260 + $0x8] sm:$0xf]
      %v415 = vld [vmem:[%s260 + $0xc] sm:$0xf]
      %v416 = vld [vmem:[%s260 + $0x10] sm:$0xf]
      %v417 = vld [vmem:[%s260 + $0x14] sm:$0xf]
      %v418 = vld [vmem:[%s260 + $0x18] sm:$0xf]
      %v419 = vld [vmem:[%s260 + $0x1c] sm:$0xf]
      %v420 = vld [vmem:[%s260 + $0x20] sm:$0xf]
      %v421 = vld [vmem:[%s260 + $0x24] sm:$0xf]
      %v422 = vld [vmem:[%s260 + $0x28] sm:$0xf]
      %v423 = vld [vmem:[%s260 + $0x2c] sm:$0xf]
      %v424 = vld [vmem:[%s260 + $0x30] sm:$0xf]
      %v425 = vld [vmem:[%s260 + $0x34] sm:$0xf]
      %v426 = vld [vmem:[%s260 + $0x38] sm:$0xf]
      %v427 = vld [vmem:[%s260 + $0x3c] sm:$0xf]
      %v428 = vld [vmem:[%s260 + $0x40] sm:$0xf]
      %v429 = vld [vmem:[%s260 + $0x44] sm:$0xf]
      %v430 = vld [vmem:[%s260 + $0x48] sm:$0xf]
      %v431 = vld [vmem:[%s260 + $0x4c] sm:$0xf]
      %v432 = vld [vmem:[%s260 + $0x50] sm:$0xf]
      %v433 = vld [vmem:[%s260 + $0x54] sm:$0xf]
      %v434 = vld [vmem:[%s260 + $0x58] sm:$0xf]
      %v435 = vld [vmem:[%s260 + $0x5c] sm:$0xf]
      %v436 = vld [vmem:[%s260 + $0x60] sm:$0xf]
      %v437 = vld [vmem:[%s260 + $0x64] sm:$0xf]
      %v438 = vld [vmem:[%s260 + $0x68] sm:$0xf]
      %v439 = vld [vmem:[%s260 + $0x6c] sm:$0xf]
      %v440 = vld [vmem:[%s260 + $0x70] sm:$0xf]
      %v441 = vld [vmem:[%s260 + $0x74] sm:$0xf]
      %v442 = vld [vmem:[%s260 + $0x78] sm:$0xf]
      %v443 = vld [vmem:[%s260 + $0x7c] sm:$0xf]
      %v444 = vld [vmem:[%s260 + $0x80] sm:$0xf]
      %v445 = vld [vmem:[%s260 + $0x84] sm:$0xf]
      %v446 = vld [vmem:[%s260 + $0x88] sm:$0xf]
      %v447 = vld [vmem:[%s260 + $0x8c] sm:$0xf]
      %v448 = vld [vmem:[%s260 + $0x90] sm:$0xf]
      %v449 = vld [vmem:[%s260 + $0x94] sm:$0xf]
      %v450 = vld [vmem:[%s260 + $0x98] sm:$0xf]
      %v451 = vld [vmem:[%s260 + $0x9c] sm:$0xf]
      %v452 = vld [vmem:[%s260 + $0xa0] sm:$0xf]
      %v453 = vld [vmem:[%s260 + $0xa4] sm:$0xf]
      %v454 = vld [vmem:[%s260 + $0xa8] sm:$0xf]
      %v455 = vld [vmem:[%s260 + $0xac] sm:$0xf]
      %v456 = vld [vmem:[%s260 + $0xb0] sm:$0xf]
      %v457 = vld [vmem:[%s260 + $0xb4] sm:$0xf]
      %v458 = vld [vmem:[%s260 + $0xb8] sm:$0xf]
      %v459 = vld [vmem:[%s260 + $0xbc] sm:$0xf]
      %v460 = vld [vmem:[%s260 + $0xc0] sm:$0xf]
      %v461 = vld [vmem:[%s260 + $0xc4] sm:$0xf]
      %v462 = vld [vmem:[%s260 + $0xc8] sm:$0xf]
      %v463 = vld [vmem:[%s260 + $0xcc] sm:$0xf]
      %v464 = vld [vmem:[%s260 + $0xd0] sm:$0xf]
      %v465 = vld [vmem:[%s260 + $0xd4] sm:$0xf]
      %v466 = vld [vmem:[%s260 + $0xd8] sm:$0xf]
      %v467 = vld [vmem:[%s260 + $0xdc] sm:$0xf]
      %v468 = vld [vmem:[%s260 + $0xe0] sm:$0xf]
      %v469 = vld [vmem:[%s260 + $0xe4] sm:$0xf]
      %v470 = vld [vmem:[%s260 + $0xe8] sm:$0xf]
      %v471 = vld [vmem:[%s260 + $0xec] sm:$0xf]
      %v472 = vld [vmem:[%s260 + $0xf0] sm:$0xf]
      %v473 = vld [vmem:[%s260 + $0xf4] sm:$0xf]
      %v474 = vld [vmem:[%s260 + $0xf8] sm:$0xf]
      %v475 = vld [vmem:[%s260 + $0xfc] sm:$0xf]
      %v604 = vunpack.c.l.b16 %v284
      %v605 = vunpack.c.h.b16 %v284
      %v606 = vunpack.c.l.b16 %v285
      %v607 = vunpack.c.h.b16 %v285
      %v608 = vunpack.c.l.b16 %v286
      %v609 = vunpack.c.h.b16 %v286
      %v610 = vunpack.c.l.b16 %v287
      %v611 = vunpack.c.h.b16 %v287
      %v612 = vunpack.c.l.b16 %v288
      %v613 = vunpack.c.h.b16 %v288
      %v614 = vunpack.c.l.b16 %v289
      %v615 = vunpack.c.h.b16 %v289
      %v616 = vunpack.c.l.b16 %v290
      %v617 = vunpack.c.h.b16 %v290
      %v618 = vunpack.c.l.b16 %v291
      %v619 = vunpack.c.h.b16 %v291
      %v620 = vunpack.c.l.b16 %v292
      %v621 = vunpack.c.h.b16 %v292
      %v622 = vunpack.c.l.b16 %v293
      %v623 = vunpack.c.h.b16 %v293
      %v624 = vunpack.c.l.b16 %v294
      %v625 = vunpack.c.h.b16 %v294
      %v626 = vunpack.c.l.b16 %v295
      %v627 = vunpack.c.h.b16 %v295
      %v628 = vunpack.c.l.b16 %v296
      %v629 = vunpack.c.h.b16 %v296
      %v630 = vunpack.c.l.b16 %v297
      %v631 = vunpack.c.h.b16 %v297
      %v632 = vunpack.c.l.b16 %v298
      %v633 = vunpack.c.h.b16 %v298
      %v634 = vunpack.c.l.b16 %v299
      %v635 = vunpack.c.h.b16 %v299
      %v636 = vunpack.c.l.b16 %v300
      %v637 = vunpack.c.h.b16 %v300
      %v638 = vunpack.c.l.b16 %v301
      %v639 = vunpack.c.h.b16 %v301
      %v640 = vunpack.c.l.b16 %v302
      %v641 = vunpack.c.h.b16 %v302
      %v642 = vunpack.c.l.b16 %v303
      %v643 = vunpack.c.h.b16 %v303
      %v644 = vunpack.c.l.b16 %v304
      %v645 = vunpack.c.h.b16 %v304
      %v646 = vunpack.c.l.b16 %v305
      %v647 = vunpack.c.h.b16 %v305
      %v648 = vunpack.c.l.b16 %v306
      %v649 = vunpack.c.h.b16 %v306
      %v650 = vunpack.c.l.b16 %v307
      %v651 = vunpack.c.h.b16 %v307
      %v652 = vunpack.c.l.b16 %v308
      %v653 = vunpack.c.h.b16 %v308
      %v654 = vunpack.c.l.b16 %v309
      %v655 = vunpack.c.h.b16 %v309
      %v656 = vunpack.c.l.b16 %v310
      %v657 = vunpack.c.h.b16 %v310
      %v658 = vunpack.c.l.b16 %v311
      %v659 = vunpack.c.h.b16 %v311
      %v660 = vunpack.c.l.b16 %v312
      %v661 = vunpack.c.h.b16 %v312
      %v662 = vunpack.c.l.b16 %v313
      %v663 = vunpack.c.h.b16 %v313
      %v664 = vunpack.c.l.b16 %v314
      %v665 = vunpack.c.h.b16 %v314
      %v666 = vunpack.c.l.b16 %v315
      %v667 = vunpack.c.h.b16 %v315
      %v668 = vunpack.c.l.b16 %v316
      %v669 = vunpack.c.h.b16 %v316
      %v670 = vunpack.c.l.b16 %v317
      %v671 = vunpack.c.h.b16 %v317
      %v672 = vunpack.c.l.b16 %v318
      %v673 = vunpack.c.h.b16 %v318
      %v674 = vunpack.c.l.b16 %v319
      %v675 = vunpack.c.h.b16 %v319
      %v676 = vunpack.c.l.b16 %v320
      %v677 = vunpack.c.h.b16 %v320
      %v678 = vunpack.c.l.b16 %v321
      %v679 = vunpack.c.h.b16 %v321
      %v680 = vunpack.c.l.b16 %v322
      %v681 = vunpack.c.h.b16 %v322
      %v682 = vunpack.c.l.b16 %v323
      %v683 = vunpack.c.h.b16 %v323
      %v684 = vunpack.c.l.b16 %v324
      %v685 = vunpack.c.h.b16 %v324
      %v686 = vunpack.c.l.b16 %v325
      %v687 = vunpack.c.h.b16 %v325
      %v688 = vunpack.c.l.b16 %v326
      %v689 = vunpack.c.h.b16 %v326
      %v690 = vunpack.c.l.b16 %v327
      %v691 = vunpack.c.h.b16 %v327
      %v692 = vunpack.c.l.b16 %v328
      %v693 = vunpack.c.h.b16 %v328
      %v694 = vunpack.c.l.b16 %v329
      %v695 = vunpack.c.h.b16 %v329
      %v696 = vunpack.c.l.b16 %v330
      %v697 = vunpack.c.h.b16 %v330
      %v698 = vunpack.c.l.b16 %v331
      %v699 = vunpack.c.h.b16 %v331
      %v700 = vunpack.c.l.b16 %v332
      %v701 = vunpack.c.h.b16 %v332
      %v702 = vunpack.c.l.b16 %v333
      %v703 = vunpack.c.h.b16 %v333
      %v704 = vunpack.c.l.b16 %v334
      %v705 = vunpack.c.h.b16 %v334
      %v706 = vunpack.c.l.b16 %v335
      %v707 = vunpack.c.h.b16 %v335
      %v708 = vunpack.c.l.b16 %v336
      %v709 = vunpack.c.h.b16 %v336
      %v710 = vunpack.c.l.b16 %v337
      %v711 = vunpack.c.h.b16 %v337
      %v712 = vunpack.c.l.b16 %v338
      %v713 = vunpack.c.h.b16 %v338
      %v714 = vunpack.c.l.b16 %v339
      %v715 = vunpack.c.h.b16 %v339
      %v716 = vunpack.c.l.b16 %v340
      %v717 = vunpack.c.h.b16 %v340
      %v718 = vunpack.c.l.b16 %v341
      %v719 = vunpack.c.h.b16 %v341
      %v720 = vunpack.c.l.b16 %v342
      %v721 = vunpack.c.h.b16 %v342
      %v722 = vunpack.c.l.b16 %v343
      %v723 = vunpack.c.h.b16 %v343
      %v724 = vunpack.c.l.b16 %v344
      %v725 = vunpack.c.h.b16 %v344
      %v726 = vunpack.c.l.b16 %v345
      %v727 = vunpack.c.h.b16 %v345
      %v728 = vunpack.c.l.b16 %v346
      %v729 = vunpack.c.h.b16 %v346
      %v730 = vunpack.c.l.b16 %v347
      %v731 = vunpack.c.h.b16 %v347
      %v732 = vunpack.c.l.b16 %v348
      %v733 = vunpack.c.h.b16 %v348
      %v734 = vunpack.c.l.b16 %v349
      %v735 = vunpack.c.h.b16 %v349
      %v736 = vunpack.c.l.b16 %v350
      %v737 = vunpack.c.h.b16 %v350
      %v738 = vunpack.c.l.b16 %v351
      %v739 = vunpack.c.h.b16 %v351
      %v740 = vunpack.c.l.b16 %v352
      %v741 = vunpack.c.h.b16 %v352
      %v742 = vunpack.c.l.b16 %v353
      %v743 = vunpack.c.h.b16 %v353
      %v744 = vunpack.c.l.b16 %v354
      %v745 = vunpack.c.h.b16 %v354
      %v746 = vunpack.c.l.b16 %v355
      %v747 = vunpack.c.h.b16 %v355
      %v748 = vunpack.c.l.b16 %v356
      %v749 = vunpack.c.h.b16 %v356
      %v750 = vunpack.c.l.b16 %v357
      %v751 = vunpack.c.h.b16 %v357
      %v752 = vunpack.c.l.b16 %v358
      %v753 = vunpack.c.h.b16 %v358
      %v754 = vunpack.c.l.b16 %v359
      %v755 = vunpack.c.h.b16 %v359
      %v756 = vunpack.c.l.b16 %v360
      %v757 = vunpack.c.h.b16 %v360
      %v758 = vunpack.c.l.b16 %v361
      %v759 = vunpack.c.h.b16 %v361
      %v760 = vunpack.c.l.b16 %v362
      %v761 = vunpack.c.h.b16 %v362
      %v762 = vunpack.c.l.b16 %v363
      %v763 = vunpack.c.h.b16 %v363
      %v764 = vunpack.c.l.b16 %v364
      %v765 = vunpack.c.h.b16 %v364
      %v766 = vunpack.c.l.b16 %v365
      %v767 = vunpack.c.h.b16 %v365
      %v768 = vunpack.c.l.b16 %v366
      %v769 = vunpack.c.h.b16 %v366
      %v770 = vunpack.c.l.b16 %v367
      %v771 = vunpack.c.h.b16 %v367
      %v772 = vunpack.c.l.b16 %v368
      %v773 = vunpack.c.h.b16 %v368
      %v774 = vunpack.c.l.b16 %v369
      %v775 = vunpack.c.h.b16 %v369
      %v776 = vunpack.c.l.b16 %v370
      %v777 = vunpack.c.h.b16 %v370
      %v778 = vunpack.c.l.b16 %v371
      %v779 = vunpack.c.h.b16 %v371
      %v780 = vunpack.c.l.b16 %v372
      %v781 = vunpack.c.h.b16 %v372
      %v782 = vunpack.c.l.b16 %v373
      %v783 = vunpack.c.h.b16 %v373
      %v784 = vunpack.c.l.b16 %v374
      %v785 = vunpack.c.h.b16 %v374
      %v786 = vunpack.c.l.b16 %v375
      %v787 = vunpack.c.h.b16 %v375
      %v788 = vunpack.c.l.b16 %v376
      %v789 = vunpack.c.h.b16 %v376
      %v790 = vunpack.c.l.b16 %v377
      %v791 = vunpack.c.h.b16 %v377
      %v792 = vunpack.c.l.b16 %v378
      %v793 = vunpack.c.h.b16 %v378
      %v794 = vunpack.c.l.b16 %v379
      %v795 = vunpack.c.h.b16 %v379
      %v796 = vunpack.c.l.b16 %v380
      %v797 = vunpack.c.h.b16 %v380
      %v798 = vunpack.c.l.b16 %v381
      %v799 = vunpack.c.h.b16 %v381
      %v800 = vunpack.c.l.b16 %v382
      %v801 = vunpack.c.h.b16 %v382
      %v802 = vunpack.c.l.b16 %v383
      %v803 = vunpack.c.h.b16 %v383
      %v804 = vunpack.c.l.b16 %v384
      %v805 = vunpack.c.h.b16 %v384
      %v806 = vunpack.c.l.b16 %v385
      %v807 = vunpack.c.h.b16 %v385
      %v808 = vunpack.c.l.b16 %v386
      %v809 = vunpack.c.h.b16 %v386
      %v810 = vunpack.c.l.b16 %v387
      %v811 = vunpack.c.h.b16 %v387
      %v812 = vunpack.c.l.b16 %v388
      %v813 = vunpack.c.h.b16 %v388
      %v814 = vunpack.c.l.b16 %v389
      %v815 = vunpack.c.h.b16 %v389
      %v816 = vunpack.c.l.b16 %v390
      %v817 = vunpack.c.h.b16 %v390
      %v818 = vunpack.c.l.b16 %v391
      %v819 = vunpack.c.h.b16 %v391
      %v820 = vunpack.c.l.b16 %v392
      %v821 = vunpack.c.h.b16 %v392
      %v822 = vunpack.c.l.b16 %v393
      %v823 = vunpack.c.h.b16 %v393
      %v824 = vunpack.c.l.b16 %v394
      %v825 = vunpack.c.h.b16 %v394
      %v826 = vunpack.c.l.b16 %v395
      %v827 = vunpack.c.h.b16 %v395
      %v828 = vunpack.c.l.b16 %v396
      %v829 = vunpack.c.h.b16 %v396
      %v830 = vunpack.c.l.b16 %v397
      %v831 = vunpack.c.h.b16 %v397
      %v832 = vunpack.c.l.b16 %v398
      %v833 = vunpack.c.h.b16 %v398
      %v834 = vunpack.c.l.b16 %v399
      %v835 = vunpack.c.h.b16 %v399
      %v836 = vunpack.c.l.b16 %v400
      %v837 = vunpack.c.h.b16 %v400
      %v838 = vunpack.c.l.b16 %v401
      %v839 = vunpack.c.h.b16 %v401
      %v840 = vunpack.c.l.b16 %v402
      %v841 = vunpack.c.h.b16 %v402
      %v842 = vunpack.c.l.b16 %v403
      %v843 = vunpack.c.h.b16 %v403
      %v844 = vunpack.c.l.b16 %v404
      %v845 = vunpack.c.h.b16 %v404
      %v846 = vunpack.c.l.b16 %v405
      %v847 = vunpack.c.h.b16 %v405
      %v848 = vunpack.c.l.b16 %v406
      %v849 = vunpack.c.h.b16 %v406
      %v850 = vunpack.c.l.b16 %v407
      %v851 = vunpack.c.h.b16 %v407
      %v852 = vunpack.c.l.b16 %v408
      %v853 = vunpack.c.h.b16 %v408
      %v854 = vunpack.c.l.b16 %v409
      %v855 = vunpack.c.h.b16 %v409
      %v856 = vunpack.c.l.b16 %v410
      %v857 = vunpack.c.h.b16 %v410
      %v858 = vunpack.c.l.b16 %v411
      %v859 = vunpack.c.h.b16 %v411
      %v860 = vpack.c.b16 %v608, %v604
      %v861 = vpack.c.b16 %v609, %v605
      %v862 = vpack.c.b16 %v610, %v606
      %v863 = vpack.c.b16 %v611, %v607
      %v864 = vpack.c.b16 %v616, %v612
      %v865 = vpack.c.b16 %v617, %v613
      %v866 = vpack.c.b16 %v618, %v614
      %v867 = vpack.c.b16 %v619, %v615
      %v868 = vpack.c.b16 %v624, %v620
      %v869 = vpack.c.b16 %v625, %v621
      %v870 = vpack.c.b16 %v626, %v622
      %v871 = vpack.c.b16 %v627, %v623
      %v872 = vpack.c.b16 %v632, %v628
      %v873 = vpack.c.b16 %v633, %v629
      %v874 = vpack.c.b16 %v634, %v630
      %v875 = vpack.c.b16 %v635, %v631
      %v876 = vpack.c.b16 %v640, %v636
      %v877 = vpack.c.b16 %v641, %v637
      %v878 = vpack.c.b16 %v642, %v638
      %v879 = vpack.c.b16 %v643, %v639
      %v880 = vpack.c.b16 %v648, %v644
      %v881 = vpack.c.b16 %v649, %v645
      %v882 = vpack.c.b16 %v650, %v646
      %v883 = vpack.c.b16 %v651, %v647
      %v884 = vpack.c.b16 %v656, %v652
      %v885 = vpack.c.b16 %v657, %v653
      %v886 = vpack.c.b16 %v658, %v654
      %v887 = vpack.c.b16 %v659, %v655
      %v888 = vpack.c.b16 %v664, %v660
      %v889 = vpack.c.b16 %v665, %v661
      %v890 = vpack.c.b16 %v666, %v662
      %v891 = vpack.c.b16 %v667, %v663
      %v892 = vpack.c.b16 %v672, %v668
      %v893 = vpack.c.b16 %v673, %v669
      %v894 = vpack.c.b16 %v674, %v670
      %v895 = vpack.c.b16 %v675, %v671
      %v896 = vpack.c.b16 %v680, %v676
      %v897 = vpack.c.b16 %v681, %v677
      %v898 = vpack.c.b16 %v682, %v678
      %v899 = vpack.c.b16 %v683, %v679
      %v900 = vpack.c.b16 %v688, %v684
      %v901 = vpack.c.b16 %v689, %v685
      %v902 = vpack.c.b16 %v690, %v686
      %v903 = vpack.c.b16 %v691, %v687
      %v904 = vpack.c.b16 %v696, %v692
      %v905 = vpack.c.b16 %v697, %v693
      %v906 = vpack.c.b16 %v698, %v694
      %v907 = vpack.c.b16 %v699, %v695
      %v908 = vpack.c.b16 %v704, %v700
      %v909 = vpack.c.b16 %v705, %v701
      %v910 = vpack.c.b16 %v706, %v702
      %v911 = vpack.c.b16 %v707, %v703
      %v912 = vpack.c.b16 %v712, %v708
      %v913 = vpack.c.b16 %v713, %v709
      %v914 = vpack.c.b16 %v714, %v710
      %v915 = vpack.c.b16 %v715, %v711
      %v916 = vpack.c.b16 %v720, %v716
      %v917 = vpack.c.b16 %v721, %v717
      %v918 = vpack.c.b16 %v722, %v718
      %v919 = vpack.c.b16 %v723, %v719
      %v920 = vpack.c.b16 %v728, %v724
      %v921 = vpack.c.b16 %v729, %v725
      %v922 = vpack.c.b16 %v730, %v726
      %v923 = vpack.c.b16 %v731, %v727
      %v924 = vpack.c.b16 %v736, %v732
      %v925 = vpack.c.b16 %v737, %v733
      %v926 = vpack.c.b16 %v738, %v734
      %v927 = vpack.c.b16 %v739, %v735
      %v928 = vpack.c.b16 %v744, %v740
      %v929 = vpack.c.b16 %v745, %v741
      %v930 = vpack.c.b16 %v746, %v742
      %v931 = vpack.c.b16 %v747, %v743
      %v932 = vpack.c.b16 %v752, %v748
      %v933 = vpack.c.b16 %v753, %v749
      %v934 = vpack.c.b16 %v754, %v750
      %v935 = vpack.c.b16 %v755, %v751
      %v936 = vpack.c.b16 %v760, %v756
      %v937 = vpack.c.b16 %v761, %v757
      %v938 = vpack.c.b16 %v762, %v758
      %v939 = vpack.c.b16 %v763, %v759
      %v940 = vpack.c.b16 %v768, %v764
      %v941 = vpack.c.b16 %v769, %v765
      %v942 = vpack.c.b16 %v770, %v766
      %v943 = vpack.c.b16 %v771, %v767
      %v944 = vpack.c.b16 %v776, %v772
      %v945 = vpack.c.b16 %v777, %v773
      %v946 = vpack.c.b16 %v778, %v774
      %v947 = vpack.c.b16 %v779, %v775
      %v948 = vpack.c.b16 %v784, %v780
      %v949 = vpack.c.b16 %v785, %v781
      %v950 = vpack.c.b16 %v786, %v782
      %v951 = vpack.c.b16 %v787, %v783
      %v952 = vpack.c.b16 %v792, %v788
      %v953 = vpack.c.b16 %v793, %v789
      %v954 = vpack.c.b16 %v794, %v790
      %v955 = vpack.c.b16 %v795, %v791
      %v956 = vpack.c.b16 %v800, %v796
      %v957 = vpack.c.b16 %v801, %v797
      %v958 = vpack.c.b16 %v802, %v798
      %v959 = vpack.c.b16 %v803, %v799
      %v960 = vpack.c.b16 %v808, %v804
      %v961 = vpack.c.b16 %v809, %v805
      %v962 = vpack.c.b16 %v810, %v806
      %v963 = vpack.c.b16 %v811, %v807
      %v964 = vpack.c.b16 %v816, %v812
      %v965 = vpack.c.b16 %v817, %v813
      %v966 = vpack.c.b16 %v818, %v814
      %v967 = vpack.c.b16 %v819, %v815
      %v968 = vpack.c.b16 %v824, %v820
      %v969 = vpack.c.b16 %v825, %v821
      %v970 = vpack.c.b16 %v826, %v822
      %v971 = vpack.c.b16 %v827, %v823
      %v972 = vpack.c.b16 %v832, %v828
      %v973 = vpack.c.b16 %v833, %v829
      %v974 = vpack.c.b16 %v834, %v830
      %v975 = vpack.c.b16 %v835, %v831
      %v976 = vpack.c.b16 %v840, %v836
      %v977 = vpack.c.b16 %v841, %v837
      %v978 = vpack.c.b16 %v842, %v838
      %v979 = vpack.c.b16 %v843, %v839
      %v980 = vpack.c.b16 %v848, %v844
      %v981 = vpack.c.b16 %v849, %v845
      %v982 = vpack.c.b16 %v850, %v846
      %v983 = vpack.c.b16 %v851, %v847
      %v984 = vpack.c.b16 %v856, %v852
      %v985 = vpack.c.b16 %v857, %v853
      %v986 = vpack.c.b16 %v858, %v854
      %v987 = vpack.c.b16 %v859, %v855
      %v1180 = vunpack.c.l.b16 %v412
      %v1181 = vunpack.c.l.b16 %v413
      %v1182 = vunpack.c.l.b16 %v414
      %v1183 = vunpack.c.l.b16 %v415
      %v1184 = vunpack.c.l.b16 %v416
      %v1185 = vunpack.c.l.b16 %v417
      %v1186 = vunpack.c.l.b16 %v418
      %v1187 = vunpack.c.l.b16 %v419
      %v1188 = vunpack.c.l.b16 %v420
      %v1189 = vunpack.c.l.b16 %v421
      %v1190 = vunpack.c.l.b16 %v422
      %v1191 = vunpack.c.l.b16 %v423
      %v1192 = vunpack.c.l.b16 %v424
      %v1193 = vunpack.c.l.b16 %v425
      %v1194 = vunpack.c.l.b16 %v426
      %v1195 = vunpack.c.l.b16 %v427
      %v1196 = vunpack.c.l.b16 %v428
      %v1197 = vunpack.c.l.b16 %v429
      %v1198 = vunpack.c.l.b16 %v430
      %v1199 = vunpack.c.l.b16 %v431
      %v1200 = vunpack.c.l.b16 %v432
      %v1201 = vunpack.c.l.b16 %v433
      %v1202 = vunpack.c.l.b16 %v434
      %v1203 = vunpack.c.l.b16 %v435
      %v1204 = vunpack.c.l.b16 %v436
      %v1205 = vunpack.c.l.b16 %v437
      %v1206 = vunpack.c.l.b16 %v438
      %v1207 = vunpack.c.l.b16 %v439
      %v1208 = vunpack.c.l.b16 %v440
      %v1209 = vunpack.c.l.b16 %v441
      %v1210 = vunpack.c.l.b16 %v442
      %v1211 = vunpack.c.l.b16 %v443
      %v1212 = vunpack.c.l.b16 %v444
      %v1213 = vunpack.c.l.b16 %v445
      %v1214 = vunpack.c.l.b16 %v446
      %v1215 = vunpack.c.l.b16 %v447
      %v1216 = vunpack.c.l.b16 %v448
      %v1217 = vunpack.c.l.b16 %v449
      %v1218 = vunpack.c.l.b16 %v450
      %v1219 = vunpack.c.l.b16 %v451
      %v1220 = vunpack.c.l.b16 %v452
      %v1221 = vunpack.c.l.b16 %v453
      %v1222 = vunpack.c.l.b16 %v454
      %v1223 = vunpack.c.l.b16 %v455
      %v1224 = vunpack.c.l.b16 %v456
      %v1225 = vunpack.c.l.b16 %v457
      %v1226 = vunpack.c.l.b16 %v458
      %v1227 = vunpack.c.l.b16 %v459
      %v1228 = vunpack.c.l.b16 %v460
      %v1229 = vunpack.c.l.b16 %v461
      %v1230 = vunpack.c.l.b16 %v462
      %v1231 = vunpack.c.l.b16 %v463
      %v1232 = vunpack.c.l.b16 %v464
      %v1233 = vunpack.c.l.b16 %v465
      %v1234 = vunpack.c.l.b16 %v466
      %v1235 = vunpack.c.l.b16 %v467
      %v1236 = vunpack.c.l.b16 %v468
      %v1237 = vunpack.c.l.b16 %v469
      %v1238 = vunpack.c.l.b16 %v470
      %v1239 = vunpack.c.l.b16 %v471
      %v1240 = vunpack.c.l.b16 %v472
      %v1241 = vunpack.c.l.b16 %v473
      %v1242 = vunpack.c.l.b16 %v474
      %v1243 = vunpack.c.l.b16 %v475
      %v1244 = vpack.c.b16 %v1181, %v1180
      %v1245 = vpack.c.b16 %v1183, %v1182
      %v1246 = vpack.c.b16 %v1185, %v1184
      %v1247 = vpack.c.b16 %v1187, %v1186
      %v1248 = vpack.c.b16 %v1189, %v1188
      %v1249 = vpack.c.b16 %v1191, %v1190
      %v1250 = vpack.c.b16 %v1193, %v1192
      %v1251 = vpack.c.b16 %v1195, %v1194
      %v1252 = vpack.c.b16 %v1197, %v1196
      %v1253 = vpack.c.b16 %v1199, %v1198
      %v1254 = vpack.c.b16 %v1201, %v1200
      %v1255 = vpack.c.b16 %v1203, %v1202
      %v1256 = vpack.c.b16 %v1205, %v1204
      %v1257 = vpack.c.b16 %v1207, %v1206
      %v1258 = vpack.c.b16 %v1209, %v1208
      %v1259 = vpack.c.b16 %v1211, %v1210
      %v1260 = vpack.c.b16 %v1213, %v1212
      %v1261 = vpack.c.b16 %v1215, %v1214
      %v1262 = vpack.c.b16 %v1217, %v1216
      %v1263 = vpack.c.b16 %v1219, %v1218
      %v1264 = vpack.c.b16 %v1221, %v1220
      %v1265 = vpack.c.b16 %v1223, %v1222
      %v1266 = vpack.c.b16 %v1225, %v1224
      %v1267 = vpack.c.b16 %v1227, %v1226
      %v1268 = vpack.c.b16 %v1229, %v1228
      %v1269 = vpack.c.b16 %v1231, %v1230
      %v1270 = vpack.c.b16 %v1233, %v1232
      %v1271 = vpack.c.b16 %v1235, %v1234
      %v1272 = vpack.c.b16 %v1237, %v1236
      %v1273 = vpack.c.b16 %v1239, %v1238
      %v1274 = vpack.c.b16 %v1241, %v1240
      %v1275 = vpack.c.b16 %v1243, %v1242
      %1308 = vmatprep.subr.bf16.mxu0 0
      %1309 = vmatpush1.bf16.msra.mxu0 %v1251
      %1310 = vmatprep.subr.bf16.mxu0 0
      %1311 = vmatpush1.bf16.msra.mxu0 %v1250
      %1312 = vmatprep.subr.bf16.mxu0 0
      %1313 = vmatpush1.bf16.msra.mxu0 %v1249
      %1314 = vmatprep.subr.bf16.mxu0 0
      %1315 = vmatpush1.bf16.msra.mxu0 %v1248
      %1316 = vmatprep.subr.bf16.mxu0 0
      %1317 = vmatpush1.bf16.msra.mxu0 %v1247
      %1318 = vmatprep.subr.bf16.mxu0 0
      %1319 = vmatpush1.bf16.msra.mxu0 %v1246
      %1320 = vmatprep.subr.bf16.mxu0 0
      %1321 = vmatpush1.bf16.msra.mxu0 %v1245
      %1322 = vmatprep.subr.bf16.mxu0 0
      %1323 = vmatpush1.bf16.msra.mxu0 %v1244
      %1324 = vmatprep.subr.bf16.mxu0 0
      %1325 = vmatpush2.bf16.msra.mxu0 %v1259
      %1326 = vmatprep.subr.bf16.mxu0 0
      %1327 = vmatpush2.bf16.msra.mxu0 %v1258
      %1328 = vmatprep.subr.bf16.mxu0 0
      %1329 = vmatpush2.bf16.msra.mxu0 %v1257
      %1330 = vmatprep.subr.bf16.mxu0 0
      %1331 = vmatpush2.bf16.msra.mxu0 %v1256
      %1332 = vmatprep.subr.bf16.mxu0 0
      %1333 = vmatpush2.bf16.msra.mxu0 %v1255
      %1334 = vmatprep.subr.bf16.mxu0 0
      %1335 = vmatpush2.bf16.msra.mxu0 %v1254
      %1336 = vmatprep.subr.bf16.mxu0 0
      %1337 = vmatpush2.bf16.msra.mxu0 %v1253
      %1338 = vmatprep.subr.bf16.mxu0 0
      %1339 = vmatpush2.bf16.msra.mxu0 %v1252
      %1340 = vmatprep.mubr.bf16.mxu0 %v861
      %1341 = vmatmul.mubr.bf16.gmra.mxu0 %v860
      %v1342 = vpop.f32.mrf.mxu0
      %v1343 = vadd.f32 0.0, %v1342
      %v1344 = vpop.f32.mrf.mxu0
      %v1345 = vpop.f32.mrf.mxu0
      %v1346 = vadd.f32 0.0, %v1345
      %v1347 = vpop.f32.mrf.mxu0
      %1348 = vmatprep.mubr.bf16.mxu0 %v865
      %1349 = vmatmul.mubr.bf16.gmra.mxu0 %v864
      %v1350 = vpop.f32.mrf.mxu0
      %v1351 = vadd.f32 0.0, %v1350
      %v1352 = vpop.f32.mrf.mxu0
      %v1353 = vpop.f32.mrf.mxu0
      %v1354 = vadd.f32 0.0, %v1353
      %v1355 = vpop.f32.mrf.mxu0
      %1356 = vmatprep.mubr.bf16.mxu0 %v869
      %1357 = vmatmul.mubr.bf16.gmra.mxu0 %v868
      %v1358 = vpop.f32.mrf.mxu0
      %v1359 = vadd.f32 0.0, %v1358
      %v1360 = vpop.f32.mrf.mxu0
      %v1361 = vpop.f32.mrf.mxu0
      %v1362 = vadd.f32 0.0, %v1361
      %v1363 = vpop.f32.mrf.mxu0
      %1364 = vmatprep.mubr.bf16.mxu0 %v873
      %1365 = vmatmul.mubr.bf16.gmra.mxu0 %v872
      %v1366 = vpop.f32.mrf.mxu0
      %v1367 = vadd.f32 0.0, %v1366
      %v1368 = vpop.f32.mrf.mxu0
      %v1369 = vpop.f32.mrf.mxu0
      %v1370 = vadd.f32 0.0, %v1369
      %v1371 = vpop.f32.mrf.mxu0
      %1372 = vmatprep.mubr.bf16.mxu0 %v877
      %1373 = vmatmul.mubr.bf16.gmra.mxu0 %v876
      %v1374 = vpop.f32.mrf.mxu0
      %v1375 = vadd.f32 0.0, %v1374
      %v1376 = vpop.f32.mrf.mxu0
      %v1377 = vpop.f32.mrf.mxu0
      %v1378 = vadd.f32 0.0, %v1377
      %v1379 = vpop.f32.mrf.mxu0
      %1380 = vmatprep.mubr.bf16.mxu0 %v881
      %1381 = vmatmul.mubr.bf16.gmra.mxu0 %v880
      %v1382 = vpop.f32.mrf.mxu0
      %v1383 = vadd.f32 0.0, %v1382
      %v1384 = vpop.f32.mrf.mxu0
      %v1385 = vpop.f32.mrf.mxu0
      %v1386 = vadd.f32 0.0, %v1385
      %v1387 = vpop.f32.mrf.mxu0
      %1388 = vmatprep.mubr.bf16.mxu0 %v885
      %1389 = vmatmul.mubr.bf16.gmra.mxu0 %v884
      %v1390 = vpop.f32.mrf.mxu0
      %v1391 = vadd.f32 0.0, %v1390
      %v1392 = vpop.f32.mrf.mxu0
      %v1393 = vpop.f32.mrf.mxu0
      %v1394 = vadd.f32 0.0, %v1393
      %v1395 = vpop.f32.mrf.mxu0
      %1396 = vmatprep.mubr.bf16.mxu0 %v889
      %1397 = vmatmul.mubr.bf16.gmra.mxu0 %v888
      %v1398 = vpop.f32.mrf.mxu0
      %v1399 = vadd.f32 0.0, %v1398
      %v1400 = vpop.f32.mrf.mxu0
      %v1401 = vpop.f32.mrf.mxu0
      %v1402 = vadd.f32 0.0, %v1401
      %v1403 = vpop.f32.mrf.mxu0
      %1404 = vmatprep.mubr.bf16.mxu0 %v893
      %1405 = vmatmul.mubr.bf16.gmra.mxu0 %v892
      %v1406 = vpop.f32.mrf.mxu0
      %v1407 = vadd.f32 0.0, %v1406
      %v1408 = vpop.f32.mrf.mxu0
      %v1409 = vpop.f32.mrf.mxu0
      %v1410 = vadd.f32 0.0, %v1409
      %v1411 = vpop.f32.mrf.mxu0
      %1412 = vmatprep.mubr.bf16.mxu0 %v897
      %1413 = vmatmul.mubr.bf16.gmra.mxu0 %v896
      %v1414 = vpop.f32.mrf.mxu0
      %v1415 = vadd.f32 0.0, %v1414
      %v1416 = vpop.f32.mrf.mxu0
      %v1417 = vpop.f32.mrf.mxu0
      %v1418 = vadd.f32 0.0, %v1417
      %v1419 = vpop.f32.mrf.mxu0
      %1420 = vmatprep.mubr.bf16.mxu0 %v901
      %1421 = vmatmul.mubr.bf16.gmra.mxu0 %v900
      %v1422 = vpop.f32.mrf.mxu0
      %v1423 = vadd.f32 0.0, %v1422
      %v1424 = vpop.f32.mrf.mxu0
      %v1425 = vpop.f32.mrf.mxu0
      %v1426 = vadd.f32 0.0, %v1425
      %v1427 = vpop.f32.mrf.mxu0
      %1428 = vmatprep.mubr.bf16.mxu0 %v905
      %1429 = vmatmul.mubr.bf16.gmra.mxu0 %v904
      %v1430 = vpop.f32.mrf.mxu0
      %v1431 = vadd.f32 0.0, %v1430
      %v1432 = vpop.f32.mrf.mxu0
      %v1433 = vpop.f32.mrf.mxu0
      %v1434 = vadd.f32 0.0, %v1433
      %v1435 = vpop.f32.mrf.mxu0
      %1436 = vmatprep.mubr.bf16.mxu0 %v909
      %1437 = vmatmul.mubr.bf16.gmra.mxu0 %v908
      %v1438 = vpop.f32.mrf.mxu0
      %v1439 = vadd.f32 0.0, %v1438
      %v1440 = vpop.f32.mrf.mxu0
      %v1441 = vpop.f32.mrf.mxu0
      %v1442 = vadd.f32 0.0, %v1441
      %v1443 = vpop.f32.mrf.mxu0
      %1444 = vmatprep.mubr.bf16.mxu0 %v913
      %1445 = vmatmul.mubr.bf16.gmra.mxu0 %v912
      %v1446 = vpop.f32.mrf.mxu0
      %v1447 = vadd.f32 0.0, %v1446
      %v1448 = vpop.f32.mrf.mxu0
      %v1449 = vpop.f32.mrf.mxu0
      %v1450 = vadd.f32 0.0, %v1449
      %v1451 = vpop.f32.mrf.mxu0
      %1452 = vmatprep.mubr.bf16.mxu0 %v917
      %1453 = vmatmul.mubr.bf16.gmra.mxu0 %v916
      %v1454 = vpop.f32.mrf.mxu0
      %v1455 = vadd.f32 0.0, %v1454
      %v1456 = vpop.f32.mrf.mxu0
      %v1457 = vpop.f32.mrf.mxu0
      %v1458 = vadd.f32 0.0, %v1457
      %v1459 = vpop.f32.mrf.mxu0
      %1460 = vmatprep.mubr.bf16.mxu0 %v921
      %1461 = vmatmul.mubr.bf16.gmra.mxu0 %v920
      %v1462 = vpop.f32.mrf.mxu0
      %v1463 = vadd.f32 0.0, %v1462
      %v1464 = vpop.f32.mrf.mxu0
      %v1465 = vpop.f32.mrf.mxu0
      %v1466 = vadd.f32 0.0, %v1465
      %v1467 = vpop.f32.mrf.mxu0
      %1468 = vmatprep.mubr.bf16.mxu0 %v925
      %1469 = vmatmul.mubr.bf16.gmra.mxu0 %v924
      %v1470 = vpop.f32.mrf.mxu0
      %v1471 = vadd.f32 0.0, %v1470
      %v1472 = vpop.f32.mrf.mxu0
      %v1473 = vpop.f32.mrf.mxu0
      %v1474 = vadd.f32 0.0, %v1473
      %v1475 = vpop.f32.mrf.mxu0
      %1476 = vmatprep.mubr.bf16.mxu0 %v929
      %1477 = vmatmul.mubr.bf16.gmra.mxu0 %v928
      %v1478 = vpop.f32.mrf.mxu0
      %v1479 = vadd.f32 0.0, %v1478
      %v1480 = vpop.f32.mrf.mxu0
      %v1481 = vpop.f32.mrf.mxu0
      %v1482 = vadd.f32 0.0, %v1481
      %v1483 = vpop.f32.mrf.mxu0
      %1484 = vmatprep.mubr.bf16.mxu0 %v933
      %1485 = vmatmul.mubr.bf16.gmra.mxu0 %v932
      %v1486 = vpop.f32.mrf.mxu0
      %v1487 = vadd.f32 0.0, %v1486
      %v1488 = vpop.f32.mrf.mxu0
      %v1489 = vpop.f32.mrf.mxu0
      %v1490 = vadd.f32 0.0, %v1489
      %v1491 = vpop.f32.mrf.mxu0
      %1492 = vmatprep.mubr.bf16.mxu0 %v937
      %1493 = vmatmul.mubr.bf16.gmra.mxu0 %v936
      %v1494 = vpop.f32.mrf.mxu0
      %v1495 = vadd.f32 0.0, %v1494
      %v1496 = vpop.f32.mrf.mxu0
      %v1497 = vpop.f32.mrf.mxu0
      %v1498 = vadd.f32 0.0, %v1497
      %v1499 = vpop.f32.mrf.mxu0
      %1500 = vmatprep.mubr.bf16.mxu0 %v941
      %1501 = vmatmul.mubr.bf16.gmra.mxu0 %v940
      %v1502 = vpop.f32.mrf.mxu0
      %v1503 = vadd.f32 0.0, %v1502
      %v1504 = vpop.f32.mrf.mxu0
      %v1505 = vpop.f32.mrf.mxu0
      %v1506 = vadd.f32 0.0, %v1505
      %v1507 = vpop.f32.mrf.mxu0
      %1508 = vmatprep.mubr.bf16.mxu0 %v945
      %1509 = vmatmul.mubr.bf16.gmra.mxu0 %v944
      %v1510 = vpop.f32.mrf.mxu0
      %v1511 = vadd.f32 0.0, %v1510
      %v1512 = vpop.f32.mrf.mxu0
      %v1513 = vpop.f32.mrf.mxu0
      %v1514 = vadd.f32 0.0, %v1513
      %v1515 = vpop.f32.mrf.mxu0
      %1516 = vmatprep.mubr.bf16.mxu0 %v949
      %1517 = vmatmul.mubr.bf16.gmra.mxu0 %v948
      %v1518 = vpop.f32.mrf.mxu0
      %v1519 = vadd.f32 0.0, %v1518
      %v1520 = vpop.f32.mrf.mxu0
      %v1521 = vpop.f32.mrf.mxu0
      %v1522 = vadd.f32 0.0, %v1521
      %v1523 = vpop.f32.mrf.mxu0
      %1524 = vmatprep.mubr.bf16.mxu0 %v953
      %1525 = vmatmul.mubr.bf16.gmra.mxu0 %v952
      %v1526 = vpop.f32.mrf.mxu0
      %v1527 = vadd.f32 0.0, %v1526
      %v1528 = vpop.f32.mrf.mxu0
      %v1529 = vpop.f32.mrf.mxu0
      %v1530 = vadd.f32 0.0, %v1529
      %v1531 = vpop.f32.mrf.mxu0
      %1532 = vmatprep.mubr.bf16.mxu0 %v957
      %1533 = vmatmul.mubr.bf16.gmra.mxu0 %v956
      %v1534 = vpop.f32.mrf.mxu0
      %v1535 = vadd.f32 0.0, %v1534
      %v1536 = vpop.f32.mrf.mxu0
      %v1537 = vpop.f32.mrf.mxu0
      %v1538 = vadd.f32 0.0, %v1537
      %v1539 = vpop.f32.mrf.mxu0
      %1540 = vmatprep.mubr.bf16.mxu0 %v961
      %1541 = vmatmul.mubr.bf16.gmra.mxu0 %v960
      %v1542 = vpop.f32.mrf.mxu0
      %v1543 = vadd.f32 0.0, %v1542
      %v1544 = vpop.f32.mrf.mxu0
      %v1545 = vpop.f32.mrf.mxu0
      %v1546 = vadd.f32 0.0, %v1545
      %v1547 = vpop.f32.mrf.mxu0
      %1548 = vmatprep.mubr.bf16.mxu0 %v965
      %1549 = vmatmul.mubr.bf16.gmra.mxu0 %v964
      %v1550 = vpop.f32.mrf.mxu0
      %v1551 = vadd.f32 0.0, %v1550
      %v1552 = vpop.f32.mrf.mxu0
      %v1553 = vpop.f32.mrf.mxu0
      %v1554 = vadd.f32 0.0, %v1553
      %v1555 = vpop.f32.mrf.mxu0
      %1556 = vmatprep.mubr.bf16.mxu0 %v969
      %1557 = vmatmul.mubr.bf16.gmra.mxu0 %v968
      %v1558 = vpop.f32.mrf.mxu0
      %v1559 = vadd.f32 0.0, %v1558
      %v1560 = vpop.f32.mrf.mxu0
      %v1561 = vpop.f32.mrf.mxu0
      %v1562 = vadd.f32 0.0, %v1561
      %v1563 = vpop.f32.mrf.mxu0
      %1564 = vmatprep.mubr.bf16.mxu0 %v973
      %1565 = vmatmul.mubr.bf16.gmra.mxu0 %v972
      %v1566 = vpop.f32.mrf.mxu0
      %v1567 = vadd.f32 0.0, %v1566
      %v1568 = vpop.f32.mrf.mxu0
      %v1569 = vpop.f32.mrf.mxu0
      %v1570 = vadd.f32 0.0, %v1569
      %v1571 = vpop.f32.mrf.mxu0
      %1572 = vmatprep.mubr.bf16.mxu0 %v977
      %1573 = vmatmul.mubr.bf16.gmra.mxu0 %v976
      %v1574 = vpop.f32.mrf.mxu0
      %v1575 = vadd.f32 0.0, %v1574
      %v1576 = vpop.f32.mrf.mxu0
      %v1577 = vpop.f32.mrf.mxu0
      %v1578 = vadd.f32 0.0, %v1577
      %v1579 = vpop.f32.mrf.mxu0
      %1580 = vmatprep.mubr.bf16.mxu0 %v981
      %1581 = vmatmul.mubr.bf16.gmra.mxu0 %v980
      %v1582 = vpop.f32.mrf.mxu0
      %v1583 = vadd.f32 0.0, %v1582
      %v1584 = vpop.f32.mrf.mxu0
      %v1585 = vpop.f32.mrf.mxu0
      %v1586 = vadd.f32 0.0, %v1585
      %v1587 = vpop.f32.mrf.mxu0
      %1588 = vmatprep.mubr.bf16.mxu0 %v985
      %1589 = vmatmul.mubr.bf16.gmra.mxu0 %v984
      %v1590 = vpop.f32.mrf.mxu0
      %v1591 = vadd.f32 0.0, %v1590
      %v1592 = vpop.f32.mrf.mxu0
      %v1593 = vpop.f32.mrf.mxu0
      %v1594 = vadd.f32 0.0, %v1593
      %v1595 = vpop.f32.mrf.mxu0
      %1596 = vdwg.mxu0
      %1597 = vmatprep.subr.bf16.mxu0 0
      %1598 = vmatpush1.bf16.msra.mxu0 %v1267
      %1599 = vmatprep.subr.bf16.mxu0 0
      %1600 = vmatpush1.bf16.msra.mxu0 %v1266
      %1601 = vmatprep.subr.bf16.mxu0 0
      %1602 = vmatpush1.bf16.msra.mxu0 %v1265
      %1603 = vmatprep.subr.bf16.mxu0 0
      %1604 = vmatpush1.bf16.msra.mxu0 %v1264
      %1605 = vmatprep.subr.bf16.mxu0 0
      %1606 = vmatpush1.bf16.msra.mxu0 %v1263
      %1607 = vmatprep.subr.bf16.mxu0 0
      %1608 = vmatpush1.bf16.msra.mxu0 %v1262
      %1609 = vmatprep.subr.bf16.mxu0 0
      %1610 = vmatpush1.bf16.msra.mxu0 %v1261
      %1611 = vmatprep.subr.bf16.mxu0 0
      %1612 = vmatpush1.bf16.msra.mxu0 %v1260
      %1613 = vmatprep.subr.bf16.mxu0 0
      %1614 = vmatpush2.bf16.msra.mxu0 %v1275
      %1615 = vmatprep.subr.bf16.mxu0 0
      %1616 = vmatpush2.bf16.msra.mxu0 %v1274
      %1617 = vmatprep.subr.bf16.mxu0 0
      %1618 = vmatpush2.bf16.msra.mxu0 %v1273
      %1619 = vmatprep.subr.bf16.mxu0 0
      %1620 = vmatpush2.bf16.msra.mxu0 %v1272
      %1621 = vmatprep.subr.bf16.mxu0 0
      %1622 = vmatpush2.bf16.msra.mxu0 %v1271
      %1623 = vmatprep.subr.bf16.mxu0 0
      %1624 = vmatpush2.bf16.msra.mxu0 %v1270
      %1625 = vmatprep.subr.bf16.mxu0 0
      %1626 = vmatpush2.bf16.msra.mxu0 %v1269
      %1627 = vmatprep.subr.bf16.mxu0 0
      %1628 = vmatpush2.bf16.msra.mxu0 %v1268
      %1629 = vmatprep.mubr.bf16.mxu0 %v863
      %1630 = vmatmul.mubr.bf16.gmra.mxu0 %v862
      %v1631 = vpop.f32.mrf.mxu0
      %v1632 = vadd.f32 %v1343, %v1631
      %v1633 = vpop.f32.mrf.mxu0
      %v1634 = vpop.f32.mrf.mxu0
      %v1635 = vadd.f32 %v1346, %v1634
      %v1636 = vpop.f32.mrf.mxu0
      %1637 = vmatprep.mubr.bf16.mxu0 %v867
      %1638 = vmatmul.mubr.bf16.gmra.mxu0 %v866
      %v1639 = vpop.f32.mrf.mxu0
      %v1640 = vadd.f32 %v1351, %v1639
      %v1641 = vpop.f32.mrf.mxu0
      %v1642 = vpop.f32.mrf.mxu0
      %v1643 = vadd.f32 %v1354, %v1642
      %v1644 = vpop.f32.mrf.mxu0
      %1645 = vmatprep.mubr.bf16.mxu0 %v871
      %1646 = vmatmul.mubr.bf16.gmra.mxu0 %v870
      %v1647 = vpop.f32.mrf.mxu0
      %v1648 = vadd.f32 %v1359, %v1647
      %v1649 = vpop.f32.mrf.mxu0
      %v1650 = vpop.f32.mrf.mxu0
      %v1651 = vadd.f32 %v1362, %v1650
      %v1652 = vpop.f32.mrf.mxu0
      %1653 = vmatprep.mubr.bf16.mxu0 %v875
      %1654 = vmatmul.mubr.bf16.gmra.mxu0 %v874
      %v1655 = vpop.f32.mrf.mxu0
      %v1656 = vadd.f32 %v1367, %v1655
      %v1657 = vpop.f32.mrf.mxu0
      %v1658 = vpop.f32.mrf.mxu0
      %v1659 = vadd.f32 %v1370, %v1658
      %v1660 = vpop.f32.mrf.mxu0
      %1661 = vmatprep.mubr.bf16.mxu0 %v879
      %1662 = vmatmul.mubr.bf16.gmra.mxu0 %v878
      %v1663 = vpop.f32.mrf.mxu0
      %v1664 = vadd.f32 %v1375, %v1663
      %v1665 = vpop.f32.mrf.mxu0
      %v1666 = vpop.f32.mrf.mxu0
      %v1667 = vadd.f32 %v1378, %v1666
      %v1668 = vpop.f32.mrf.mxu0
      %1669 = vmatprep.mubr.bf16.mxu0 %v883
      %1670 = vmatmul.mubr.bf16.gmra.mxu0 %v882
      %v1671 = vpop.f32.mrf.mxu0
      %v1672 = vadd.f32 %v1383, %v1671
      %v1673 = vpop.f32.mrf.mxu0
      %v1674 = vpop.f32.mrf.mxu0
      %v1675 = vadd.f32 %v1386, %v1674
      %v1676 = vpop.f32.mrf.mxu0
      %1677 = vmatprep.mubr.bf16.mxu0 %v887
      %1678 = vmatmul.mubr.bf16.gmra.mxu0 %v886
      %v1679 = vpop.f32.mrf.mxu0
      %v1680 = vadd.f32 %v1391, %v1679
      %v1681 = vpop.f32.mrf.mxu0
      %v1682 = vpop.f32.mrf.mxu0
      %v1683 = vadd.f32 %v1394, %v1682
      %v1684 = vpop.f32.mrf.mxu0
      %1685 = vmatprep.mubr.bf16.mxu0 %v891
      %1686 = vmatmul.mubr.bf16.gmra.mxu0 %v890
      %v1687 = vpop.f32.mrf.mxu0
      %v1688 = vadd.f32 %v1399, %v1687
      %v1689 = vpop.f32.mrf.mxu0
      %v1690 = vpop.f32.mrf.mxu0
      %v1691 = vadd.f32 %v1402, %v1690
      %v1692 = vpop.f32.mrf.mxu0
      %1693 = vmatprep.mubr.bf16.mxu0 %v895
      %1694 = vmatmul.mubr.bf16.gmra.mxu0 %v894
      %v1695 = vpop.f32.mrf.mxu0
      %v1696 = vadd.f32 %v1407, %v1695
      %v1697 = vpop.f32.mrf.mxu0
      %v1698 = vpop.f32.mrf.mxu0
      %v1699 = vadd.f32 %v1410, %v1698
      %v1700 = vpop.f32.mrf.mxu0
      %1701 = vmatprep.mubr.bf16.mxu0 %v899
      %1702 = vmatmul.mubr.bf16.gmra.mxu0 %v898
      %v1703 = vpop.f32.mrf.mxu0
      %v1704 = vadd.f32 %v1415, %v1703
      %v1705 = vpop.f32.mrf.mxu0
      %v1706 = vpop.f32.mrf.mxu0
      %v1707 = vadd.f32 %v1418, %v1706
      %v1708 = vpop.f32.mrf.mxu0
      %1709 = vmatprep.mubr.bf16.mxu0 %v903
      %1710 = vmatmul.mubr.bf16.gmra.mxu0 %v902
      %v1711 = vpop.f32.mrf.mxu0
      %v1712 = vadd.f32 %v1423, %v1711
      %v1713 = vpop.f32.mrf.mxu0
      %v1714 = vpop.f32.mrf.mxu0
      %v1715 = vadd.f32 %v1426, %v1714
      %v1716 = vpop.f32.mrf.mxu0
      %1717 = vmatprep.mubr.bf16.mxu0 %v907
      %1718 = vmatmul.mubr.bf16.gmra.mxu0 %v906
      %v1719 = vpop.f32.mrf.mxu0
      %v1720 = vadd.f32 %v1431, %v1719
      %v1721 = vpop.f32.mrf.mxu0
      %v1722 = vpop.f32.mrf.mxu0
      %v1723 = vadd.f32 %v1434, %v1722
      %v1724 = vpop.f32.mrf.mxu0
      %1725 = vmatprep.mubr.bf16.mxu0 %v911
      %1726 = vmatmul.mubr.bf16.gmra.mxu0 %v910
      %v1727 = vpop.f32.mrf.mxu0
      %v1728 = vadd.f32 %v1439, %v1727
      %v1729 = vpop.f32.mrf.mxu0
      %v1730 = vpop.f32.mrf.mxu0
      %v1731 = vadd.f32 %v1442, %v1730
      %v1732 = vpop.f32.mrf.mxu0
      %1733 = vmatprep.mubr.bf16.mxu0 %v915
      %1734 = vmatmul.mubr.bf16.gmra.mxu0 %v914
      %v1735 = vpop.f32.mrf.mxu0
      %v1736 = vadd.f32 %v1447, %v1735
      %v1737 = vpop.f32.mrf.mxu0
      %v1738 = vpop.f32.mrf.mxu0
      %v1739 = vadd.f32 %v1450, %v1738
      %v1740 = vpop.f32.mrf.mxu0
      %1741 = vmatprep.mubr.bf16.mxu0 %v919
      %1742 = vmatmul.mubr.bf16.gmra.mxu0 %v918
      %v1743 = vpop.f32.mrf.mxu0
      %v1744 = vadd.f32 %v1455, %v1743
      %v1745 = vpop.f32.mrf.mxu0
      %v1746 = vpop.f32.mrf.mxu0
      %v1747 = vadd.f32 %v1458, %v1746
      %v1748 = vpop.f32.mrf.mxu0
      %1749 = vmatprep.mubr.bf16.mxu0 %v923
      %1750 = vmatmul.mubr.bf16.gmra.mxu0 %v922
      %v1751 = vpop.f32.mrf.mxu0
      %v1752 = vadd.f32 %v1463, %v1751
      %v1753 = vpop.f32.mrf.mxu0
      %v1754 = vpop.f32.mrf.mxu0
      %v1755 = vadd.f32 %v1466, %v1754
      %v1756 = vpop.f32.mrf.mxu0
      %1757 = vmatprep.mubr.bf16.mxu0 %v927
      %1758 = vmatmul.mubr.bf16.gmra.mxu0 %v926
      %v1759 = vpop.f32.mrf.mxu0
      %v1760 = vadd.f32 %v1471, %v1759
      %v1761 = vpop.f32.mrf.mxu0
      %v1762 = vpop.f32.mrf.mxu0
      %v1763 = vadd.f32 %v1474, %v1762
      %v1764 = vpop.f32.mrf.mxu0
      %1765 = vmatprep.mubr.bf16.mxu0 %v931
      %1766 = vmatmul.mubr.bf16.gmra.mxu0 %v930
      %v1767 = vpop.f32.mrf.mxu0
      %v1768 = vadd.f32 %v1479, %v1767
      %v1769 = vpop.f32.mrf.mxu0
      %v1770 = vpop.f32.mrf.mxu0
      %v1771 = vadd.f32 %v1482, %v1770
      %v1772 = vpop.f32.mrf.mxu0
      %1773 = vmatprep.mubr.bf16.mxu0 %v935
      %1774 = vmatmul.mubr.bf16.gmra.mxu0 %v934
      %v1775 = vpop.f32.mrf.mxu0
      %v1776 = vadd.f32 %v1487, %v1775
      %v1777 = vpop.f32.mrf.mxu0
      %v1778 = vpop.f32.mrf.mxu0
      %v1779 = vadd.f32 %v1490, %v1778
      %v1780 = vpop.f32.mrf.mxu0
      %1781 = vmatprep.mubr.bf16.mxu0 %v939
      %1782 = vmatmul.mubr.bf16.gmra.mxu0 %v938
      %v1783 = vpop.f32.mrf.mxu0
      %v1784 = vadd.f32 %v1495, %v1783
      %v1785 = vpop.f32.mrf.mxu0
      %v1786 = vpop.f32.mrf.mxu0
      %v1787 = vadd.f32 %v1498, %v1786
      %v1788 = vpop.f32.mrf.mxu0
      %1789 = vmatprep.mubr.bf16.mxu0 %v943
      %1790 = vmatmul.mubr.bf16.gmra.mxu0 %v942
      %v1791 = vpop.f32.mrf.mxu0
      %v1792 = vadd.f32 %v1503, %v1791
      %v1793 = vpop.f32.mrf.mxu0
      %v1794 = vpop.f32.mrf.mxu0
      %v1795 = vadd.f32 %v1506, %v1794
      %v1796 = vpop.f32.mrf.mxu0
      %1797 = vmatprep.mubr.bf16.mxu0 %v947
      %1798 = vmatmul.mubr.bf16.gmra.mxu0 %v946
      %v1799 = vpop.f32.mrf.mxu0
      %v1800 = vadd.f32 %v1511, %v1799
      %v1801 = vpop.f32.mrf.mxu0
      %v1802 = vpop.f32.mrf.mxu0
      %v1803 = vadd.f32 %v1514, %v1802
      %v1804 = vpop.f32.mrf.mxu0
      %1805 = vmatprep.mubr.bf16.mxu0 %v951
      %1806 = vmatmul.mubr.bf16.gmra.mxu0 %v950
      %v1807 = vpop.f32.mrf.mxu0
      %v1808 = vadd.f32 %v1519, %v1807
      %v1809 = vpop.f32.mrf.mxu0
      %v1810 = vpop.f32.mrf.mxu0
      %v1811 = vadd.f32 %v1522, %v1810
      %v1812 = vpop.f32.mrf.mxu0
      %1813 = vmatprep.mubr.bf16.mxu0 %v955
      %1814 = vmatmul.mubr.bf16.gmra.mxu0 %v954
      %v1815 = vpop.f32.mrf.mxu0
      %v1816 = vadd.f32 %v1527, %v1815
      %v1817 = vpop.f32.mrf.mxu0
      %v1818 = vpop.f32.mrf.mxu0
      %v1819 = vadd.f32 %v1530, %v1818
      %v1820 = vpop.f32.mrf.mxu0
      %1821 = vmatprep.mubr.bf16.mxu0 %v959
      %1822 = vmatmul.mubr.bf16.gmra.mxu0 %v958
      %v1823 = vpop.f32.mrf.mxu0
      %v1824 = vadd.f32 %v1535, %v1823
      %v1825 = vpop.f32.mrf.mxu0
      %v1826 = vpop.f32.mrf.mxu0
      %v1827 = vadd.f32 %v1538, %v1826
      %v1828 = vpop.f32.mrf.mxu0
      %1829 = vmatprep.mubr.bf16.mxu0 %v963
      %1830 = vmatmul.mubr.bf16.gmra.mxu0 %v962
      %v1831 = vpop.f32.mrf.mxu0
      %v1832 = vadd.f32 %v1543, %v1831
      %v1833 = vpop.f32.mrf.mxu0
      %v1834 = vpop.f32.mrf.mxu0
      %v1835 = vadd.f32 %v1546, %v1834
      %v1836 = vpop.f32.mrf.mxu0
      %1837 = vmatprep.mubr.bf16.mxu0 %v967
      %1838 = vmatmul.mubr.bf16.gmra.mxu0 %v966
      %v1839 = vpop.f32.mrf.mxu0
      %v1840 = vadd.f32 %v1551, %v1839
      %v1841 = vpop.f32.mrf.mxu0
      %v1842 = vpop.f32.mrf.mxu0
      %v1843 = vadd.f32 %v1554, %v1842
      %v1844 = vpop.f32.mrf.mxu0
      %1845 = vmatprep.mubr.bf16.mxu0 %v971
      %1846 = vmatmul.mubr.bf16.gmra.mxu0 %v970
      %v1847 = vpop.f32.mrf.mxu0
      %v1848 = vadd.f32 %v1559, %v1847
      %v1849 = vpop.f32.mrf.mxu0
      %v1850 = vpop.f32.mrf.mxu0
      %v1851 = vadd.f32 %v1562, %v1850
      %v1852 = vpop.f32.mrf.mxu0
      %1853 = vmatprep.mubr.bf16.mxu0 %v975
      %1854 = vmatmul.mubr.bf16.gmra.mxu0 %v974
      %v1855 = vpop.f32.mrf.mxu0
      %v1856 = vadd.f32 %v1567, %v1855
      %v1857 = vpop.f32.mrf.mxu0
      %v1858 = vpop.f32.mrf.mxu0
      %v1859 = vadd.f32 %v1570, %v1858
      %v1860 = vpop.f32.mrf.mxu0
      %1861 = vmatprep.mubr.bf16.mxu0 %v979
      %1862 = vmatmul.mubr.bf16.gmra.mxu0 %v978
      %v1863 = vpop.f32.mrf.mxu0
      %v1864 = vadd.f32 %v1575, %v1863
      %v1865 = vpop.f32.mrf.mxu0
      %v1866 = vpop.f32.mrf.mxu0
      %v1867 = vadd.f32 %v1578, %v1866
      %v1868 = vpop.f32.mrf.mxu0
      %1869 = vmatprep.mubr.bf16.mxu0 %v983
      %1870 = vmatmul.mubr.bf16.gmra.mxu0 %v982
      %v1871 = vpop.f32.mrf.mxu0
      %v1872 = vadd.f32 %v1583, %v1871
      %v1873 = vpop.f32.mrf.mxu0
      %v1874 = vpop.f32.mrf.mxu0
      %v1875 = vadd.f32 %v1586, %v1874
      %v1876 = vpop.f32.mrf.mxu0
      %1877 = vmatprep.mubr.bf16.mxu0 %v987
      %1878 = vmatmul.mubr.bf16.gmra.mxu0 %v986
      %v1879 = vpop.f32.mrf.mxu0
      %v1880 = vadd.f32 %v1591, %v1879
      %v1881 = vpop.f32.mrf.mxu0
      %v1882 = vpop.f32.mrf.mxu0
      %v1883 = vadd.f32 %v1594, %v1882
      %v1884 = vpop.f32.mrf.mxu0
      %1885 = vdwg.mxu0
      %1886 = vst [vmem:[%s272] sm:$0xff] %v1632
      %1887 = vst [vmem:[%s272 + $0x8] sm:$0xff] %v1635
      %1888 = vst [vmem:[%s272 + $0x10] sm:$0xff] %v1640
      %1889 = vst [vmem:[%s272 + $0x18] sm:$0xff] %v1643
      %1890 = vst [vmem:[%s272 + $0x20] sm:$0xff] %v1648
      %1891 = vst [vmem:[%s272 + $0x28] sm:$0xff] %v1651
      %1892 = vst [vmem:[%s272 + $0x30] sm:$0xff] %v1656
      %1893 = vst [vmem:[%s272 + $0x38] sm:$0xff] %v1659
      %1894 = vst [vmem:[%s272 + $0x40] sm:$0xff] %v1664
      %1895 = vst [vmem:[%s272 + $0x48] sm:$0xff] %v1667
      %1896 = vst [vmem:[%s272 + $0x50] sm:$0xff] %v1672
      %1897 = vst [vmem:[%s272 + $0x58] sm:$0xff] %v1675
      %1898 = vst [vmem:[%s272 + $0x60] sm:$0xff] %v1680
      %1899 = vst [vmem:[%s272 + $0x68] sm:$0xff] %v1683
      %1900 = vst [vmem:[%s272 + $0x70] sm:$0xff] %v1688
      %1901 = vst [vmem:[%s272 + $0x78] sm:$0xff] %v1691
      %1902 = vst [vmem:[%s272 + $0x80] sm:$0xff] %v1696
      %1903 = vst [vmem:[%s272 + $0x88] sm:$0xff] %v1699
      %1904 = vst [vmem:[%s272 + $0x90] sm:$0xff] %v1704
      %1905 = vst [vmem:[%s272 + $0x98] sm:$0xff] %v1707
      %1906 = vst [vmem:[%s272 + $0xa0] sm:$0xff] %v1712
      %1907 = vst [vmem:[%s272 + $0xa8] sm:$0xff] %v1715
      %1908 = vst [vmem:[%s272 + $0xb0] sm:$0xff] %v1720
      %1909 = vst [vmem:[%s272 + $0xb8] sm:$0xff] %v1723
      %1910 = vst [vmem:[%s272 + $0xc0] sm:$0xff] %v1728
      %1911 = vst [vmem:[%s272 + $0xc8] sm:$0xff] %v1731
      %1912 = vst [vmem:[%s272 + $0xd0] sm:$0xff] %v1736
      %1913 = vst [vmem:[%s272 + $0xd8] sm:$0xff] %v1739
      %1914 = vst [vmem:[%s272 + $0xe0] sm:$0xff] %v1744
      %1915 = vst [vmem:[%s272 + $0xe8] sm:$0xff] %v1747
      %1916 = vst [vmem:[%s272 + $0xf0] sm:$0xff] %v1752
      %1917 = vst [vmem:[%s272 + $0xf8] sm:$0xff] %v1755
      %1918 = vst [vmem:[%s272 + $0x100] sm:$0xff] %v1760
      %1919 = vst [vmem:[%s272 + $0x108] sm:$0xff] %v1763
      %1920 = vst [vmem:[%s272 + $0x110] sm:$0xff] %v1768
      %1921 = vst [vmem:[%s272 + $0x118] sm:$0xff] %v1771
      %1922 = vst [vmem:[%s272 + $0x120] sm:$0xff] %v1776
      %1923 = vst [vmem:[%s272 + $0x128] sm:$0xff] %v1779
      %1924 = vst [vmem:[%s272 + $0x130] sm:$0xff] %v1784
      %1925 = vst [vmem:[%s272 + $0x138] sm:$0xff] %v1787
      %1926 = vst [vmem:[%s272 + $0x140] sm:$0xff] %v1792
      %1927 = vst [vmem:[%s272 + $0x148] sm:$0xff] %v1795
      %1928 = vst [vmem:[%s272 + $0x150] sm:$0xff] %v1800
      %1929 = vst [vmem:[%s272 + $0x158] sm:$0xff] %v1803
      %1930 = vst [vmem:[%s272 + $0x160] sm:$0xff] %v1808
      %1931 = vst [vmem:[%s272 + $0x168] sm:$0xff] %v1811
      %1932 = vst [vmem:[%s272 + $0x170] sm:$0xff] %v1816
      %1933 = vst [vmem:[%s272 + $0x178] sm:$0xff] %v1819
      %1934 = vst [vmem:[%s272 + $0x180] sm:$0xff] %v1824
      %1935 = vst [vmem:[%s272 + $0x188] sm:$0xff] %v1827
      %1936 = vst [vmem:[%s272 + $0x190] sm:$0xff] %v1832
      %1937 = vst [vmem:[%s272 + $0x198] sm:$0xff] %v1835
      %1938 = vst [vmem:[%s272 + $0x1a0] sm:$0xff] %v1840
      %1939 = vst [vmem:[%s272 + $0x1a8] sm:$0xff] %v1843
      %1940 = vst [vmem:[%s272 + $0x1b0] sm:$0xff] %v1848
      %1941 = vst [vmem:[%s272 + $0x1b8] sm:$0xff] %v1851
      %1942 = vst [vmem:[%s272 + $0x1c0] sm:$0xff] %v1856
      %1943 = vst [vmem:[%s272 + $0x1c8] sm:$0xff] %v1859
      %1944 = vst [vmem:[%s272 + $0x1d0] sm:$0xff] %v1864
      %1945 = vst [vmem:[%s272 + $0x1d8] sm:$0xff] %v1867
      %1946 = vst [vmem:[%s272 + $0x1e0] sm:$0xff] %v1872
      %1947 = vst [vmem:[%s272 + $0x1e8] sm:$0xff] %v1875
      %1948 = vst [vmem:[%s272 + $0x1f0] sm:$0xff] %v1880
      %1949 = vst [vmem:[%s272 + $0x1f8] sm:$0xff] %v1883
      %v1950 = vadd.f32 %v1632, %v1635
      %v1951 = vadd.f32 %v1950, %v1640
      %v1952 = vadd.f32 %v1951, %v1643
      %v1953 = vadd.f32 %v1952, %v1648
      %v1954 = vadd.f32 %v1953, %v1651
      %v1955 = vadd.f32 %v1954, %v1656
      %v1956 = vadd.f32 %v1955, %v1659
      %v1957 = vadd.f32 %v1956, %v1664
      %v1958 = vadd.f32 %v1957, %v1667
      %v1959 = vadd.f32 %v1958, %v1672
      %v1960 = vadd.f32 %v1959, %v1675
      %v1961 = vadd.f32 %v1960, %v1680
      %v1962 = vadd.f32 %v1961, %v1683
      %v1963 = vadd.f32 %v1962, %v1688
      %v1964 = vadd.f32 %v1963, %v1691
      %v1965 = vadd.f32 %v1964, %v1696
      %v1966 = vadd.f32 %v1965, %v1699
      %v1967 = vadd.f32 %v1966, %v1704
      %v1968 = vadd.f32 %v1967, %v1707
      %v1969 = vadd.f32 %v1968, %v1712
      %v1970 = vadd.f32 %v1969, %v1715
      %v1971 = vadd.f32 %v1970, %v1720
      %v1972 = vadd.f32 %v1971, %v1723
      %v1973 = vadd.f32 %v1972, %v1728
      %v1974 = vadd.f32 %v1973, %v1731
      %v1975 = vadd.f32 %v1974, %v1736
      %v1976 = vadd.f32 %v1975, %v1739
      %v1977 = vadd.f32 %v1976, %v1744
      %v1978 = vadd.f32 %v1977, %v1747
      %v1979 = vadd.f32 %v1978, %v1752
      %v1980 = vadd.f32 %v1979, %v1755
      %v1981 = vadd.f32 %v1980, %v1760
      %v1982 = vadd.f32 %v1981, %v1763
      %v1983 = vadd.f32 %v1982, %v1768
      %v1984 = vadd.f32 %v1983, %v1771
      %v1985 = vadd.f32 %v1984, %v1776
      %v1986 = vadd.f32 %v1985, %v1779
      %v1987 = vadd.f32 %v1986, %v1784
      %v1988 = vadd.f32 %v1987, %v1787
      %v1989 = vadd.f32 %v1988, %v1792
      %v1990 = vadd.f32 %v1989, %v1795
      %v1991 = vadd.f32 %v1990, %v1800
      %v1992 = vadd.f32 %v1991, %v1803
      %v1993 = vadd.f32 %v1992, %v1808
      %v1994 = vadd.f32 %v1993, %v1811
      %v1995 = vadd.f32 %v1994, %v1816
      %v1996 = vadd.f32 %v1995, %v1819
      %v1997 = vadd.f32 %v1996, %v1824
      %v1998 = vadd.f32 %v1997, %v1827
      %v1999 = vadd.f32 %v1998, %v1832
      %v2000 = vadd.f32 %v1999, %v1835
      %v2001 = vadd.f32 %v2000, %v1840
      %v2002 = vadd.f32 %v2001, %v1843
      %v2003 = vadd.f32 %v2002, %v1848
      %v2004 = vadd.f32 %v2003, %v1851
      %v2005 = vadd.f32 %v2004, %v1856
      %v2006 = vadd.f32 %v2005, %v1859
      %v2007 = vadd.f32 %v2006, %v1864
      %v2008 = vadd.f32 %v2007, %v1867
      %v2009 = vadd.f32 %v2008, %v1872
      %v2010 = vadd.f32 %v2009, %v1875
      %v2011 = vadd.f32 %v2010, %v1880
      %v2012 = vadd.f32 %v2011, %v1883
      %v2013 = vrot.slane %v2012, 4
      %v2014 = vadd.f32 %v2012, %v2013
      %v2015 = vrot.slane %v2014, 2
      %v2016 = vadd.f32 %v2014, %v2015
      %v2017 = vrot.slane %v2016, 1
      %v2018 = vadd.f32 %v2016, %v2017
      %2019 = vst [vmem:[%s281] sm:$0x1] %v2018
      %v2020 = vmul.f32 %v1632, %v1632
      %v2021 = vmul.f32 %v1635, %v1635
      %v2022 = vmul.f32 %v1640, %v1640
      %v2023 = vmul.f32 %v1643, %v1643
      %v2024 = vmul.f32 %v1648, %v1648
      %v2025 = vmul.f32 %v1651, %v1651
      %v2026 = vmul.f32 %v1656, %v1656
      %v2027 = vmul.f32 %v1659, %v1659
      %v2028 = vmul.f32 %v1664, %v1664
      %v2029 = vmul.f32 %v1667, %v1667
      %v2030 = vmul.f32 %v1672, %v1672
      %v2031 = vmul.f32 %v1675, %v1675
      %v2032 = vmul.f32 %v1680, %v1680
      %v2033 = vmul.f32 %v1683, %v1683
      %v2034 = vmul.f32 %v1688, %v1688
      %v2035 = vmul.f32 %v1691, %v1691
      %v2036 = vmul.f32 %v1696, %v1696
      %v2037 = vmul.f32 %v1699, %v1699
      %v2038 = vmul.f32 %v1704, %v1704
      %v2039 = vmul.f32 %v1707, %v1707
      %v2040 = vmul.f32 %v1712, %v1712
      %v2041 = vmul.f32 %v1715, %v1715
      %v2042 = vmul.f32 %v1720, %v1720
      %v2043 = vmul.f32 %v1723, %v1723
      %v2044 = vmul.f32 %v1728, %v1728
      %v2045 = vmul.f32 %v1731, %v1731
      %v2046 = vmul.f32 %v1736, %v1736
      %v2047 = vmul.f32 %v1739, %v1739
      %v2048 = vmul.f32 %v1744, %v1744
      %v2049 = vmul.f32 %v1747, %v1747
      %v2050 = vmul.f32 %v1752, %v1752
      %v2051 = vmul.f32 %v1755, %v1755
      %v2052 = vmul.f32 %v1760, %v1760
      %v2053 = vmul.f32 %v1763, %v1763
      %v2054 = vmul.f32 %v1768, %v1768
      %v2055 = vmul.f32 %v1771, %v1771
      %v2056 = vmul.f32 %v1776, %v1776
      %v2057 = vmul.f32 %v1779, %v1779
      %v2058 = vmul.f32 %v1784, %v1784
      %v2059 = vmul.f32 %v1787, %v1787
      %v2060 = vmul.f32 %v1792, %v1792
      %v2061 = vmul.f32 %v1795, %v1795
      %v2062 = vmul.f32 %v1800, %v1800
      %v2063 = vmul.f32 %v1803, %v1803
      %v2064 = vmul.f32 %v1808, %v1808
      %v2065 = vmul.f32 %v1811, %v1811
      %v2066 = vmul.f32 %v1816, %v1816
      %v2067 = vmul.f32 %v1819, %v1819
      %v2068 = vmul.f32 %v1824, %v1824
      %v2069 = vmul.f32 %v1827, %v1827
      %v2070 = vmul.f32 %v1832, %v1832
      %v2071 = vmul.f32 %v1835, %v1835
      %v2072 = vmul.f32 %v1840, %v1840
      %v2073 = vmul.f32 %v1843, %v1843
      %v2074 = vmul.f32 %v1848, %v1848
      %v2075 = vmul.f32 %v1851, %v1851
      %v2076 = vmul.f32 %v1856, %v1856
      %v2077 = vmul.f32 %v1859, %v1859
      %v2078 = vmul.f32 %v1864, %v1864
      %v2079 = vmul.f32 %v1867, %v1867
      %v2080 = vmul.f32 %v1872, %v1872
      %v2081 = vmul.f32 %v1875, %v1875
      %v2082 = vmul.f32 %v1880, %v1880
      %v2083 = vmul.f32 %v1883, %v1883
      %v2084 = vadd.f32 %v2020, %v2021
      %v2085 = vadd.f32 %v2084, %v2022
      %v2086 = vadd.f32 %v2085, %v2023
      %v2087 = vadd.f32 %v2086, %v2024
      %v2088 = vadd.f32 %v2087, %v2025
      %v2089 = vadd.f32 %v2088, %v2026
      %v2090 = vadd.f32 %v2089, %v2027
      %v2091 = vadd.f32 %v2090, %v2028
      %v2092 = vadd.f32 %v2091, %v2029
      %v2093 = vadd.f32 %v2092, %v2030
      %v2094 = vadd.f32 %v2093, %v2031
      %v2095 = vadd.f32 %v2094, %v2032
      %v2096 = vadd.f32 %v2095, %v2033
      %v2097 = vadd.f32 %v2096, %v2034
      %v2098 = vadd.f32 %v2097, %v2035
      %v2099 = vadd.f32 %v2098, %v2036
      %v2100 = vadd.f32 %v2099, %v2037
      %v2101 = vadd.f32 %v2100, %v2038
      %v2102 = vadd.f32 %v2101, %v2039
      %v2103 = vadd.f32 %v2102, %v2040
      %v2104 = vadd.f32 %v2103, %v2041
      %v2105 = vadd.f32 %v2104, %v2042
      %v2106 = vadd.f32 %v2105, %v2043
      %v2107 = vadd.f32 %v2106, %v2044
      %v2108 = vadd.f32 %v2107, %v2045
      %v2109 = vadd.f32 %v2108, %v2046
      %v2110 = vadd.f32 %v2109, %v2047
      %v2111 = vadd.f32 %v2110, %v2048
      %v2112 = vadd.f32 %v2111, %v2049
      %v2113 = vadd.f32 %v2112, %v2050
      %v2114 = vadd.f32 %v2113, %v2051
      %v2115 = vadd.f32 %v2114, %v2052
      %v2116 = vadd.f32 %v2115, %v2053
      %v2117 = vadd.f32 %v2116, %v2054
      %v2118 = vadd.f32 %v2117, %v2055
      %v2119 = vadd.f32 %v2118, %v2056
      %v2120 = vadd.f32 %v2119, %v2057
      %v2121 = vadd.f32 %v2120, %v2058
      %v2122 = vadd.f32 %v2121, %v2059
      %v2123 = vadd.f32 %v2122, %v2060
      %v2124 = vadd.f32 %v2123, %v2061
      %v2125 = vadd.f32 %v2124, %v2062
      %v2126 = vadd.f32 %v2125, %v2063
      %v2127 = vadd.f32 %v2126, %v2064
      %v2128 = vadd.f32 %v2127, %v2065
      %v2129 = vadd.f32 %v2128, %v2066
      %v2130 = vadd.f32 %v2129, %v2067
      %v2131 = vadd.f32 %v2130, %v2068
      %v2132 = vadd.f32 %v2131, %v2069
      %v2133 = vadd.f32 %v2132, %v2070
      %v2134 = vadd.f32 %v2133, %v2071
      %v2135 = vadd.f32 %v2134, %v2072
      %v2136 = vadd.f32 %v2135, %v2073
      %v2137 = vadd.f32 %v2136, %v2074
      %v2138 = vadd.f32 %v2137, %v2075
      %v2139 = vadd.f32 %v2138, %v2076
      %v2140 = vadd.f32 %v2139, %v2077
      %v2141 = vadd.f32 %v2140, %v2078
      %v2142 = vadd.f32 %v2141, %v2079
      %v2143 = vadd.f32 %v2142, %v2080
      %v2144 = vadd.f32 %v2143, %v2081
      %v2145 = vadd.f32 %v2144, %v2082
      %v2146 = vadd.f32 %v2145, %v2083
      %v2147 = vrot.slane %v2146, 4
      %v2148 = vadd.f32 %v2146, %v2147
      %v2149 = vrot.slane %v2148, 2
      %v2150 = vadd.f32 %v2148, %v2149
      %v2151 = vrot.slane %v2150, 1
      %v2152 = vadd.f32 %v2150, %v2151
      %2153 = vst [vmem:[%s281 + $0x1] sm:$0x1] %v2152
      %s2154 = smul.u32 64, %s21
      %p2155 = scmp.lt.s32.totalorder %s20, 3
      %s2156 = scalar_select %p2155, %s20, 3
      %p2157 = scmp.lt.s32.totalorder %s2154, 63
      %s2158 = scalar_select %p2157, %s2154, 63
      %p2159 = scmp.lt.s32.totalorder %s22, 0
      %s2160 = scalar_select %p2159, %s22, 0
      %s2161 = sadd.s32 %s2160, %s2158
      %s2162 = smul.addr %s2156, 64
      %s2163 = sadd.s32 %s2161, %s2162
      %s2164 = smul.addr %s2163, 8
      %s2165 = scalar_lea.vmem %s2, %s2164
      %s2166 = sadd.s32 %s20, %s21
      %p2167 = scmp.lt.s32.totalorder %s2166, 3
      %s2168 = scalar_select %p2167, %s2166, 3
      %p2169 = scmp.lt.s32.totalorder %s22, 0
      %s2170 = scalar_select %p2169, %s22, 0
      %s2171 = sadd.s32 %s2170, %s2168
      %s2172 = smul.addr %s2171, 2
      %s2173 = scalar_lea.vmem %s3, %s2172
      // Predicated region
      $region29: #{gen_forward.8} parent=27 // pred_check
        %p2174 = pneg %p112
      $region30: #{gen_forward.8} parent=27 // pred_check_branch
        %2176 = sbr.rel (%p2174) target = $region32
      $region31: #{gen_forward.8} parent=27 // pred_region
        %s2177 = smul.u32 64, %s21
      $region32: #{gen_forward.8} parent=27 // pred_fallthru
        _
      // Predicated region
      $region33: #{gen_forward.8} parent=27 // pred_check
        %p2178 = pneg %p142
      $region34: #{gen_forward.8} parent=27 // pred_check_branch
        %2180 = sbr.rel (%p2178) target = $region36
      $region35: #{gen_forward.8} parent=27 // pred_region
        %s2181 = sadd.s32 %s20, %s21
      $region36: #{gen_forward.8} parent=27 // pred_fallthru
        _
    $region28: #{gen_forward.8} parent=5 // pred_fallthru
      _
    %p2182 = scmp.le.s32.totalorder 2, %s10
    // Predicated region
    $region37: #{gen_forward.8} parent=5 // pred_check
      %p2183 = pneg %p2182
    $region38: #{gen_forward.8} parent=5 // pred_check_branch
      %2185 = sbr.rel (%p2183) target = $region40
    $region39: #{gen_forward.8} parent=5 // pred_region
      %s2186 = ssub.s32 %s10, 2
      // Predicated region
      $region41: #{gen_forward.8} parent=39 // pred_check
        %p2187 = pneg %p118
      $region42: #{gen_forward.8} parent=39 // pred_check_branch
        %2189 = sbr.rel (%p2187) target = $region44
      $region43: #{gen_forward.8} parent=39 // pred_region
        %s2190 = smul.u32 64, %s24
        %p2191 = scmp.lt.s32.totalorder %s23, 3
        %s2192 = scalar_select %p2191, %s23, 3
        %p2193 = scmp.lt.s32.totalorder %s2190, 63
        %s2194 = scalar_select %p2193, %s2190, 63
        %p2195 = scmp.lt.s32.totalorder %s25, 0
        %s2196 = scalar_select %p2195, %s25, 0
        %s2197 = sadd.s32 %s2196, %s2194
        %s2198 = smul.addr %s2192, 64
        %s2199 = sadd.s32 %s2197, %s2198
        %s2200 = smul.addr %s2199, 8
        %s2201 = scalar_lea.vmem %s2, %s2200
      $region44: #{gen_forward.8} parent=39 // pred_fallthru
        _
      // Predicated region
      $region45: #{gen_forward.8} parent=39 // pred_check
        %p2202 = pneg %p148
      $region46: #{gen_forward.8} parent=39 // pred_check_branch
        %2204 = sbr.rel (%p2202) target = $region48
      $region47: #{gen_forward.8} parent=39 // pred_region
        %s2205 = sadd.s32 %s23, %s24
        %p2206 = scmp.lt.s32.totalorder %s2205, 3
        %s2207 = scalar_select %p2206, %s2205, 3
        %p2208 = scmp.lt.s32.totalorder %s25, 0
        %s2209 = scalar_select %p2208, %s25, 0
        %s2210 = sadd.s32 %s2209, %s2207
        %s2211 = smul.addr %s2210, 2
        %s2212 = scalar_lea.vmem %s3, %s2211
      $region48: #{gen_forward.8} parent=39 // pred_fallthru
        _
    $region40: #{gen_forward.8} parent=5 // pred_fallthru
      _
  $region6: #{gen_forward.8} parent=0 // loop_footer
    %s14 = sadd.s32 1, %s10
  $region7: #{gen_forward.8} parent=0 // loop_footer_branch
    %9 = sbr.rel target = $region3
  $region8: #{gen_forward.8} parent=0 // loop_exit
    _

// kernel: gen_forward.9
$region0: #{gen_forward.9}
  #allocation0 [shape = 'u32[]', space=smem, size = 0x4, offset = 0x4, fixed_abs, tag = 'smem constant byte address 0x4 - core index']
  #allocation1 [shape = 'u32[144,128]{1,0:T(1,128)}', space=vmem, size = 0x12000, scoped, tag = 'internal scratch']
  %s0 = inlined_call_operand.vmem [shape: bf16[4,8,256], index: 0, kind: input, shape index: {}]
  %s1 = inlined_call_operand.vmem [shape: bf16[4,256,2048], index: 1, kind: input, shape index: {}]
  %s2 = inlined_call_operand.vmem [shape: f32[4,8,2048], index: 2, kind: output, shape index: {}]
  %s3 = sld [smem:[#allocation0]]
  $region41: #{gen_forward.9} parent=0
    _
  %s5 = ssub.s32 1, %s3
  %s6 = scalar_select 0, %s5, %s3
  loop: start=0, step=1, limit=6
  $region2: #{gen_forward.9} parent=0 // loop_pre_header
    _
  $region3: #{gen_forward.9} parent=0 // loop_header
    %s8 = sphi 0, %s12
    %p9 = scmp.ge.s32.totalorder %s8, 6
    %s15 = sphi 0, %s34
    %s16 = sphi 0, %s30
    %s17 = sphi 0, %s26
    %s18 = sphi 0, %s15
    %s19 = sphi 0, %s16
    %s20 = sphi 0, %s17
    %s21 = sphi 0, %s18
    %s22 = sphi 0, %s19
    %s23 = sphi 0, %s20
    %s39 = sphi 0, %s41
    %s42 = sphi 0, %s39
    %s43 = sphi 0, %s42
    %s59 = sphi 0, %s43
    %s67 = sphi 0, %s69
    %s70 = sphi 0, %s67
    %s71 = sphi 0, %s70
    %s87 = sphi 0, %s71
    %s97 = sphi 0, %s99
    %s100 = sphi 0, %s97
    %s101 = sphi 0, %s100
    %s117 = sphi 0, %s101
  $region4: #{gen_forward.9} parent=0 // loop_header_branch
    %11 = sbr.rel (%p9) target = $region8
  $region5: #{gen_forward.9} parent=0 // loop_body
    %s13 = ssub.s32 %s8, 1
    %s14 = ssub.s32 %s8, 2
    %s24 = sadd.s32 1, %s17
    %p25 = scmp.ge.s32.totalorder %s24, 1
    %s26 = scalar_select %p25, 0, %s24
    %s27 = sadd.s32 1, %s16
    %s28 = scalar_select %p25, %s27, %s16
    %p29 = scmp.ge.s32.totalorder %s28, 1
    %s30 = scalar_select %p29, 0, %s28
    %s31 = sadd.s32 1, %s15
    %s32 = scalar_select %p29, %s31, %s15
    %p33 = scmp.ge.s32.totalorder %s32, 4
    %s34 = scalar_select %p33, 0, %s32
    %s35 = ssub.s32 %s15, %s34
    %s36 = ssub.s32 %s16, %s30
    %s37 = sor.u32 %s35, %s36
    %p38 = scmp.eq.s32.totalorder %s37, 0
    %s40 = sadd.s32 %s39, 1
    %s41 = scalar_select %p38, %s39, %s40
    %p44 = pneg %p38
    %p45 = scmp.eq.s32.totalorder %s8, 3
    %p46 = por %p44, %p45
    %p47 = scmp.ne.s32.totalorder %s39, %s42
    %p48 = scmp.eq.s32.totalorder %s8, 0
    %p49 = por %p47, %p48
    %p50 = scmp.ne.s32.totalorder %s39, %s42
    %p51 = scmp.eq.s32.totalorder %s13, 3
    %p52 = por %p50, %p51
    %p53 = scmp.ne.s32.totalorder %s42, %s43
    %p54 = scmp.eq.s32.totalorder %s13, 0
    %p55 = por %p53, %p54
    %p56 = scmp.ne.s32.totalorder %s42, %s43
    %p57 = scmp.eq.s32.totalorder %s14, 3
    %p58 = por %p56, %p57
    %p60 = scmp.ne.s32.totalorder %s43, %s59
    %p61 = scmp.eq.s32.totalorder %s14, 0
    %p62 = por %p60, %p61
    %s63 = ssub.s32 %s15, %s34
    %s64 = ssub.s32 %s17, %s26
    %s65 = sor.u32 %s63, %s64
    %p66 = scmp.eq.s32.totalorder %s65, 0
    %s68 = sadd.s32 %s67, 1
    %s69 = scalar_select %p66, %s67, %s68
    %p72 = pneg %p66
    %p73 = scmp.eq.s32.totalorder %s8, 3
    %p74 = por %p72, %p73
    %p75 = scmp.ne.s32.totalorder %s67, %s70
    %p76 = scmp.eq.s32.totalorder %s8, 0
    %p77 = por %p75, %p76
    %p78 = scmp.ne.s32.totalorder %s67, %s70
    %p79 = scmp.eq.s32.totalorder %s13, 3
    %p80 = por %p78, %p79
    %p81 = scmp.ne.s32.totalorder %s70, %s71
    %p82 = scmp.eq.s32.totalorder %s13, 0
    %p83 = por %p81, %p82
    %p84 = scmp.ne.s32.totalorder %s70, %s71
    %p85 = scmp.eq.s32.totalorder %s14, 3
    %p86 = por %p84, %p85
    %p88 = scmp.ne.s32.totalorder %s71, %s87
    %p89 = scmp.eq.s32.totalorder %s14, 0
    %p90 = por %p88, %p89
    %s91 = ssub.s32 %s15, %s34
    %s92 = ssub.s32 %s16, %s30
    %s93 = sor.u32 %s91, %s92
    %s94 = ssub.s32 %s17, %s26
    %s95 = sor.u32 %s93, %s94
    %p96 = scmp.eq.s32.totalorder %s95, 0
    %s98 = sadd.s32 %s97, 1
    %s99 = scalar_select %p96, %s97, %s98
    %p102 = pneg %p96
    %p103 = scmp.eq.s32.totalorder %s8, 3
    %p104 = por %p102, %p103
    %p105 = scmp.ne.s32.totalorder %s97, %s100
    %p106 = scmp.eq.s32.totalorder %s8, 0
    %p107 = por %p105, %p106
    %p108 = scmp.ne.s32.totalorder %s97, %s100
    %p109 = scmp.eq.s32.totalorder %s13, 3
    %p110 = por %p108, %p109
    %p111 = scmp.ne.s32.totalorder %s100, %s101
    %p112 = scmp.eq.s32.totalorder %s13, 0
    %p113 = por %p111, %p112
    %p114 = scmp.ne.s32.totalorder %s100, %s101
    %p115 = scmp.eq.s32.totalorder %s14, 3
    %p116 = por %p114, %p115
    %p118 = scmp.ne.s32.totalorder %s101, %s117
    %p119 = scmp.eq.s32.totalorder %s14, 0
    %p120 = por %p118, %p119
    %p121 = scmp.le.s32.totalorder 1, %s8
    %p122 = scmp.lt.s32.totalorder %s8, 5
    %p123 = pnand %p121, %p122
    %p124 = pneg %p123
    // Predicated region
    $region9: #{gen_forward.9} parent=5 // pred_check
      _
    $region10: #{gen_forward.9} parent=5 // pred_check_branch
      %126 = sbr.rel (%p123) target = $region12
    $region11: #{gen_forward.9} parent=5 // pred_region
      %s127 = ssub.s32 %s8, 1
    $region12: #{gen_forward.9} parent=5 // pred_fallthru
      _
    %p128 = scmp.lt.s32.totalorder %s8, 4
    // Predicated region
    $region13: #{gen_forward.9} parent=5 // pred_check
      %p129 = pneg %p128
    $region14: #{gen_forward.9} parent=5 // pred_check_branch
      %131 = sbr.rel (%p129) target = $region16
    $region15: #{gen_forward.9} parent=5 // pred_region
      // Predicated region
      $region17: #{gen_forward.9} parent=15 // pred_check
        %p132 = pneg %p49
      $region18: #{gen_forward.9} parent=15 // pred_check_branch
        %134 = sbr.rel (%p132) target = $region20
      $region19: #{gen_forward.9} parent=15 // pred_region
        %p135 = scmp.lt.s32.totalorder %s15, 3
        %s136 = scalar_select %p135, %s15, 3
        %p137 = scmp.lt.s32.totalorder %s16, 0
        %s138 = scalar_select %p137, %s16, 0
        %s139 = smul.addr %s138, 2
        %s140 = smul.addr %s136, 2
        %s141 = sadd.s32 %s139, %s140
        %s142 = smul.addr %s141, 4
        %s143 = scalar_lea.vmem %s0, %s142
      $region20: #{gen_forward.9} parent=15 // pred_fallthru
        _
      // Predicated region
      $region21: #{gen_forward.9} parent=15 // pred_check
        %p144 = pneg %p77
      $region22: #{gen_forward.9} parent=15 // pred_check_branch
        %146 = sbr.rel (%p144) target = $region24
      $region23: #{gen_forward.9} parent=15 // pred_region
        %s147 = smul.u32 16, %s17
        %p148 = scmp.lt.s32.totalorder %s15, 3
        %s149 = scalar_select %p148, %s15, 3
        %p150 = scmp.lt.s32.totalorder %s147, 15
        %s151 = scalar_select %p150, %s147, 15
        %s152 = smul.addr %s149, 512
        %s153 = sadd.s32 %s151, %s152
        %s154 = smul.addr %s153, 4
        %s155 = scalar_lea.vmem %s1, %s154
        %s156 = smul.u32 16, %s17
      $region24: #{gen_forward.9} parent=15 // pred_fallthru
        _
    $region16: #{gen_forward.9} parent=5 // pred_fallthru
      _
    %p157 = scmp.le.s32.totalorder 1, %s8
    %p158 = scmp.lt.s32.totalorder %s8, 5
    %p159 = pnand %p157, %p158
    %p160 = pneg %p159
    // Predicated region
    $region25: #{gen_forward.9} parent=5 // pred_check
      _
    $region26: #{gen_forward.9} parent=5 // pred_check_branch
      %162 = sbr.rel (%p159) target = $region28
    $region27: #{gen_forward.9} parent=5 // pred_region
      %s163 = ssub.s32 %s8, 1
      %p164 = scmp.lt.s32.totalorder %s18, 3
      %s165 = scalar_select %p164, %s18, 3
      %p166 = scmp.lt.s32.totalorder %s19, 0
      %s167 = scalar_select %p166, %s19, 0
      %s168 = smul.addr %s167, 2
      %s169 = smul.addr %s165, 2
      %s170 = sadd.s32 %s168, %s169
      %s171 = smul.addr %s170, 4
      %s172 = scalar_lea.vmem %s0, %s171
      %p173 = pneg %p55
      %p174 = pneg %p52
      %s175 = smul.u32 16, %s20
      %p176 = scmp.lt.s32.totalorder %s18, 3
      %s177 = scalar_select %p176, %s18, 3
      %p178 = scmp.lt.s32.totalorder %s175, 15
      %s179 = scalar_select %p178, %s175, 15
      %s180 = smul.addr %s177, 512
      %s181 = sadd.s32 %s179, %s180
      %s182 = smul.addr %s181, 4
      %s183 = scalar_lea.vmem %s1, %s182
      %p184 = pneg %p83
      %p185 = pneg %p80
      %p186 = pneg %p113
      %p187 = pneg %p110
      %s188 = smul.u32 16, %s20
      %p189 = scmp.lt.s32.totalorder %s18, 3
      %s190 = scalar_select %p189, %s18, 3
      %p191 = scmp.lt.s32.totalorder %s19, 0
      %s192 = scalar_select %p191, %s19, 0
      %p193 = scmp.lt.s32.totalorder %s188, 15
      %s194 = scalar_select %p193, %s188, 15
      %s195 = smul.addr %s192, 16
      %s196 = sadd.s32 %s194, %s195
      %s197 = smul.addr %s190, 16
      %s198 = sadd.s32 %s196, %s197
      %s199 = smul.addr %s198, 8
      %s200 = scalar_lea.vmem %s2, %s199
      %p201 = scmp.lt.s32.totalorder %s18, 3
      %s202 = scalar_select %p201, %s18, 3
      %p203 = scmp.lt.s32.totalorder %s19, 0
      %s204 = scalar_select %p203, %s19, 0
      %s205 = smul.addr %s204, 2
      %s206 = smul.addr %s202, 2
      %s207 = sadd.s32 %s205, %s206
      %s208 = smul.addr %s207, 4
      %s209 = scalar_lea.vmem %s0, %s208
      %s210 = smul.u32 16, %s20
      %p211 = scmp.lt.s32.totalorder %s18, 3
      %s212 = scalar_select %p211, %s18, 3
      %p213 = scmp.lt.s32.totalorder %s210, 15
      %s214 = scalar_select %p213, %s210, 15
      %s215 = smul.addr %s212, 512
      %s216 = sadd.s32 %s214, %s215
      %s217 = smul.addr %s216, 4
      %s218 = scalar_lea.vmem %s1, %s217
      %s219 = smul.u32 16, %s20
      %s220 = smul.u32 16, %s20
      %p221 = scmp.lt.s32.totalorder %s18, 3
      %s222 = scalar_select %p221, %s18, 3
      %p223 = scmp.lt.s32.totalorder %s19, 0
      %s224 = scalar_select %p223, %s19, 0
      %p225 = scmp.lt.s32.totalorder %s220, 15
      %s226 = scalar_select %p225, %s220, 15
      %s227 = smul.addr %s224, 16
      %s228 = sadd.s32 %s226, %s227
      %s229 = smul.addr %s222, 16
      %s230 = sadd.s32 %s228, %s229
      %s231 = smul.addr %s230, 8
      %s232 = scalar_lea.vmem %s2, %s231
      %s233 = smul.u32 16, %s20
      %v234 = vld [vmem:[%s209] sm:$0xff]
      %v235 = vld [vmem:[%s218] sm:$0xff]
      %v236 = vld [vmem:[%s218 + $0x8] sm:$0xff]
      %v237 = vld [vmem:[%s218 + $0x10] sm:$0xff]
      %v238 = vld [vmem:[%s218 + $0x18] sm:$0xff]
      %v239 = vld [vmem:[%s218 + $0x20] sm:$0xff]
      %v240 = vld [vmem:[%s218 + $0x28] sm:$0xff]
      %v241 = vld [vmem:[%s218 + $0x30] sm:$0xff]
      %v242 = vld [vmem:[%s218 + $0x38] sm:$0xff]
      %v243 = vld [vmem:[%s218 + $0x40] sm:$0xff]
      %v244 = vld [vmem:[%s218 + $0x48] sm:$0xff]
      %v245 = vld [vmem:[%s218 + $0x50] sm:$0xff]
      %v246 = vld [vmem:[%s218 + $0x58] sm:$0xff]
      %v247 = vld [vmem:[%s218 + $0x60] sm:$0xff]
      %v248 = vld [vmem:[%s218 + $0x68] sm:$0xff]
      %v249 = vld [vmem:[%s218 + $0x70] sm:$0xff]
      %v250 = vld [vmem:[%s218 + $0x78] sm:$0xff]
      %v251 = vld [vmem:[%s218 + $0x80] sm:$0xff]
      %v252 = vld [vmem:[%s218 + $0x88] sm:$0xff]
      %v253 = vld [vmem:[%s218 + $0x90] sm:$0xff]
      %v254 = vld [vmem:[%s218 + $0x98] sm:$0xff]
      %v255 = vld [vmem:[%s218 + $0xa0] sm:$0xff]
      %v256 = vld [vmem:[%s218 + $0xa8] sm:$0xff]
      %v257 = vld [vmem:[%s218 + $0xb0] sm:$0xff]
      %v258 = vld [vmem:[%s218 + $0xb8] sm:$0xff]
      %v259 = vld [vmem:[%s218 + $0xc0] sm:$0xff]
      %v260 = vld [vmem:[%s218 + $0xc8] sm:$0xff]
      %v261 = vld [vmem:[%s218 + $0xd0] sm:$0xff]
      %v262 = vld [vmem:[%s218 + $0xd8] sm:$0xff]
      %v263 = vld [vmem:[%s218 + $0xe0] sm:$0xff]
      %v264 = vld [vmem:[%s218 + $0xe8] sm:$0xff]
      %v265 = vld [vmem:[%s218 + $0xf0] sm:$0xff]
      %v266 = vld [vmem:[%s218 + $0xf8] sm:$0xff]
      %v267 = vld [vmem:[%s218 + $0x100] sm:$0xff]
      %v268 = vld [vmem:[%s218 + $0x108] sm:$0xff]
      %v269 = vld [vmem:[%s218 + $0x110] sm:$0xff]
      %v270 = vld [vmem:[%s218 + $0x118] sm:$0xff]
      %v271 = vld [vmem:[%s218 + $0x120] sm:$0xff]
      %v272 = vld [vmem:[%s218 + $0x128] sm:$0xff]
      %v273 = vld [vmem:[%s218 + $0x130] sm:$0xff]
      %v274 = vld [vmem:[%s218 + $0x138] sm:$0xff]
      %v275 = vld [vmem:[%s218 + $0x140] sm:$0xff]
      %v276 = vld [vmem:[%s218 + $0x148] sm:$0xff]
      %v277 = vld [vmem:[%s218 + $0x150] sm:$0xff]
      %v278 = vld [vmem:[%s218 + $0x158] sm:$0xff]
      %v279 = vld [vmem:[%s218 + $0x160] sm:$0xff]
      %v280 = vld [vmem:[%s218 + $0x168] sm:$0xff]
      %v281 = vld [vmem:[%s218 + $0x170] sm:$0xff]
      %v282 = vld [vmem:[%s218 + $0x178] sm:$0xff]
      %v283 = vld [vmem:[%s218 + $0x180] sm:$0xff]
      %v284 = vld [vmem:[%s218 + $0x188] sm:$0xff]
      %v285 = vld [vmem:[%s218 + $0x190] sm:$0xff]
      %v286 = vld [vmem:[%s218 + $0x198] sm:$0xff]
      %v287 = vld [vmem:[%s218 + $0x1a0] sm:$0xff]
      %v288 = vld [vmem:[%s218 + $0x1a8] sm:$0xff]
      %v289 = vld [vmem:[%s218 + $0x1b0] sm:$0xff]
      %v290 = vld [vmem:[%s218 + $0x1b8] sm:$0xff]
      %v291 = vld [vmem:[%s218 + $0x1c0] sm:$0xff]
      %v292 = vld [vmem:[%s218 + $0x1c8] sm:$0xff]
      %v293 = vld [vmem:[%s218 + $0x1d0] sm:$0xff]
      %v294 = vld [vmem:[%s218 + $0x1d8] sm:$0xff]
      %v295 = vld [vmem:[%s218 + $0x1e0] sm:$0xff]
      %v296 = vld [vmem:[%s218 + $0x1e8] sm:$0xff]
      %v297 = vld [vmem:[%s218 + $0x1f0] sm:$0xff]
      %v298 = vld [vmem:[%s218 + $0x1f8] sm:$0xff]
      %v299 = vld [vmem:[%s218 + $0x200] sm:$0xff]
      %v300 = vld [vmem:[%s218 + $0x208] sm:$0xff]
      %v301 = vld [vmem:[%s218 + $0x210] sm:$0xff]
      %v302 = vld [vmem:[%s218 + $0x218] sm:$0xff]
      %v303 = vld [vmem:[%s218 + $0x220] sm:$0xff]
      %v304 = vld [vmem:[%s218 + $0x228] sm:$0xff]
      %v305 = vld [vmem:[%s218 + $0x230] sm:$0xff]
      %v306 = vld [vmem:[%s218 + $0x238] sm:$0xff]
      %v307 = vld [vmem:[%s218 + $0x240] sm:$0xff]
      %v308 = vld [vmem:[%s218 + $0x248] sm:$0xff]
      %v309 = vld [vmem:[%s218 + $0x250] sm:$0xff]
      %v310 = vld [vmem:[%s218 + $0x258] sm:$0xff]
      %v311 = vld [vmem:[%s218 + $0x260] sm:$0xff]
      %v312 = vld [vmem:[%s218 + $0x268] sm:$0xff]
      %v313 = vld [vmem:[%s218 + $0x270] sm:$0xff]
      %v314 = vld [vmem:[%s218 + $0x278] sm:$0xff]
      %v315 = vld [vmem:[%s218 + $0x280] sm:$0xff]
      %v316 = vld [vmem:[%s218 + $0x288] sm:$0xff]
      %v317 = vld [vmem:[%s218 + $0x290] sm:$0xff]
      %v318 = vld [vmem:[%s218 + $0x298] sm:$0xff]
      %v319 = vld [vmem:[%s218 + $0x2a0] sm:$0xff]
      %v320 = vld [vmem:[%s218 + $0x2a8] sm:$0xff]
      %v321 = vld [vmem:[%s218 + $0x2b0] sm:$0xff]
      %v322 = vld [vmem:[%s218 + $0x2b8] sm:$0xff]
      %v323 = vld [vmem:[%s218 + $0x2c0] sm:$0xff]
      %v324 = vld [vmem:[%s218 + $0x2c8] sm:$0xff]
      %v325 = vld [vmem:[%s218 + $0x2d0] sm:$0xff]
      %v326 = vld [vmem:[%s218 + $0x2d8] sm:$0xff]
      %v327 = vld [vmem:[%s218 + $0x2e0] sm:$0xff]
      %v328 = vld [vmem:[%s218 + $0x2e8] sm:$0xff]
      %v329 = vld [vmem:[%s218 + $0x2f0] sm:$0xff]
      %v330 = vld [vmem:[%s218 + $0x2f8] sm:$0xff]
      %v331 = vld [vmem:[%s218 + $0x300] sm:$0xff]
      %v332 = vld [vmem:[%s218 + $0x308] sm:$0xff]
      %v333 = vld [vmem:[%s218 + $0x310] sm:$0xff]
      %v334 = vld [vmem:[%s218 + $0x318] sm:$0xff]
      %v335 = vld [vmem:[%s218 + $0x320] sm:$0xff]
      %v336 = vld [vmem:[%s218 + $0x328] sm:$0xff]
      %v337 = vld [vmem:[%s218 + $0x330] sm:$0xff]
      %v338 = vld [vmem:[%s218 + $0x338] sm:$0xff]
      %v339 = vld [vmem:[%s218 + $0x340] sm:$0xff]
      %v340 = vld [vmem:[%s218 + $0x348] sm:$0xff]
      %v341 = vld [vmem:[%s218 + $0x350] sm:$0xff]
      %v342 = vld [vmem:[%s218 + $0x358] sm:$0xff]
      %v343 = vld [vmem:[%s218 + $0x360] sm:$0xff]
      %v344 = vld [vmem:[%s218 + $0x368] sm:$0xff]
      %v345 = vld [vmem:[%s218 + $0x370] sm:$0xff]
      %v346 = vld [vmem:[%s218 + $0x378] sm:$0xff]
      %v347 = vld [vmem:[%s218 + $0x380] sm:$0xff]
      %v348 = vld [vmem:[%s218 + $0x388] sm:$0xff]
      %v349 = vld [vmem:[%s218 + $0x390] sm:$0xff]
      %v350 = vld [vmem:[%s218 + $0x398] sm:$0xff]
      %v351 = vld [vmem:[%s218 + $0x3a0] sm:$0xff]
      %v352 = vld [vmem:[%s218 + $0x3a8] sm:$0xff]
      %v353 = vld [vmem:[%s218 + $0x3b0] sm:$0xff]
      %v354 = vld [vmem:[%s218 + $0x3b8] sm:$0xff]
      %v355 = vld [vmem:[%s218 + $0x3c0] sm:$0xff]
      %v356 = vld [vmem:[%s218 + $0x3c8] sm:$0xff]
      %v357 = vld [vmem:[%s218 + $0x3d0] sm:$0xff]
      %v358 = vld [vmem:[%s218 + $0x3d8] sm:$0xff]
      %v359 = vld [vmem:[%s218 + $0x3e0] sm:$0xff]
      %v360 = vld [vmem:[%s218 + $0x3e8] sm:$0xff]
      %v361 = vld [vmem:[%s218 + $0x3f0] sm:$0xff]
      %v362 = vld [vmem:[%s218 + $0x3f8] sm:$0xff]
      %v363 = vld [vmem:[%s218 + $0x400] sm:$0xff]
      %v364 = vld [vmem:[%s218 + $0x408] sm:$0xff]
      %v365 = vld [vmem:[%s218 + $0x410] sm:$0xff]
      %v366 = vld [vmem:[%s218 + $0x418] sm:$0xff]
      %v367 = vld [vmem:[%s218 + $0x420] sm:$0xff]
      %v368 = vld [vmem:[%s218 + $0x428] sm:$0xff]
      %v369 = vld [vmem:[%s218 + $0x430] sm:$0xff]
      %v370 = vld [vmem:[%s218 + $0x438] sm:$0xff]
      %v371 = vld [vmem:[%s218 + $0x440] sm:$0xff]
      %v372 = vld [vmem:[%s218 + $0x448] sm:$0xff]
      %v373 = vld [vmem:[%s218 + $0x450] sm:$0xff]
      %v374 = vld [vmem:[%s218 + $0x458] sm:$0xff]
      %v375 = vld [vmem:[%s218 + $0x460] sm:$0xff]
      %v376 = vld [vmem:[%s218 + $0x468] sm:$0xff]
      %v377 = vld [vmem:[%s218 + $0x470] sm:$0xff]
      %v378 = vld [vmem:[%s218 + $0x478] sm:$0xff]
      %v379 = vld [vmem:[%s218 + $0x480] sm:$0xff]
      %v380 = vld [vmem:[%s218 + $0x488] sm:$0xff]
      %v381 = vld [vmem:[%s218 + $0x490] sm:$0xff]
      %v382 = vld [vmem:[%s218 + $0x498] sm:$0xff]
      %v383 = vld [vmem:[%s218 + $0x4a0] sm:$0xff]
      %v384 = vld [vmem:[%s218 + $0x4a8] sm:$0xff]
      %v385 = vld [vmem:[%s218 + $0x4b0] sm:$0xff]
      %v386 = vld [vmem:[%s218 + $0x4b8] sm:$0xff]
      %v387 = vld [vmem:[%s218 + $0x4c0] sm:$0xff]
      %v388 = vld [vmem:[%s218 + $0x4c8] sm:$0xff]
      %v389 = vld [vmem:[%s218 + $0x4d0] sm:$0xff]
      %v390 = vld [vmem:[%s218 + $0x4d8] sm:$0xff]
      %v391 = vld [vmem:[%s218 + $0x4e0] sm:$0xff]
      %v392 = vld [vmem:[%s218 + $0x4e8] sm:$0xff]
      %v393 = vld [vmem:[%s218 + $0x4f0] sm:$0xff]
      %v394 = vld [vmem:[%s218 + $0x4f8] sm:$0xff]
      %v395 = vld [vmem:[%s218 + $0x500] sm:$0xff]
      %v396 = vld [vmem:[%s218 + $0x508] sm:$0xff]
      %v397 = vld [vmem:[%s218 + $0x510] sm:$0xff]
      %v398 = vld [vmem:[%s218 + $0x518] sm:$0xff]
      %v399 = vld [vmem:[%s218 + $0x520] sm:$0xff]
      %v400 = vld [vmem:[%s218 + $0x528] sm:$0xff]
      %v401 = vld [vmem:[%s218 + $0x530] sm:$0xff]
      %v402 = vld [vmem:[%s218 + $0x538] sm:$0xff]
      %v403 = vld [vmem:[%s218 + $0x540] sm:$0xff]
      %v404 = vld [vmem:[%s218 + $0x548] sm:$0xff]
      %v405 = vld [vmem:[%s218 + $0x550] sm:$0xff]
      %v406 = vld [vmem:[%s218 + $0x558] sm:$0xff]
      %v407 = vld [vmem:[%s218 + $0x560] sm:$0xff]
      %v408 = vld [vmem:[%s218 + $0x568] sm:$0xff]
      %v409 = vld [vmem:[%s218 + $0x570] sm:$0xff]
      %v410 = vld [vmem:[%s218 + $0x578] sm:$0xff]
      %v411 = vld [vmem:[%s218 + $0x580] sm:$0xff]
      %v412 = vld [vmem:[%s218 + $0x588] sm:$0xff]
      %v413 = vld [vmem:[%s218 + $0x590] sm:$0xff]
      %v414 = vld [vmem:[%s218 + $0x598] sm:$0xff]
      %v415 = vld [vmem:[%s218 + $0x5a0] sm:$0xff]
      %v416 = vld [vmem:[%s218 + $0x5a8] sm:$0xff]
      %v417 = vld [vmem:[%s218 + $0x5b0] sm:$0xff]
      %v418 = vld [vmem:[%s218 + $0x5b8] sm:$0xff]
      %v419 = vld [vmem:[%s218 + $0x5c0] sm:$0xff]
      %v420 = vld [vmem:[%s218 + $0x5c8] sm:$0xff]
      %v421 = vld [vmem:[%s218 + $0x5d0] sm:$0xff]
      %v422 = vld [vmem:[%s218 + $0x5d8] sm:$0xff]
      %v423 = vld [vmem:[%s218 + $0x5e0] sm:$0xff]
      %v424 = vld [vmem:[%s218 + $0x5e8] sm:$0xff]
      %v425 = vld [vmem:[%s218 + $0x5f0] sm:$0xff]
      %v426 = vld [vmem:[%s218 + $0x5f8] sm:$0xff]
      %v427 = vld [vmem:[%s218 + $0x600] sm:$0xff]
      %v428 = vld [vmem:[%s218 + $0x608] sm:$0xff]
      %v429 = vld [vmem:[%s218 + $0x610] sm:$0xff]
      %v430 = vld [vmem:[%s218 + $0x618] sm:$0xff]
      %v431 = vld [vmem:[%s218 + $0x620] sm:$0xff]
      %v432 = vld [vmem:[%s218 + $0x628] sm:$0xff]
      %v433 = vld [vmem:[%s218 + $0x630] sm:$0xff]
      %v434 = vld [vmem:[%s218 + $0x638] sm:$0xff]
      %v435 = vld [vmem:[%s218 + $0x640] sm:$0xff]
      %v436 = vld [vmem:[%s218 + $0x648] sm:$0xff]
      %v437 = vld [vmem:[%s218 + $0x650] sm:$0xff]
      %v438 = vld [vmem:[%s218 + $0x658] sm:$0xff]
      %v439 = vld [vmem:[%s218 + $0x660] sm:$0xff]
      %v440 = vld [vmem:[%s218 + $0x668] sm:$0xff]
      %v441 = vld [vmem:[%s218 + $0x670] sm:$0xff]
      %v442 = vld [vmem:[%s218 + $0x678] sm:$0xff]
      %v443 = vld [vmem:[%s218 + $0x680] sm:$0xff]
      %v444 = vld [vmem:[%s218 + $0x688] sm:$0xff]
      %v445 = vld [vmem:[%s218 + $0x690] sm:$0xff]
      %v446 = vld [vmem:[%s218 + $0x698] sm:$0xff]
      %v447 = vld [vmem:[%s218 + $0x6a0] sm:$0xff]
      %v448 = vld [vmem:[%s218 + $0x6a8] sm:$0xff]
      %v449 = vld [vmem:[%s218 + $0x6b0] sm:$0xff]
      %v450 = vld [vmem:[%s218 + $0x6b8] sm:$0xff]
      %v451 = vld [vmem:[%s218 + $0x6c0] sm:$0xff]
      %v452 = vld [vmem:[%s218 + $0x6c8] sm:$0xff]
      %v453 = vld [vmem:[%s218 + $0x6d0] sm:$0xff]
      %v454 = vld [vmem:[%s218 + $0x6d8] sm:$0xff]
      %v455 = vld [vmem:[%s218 + $0x6e0] sm:$0xff]
      %v456 = vld [vmem:[%s218 + $0x6e8] sm:$0xff]
      %v457 = vld [vmem:[%s218 + $0x6f0] sm:$0xff]
      %v458 = vld [vmem:[%s218 + $0x6f8] sm:$0xff]
      %v459 = vld [vmem:[%s218 + $0x700] sm:$0xff]
      %v460 = vld [vmem:[%s218 + $0x708] sm:$0xff]
      %v461 = vld [vmem:[%s218 + $0x710] sm:$0xff]
      %v462 = vld [vmem:[%s218 + $0x718] sm:$0xff]
      %v463 = vld [vmem:[%s218 + $0x720] sm:$0xff]
      %v464 = vld [vmem:[%s218 + $0x728] sm:$0xff]
      %v465 = vld [vmem:[%s218 + $0x730] sm:$0xff]
      %v466 = vld [vmem:[%s218 + $0x738] sm:$0xff]
      %v467 = vld [vmem:[%s218 + $0x740] sm:$0xff]
      %v468 = vld [vmem:[%s218 + $0x748] sm:$0xff]
      %v469 = vld [vmem:[%s218 + $0x750] sm:$0xff]
      %v470 = vld [vmem:[%s218 + $0x758] sm:$0xff]
      %v471 = vld [vmem:[%s218 + $0x760] sm:$0xff]
      %v472 = vld [vmem:[%s218 + $0x768] sm:$0xff]
      %v473 = vld [vmem:[%s218 + $0x770] sm:$0xff]
      %v474 = vld [vmem:[%s218 + $0x778] sm:$0xff]
      %v475 = vld [vmem:[%s218 + $0x780] sm:$0xff]
      %v476 = vld [vmem:[%s218 + $0x788] sm:$0xff]
      %v477 = vld [vmem:[%s218 + $0x790] sm:$0xff]
      %v478 = vld [vmem:[%s218 + $0x798] sm:$0xff]
      %v479 = vld [vmem:[%s218 + $0x7a0] sm:$0xff]
      %v480 = vld [vmem:[%s218 + $0x7a8] sm:$0xff]
      %v481 = vld [vmem:[%s218 + $0x7b0] sm:$0xff]
      %v482 = vld [vmem:[%s218 + $0x7b8] sm:$0xff]
      %v483 = vld [vmem:[%s218 + $0x7c0] sm:$0xff]
      %v484 = vld [vmem:[%s218 + $0x7c8] sm:$0xff]
      %v485 = vld [vmem:[%s218 + $0x7d0] sm:$0xff]
      %v486 = vld [vmem:[%s218 + $0x7d8] sm:$0xff]
      %v487 = vld [vmem:[%s218 + $0x7e0] sm:$0xff]
      %v488 = vld [vmem:[%s218 + $0x7e8] sm:$0xff]
      %v489 = vld [vmem:[%s218 + $0x7f0] sm:$0xff]
      %v490 = vld [vmem:[%s218 + $0x7f8] sm:$0xff]
      %v492 = vunpack.c.l.b16 %v234
      %v493 = vunpack.c.h.b16 %v234
      %v494 = vpack.c.b16 %v492, %v492
      %v495 = vpack.c.b16 %v493, %v493
      %v754 = vunpack.c.l.b16 %v235
      %v755 = vunpack.c.h.b16 %v235
      %v756 = vunpack.c.l.b16 %v236
      %v757 = vunpack.c.h.b16 %v236
      %v758 = vunpack.c.l.b16 %v237
      %v759 = vunpack.c.h.b16 %v237
      %v760 = vunpack.c.l.b16 %v238
      %v761 = vunpack.c.h.b16 %v238
      %v762 = vunpack.c.l.b16 %v239
      %v763 = vunpack.c.h.b16 %v239
      %v764 = vunpack.c.l.b16 %v240
      %v765 = vunpack.c.h.b16 %v240
      %v766 = vunpack.c.l.b16 %v241
      %v767 = vunpack.c.h.b16 %v241
      %v768 = vunpack.c.l.b16 %v242
      %v769 = vunpack.c.h.b16 %v242
      %v770 = vunpack.c.l.b16 %v243
      %v771 = vunpack.c.h.b16 %v243
      %v772 = vunpack.c.l.b16 %v244
      %v773 = vunpack.c.h.b16 %v244
      %v774 = vunpack.c.l.b16 %v245
      %v775 = vunpack.c.h.b16 %v245
      %v776 = vunpack.c.l.b16 %v246
      %v777 = vunpack.c.h.b16 %v246
      %v778 = vunpack.c.l.b16 %v247
      %v779 = vunpack.c.h.b16 %v247
      %v780 = vunpack.c.l.b16 %v248
      %v781 = vunpack.c.h.b16 %v248
      %v782 = vunpack.c.l.b16 %v249
      %v783 = vunpack.c.h.b16 %v249
      %v784 = vunpack.c.l.b16 %v250
      %v785 = vunpack.c.h.b16 %v250
      %v786 = vunpack.c.l.b16 %v251
      %v787 = vunpack.c.h.b16 %v251
      %v788 = vunpack.c.l.b16 %v252
      %v789 = vunpack.c.h.b16 %v252
      %v790 = vunpack.c.l.b16 %v253
      %v791 = vunpack.c.h.b16 %v253
      %v792 = vunpack.c.l.b16 %v254
      %v793 = vunpack.c.h.b16 %v254
      %v794 = vunpack.c.l.b16 %v255
      %v795 = vunpack.c.h.b16 %v255
      %v796 = vunpack.c.l.b16 %v256
      %v797 = vunpack.c.h.b16 %v256
      %v798 = vunpack.c.l.b16 %v257
      %v799 = vunpack.c.h.b16 %v257
      %v800 = vunpack.c.l.b16 %v258
      %v801 = vunpack.c.h.b16 %v258
      %v802 = vunpack.c.l.b16 %v259
      %v803 = vunpack.c.h.b16 %v259
      %v804 = vunpack.c.l.b16 %v260
      %v805 = vunpack.c.h.b16 %v260
      %v806 = vunpack.c.l.b16 %v261
      %v807 = vunpack.c.h.b16 %v261
      %v808 = vunpack.c.l.b16 %v262
      %v809 = vunpack.c.h.b16 %v262
      %v810 = vunpack.c.l.b16 %v263
      %v811 = vunpack.c.h.b16 %v263
      %v812 = vunpack.c.l.b16 %v264
      %v813 = vunpack.c.h.b16 %v264
      %v814 = vunpack.c.l.b16 %v265
      %v815 = vunpack.c.h.b16 %v265
      %v816 = vunpack.c.l.b16 %v266
      %v817 = vunpack.c.h.b16 %v266
      %v818 = vunpack.c.l.b16 %v267
      %v819 = vunpack.c.h.b16 %v267
      %v820 = vunpack.c.l.b16 %v268
      %v821 = vunpack.c.h.b16 %v268
      %v822 = vunpack.c.l.b16 %v269
      %v823 = vunpack.c.h.b16 %v269
      %v824 = vunpack.c.l.b16 %v270
      %v825 = vunpack.c.h.b16 %v270
      %v826 = vunpack.c.l.b16 %v271
      %v827 = vunpack.c.h.b16 %v271
      %v828 = vunpack.c.l.b16 %v272
      %v829 = vunpack.c.h.b16 %v272
      %v830 = vunpack.c.l.b16 %v273
      %v831 = vunpack.c.h.b16 %v273
      %v832 = vunpack.c.l.b16 %v274
      %v833 = vunpack.c.h.b16 %v274
      %v834 = vunpack.c.l.b16 %v275
      %v835 = vunpack.c.h.b16 %v275
      %v836 = vunpack.c.l.b16 %v276
      %v837 = vunpack.c.h.b16 %v276
      %v838 = vunpack.c.l.b16 %v277
      %v839 = vunpack.c.h.b16 %v277
      %v840 = vunpack.c.l.b16 %v278
      %v841 = vunpack.c.h.b16 %v278
      %v842 = vunpack.c.l.b16 %v279
      %v843 = vunpack.c.h.b16 %v279
      %v844 = vunpack.c.l.b16 %v280
      %v845 = vunpack.c.h.b16 %v280
      %v846 = vunpack.c.l.b16 %v281
      %v847 = vunpack.c.h.b16 %v281
      %v848 = vunpack.c.l.b16 %v282
      %v849 = vunpack.c.h.b16 %v282
      %v850 = vunpack.c.l.b16 %v283
      %v851 = vunpack.c.h.b16 %v283
      %v852 = vunpack.c.l.b16 %v284
      %v853 = vunpack.c.h.b16 %v284
      %v854 = vunpack.c.l.b16 %v285
      %v855 = vunpack.c.h.b16 %v285
      %v856 = vunpack.c.l.b16 %v286
      %v857 = vunpack.c.h.b16 %v286
      %v858 = vunpack.c.l.b16 %v287
      %v859 = vunpack.c.h.b16 %v287
      %v860 = vunpack.c.l.b16 %v288
      %v861 = vunpack.c.h.b16 %v288
      %v862 = vunpack.c.l.b16 %v289
      %v863 = vunpack.c.h.b16 %v289
      %v864 = vunpack.c.l.b16 %v290
      %v865 = vunpack.c.h.b16 %v290
      %v866 = vunpack.c.l.b16 %v291
      %v867 = vunpack.c.h.b16 %v291
      %v868 = vunpack.c.l.b16 %v292
      %v869 = vunpack.c.h.b16 %v292
      %v870 = vunpack.c.l.b16 %v293
      %v871 = vunpack.c.h.b16 %v293
      %v872 = vunpack.c.l.b16 %v294
      %v873 = vunpack.c.h.b16 %v294
      %v874 = vunpack.c.l.b16 %v295
      %v875 = vunpack.c.h.b16 %v295
      %v876 = vunpack.c.l.b16 %v296
      %v877 = vunpack.c.h.b16 %v296
      %v878 = vunpack.c.l.b16 %v297
      %v879 = vunpack.c.h.b16 %v297
      %v880 = vunpack.c.l.b16 %v298
      %v881 = vunpack.c.h.b16 %v298
      %v882 = vunpack.c.l.b16 %v299
      %v883 = vunpack.c.h.b16 %v299
      %v884 = vunpack.c.l.b16 %v300
      %v885 = vunpack.c.h.b16 %v300
      %v886 = vunpack.c.l.b16 %v301
      %v887 = vunpack.c.h.b16 %v301
      %v888 = vunpack.c.l.b16 %v302
      %v889 = vunpack.c.h.b16 %v302
      %v890 = vunpack.c.l.b16 %v303
      %v891 = vunpack.c.h.b16 %v303
      %v892 = vunpack.c.l.b16 %v304
      %v893 = vunpack.c.h.b16 %v304
      %v894 = vunpack.c.l.b16 %v305
      %v895 = vunpack.c.h.b16 %v305
      %v896 = vunpack.c.l.b16 %v306
      %v897 = vunpack.c.h.b16 %v306
      %v898 = vunpack.c.l.b16 %v307
      %v899 = vunpack.c.h.b16 %v307
      %v900 = vunpack.c.l.b16 %v308
      %v901 = vunpack.c.h.b16 %v308
      %v902 = vunpack.c.l.b16 %v309
      %v903 = vunpack.c.h.b16 %v309
      %v904 = vunpack.c.l.b16 %v310
      %v905 = vunpack.c.h.b16 %v310
      %v906 = vunpack.c.l.b16 %v311
      %v907 = vunpack.c.h.b16 %v311
      %v908 = vunpack.c.l.b16 %v312
      %v909 = vunpack.c.h.b16 %v312
      %v910 = vunpack.c.l.b16 %v313
      %v911 = vunpack.c.h.b16 %v313
      %v912 = vunpack.c.l.b16 %v314
      %v913 = vunpack.c.h.b16 %v314
      %v914 = vunpack.c.l.b16 %v315
      %v915 = vunpack.c.h.b16 %v315
      %v916 = vunpack.c.l.b16 %v316
      %v917 = vunpack.c.h.b16 %v316
      %v918 = vunpack.c.l.b16 %v317
      %v919 = vunpack.c.h.b16 %v317
      %v920 = vunpack.c.l.b16 %v318
      %v921 = vunpack.c.h.b16 %v318
      %v922 = vunpack.c.l.b16 %v319
      %v923 = vunpack.c.h.b16 %v319
      %v924 = vunpack.c.l.b16 %v320
      %v925 = vunpack.c.h.b16 %v320
      %v926 = vunpack.c.l.b16 %v321
      %v927 = vunpack.c.h.b16 %v321
      %v928 = vunpack.c.l.b16 %v322
      %v929 = vunpack.c.h.b16 %v322
      %v930 = vunpack.c.l.b16 %v323
      %v931 = vunpack.c.h.b16 %v323
      %v932 = vunpack.c.l.b16 %v324
      %v933 = vunpack.c.h.b16 %v324
      %v934 = vunpack.c.l.b16 %v325
      %v935 = vunpack.c.h.b16 %v325
      %v936 = vunpack.c.l.b16 %v326
      %v937 = vunpack.c.h.b16 %v326
      %v938 = vunpack.c.l.b16 %v327
      %v939 = vunpack.c.h.b16 %v327
      %v940 = vunpack.c.l.b16 %v328
      %v941 = vunpack.c.h.b16 %v328
      %v942 = vunpack.c.l.b16 %v329
      %v943 = vunpack.c.h.b16 %v329
      %v944 = vunpack.c.l.b16 %v330
      %v945 = vunpack.c.h.b16 %v330
      %v946 = vunpack.c.l.b16 %v331
      %v947 = vunpack.c.h.b16 %v331
      %v948 = vunpack.c.l.b16 %v332
      %v949 = vunpack.c.h.b16 %v332
      %v950 = vunpack.c.l.b16 %v333
      %v951 = vunpack.c.h.b16 %v333
      %v952 = vunpack.c.l.b16 %v334
      %v953 = vunpack.c.h.b16 %v334
      %v954 = vunpack.c.l.b16 %v335
      %v955 = vunpack.c.h.b16 %v335
      %v956 = vunpack.c.l.b16 %v336
      %v957 = vunpack.c.h.b16 %v336
      %v958 = vunpack.c.l.b16 %v337
      %v959 = vunpack.c.h.b16 %v337
      %v960 = vunpack.c.l.b16 %v338
      %v961 = vunpack.c.h.b16 %v338
      %v962 = vunpack.c.l.b16 %v339
      %v963 = vunpack.c.h.b16 %v339
      %v964 = vunpack.c.l.b16 %v340
      %v965 = vunpack.c.h.b16 %v340
      %v966 = vunpack.c.l.b16 %v341
      %v967 = vunpack.c.h.b16 %v341
      %v968 = vunpack.c.l.b16 %v342
      %v969 = vunpack.c.h.b16 %v342
      %v970 = vunpack.c.l.b16 %v343
      %v971 = vunpack.c.h.b16 %v343
      %v972 = vunpack.c.l.b16 %v344
      %v973 = vunpack.c.h.b16 %v344
      %v974 = vunpack.c.l.b16 %v345
      %v975 = vunpack.c.h.b16 %v345
      %v976 = vunpack.c.l.b16 %v346
      %v977 = vunpack.c.h.b16 %v346
      %v978 = vunpack.c.l.b16 %v347
      %v979 = vunpack.c.h.b16 %v347
      %v980 = vunpack.c.l.b16 %v348
      %v981 = vunpack.c.h.b16 %v348
      %v982 = vunpack.c.l.b16 %v349
      %v983 = vunpack.c.h.b16 %v349
      %v984 = vunpack.c.l.b16 %v350
      %v985 = vunpack.c.h.b16 %v350
      %v986 = vunpack.c.l.b16 %v351
      %v987 = vunpack.c.h.b16 %v351
      %v988 = vunpack.c.l.b16 %v352
      %v989 = vunpack.c.h.b16 %v352
      %v990 = vunpack.c.l.b16 %v353
      %v991 = vunpack.c.h.b16 %v353
      %v992 = vunpack.c.l.b16 %v354
      %v993 = vunpack.c.h.b16 %v354
      %v994 = vunpack.c.l.b16 %v355
      %v995 = vunpack.c.h.b16 %v355
      %v996 = vunpack.c.l.b16 %v356
      %v997 = vunpack.c.h.b16 %v356
      %v998 = vunpack.c.l.b16 %v357
      %v999 = vunpack.c.h.b16 %v357
      %v1000 = vunpack.c.l.b16 %v358
      %v1001 = vunpack.c.h.b16 %v358
      %v1002 = vunpack.c.l.b16 %v359
      %v1003 = vunpack.c.h.b16 %v359
      %v1004 = vunpack.c.l.b16 %v360
      %v1005 = vunpack.c.h.b16 %v360
      %v1006 = vunpack.c.l.b16 %v361
      %v1007 = vunpack.c.h.b16 %v361
      %v1008 = vunpack.c.l.b16 %v362
      %v1009 = vunpack.c.h.b16 %v362
      %v1010 = vunpack.c.l.b16 %v363
      %v1011 = vunpack.c.h.b16 %v363
      %v1012 = vunpack.c.l.b16 %v364
      %v1013 = vunpack.c.h.b16 %v364
      %v1014 = vunpack.c.l.b16 %v365
      %v1015 = vunpack.c.h.b16 %v365
      %v1016 = vunpack.c.l.b16 %v366
      %v1017 = vunpack.c.h.b16 %v366
      %v1018 = vunpack.c.l.b16 %v367
      %v1019 = vunpack.c.h.b16 %v367
      %v1020 = vunpack.c.l.b16 %v368
      %v1021 = vunpack.c.h.b16 %v368
      %v1022 = vunpack.c.l.b16 %v369
      %v1023 = vunpack.c.h.b16 %v369
      %v1024 = vunpack.c.l.b16 %v370
      %v1025 = vunpack.c.h.b16 %v370
      %v1026 = vunpack.c.l.b16 %v371
      %v1027 = vunpack.c.h.b16 %v371
      %v1028 = vunpack.c.l.b16 %v372
      %v1029 = vunpack.c.h.b16 %v372
      %v1030 = vunpack.c.l.b16 %v373
      %v1031 = vunpack.c.h.b16 %v373
      %v1032 = vunpack.c.l.b16 %v374
      %v1033 = vunpack.c.h.b16 %v374
      %v1034 = vunpack.c.l.b16 %v375
      %v1035 = vunpack.c.h.b16 %v375
      %v1036 = vunpack.c.l.b16 %v376
      %v1037 = vunpack.c.h.b16 %v376
      %v1038 = vunpack.c.l.b16 %v377
      %v1039 = vunpack.c.h.b16 %v377
      %v1040 = vunpack.c.l.b16 %v378
      %v1041 = vunpack.c.h.b16 %v378
      %v1042 = vunpack.c.l.b16 %v379
      %v1043 = vunpack.c.h.b16 %v379
      %v1044 = vunpack.c.l.b16 %v380
      %v1045 = vunpack.c.h.b16 %v380
      %v1046 = vunpack.c.l.b16 %v381
      %v1047 = vunpack.c.h.b16 %v381
      %v1048 = vunpack.c.l.b16 %v382
      %v1049 = vunpack.c.h.b16 %v382
      %v1050 = vunpack.c.l.b16 %v383
      %v1051 = vunpack.c.h.b16 %v383
      %v1052 = vunpack.c.l.b16 %v384
      %v1053 = vunpack.c.h.b16 %v384
      %v1054 = vunpack.c.l.b16 %v385
      %v1055 = vunpack.c.h.b16 %v385
      %v1056 = vunpack.c.l.b16 %v386
      %v1057 = vunpack.c.h.b16 %v386
      %v1058 = vunpack.c.l.b16 %v387
      %v1059 = vunpack.c.h.b16 %v387
      %v1060 = vunpack.c.l.b16 %v388
      %v1061 = vunpack.c.h.b16 %v388
      %v1062 = vunpack.c.l.b16 %v389
      %v1063 = vunpack.c.h.b16 %v389
      %v1064 = vunpack.c.l.b16 %v390
      %v1065 = vunpack.c.h.b16 %v390
      %v1066 = vunpack.c.l.b16 %v391
      %v1067 = vunpack.c.h.b16 %v391
      %v1068 = vunpack.c.l.b16 %v392
      %v1069 = vunpack.c.h.b16 %v392
      %v1070 = vunpack.c.l.b16 %v393
      %v1071 = vunpack.c.h.b16 %v393
      %v1072 = vunpack.c.l.b16 %v394
      %v1073 = vunpack.c.h.b16 %v394
      %v1074 = vunpack.c.l.b16 %v395
      %v1075 = vunpack.c.h.b16 %v395
      %v1076 = vunpack.c.l.b16 %v396
      %v1077 = vunpack.c.h.b16 %v396
      %v1078 = vunpack.c.l.b16 %v397
      %v1079 = vunpack.c.h.b16 %v397
      %v1080 = vunpack.c.l.b16 %v398
      %v1081 = vunpack.c.h.b16 %v398
      %v1082 = vunpack.c.l.b16 %v399
      %v1083 = vunpack.c.h.b16 %v399
      %v1084 = vunpack.c.l.b16 %v400
      %v1085 = vunpack.c.h.b16 %v400
      %v1086 = vunpack.c.l.b16 %v401
      %v1087 = vunpack.c.h.b16 %v401
      %v1088 = vunpack.c.l.b16 %v402
      %v1089 = vunpack.c.h.b16 %v402
      %v1090 = vunpack.c.l.b16 %v403
      %v1091 = vunpack.c.h.b16 %v403
      %v1092 = vunpack.c.l.b16 %v404
      %v1093 = vunpack.c.h.b16 %v404
      %v1094 = vunpack.c.l.b16 %v405
      %v1095 = vunpack.c.h.b16 %v405
      %v1096 = vunpack.c.l.b16 %v406
      %v1097 = vunpack.c.h.b16 %v406
      %v1098 = vunpack.c.l.b16 %v407
      %v1099 = vunpack.c.h.b16 %v407
      %v1100 = vunpack.c.l.b16 %v408
      %v1101 = vunpack.c.h.b16 %v408
      %v1102 = vunpack.c.l.b16 %v409
      %v1103 = vunpack.c.h.b16 %v409
      %v1104 = vunpack.c.l.b16 %v410
      %v1105 = vunpack.c.h.b16 %v410
      %v1106 = vunpack.c.l.b16 %v411
      %v1107 = vunpack.c.h.b16 %v411
      %v1108 = vunpack.c.l.b16 %v412
      %v1109 = vunpack.c.h.b16 %v412
      %v1110 = vunpack.c.l.b16 %v413
      %v1111 = vunpack.c.h.b16 %v413
      %v1112 = vunpack.c.l.b16 %v414
      %v1113 = vunpack.c.h.b16 %v414
      %v1114 = vunpack.c.l.b16 %v415
      %v1115 = vunpack.c.h.b16 %v415
      %v1116 = vunpack.c.l.b16 %v416
      %v1117 = vunpack.c.h.b16 %v416
      %v1118 = vunpack.c.l.b16 %v417
      %v1119 = vunpack.c.h.b16 %v417
      %v1120 = vunpack.c.l.b16 %v418
      %v1121 = vunpack.c.h.b16 %v418
      %v1122 = vunpack.c.l.b16 %v419
      %v1123 = vunpack.c.h.b16 %v419
      %v1124 = vunpack.c.l.b16 %v420
      %v1125 = vunpack.c.h.b16 %v420
      %v1126 = vunpack.c.l.b16 %v421
      %v1127 = vunpack.c.h.b16 %v421
      %v1128 = vunpack.c.l.b16 %v422
      %v1129 = vunpack.c.h.b16 %v422
      %v1130 = vunpack.c.l.b16 %v423
      %v1131 = vunpack.c.h.b16 %v423
      %v1132 = vunpack.c.l.b16 %v424
      %v1133 = vunpack.c.h.b16 %v424
      %v1134 = vunpack.c.l.b16 %v425
      %v1135 = vunpack.c.h.b16 %v425
      %v1136 = vunpack.c.l.b16 %v426
      %v1137 = vunpack.c.h.b16 %v426
      %v1138 = vunpack.c.l.b16 %v427
      %v1139 = vunpack.c.h.b16 %v427
      %v1140 = vunpack.c.l.b16 %v428
      %v1141 = vunpack.c.h.b16 %v428
      %v1142 = vunpack.c.l.b16 %v429
      %v1143 = vunpack.c.h.b16 %v429
      %v1144 = vunpack.c.l.b16 %v430
      %v1145 = vunpack.c.h.b16 %v430
      %v1146 = vunpack.c.l.b16 %v431
      %v1147 = vunpack.c.h.b16 %v431
      %v1148 = vunpack.c.l.b16 %v432
      %v1149 = vunpack.c.h.b16 %v432
      %v1150 = vunpack.c.l.b16 %v433
      %v1151 = vunpack.c.h.b16 %v433
      %v1152 = vunpack.c.l.b16 %v434
      %v1153 = vunpack.c.h.b16 %v434
      %v1154 = vunpack.c.l.b16 %v435
      %v1155 = vunpack.c.h.b16 %v435
      %v1156 = vunpack.c.l.b16 %v436
      %v1157 = vunpack.c.h.b16 %v436
      %v1158 = vunpack.c.l.b16 %v437
      %v1159 = vunpack.c.h.b16 %v437
      %v1160 = vunpack.c.l.b16 %v438
      %v1161 = vunpack.c.h.b16 %v438
      %v1162 = vunpack.c.l.b16 %v439
      %v1163 = vunpack.c.h.b16 %v439
      %v1164 = vunpack.c.l.b16 %v440
      %v1165 = vunpack.c.h.b16 %v440
      %v1166 = vunpack.c.l.b16 %v441
      %v1167 = vunpack.c.h.b16 %v441
      %v1168 = vunpack.c.l.b16 %v442
      %v1169 = vunpack.c.h.b16 %v442
      %v1170 = vunpack.c.l.b16 %v443
      %v1171 = vunpack.c.h.b16 %v443
      %v1172 = vunpack.c.l.b16 %v444
      %v1173 = vunpack.c.h.b16 %v444
      %v1174 = vunpack.c.l.b16 %v445
      %v1175 = vunpack.c.h.b16 %v445
      %v1176 = vunpack.c.l.b16 %v446
      %v1177 = vunpack.c.h.b16 %v446
      %v1178 = vunpack.c.l.b16 %v447
      %v1179 = vunpack.c.h.b16 %v447
      %v1180 = vunpack.c.l.b16 %v448
      %v1181 = vunpack.c.h.b16 %v448
      %v1182 = vunpack.c.l.b16 %v449
      %v1183 = vunpack.c.h.b16 %v449
      %v1184 = vunpack.c.l.b16 %v450
      %v1185 = vunpack.c.h.b16 %v450
      %v1186 = vunpack.c.l.b16 %v451
      %v1187 = vunpack.c.h.b16 %v451
      %v1188 = vunpack.c.l.b16 %v452
      %v1189 = vunpack.c.h.b16 %v452
      %v1190 = vunpack.c.l.b16 %v453
      %v1191 = vunpack.c.h.b16 %v453
      %v1192 = vunpack.c.l.b16 %v454
      %v1193 = vunpack.c.h.b16 %v454
      %v1194 = vunpack.c.l.b16 %v455
      %v1195 = vunpack.c.h.b16 %v455
      %v1196 = vunpack.c.l.b16 %v456
      %v1197 = vunpack.c.h.b16 %v456
      %v1198 = vunpack.c.l.b16 %v457
      %v1199 = vunpack.c.h.b16 %v457
      %v1200 = vunpack.c.l.b16 %v458
      %v1201 = vunpack.c.h.b16 %v458
      %v1202 = vunpack.c.l.b16 %v459
      %v1203 = vunpack.c.h.b16 %v459
      %v1204 = vunpack.c.l.b16 %v460
      %v1205 = vunpack.c.h.b16 %v460
      %v1206 = vunpack.c.l.b16 %v461
      %v1207 = vunpack.c.h.b16 %v461
      %v1208 = vunpack.c.l.b16 %v462
      %v1209 = vunpack.c.h.b16 %v462
      %v1210 = vunpack.c.l.b16 %v463
      %v1211 = vunpack.c.h.b16 %v463
      %v1212 = vunpack.c.l.b16 %v464
      %v1213 = vunpack.c.h.b16 %v464
      %v1214 = vunpack.c.l.b16 %v465
      %v1215 = vunpack.c.h.b16 %v465
      %v1216 = vunpack.c.l.b16 %v466
      %v1217 = vunpack.c.h.b16 %v466
      %v1218 = vunpack.c.l.b16 %v467
      %v1219 = vunpack.c.h.b16 %v467
      %v1220 = vunpack.c.l.b16 %v468
      %v1221 = vunpack.c.h.b16 %v468
      %v1222 = vunpack.c.l.b16 %v469
      %v1223 = vunpack.c.h.b16 %v469
      %v1224 = vunpack.c.l.b16 %v470
      %v1225 = vunpack.c.h.b16 %v470
      %v1226 = vunpack.c.l.b16 %v471
      %v1227 = vunpack.c.h.b16 %v471
      %v1228 = vunpack.c.l.b16 %v472
      %v1229 = vunpack.c.h.b16 %v472
      %v1230 = vunpack.c.l.b16 %v473
      %v1231 = vunpack.c.h.b16 %v473
      %v1232 = vunpack.c.l.b16 %v474
      %v1233 = vunpack.c.h.b16 %v474
      %v1234 = vunpack.c.l.b16 %v475
      %v1235 = vunpack.c.h.b16 %v475
      %v1236 = vunpack.c.l.b16 %v476
      %v1237 = vunpack.c.h.b16 %v476
      %v1238 = vunpack.c.l.b16 %v477
      %v1239 = vunpack.c.h.b16 %v477
      %v1240 = vunpack.c.l.b16 %v478
      %v1241 = vunpack.c.h.b16 %v478
      %v1242 = vunpack.c.l.b16 %v479
      %v1243 = vunpack.c.h.b16 %v479
      %v1244 = vunpack.c.l.b16 %v480
      %v1245 = vunpack.c.h.b16 %v480
      %v1246 = vunpack.c.l.b16 %v481
      %v1247 = vunpack.c.h.b16 %v481
      %v1248 = vunpack.c.l.b16 %v482
      %v1249 = vunpack.c.h.b16 %v482
      %v1250 = vunpack.c.l.b16 %v483
      %v1251 = vunpack.c.h.b16 %v483
      %v1252 = vunpack.c.l.b16 %v484
      %v1253 = vunpack.c.h.b16 %v484
      %v1254 = vunpack.c.l.b16 %v485
      %v1255 = vunpack.c.h.b16 %v485
      %v1256 = vunpack.c.l.b16 %v486
      %v1257 = vunpack.c.h.b16 %v486
      %v1258 = vunpack.c.l.b16 %v487
      %v1259 = vunpack.c.h.b16 %v487
      %v1260 = vunpack.c.l.b16 %v488
      %v1261 = vunpack.c.h.b16 %v488
      %v1262 = vunpack.c.l.b16 %v489
      %v1263 = vunpack.c.h.b16 %v489
      %v1264 = vunpack.c.l.b16 %v490
      %v1265 = vunpack.c.h.b16 %v490
      %v1266 = vpack.c.b16 %v770, %v754
      %v1267 = vpack.c.b16 %v771, %v755
      %v1268 = vpack.c.b16 %v772, %v756
      %v1269 = vpack.c.b16 %v773, %v757
      %v1270 = vpack.c.b16 %v774, %v758
      %v1271 = vpack.c.b16 %v775, %v759
      %v1272 = vpack.c.b16 %v776, %v760
      %v1273 = vpack.c.b16 %v777, %v761
      %v1274 = vpack.c.b16 %v778, %v762
      %v1275 = vpack.c.b16 %v779, %v763
      %v1276 = vpack.c.b16 %v780, %v764
      %v1277 = vpack.c.b16 %v781, %v765
      %v1278 = vpack.c.b16 %v782, %v766
      %v1279 = vpack.c.b16 %v783, %v767
      %v1280 = vpack.c.b16 %v784, %v768
      %v1281 = vpack.c.b16 %v785, %v769
      %v1282 = vpack.c.b16 %v802, %v786
      %v1283 = vpack.c.b16 %v803, %v787
      %v1284 = vpack.c.b16 %v804, %v788
      %v1285 = vpack.c.b16 %v805, %v789
      %v1286 = vpack.c.b16 %v806, %v790
      %v1287 = vpack.c.b16 %v807, %v791
      %v1288 = vpack.c.b16 %v808, %v792
      %v1289 = vpack.c.b16 %v809, %v793
      %v1290 = vpack.c.b16 %v810, %v794
      %v1291 = vpack.c.b16 %v811, %v795
      %v1292 = vpack.c.b16 %v812, %v796
      %v1293 = vpack.c.b16 %v813, %v797
      %v1294 = vpack.c.b16 %v814, %v798
      %v1295 = vpack.c.b16 %v815, %v799
      %v1296 = vpack.c.b16 %v816, %v800
      %v1297 = vpack.c.b16 %v817, %v801
      %v1298 = vpack.c.b16 %v834, %v818
      %v1299 = vpack.c.b16 %v835, %v819
      %v1300 = vpack.c.b16 %v836, %v820
      %v1301 = vpack.c.b16 %v837, %v821
      %v1302 = vpack.c.b16 %v838, %v822
      %v1303 = vpack.c.b16 %v839, %v823
      %v1304 = vpack.c.b16 %v840, %v824
      %v1305 = vpack.c.b16 %v841, %v825
      %v1306 = vpack.c.b16 %v842, %v826
      %v1307 = vpack.c.b16 %v843, %v827
      %v1308 = vpack.c.b16 %v844, %v828
      %v1309 = vpack.c.b16 %v845, %v829
      %v1310 = vpack.c.b16 %v846, %v830
      %v1311 = vpack.c.b16 %v847, %v831
      %v1312 = vpack.c.b16 %v848, %v832
      %v1313 = vpack.c.b16 %v849, %v833
      %v1314 = vpack.c.b16 %v866, %v850
      %v1315 = vpack.c.b16 %v867, %v851
      %v1316 = vpack.c.b16 %v868, %v852
      %v1317 = vpack.c.b16 %v869, %v853
      %v1318 = vpack.c.b16 %v870, %v854
      %v1319 = vpack.c.b16 %v871, %v855
      %v1320 = vpack.c.b16 %v872, %v856
      %v1321 = vpack.c.b16 %v873, %v857
      %v1322 = vpack.c.b16 %v874, %v858
      %v1323 = vpack.c.b16 %v875, %v859
      %v1324 = vpack.c.b16 %v876, %v860
      %v1325 = vpack.c.b16 %v877, %v861
      %v1326 = vpack.c.b16 %v878, %v862
      %v1327 = vpack.c.b16 %v879, %v863
      %v1328 = vpack.c.b16 %v880, %v864
      %v1329 = vpack.c.b16 %v881, %v865
      %v1330 = vpack.c.b16 %v898, %v882
      %v1331 = vpack.c.b16 %v899, %v883
      %v1332 = vpack.c.b16 %v900, %v884
      %v1333 = vpack.c.b16 %v901, %v885
      %v1334 = vpack.c.b16 %v902, %v886
      %v1335 = vpack.c.b16 %v903, %v887
      %v1336 = vpack.c.b16 %v904, %v888
      %v1337 = vpack.c.b16 %v905, %v889
      %v1338 = vpack.c.b16 %v906, %v890
      %v1339 = vpack.c.b16 %v907, %v891
      %v1340 = vpack.c.b16 %v908, %v892
      %v1341 = vpack.c.b16 %v909, %v893
      %v1342 = vpack.c.b16 %v910, %v894
      %v1343 = vpack.c.b16 %v911, %v895
      %v1344 = vpack.c.b16 %v912, %v896
      %v1345 = vpack.c.b16 %v913, %v897
      %v1346 = vpack.c.b16 %v930, %v914
      %v1347 = vpack.c.b16 %v931, %v915
      %v1348 = vpack.c.b16 %v932, %v916
      %v1349 = vpack.c.b16 %v933, %v917
      %v1350 = vpack.c.b16 %v934, %v918
      %v1351 = vpack.c.b16 %v935, %v919
      %v1352 = vpack.c.b16 %v936, %v920
      %v1353 = vpack.c.b16 %v937, %v921
      %v1354 = vpack.c.b16 %v938, %v922
      %v1355 = vpack.c.b16 %v939, %v923
      %v1356 = vpack.c.b16 %v940, %v924
      %v1357 = vpack.c.b16 %v941, %v925
      %v1358 = vpack.c.b16 %v942, %v926
      %v1359 = vpack.c.b16 %v943, %v927
      %v1360 = vpack.c.b16 %v944, %v928
      %v1361 = vpack.c.b16 %v945, %v929
      %v1362 = vpack.c.b16 %v962, %v946
      %v1363 = vpack.c.b16 %v963, %v947
      %v1364 = vpack.c.b16 %v964, %v948
      %v1365 = vpack.c.b16 %v965, %v949
      %v1366 = vpack.c.b16 %v966, %v950
      %v1367 = vpack.c.b16 %v967, %v951
      %v1368 = vpack.c.b16 %v968, %v952
      %v1369 = vpack.c.b16 %v969, %v953
      %v1370 = vpack.c.b16 %v970, %v954
      %v1371 = vpack.c.b16 %v971, %v955
      %v1372 = vpack.c.b16 %v972, %v956
      %v1373 = vpack.c.b16 %v973, %v957
      %v1374 = vpack.c.b16 %v974, %v958
      %v1375 = vpack.c.b16 %v975, %v959
      %v1376 = vpack.c.b16 %v976, %v960
      %v1377 = vpack.c.b16 %v977, %v961
      %v1378 = vpack.c.b16 %v994, %v978
      %v1379 = vpack.c.b16 %v995, %v979
      %v1380 = vpack.c.b16 %v996, %v980
      %v1381 = vpack.c.b16 %v997, %v981
      %v1382 = vpack.c.b16 %v998, %v982
      %v1383 = vpack.c.b16 %v999, %v983
      %v1384 = vpack.c.b16 %v1000, %v984
      %v1385 = vpack.c.b16 %v1001, %v985
      %v1386 = vpack.c.b16 %v1002, %v986
      %v1387 = vpack.c.b16 %v1003, %v987
      %v1388 = vpack.c.b16 %v1004, %v988
      %v1389 = vpack.c.b16 %v1005, %v989
      %v1390 = vpack.c.b16 %v1006, %v990
      %v1391 = vpack.c.b16 %v1007, %v991
      %v1392 = vpack.c.b16 %v1008, %v992
      %v1393 = vpack.c.b16 %v1009, %v993
      %v1394 = vpack.c.b16 %v1026, %v1010
      %v1395 = vpack.c.b16 %v1027, %v1011
      %v1396 = vpack.c.b16 %v1028, %v1012
      %v1397 = vpack.c.b16 %v1029, %v1013
      %v1398 = vpack.c.b16 %v1030, %v1014
      %v1399 = vpack.c.b16 %v1031, %v1015
      %v1400 = vpack.c.b16 %v1032, %v1016
      %v1401 = vpack.c.b16 %v1033, %v1017
      %v1402 = vpack.c.b16 %v1034, %v1018
      %v1403 = vpack.c.b16 %v1035, %v1019
      %v1404 = vpack.c.b16 %v1036, %v1020
      %v1405 = vpack.c.b16 %v1037, %v1021
      %v1406 = vpack.c.b16 %v1038, %v1022
      %v1407 = vpack.c.b16 %v1039, %v1023
      %v1408 = vpack.c.b16 %v1040, %v1024
      %v1409 = vpack.c.b16 %v1041, %v1025
      %v1410 = vpack.c.b16 %v1058, %v1042
      %v1411 = vpack.c.b16 %v1059, %v1043
      %v1412 = vpack.c.b16 %v1060, %v1044
      %v1413 = vpack.c.b16 %v1061, %v1045
      %v1414 = vpack.c.b16 %v1062, %v1046
      %v1415 = vpack.c.b16 %v1063, %v1047
      %v1416 = vpack.c.b16 %v1064, %v1048
      %v1417 = vpack.c.b16 %v1065, %v1049
      %v1418 = vpack.c.b16 %v1066, %v1050
      %v1419 = vpack.c.b16 %v1067, %v1051
      %v1420 = vpack.c.b16 %v1068, %v1052
      %v1421 = vpack.c.b16 %v1069, %v1053
      %v1422 = vpack.c.b16 %v1070, %v1054
      %v1423 = vpack.c.b16 %v1071, %v1055
      %v1424 = vpack.c.b16 %v1072, %v1056
      %v1425 = vpack.c.b16 %v1073, %v1057
      %v1426 = vpack.c.b16 %v1090, %v1074
      %v1427 = vpack.c.b16 %v1091, %v1075
      %v1428 = vpack.c.b16 %v1092, %v1076
      %v1429 = vpack.c.b16 %v1093, %v1077
      %v1430 = vpack.c.b16 %v1094, %v1078
      %v1431 = vpack.c.b16 %v1095, %v1079
      %v1432 = vpack.c.b16 %v1096, %v1080
      %v1433 = vpack.c.b16 %v1097, %v1081
      %v1434 = vpack.c.b16 %v1098, %v1082
      %v1435 = vpack.c.b16 %v1099, %v1083
      %v1436 = vpack.c.b16 %v1100, %v1084
      %v1437 = vpack.c.b16 %v1101, %v1085
      %v1438 = vpack.c.b16 %v1102, %v1086
      %v1439 = vpack.c.b16 %v1103, %v1087
      %v1440 = vpack.c.b16 %v1104, %v1088
      %v1441 = vpack.c.b16 %v1105, %v1089
      %v1442 = vpack.c.b16 %v1122, %v1106
      %v1443 = vpack.c.b16 %v1123, %v1107
      %v1444 = vpack.c.b16 %v1124, %v1108
      %v1445 = vpack.c.b16 %v1125, %v1109
      %v1446 = vpack.c.b16 %v1126, %v1110
      %v1447 = vpack.c.b16 %v1127, %v1111
      %v1448 = vpack.c.b16 %v1128, %v1112
      %v1449 = vpack.c.b16 %v1129, %v1113
      %v1450 = vpack.c.b16 %v1130, %v1114
      %v1451 = vpack.c.b16 %v1131, %v1115
      %v1452 = vpack.c.b16 %v1132, %v1116
      %v1453 = vpack.c.b16 %v1133, %v1117
      %v1454 = vpack.c.b16 %v1134, %v1118
      %v1455 = vpack.c.b16 %v1135, %v1119
      %v1456 = vpack.c.b16 %v1136, %v1120
      %v1457 = vpack.c.b16 %v1137, %v1121
      %v1458 = vpack.c.b16 %v1154, %v1138
      %v1459 = vpack.c.b16 %v1155, %v1139
      %v1460 = vpack.c.b16 %v1156, %v1140
      %v1461 = vpack.c.b16 %v1157, %v1141
      %v1462 = vpack.c.b16 %v1158, %v1142
      %v1463 = vpack.c.b16 %v1159, %v1143
      %v1464 = vpack.c.b16 %v1160, %v1144
      %v1465 = vpack.c.b16 %v1161, %v1145
      %v1466 = vpack.c.b16 %v1162, %v1146
      %v1467 = vpack.c.b16 %v1163, %v1147
      %v1468 = vpack.c.b16 %v1164, %v1148
      %v1469 = vpack.c.b16 %v1165, %v1149
      %v1470 = vpack.c.b16 %v1166, %v1150
      %v1471 = vpack.c.b16 %v1167, %v1151
      %v1472 = vpack.c.b16 %v1168, %v1152
      %v1473 = vpack.c.b16 %v1169, %v1153
      %v1474 = vpack.c.b16 %v1186, %v1170
      %v1475 = vpack.c.b16 %v1187, %v1171
      %v1476 = vpack.c.b16 %v1188, %v1172
      %v1477 = vpack.c.b16 %v1189, %v1173
      %v1478 = vpack.c.b16 %v1190, %v1174
      %v1479 = vpack.c.b16 %v1191, %v1175
      %v1480 = vpack.c.b16 %v1192, %v1176
      %v1481 = vpack.c.b16 %v1193, %v1177
      %v1482 = vpack.c.b16 %v1194, %v1178
      %v1483 = vpack.c.b16 %v1195, %v1179
      %v1484 = vpack.c.b16 %v1196, %v1180
      %v1485 = vpack.c.b16 %v1197, %v1181
      %v1486 = vpack.c.b16 %v1198, %v1182
      %v1487 = vpack.c.b16 %v1199, %v1183
      %v1488 = vpack.c.b16 %v1200, %v1184
      %v1489 = vpack.c.b16 %v1201, %v1185
      %v1490 = vpack.c.b16 %v1218, %v1202
      %v1491 = vpack.c.b16 %v1219, %v1203
      %v1492 = vpack.c.b16 %v1220, %v1204
      %v1493 = vpack.c.b16 %v1221, %v1205
      %v1494 = vpack.c.b16 %v1222, %v1206
      %v1495 = vpack.c.b16 %v1223, %v1207
      %v1496 = vpack.c.b16 %v1224, %v1208
      %v1497 = vpack.c.b16 %v1225, %v1209
      %v1498 = vpack.c.b16 %v1226, %v1210
      %v1499 = vpack.c.b16 %v1227, %v1211
      %v1500 = vpack.c.b16 %v1228, %v1212
      %v1501 = vpack.c.b16 %v1229, %v1213
      %v1502 = vpack.c.b16 %v1230, %v1214
      %v1503 = vpack.c.b16 %v1231, %v1215
      %v1504 = vpack.c.b16 %v1232, %v1216
      %v1505 = vpack.c.b16 %v1233, %v1217
      %v1506 = vpack.c.b16 %v1250, %v1234
      %v1507 = vpack.c.b16 %v1251, %v1235
      %v1508 = vpack.c.b16 %v1252, %v1236
      %v1509 = vpack.c.b16 %v1253, %v1237
      %v1510 = vpack.c.b16 %v1254, %v1238
      %v1511 = vpack.c.b16 %v1255, %v1239
      %v1512 = vpack.c.b16 %v1256, %v1240
      %v1513 = vpack.c.b16 %v1257, %v1241
      %v1514 = vpack.c.b16 %v1258, %v1242
      %v1515 = vpack.c.b16 %v1259, %v1243
      %v1516 = vpack.c.b16 %v1260, %v1244
      %v1517 = vpack.c.b16 %v1261, %v1245
      %v1518 = vpack.c.b16 %v1262, %v1246
      %v1519 = vpack.c.b16 %v1263, %v1247
      %v1520 = vpack.c.b16 %v1264, %v1248
      %v1521 = vpack.c.b16 %v1265, %v1249
      %1778 = vmatprep.subr.bf16.mxu0 %v1379
      %1779 = vmatpush1.bf16.msra.mxu0 %v1378
      %1780 = vmatprep.subr.bf16.mxu0 %v1363
      %1781 = vmatpush1.bf16.msra.mxu0 %v1362
      %1782 = vmatprep.subr.bf16.mxu0 %v1347
      %1783 = vmatpush1.bf16.msra.mxu0 %v1346
      %1784 = vmatprep.subr.bf16.mxu0 %v1331
      %1785 = vmatpush1.bf16.msra.mxu0 %v1330
      %1786 = vmatprep.subr.bf16.mxu0 %v1315
      %1787 = vmatpush1.bf16.msra.mxu0 %v1314
      %1788 = vmatprep.subr.bf16.mxu0 %v1299
      %1789 = vmatpush1.bf16.msra.mxu0 %v1298
      %1790 = vmatprep.subr.bf16.mxu0 %v1283
      %1791 = vmatpush1.bf16.msra.mxu0 %v1282
      %1792 = vmatprep.subr.bf16.mxu0 %v1267
      %1793 = vmatpush1.bf16.msra.mxu0 %v1266
      %1794 = vmatprep.subr.bf16.mxu0 %v1507
      %1795 = vmatpush2.bf16.msra.mxu0 %v1506
      %1796 = vmatprep.subr.bf16.mxu0 %v1491
      %1797 = vmatpush2.bf16.msra.mxu0 %v1490
      %1798 = vmatprep.subr.bf16.mxu0 %v1475
      %1799 = vmatpush2.bf16.msra.mxu0 %v1474
      %1800 = vmatprep.subr.bf16.mxu0 %v1459
      %1801 = vmatpush2.bf16.msra.mxu0 %v1458
      %1802 = vmatprep.subr.bf16.mxu0 %v1443
      %1803 = vmatpush2.bf16.msra.mxu0 %v1442
      %1804 = vmatprep.subr.bf16.mxu0 %v1427
      %1805 = vmatpush2.bf16.msra.mxu0 %v1426
      %1806 = vmatprep.subr.bf16.mxu0 %v1411
      %1807 = vmatpush2.bf16.msra.mxu0 %v1410
      %1808 = vmatprep.subr.bf16.mxu0 %v1395
      %1809 = vmatpush2.bf16.msra.mxu0 %v1394
      %1810 = vmatprep.mubr.bf16.mxu0 %v495
      %1811 = vmatmul.mubr.bf16.gmra.mxu0 %v494
      %v1812 = vpop.f32.mrf.mxu0
      %v1813 = vadd.f32 0.0, %v1812
      %v1814 = vpop.f32.mrf.mxu0
      %v1815 = vadd.f32 0.0, %v1814
      %v1816 = vpop.f32.mrf.mxu0
      %v1817 = vpop.f32.mrf.mxu0
      %1818 = vdwg.mxu0
      %1819 = vmatprep.subr.bf16.mxu0 %v1381
      %1820 = vmatpush1.bf16.msra.mxu0 %v1380
      %1821 = vmatprep.subr.bf16.mxu0 %v1365
      %1822 = vmatpush1.bf16.msra.mxu0 %v1364
      %1823 = vmatprep.subr.bf16.mxu0 %v1349
      %1824 = vmatpush1.bf16.msra.mxu0 %v1348
      %1825 = vmatprep.subr.bf16.mxu0 %v1333
      %1826 = vmatpush1.bf16.msra.mxu0 %v1332
      %1827 = vmatprep.subr.bf16.mxu0 %v1317
      %1828 = vmatpush1.bf16.msra.mxu0 %v1316
      %1829 = vmatprep.subr.bf16.mxu0 %v1301
      %1830 = vmatpush1.bf16.msra.mxu0 %v1300
      %1831 = vmatprep.subr.bf16.mxu0 %v1285
      %1832 = vmatpush1.bf16.msra.mxu0 %v1284
      %1833 = vmatprep.subr.bf16.mxu0 %v1269
      %1834 = vmatpush1.bf16.msra.mxu0 %v1268
      %1835 = vmatprep.subr.bf16.mxu0 %v1509
      %1836 = vmatpush2.bf16.msra.mxu0 %v1508
      %1837 = vmatprep.subr.bf16.mxu0 %v1493
      %1838 = vmatpush2.bf16.msra.mxu0 %v1492
      %1839 = vmatprep.subr.bf16.mxu0 %v1477
      %1840 = vmatpush2.bf16.msra.mxu0 %v1476
      %1841 = vmatprep.subr.bf16.mxu0 %v1461
      %1842 = vmatpush2.bf16.msra.mxu0 %v1460
      %1843 = vmatprep.subr.bf16.mxu0 %v1445
      %1844 = vmatpush2.bf16.msra.mxu0 %v1444
      %1845 = vmatprep.subr.bf16.mxu0 %v1429
      %1846 = vmatpush2.bf16.msra.mxu0 %v1428
      %1847 = vmatprep.subr.bf16.mxu0 %v1413
      %1848 = vmatpush2.bf16.msra.mxu0 %v1412
      %1849 = vmatprep.subr.bf16.mxu0 %v1397
      %1850 = vmatpush2.bf16.msra.mxu0 %v1396
      %1851 = vmatprep.mubr.bf16.mxu0 %v495
      %1852 = vmatmul.mubr.bf16.gmra.mxu0 %v494
      %v1853 = vpop.f32.mrf.mxu0
      %v1854 = vadd.f32 0.0, %v1853
      %v1855 = vpop.f32.mrf.mxu0
      %v1856 = vadd.f32 0.0, %v1855
      %v1857 = vpop.f32.mrf.mxu0
      %v1858 = vpop.f32.mrf.mxu0
      %1859 = vdwg.mxu0
      %1860 = vmatprep.subr.bf16.mxu0 %v1383
      %1861 = vmatpush1.bf16.msra.mxu0 %v1382
      %1862 = vmatprep.subr.bf16.mxu0 %v1367
      %1863 = vmatpush1.bf16.msra.mxu0 %v1366
      %1864 = vmatprep.subr.bf16.mxu0 %v1351
      %1865 = vmatpush1.bf16.msra.mxu0 %v1350
      %1866 = vmatprep.subr.bf16.mxu0 %v1335
      %1867 = vmatpush1.bf16.msra.mxu0 %v1334
      %1868 = vmatprep.subr.bf16.mxu0 %v1319
      %1869 = vmatpush1.bf16.msra.mxu0 %v1318
      %1870 = vmatprep.subr.bf16.mxu0 %v1303
      %1871 = vmatpush1.bf16.msra.mxu0 %v1302
      %1872 = vmatprep.subr.bf16.mxu0 %v1287
      %1873 = vmatpush1.bf16.msra.mxu0 %v1286
      %1874 = vmatprep.subr.bf16.mxu0 %v1271
      %1875 = vmatpush1.bf16.msra.mxu0 %v1270
      %1876 = vmatprep.subr.bf16.mxu0 %v1511
      %1877 = vmatpush2.bf16.msra.mxu0 %v1510
      %1878 = vmatprep.subr.bf16.mxu0 %v1495
      %1879 = vmatpush2.bf16.msra.mxu0 %v1494
      %1880 = vmatprep.subr.bf16.mxu0 %v1479
      %1881 = vmatpush2.bf16.msra.mxu0 %v1478
      %1882 = vmatprep.subr.bf16.mxu0 %v1463
      %1883 = vmatpush2.bf16.msra.mxu0 %v1462
      %1884 = vmatprep.subr.bf16.mxu0 %v1447
      %1885 = vmatpush2.bf16.msra.mxu0 %v1446
      %1886 = vmatprep.subr.bf16.mxu0 %v1431
      %1887 = vmatpush2.bf16.msra.mxu0 %v1430
      %1888 = vmatprep.subr.bf16.mxu0 %v1415
      %1889 = vmatpush2.bf16.msra.mxu0 %v1414
      %1890 = vmatprep.subr.bf16.mxu0 %v1399
      %1891 = vmatpush2.bf16.msra.mxu0 %v1398
      %1892 = vmatprep.mubr.bf16.mxu0 %v495
      %1893 = vmatmul.mubr.bf16.gmra.mxu0 %v494
      %v1894 = vpop.f32.mrf.mxu0
      %v1895 = vadd.f32 0.0, %v1894
      %v1896 = vpop.f32.mrf.mxu0
      %v1897 = vadd.f32 0.0, %v1896
      %v1898 = vpop.f32.mrf.mxu0
      %v1899 = vpop.f32.mrf.mxu0
      %1900 = vdwg.mxu0
      %1901 = vmatprep.subr.bf16.mxu0 %v1385
      %1902 = vmatpush1.bf16.msra.mxu0 %v1384
      %1903 = vmatprep.subr.bf16.mxu0 %v1369
      %1904 = vmatpush1.bf16.msra.mxu0 %v1368
      %1905 = vmatprep.subr.bf16.mxu0 %v1353
      %1906 = vmatpush1.bf16.msra.mxu0 %v1352
      %1907 = vmatprep.subr.bf16.mxu0 %v1337
      %1908 = vmatpush1.bf16.msra.mxu0 %v1336
      %1909 = vmatprep.subr.bf16.mxu0 %v1321
      %1910 = vmatpush1.bf16.msra.mxu0 %v1320
      %1911 = vmatprep.subr.bf16.mxu0 %v1305
      %1912 = vmatpush1.bf16.msra.mxu0 %v1304
      %1913 = vmatprep.subr.bf16.mxu0 %v1289
      %1914 = vmatpush1.bf16.msra.mxu0 %v1288
      %1915 = vmatprep.subr.bf16.mxu0 %v1273
      %1916 = vmatpush1.bf16.msra.mxu0 %v1272
      %1917 = vmatprep.subr.bf16.mxu0 %v1513
      %1918 = vmatpush2.bf16.msra.mxu0 %v1512
      %1919 = vmatprep.subr.bf16.mxu0 %v1497
      %1920 = vmatpush2.bf16.msra.mxu0 %v1496
      %1921 = vmatprep.subr.bf16.mxu0 %v1481
      %1922 = vmatpush2.bf16.msra.mxu0 %v1480
      %1923 = vmatprep.subr.bf16.mxu0 %v1465
      %1924 = vmatpush2.bf16.msra.mxu0 %v1464
      %1925 = vmatprep.subr.bf16.mxu0 %v1449
      %1926 = vmatpush2.bf16.msra.mxu0 %v1448
      %1927 = vmatprep.subr.bf16.mxu0 %v1433
      %1928 = vmatpush2.bf16.msra.mxu0 %v1432
      %1929 = vmatprep.subr.bf16.mxu0 %v1417
      %1930 = vmatpush2.bf16.msra.mxu0 %v1416
      %1931 = vmatprep.subr.bf16.mxu0 %v1401
      %1932 = vmatpush2.bf16.msra.mxu0 %v1400
      %1933 = vmatprep.mubr.bf16.mxu0 %v495
      %1934 = vmatmul.mubr.bf16.gmra.mxu0 %v494
      %v1935 = vpop.f32.mrf.mxu0
      %v1936 = vadd.f32 0.0, %v1935
      %v1937 = vpop.f32.mrf.mxu0
      %v1938 = vadd.f32 0.0, %v1937
      %v1939 = vpop.f32.mrf.mxu0
      %v1940 = vpop.f32.mrf.mxu0
      %1941 = vdwg.mxu0
      %1942 = vmatprep.subr.bf16.mxu0 %v1387
      %1943 = vmatpush1.bf16.msra.mxu0 %v1386
      %1944 = vmatprep.subr.bf16.mxu0 %v1371
      %1945 = vmatpush1.bf16.msra.mxu0 %v1370
      %1946 = vmatprep.subr.bf16.mxu0 %v1355
      %1947 = vmatpush1.bf16.msra.mxu0 %v1354
      %1948 = vmatprep.subr.bf16.mxu0 %v1339
      %1949 = vmatpush1.bf16.msra.mxu0 %v1338
      %1950 = vmatprep.subr.bf16.mxu0 %v1323
      %1951 = vmatpush1.bf16.msra.mxu0 %v1322
      %1952 = vmatprep.subr.bf16.mxu0 %v1307
      %1953 = vmatpush1.bf16.msra.mxu0 %v1306
      %1954 = vmatprep.subr.bf16.mxu0 %v1291
      %1955 = vmatpush1.bf16.msra.mxu0 %v1290
      %1956 = vmatprep.subr.bf16.mxu0 %v1275
      %1957 = vmatpush1.bf16.msra.mxu0 %v1274
      %1958 = vmatprep.subr.bf16.mxu0 %v1515
      %1959 = vmatpush2.bf16.msra.mxu0 %v1514
      %1960 = vmatprep.subr.bf16.mxu0 %v1499
      %1961 = vmatpush2.bf16.msra.mxu0 %v1498
      %1962 = vmatprep.subr.bf16.mxu0 %v1483
      %1963 = vmatpush2.bf16.msra.mxu0 %v1482
      %1964 = vmatprep.subr.bf16.mxu0 %v1467
      %1965 = vmatpush2.bf16.msra.mxu0 %v1466
      %1966 = vmatprep.subr.bf16.mxu0 %v1451
      %1967 = vmatpush2.bf16.msra.mxu0 %v1450
      %1968 = vmatprep.subr.bf16.mxu0 %v1435
      %1969 = vmatpush2.bf16.msra.mxu0 %v1434
      %1970 = vmatprep.subr.bf16.mxu0 %v1419
      %1971 = vmatpush2.bf16.msra.mxu0 %v1418
      %1972 = vmatprep.subr.bf16.mxu0 %v1403
      %1973 = vmatpush2.bf16.msra.mxu0 %v1402
      %1974 = vmatprep.mubr.bf16.mxu0 %v495
      %1975 = vmatmul.mubr.bf16.gmra.mxu0 %v494
      %v1976 = vpop.f32.mrf.mxu0
      %v1977 = vadd.f32 0.0, %v1976
      %v1978 = vpop.f32.mrf.mxu0
      %v1979 = vadd.f32 0.0, %v1978
      %v1980 = vpop.f32.mrf.mxu0
      %v1981 = vpop.f32.mrf.mxu0
      %1982 = vdwg.mxu0
      %1983 = vmatprep.subr.bf16.mxu0 %v1389
      %1984 = vmatpush1.bf16.msra.mxu0 %v1388
      %1985 = vmatprep.subr.bf16.mxu0 %v1373
      %1986 = vmatpush1.bf16.msra.mxu0 %v1372
      %1987 = vmatprep.subr.bf16.mxu0 %v1357
      %1988 = vmatpush1.bf16.msra.mxu0 %v1356
      %1989 = vmatprep.subr.bf16.mxu0 %v1341
      %1990 = vmatpush1.bf16.msra.mxu0 %v1340
      %1991 = vmatprep.subr.bf16.mxu0 %v1325
      %1992 = vmatpush1.bf16.msra.mxu0 %v1324
      %1993 = vmatprep.subr.bf16.mxu0 %v1309
      %1994 = vmatpush1.bf16.msra.mxu0 %v1308
      %1995 = vmatprep.subr.bf16.mxu0 %v1293
      %1996 = vmatpush1.bf16.msra.mxu0 %v1292
      %1997 = vmatprep.subr.bf16.mxu0 %v1277
      %1998 = vmatpush1.bf16.msra.mxu0 %v1276
      %1999 = vmatprep.subr.bf16.mxu0 %v1517
      %2000 = vmatpush2.bf16.msra.mxu0 %v1516
      %2001 = vmatprep.subr.bf16.mxu0 %v1501
      %2002 = vmatpush2.bf16.msra.mxu0 %v1500
      %2003 = vmatprep.subr.bf16.mxu0 %v1485
      %2004 = vmatpush2.bf16.msra.mxu0 %v1484
      %2005 = vmatprep.subr.bf16.mxu0 %v1469
      %2006 = vmatpush2.bf16.msra.mxu0 %v1468
      %2007 = vmatprep.subr.bf16.mxu0 %v1453
      %2008 = vmatpush2.bf16.msra.mxu0 %v1452
      %2009 = vmatprep.subr.bf16.mxu0 %v1437
      %2010 = vmatpush2.bf16.msra.mxu0 %v1436
      %2011 = vmatprep.subr.bf16.mxu0 %v1421
      %2012 = vmatpush2.bf16.msra.mxu0 %v1420
      %2013 = vmatprep.subr.bf16.mxu0 %v1405
      %2014 = vmatpush2.bf16.msra.mxu0 %v1404
      %2015 = vmatprep.mubr.bf16.mxu0 %v495
      %2016 = vmatmul.mubr.bf16.gmra.mxu0 %v494
      %v2017 = vpop.f32.mrf.mxu0
      %v2018 = vadd.f32 0.0, %v2017
      %v2019 = vpop.f32.mrf.mxu0
      %v2020 = vadd.f32 0.0, %v2019
      %v2021 = vpop.f32.mrf.mxu0
      %v2022 = vpop.f32.mrf.mxu0
      %2023 = vdwg.mxu0
      %2024 = vmatprep.subr.bf16.mxu0 %v1391
      %2025 = vmatpush1.bf16.msra.mxu0 %v1390
      %2026 = vmatprep.subr.bf16.mxu0 %v1375
      %2027 = vmatpush1.bf16.msra.mxu0 %v1374
      %2028 = vmatprep.subr.bf16.mxu0 %v1359
      %2029 = vmatpush1.bf16.msra.mxu0 %v1358
      %2030 = vmatprep.subr.bf16.mxu0 %v1343
      %2031 = vmatpush1.bf16.msra.mxu0 %v1342
      %2032 = vmatprep.subr.bf16.mxu0 %v1327
      %2033 = vmatpush1.bf16.msra.mxu0 %v1326
      %2034 = vmatprep.subr.bf16.mxu0 %v1311
      %2035 = vmatpush1.bf16.msra.mxu0 %v1310
      %2036 = vmatprep.subr.bf16.mxu0 %v1295
      %2037 = vmatpush1.bf16.msra.mxu0 %v1294
      %2038 = vmatprep.subr.bf16.mxu0 %v1279
      %2039 = vmatpush1.bf16.msra.mxu0 %v1278
      %2040 = vmatprep.subr.bf16.mxu0 %v1519
      %2041 = vmatpush2.bf16.msra.mxu0 %v1518
      %2042 = vmatprep.subr.bf16.mxu0 %v1503
      %2043 = vmatpush2.bf16.msra.mxu0 %v1502
      %2044 = vmatprep.subr.bf16.mxu0 %v1487
      %2045 = vmatpush2.bf16.msra.mxu0 %v1486
      %2046 = vmatprep.subr.bf16.mxu0 %v1471
      %2047 = vmatpush2.bf16.msra.mxu0 %v1470
      %2048 = vmatprep.subr.bf16.mxu0 %v1455
      %2049 = vmatpush2.bf16.msra.mxu0 %v1454
      %2050 = vmatprep.subr.bf16.mxu0 %v1439
      %2051 = vmatpush2.bf16.msra.mxu0 %v1438
      %2052 = vmatprep.subr.bf16.mxu0 %v1423
      %2053 = vmatpush2.bf16.msra.mxu0 %v1422
      %2054 = vmatprep.subr.bf16.mxu0 %v1407
      %2055 = vmatpush2.bf16.msra.mxu0 %v1406
      %2056 = vmatprep.mubr.bf16.mxu0 %v495
      %2057 = vmatmul.mubr.bf16.gmra.mxu0 %v494
      %v2058 = vpop.f32.mrf.mxu0
      %v2059 = vadd.f32 0.0, %v2058
      %v2060 = vpop.f32.mrf.mxu0
      %v2061 = vadd.f32 0.0, %v2060
      %v2062 = vpop.f32.mrf.mxu0
      %v2063 = vpop.f32.mrf.mxu0
      %2064 = vdwg.mxu0
      %2065 = vmatprep.subr.bf16.mxu0 %v1393
      %2066 = vmatpush1.bf16.msra.mxu0 %v1392
      %2067 = vmatprep.subr.bf16.mxu0 %v1377
      %2068 = vmatpush1.bf16.msra.mxu0 %v1376
      %2069 = vmatprep.subr.bf16.mxu0 %v1361
      %2070 = vmatpush1.bf16.msra.mxu0 %v1360
      %2071 = vmatprep.subr.bf16.mxu0 %v1345
      %2072 = vmatpush1.bf16.msra.mxu0 %v1344
      %2073 = vmatprep.subr.bf16.mxu0 %v1329
      %2074 = vmatpush1.bf16.msra.mxu0 %v1328
      %2075 = vmatprep.subr.bf16.mxu0 %v1313
      %2076 = vmatpush1.bf16.msra.mxu0 %v1312
      %2077 = vmatprep.subr.bf16.mxu0 %v1297
      %2078 = vmatpush1.bf16.msra.mxu0 %v1296
      %2079 = vmatprep.subr.bf16.mxu0 %v1281
      %2080 = vmatpush1.bf16.msra.mxu0 %v1280
      %2081 = vmatprep.subr.bf16.mxu0 %v1521
      %2082 = vmatpush2.bf16.msra.mxu0 %v1520
      %2083 = vmatprep.subr.bf16.mxu0 %v1505
      %2084 = vmatpush2.bf16.msra.mxu0 %v1504
      %2085 = vmatprep.subr.bf16.mxu0 %v1489
      %2086 = vmatpush2.bf16.msra.mxu0 %v1488
      %2087 = vmatprep.subr.bf16.mxu0 %v1473
      %2088 = vmatpush2.bf16.msra.mxu0 %v1472
      %2089 = vmatprep.subr.bf16.mxu0 %v1457
      %2090 = vmatpush2.bf16.msra.mxu0 %v1456
      %2091 = vmatprep.subr.bf16.mxu0 %v1441
      %2092 = vmatpush2.bf16.msra.mxu0 %v1440
      %2093 = vmatprep.subr.bf16.mxu0 %v1425
      %2094 = vmatpush2.bf16.msra.mxu0 %v1424
      %2095 = vmatprep.subr.bf16.mxu0 %v1409
      %2096 = vmatpush2.bf16.msra.mxu0 %v1408
      %2097 = vmatprep.mubr.bf16.mxu0 %v495
      %2098 = vmatmul.mubr.bf16.gmra.mxu0 %v494
      %v2099 = vpop.f32.mrf.mxu0
      %v2100 = vadd.f32 0.0, %v2099
      %v2101 = vpop.f32.mrf.mxu0
      %v2102 = vadd.f32 0.0, %v2101
      %v2103 = vpop.f32.mrf.mxu0
      %v2104 = vpop.f32.mrf.mxu0
      %2105 = vdwg.mxu0
      %v2106 = vtanh.pop %v1813
      %v2107 = vtanh.pop %v1815
      %v2108 = vtanh.pop %v1854
      %v2109 = vtanh.pop %v1856
      %v2110 = vtanh.pop %v1895
      %v2111 = vtanh.pop %v1897
      %v2112 = vtanh.pop %v1936
      %v2113 = vtanh.pop %v1938
      %v2114 = vtanh.pop %v1977
      %v2115 = vtanh.pop %v1979
      %v2116 = vtanh.pop %v2018
      %v2117 = vtanh.pop %v2020
      %v2118 = vtanh.pop %v2059
      %v2119 = vtanh.pop %v2061
      %v2120 = vtanh.pop %v2100
      %v2121 = vtanh.pop %v2102
      %2122 = vst [vmem:[%s232] sm:$0xff] %v2106
      %2123 = vst [vmem:[%s232 + $0x8] sm:$0xff] %v2107
      %2124 = vst [vmem:[%s232 + $0x10] sm:$0xff] %v2108
      %2125 = vst [vmem:[%s232 + $0x18] sm:$0xff] %v2109
      %2126 = vst [vmem:[%s232 + $0x20] sm:$0xff] %v2110
      %2127 = vst [vmem:[%s232 + $0x28] sm:$0xff] %v2111
      %2128 = vst [vmem:[%s232 + $0x30] sm:$0xff] %v2112
      %2129 = vst [vmem:[%s232 + $0x38] sm:$0xff] %v2113
      %2130 = vst [vmem:[%s232 + $0x40] sm:$0xff] %v2114
      %2131 = vst [vmem:[%s232 + $0x48] sm:$0xff] %v2115
      %2132 = vst [vmem:[%s232 + $0x50] sm:$0xff] %v2116
      %2133 = vst [vmem:[%s232 + $0x58] sm:$0xff] %v2117
      %2134 = vst [vmem:[%s232 + $0x60] sm:$0xff] %v2118
      %2135 = vst [vmem:[%s232 + $0x68] sm:$0xff] %v2119
      %2136 = vst [vmem:[%s232 + $0x70] sm:$0xff] %v2120
      %2137 = vst [vmem:[%s232 + $0x78] sm:$0xff] %v2121
      %s2138 = smul.u32 16, %s20
      %p2139 = scmp.lt.s32.totalorder %s18, 3
      %s2140 = scalar_select %p2139, %s18, 3
      %p2141 = scmp.lt.s32.totalorder %s19, 0
      %s2142 = scalar_select %p2141, %s19, 0
      %p2143 = scmp.lt.s32.totalorder %s2138, 15
      %s2144 = scalar_select %p2143, %s2138, 15
      %s2145 = smul.addr %s2142, 16
      %s2146 = sadd.s32 %s2144, %s2145
      %s2147 = smul.addr %s2140, 16
      %s2148 = sadd.s32 %s2146, %s2147
      %s2149 = smul.addr %s2148, 8
      %s2150 = scalar_lea.vmem %s2, %s2149
      // Predicated region
      $region29: #{gen_forward.9} parent=27 // pred_check
        %p2151 = pneg %p110
      $region30: #{gen_forward.9} parent=27 // pred_check_branch
        %2153 = sbr.rel (%p2151) target = $region32
      $region31: #{gen_forward.9} parent=27 // pred_region
        %s2154 = smul.u32 16, %s20
      $region32: #{gen_forward.9} parent=27 // pred_fallthru
        _
    $region28: #{gen_forward.9} parent=5 // pred_fallthru
      _
    %p2155 = scmp.le.s32.totalorder 2, %s8
    // Predicated region
    $region33: #{gen_forward.9} parent=5 // pred_check
      %p2156 = pneg %p2155
    $region34: #{gen_forward.9} parent=5 // pred_check_branch
      %2158 = sbr.rel (%p2156) target = $region36
    $region35: #{gen_forward.9} parent=5 // pred_region
      %s2159 = ssub.s32 %s8, 2
      // Predicated region
      $region37: #{gen_forward.9} parent=35 // pred_check
        %p2160 = pneg %p116
      $region38: #{gen_forward.9} parent=35 // pred_check_branch
        %2162 = sbr.rel (%p2160) target = $region40
      $region39: #{gen_forward.9} parent=35 // pred_region
        %s2163 = smul.u32 16, %s23
        %p2164 = scmp.lt.s32.totalorder %s21, 3
        %s2165 = scalar_select %p2164, %s21, 3
        %p2166 = scmp.lt.s32.totalorder %s22, 0
        %s2167 = scalar_select %p2166, %s22, 0
        %p2168 = scmp.lt.s32.totalorder %s2163, 15
        %s2169 = scalar_select %p2168, %s2163, 15
        %s2170 = smul.addr %s2167, 16
        %s2171 = sadd.s32 %s2169, %s2170
        %s2172 = smul.addr %s2165, 16
        %s2173 = sadd.s32 %s2171, %s2172
        %s2174 = smul.addr %s2173, 8
        %s2175 = scalar_lea.vmem %s2, %s2174
      $region40: #{gen_forward.9} parent=35 // pred_fallthru
        _
    $region36: #{gen_forward.9} parent=5 // pred_fallthru
      _
  $region6: #{gen_forward.9} parent=0 // loop_footer
    %s12 = sadd.s32 1, %s8
  $region7: #{gen_forward.9} parent=0 // loop_footer_branch
    %7 = sbr.rel target = $region3
  $region8: #{gen_forward.9} parent=0 // loop_exit
    _

</llo_original>
